<compile_context>
chip_gen: v6e
topology: v6e:2x2x1
jax: 0.10.0
libtpu: 0.0.40
codegen_flags: <defaults>
</compile_context>

<pallas_src>
import math
import functools

import jax
import jax.numpy as jnp
from jax.experimental import pallas as pl
from jax.experimental.pallas import tpu as pltpu

LANE = 128


def _cp(c):
    """Channel width padded up to a multiple of 128 (lane-dense)."""
    return ((c + LANE - 1) // LANE) * LANE


def _pad_last(x, to):
    p = to - x.shape[-1]
    if p == 0:
        return x
    return jnp.pad(x, [(0, 0)] * (x.ndim - 1) + [(0, p)])


# ----------------------------- Pallas kernels ------------------------------

def _conv3x3_kernel(x_ref, w_ref, scale_ref, shift_ref, *rest,
                    offs, OHt, OW, has_residual, apply_relu):
    """Fused 3x3 conv (column taps packed into K) + BN (+ residual) (+ ReLU).

    x_ref:  (1, PR, OW, Kp)   column-packed (and row-polyphased) input, bf16
    w_ref:  (3, Kp, CPo)      one K-packed weight matrix per row tap, bf16
    scale/shift: (1, CPo) f32 folded BatchNorm
    rest:   [res_ref (1, OHt, OW, CPo)]?, out_ref (1, OHt, OW, CPo)
    """
    out_ref = rest[-1]
    res_ref = rest[0] if has_residual else None
    Kp = w_ref.shape[1]
    CPo = w_ref.shape[2]
    r0 = pl.program_id(1) * OHt
    acc = None
    for ki in range(3):
        # Row-only slice; reshape is a free view because OW % 8 == 0.
        patch = x_ref[0, pl.ds(r0 + offs[ki], OHt), :, :].reshape(OHt * OW, Kp)
        d = jnp.dot(patch, w_ref[ki], preferred_element_type=jnp.float32)
        acc = d if acc is None else acc + d
    y = acc * scale_ref[...] + shift_ref[...]
    if has_residual:
        y = y + res_ref[...].reshape(OHt * OW, CPo).astype(jnp.float32)
    if apply_relu:
        y = jnp.maximum(y, 0.0)
    out_ref[...] = y.reshape(1, OHt, OW, CPo).astype(out_ref.dtype)


def _pointwise_kernel(*refs, num_in, has_residual, apply_relu):
    """Fused 1x1 conv over several (conceptually concatenated) inputs + BN.

    refs: x_0..x_{n-1} (tm, CP_i), w_0..w_{n-1} (CP_i, CPo), scale, shift,
          [res (tm, CPo)]?, out (tm, CPo)
    """
    out_ref = refs[-1]
    xs = refs[:num_in]
    ws = refs[num_in:2 * num_in]
    scale_ref = refs[2 * num_in]
    shift_ref = refs[2 * num_in + 1]
    res_ref = refs[2 * num_in + 2] if has_residual else None
    acc = None
    for i in range(num_in):
        d = jnp.dot(xs[i][...], ws[i][...], preferred_element_type=jnp.float32)
        acc = d if acc is None else acc + d
    y = acc * scale_ref[...] + shift_ref[...]
    if has_residual:
        y = y + res_ref[...].astype(jnp.float32)
    if apply_relu:
        y = jnp.maximum(y, 0.0)
    out_ref[...] = y.astype(out_ref.dtype)


def _maxpool_kernel(x_ref, o_ref, *, s, CP):
    """x_ref: (OH, s, OW, s*CP) reshape-only view; o_ref: (OH, OW, CP)."""
    m = None
    for i in range(s):
        for j in range(s):
            v = x_ref[:, i, :, j * CP:(j + 1) * CP]   # lane-aligned slice
            m = v if m is None else jnp.maximum(m, v)
    o_ref[...] = m


# ------------------------------ kernel wrappers -----------------------------

def _conv3x3_prepack(x, cin, stride, kp):
    """Column-pack 3 taps into channels (and row-polyphase for stride 2).

    x: (N, H, W, CP>=cin) -> (N, PR, OW, kp) bf16, row offsets per ki, OH, OW.
    Fuses with the producing op under jit (pad / slice / concat only).
    """
    N, H, W, _ = x.shape
    xl = x[..., :cin]
    xp = jnp.pad(xl, ((0, 0), (1, 1), (1, 1), (0, 0)))
    if stride == 1:
        OH, OW = H, W
        xc = jnp.concatenate([xp[:, :, j:j + OW, :] for j in range(3)], axis=-1)
        offs = (0, 1, 2)
    elif stride == 2:
        OH, OW = (H - 1) // 2 + 1, (W - 1) // 2 + 1
        xc = jnp.concatenate(
            [xp[:, :, j::2, :][:, :, :OW, :] for j in range(3)], axis=-1)
        xe = xc[:, 0::2, :, :][:, :OH + 1]     # even input rows (ki = 0, 2)
        xo = xc[:, 1::2, :, :][:, :OH]         # odd input rows  (ki = 1)
        xc = jnp.concatenate([xe, xo], axis=1)
        offs = (0, OH + 1, 1)
    else:
        raise NotImplementedError("conv3x3: only stride 1 or 2 supported")
    xc = _pad_last(xc, kp).astype(jnp.bfloat16)
    return xc, offs, OH, OW


def conv3x3_bn(x, cin, p, *, stride=1, residual=None, relu=True):
    """x: (N,H,W,>=cin) bf16 -> (N, OH, OW, CPo) bf16."""
    N = x.shape[0]
    Kp = p["w"].shape[1]
    CPo = p["w"].shape[2]
    xin, offs, OH, OW = _conv3x3_prepack(x, cin, stride, Kp)
    PR = xin.shape[1]

    # Row tiling: single tile at small maps (min per-step overhead on 1-TC
    # chips); multiple tiles on large maps so BlockSpec pipelining can hide
    # DMA behind MXU work and the output/res blocks stay small.
    OHt = OH
    tap_bytes = OH * OW * Kp * 2
    if tap_bytes > (2 << 20):
        target = max(8, (2 << 20) // (OW * Kp * 2))
        for t in range(min(OH, target), 0, -1):
            if OH % t == 0:
                OHt = t
                break
    nrt = OH // OHt

    has_res = residual is not None
    in_specs = [
        pl.BlockSpec((1, PR, OW, Kp), lambda n, r: (n, 0, 0, 0)),   # resident
        pl.BlockSpec((3, Kp, CPo), lambda n, r: (0, 0, 0)),
        pl.BlockSpec((1, CPo), lambda n, r: (0, 0)),
        pl.BlockSpec((1, CPo), lambda n, r: (0, 0)),
    ]
    args = [xin, p["w"], p["scale"], p["shift"]]
    if has_res:
        in_specs.append(pl.BlockSpec((1, OHt, OW, CPo), lambda n, r: (n, r, 0, 0)))
        args.append(residual)

    in_bytes = PR * OW * Kp * 2
    out_bytes = OHt * OW * CPo * 2
    est = 2 * (in_bytes + 3 * Kp * CPo * 2 + out_bytes * (2 if has_res else 1))
    cp_kwargs = dict(dimension_semantics=("parallel", "arbitrary"))
    if est > (16 << 20):   # only needed when scaling spatial size
        cp_kwargs["vmem_limit_bytes"] = min(est + (8 << 20), 64 << 20)

    kernel = functools.partial(_conv3x3_kernel, offs=offs, OHt=OHt, OW=OW,
                               has_residual=has_res, apply_relu=relu)
    return pl.pallas_call(
        kernel,
        out_shape=jax.ShapeDtypeStruct((N, OH, OW, CPo), jnp.bfloat16),
        grid=(N, nrt),
        in_specs=in_specs,
        out_specs=pl.BlockSpec((1, OHt, OW, CPo), lambda n, r: (n, r, 0, 0)),
        compiler_params=pltpu.CompilerParams(**cp_kwargs),
    )(*args)


def _pick_row_tile(M):
    if M <= 1024:
        return M
    for t in range(1024, 7, -8):
        if M % t == 0:
            return t
    return M


def pointwise_bn(xs, ws, scale, shift, *, residual=None, relu=True):
    """Fused 1x1 conv (sum over inputs == conv of their concat) + BN (+res)(+ReLU)."""
    N, H, W, _ = xs[0].shape
    CPo = ws[0].shape[-1]
    M = N * H * W
    tm = _pick_row_tile(M)
    num_in = len(xs)
    xs2 = [a.reshape(M, a.shape[-1]) for a in xs]
    args = xs2 + list(ws) + [scale, shift]
    in_specs = [pl.BlockSpec((tm, a.shape[-1]), lambda i: (i, 0)) for a in xs2]
    in_specs += [pl.BlockSpec(w.shape, lambda i: (0, 0)) for w in ws]
    in_specs += [pl.BlockSpec((1, CPo), lambda i: (0, 0)),
                 pl.BlockSpec((1, CPo), lambda i: (0, 0))]
    has_res = residual is not None
    if has_res:
        args.append(residual.reshape(M, CPo))
        in_specs.append(pl.BlockSpec((tm, CPo), lambda i: (i, 0)))
    out = pl.pallas_call(
        functools.partial(_pointwise_kernel, num_in=num_in,
                          has_residual=has_res, apply_relu=relu),
        out_shape=jax.ShapeDtypeStruct((M, CPo), jnp.bfloat16),
        grid=(M // tm,),
        in_specs=in_specs,
        out_specs=pl.BlockSpec((tm, CPo), lambda i: (i, 0)),
        compiler_params=pltpu.CompilerParams(dimension_semantics=("parallel",)),
    )(*args)
    return out.reshape(N, H, W, CPo)


def maxpool(x, s):
    """MaxPool2d(kernel=s, stride=s) on NHWC, via a reshape-only phase view."""
    N, H, W, CP = x.shape
    OH, OW = H // s, W // s
    xv = x.reshape(N * OH, s, OW, s * CP)       # pure reshape, no transpose
    out = pl.pallas_call(
        functools.partial(_maxpool_kernel, s=s, CP=CP),
        out_shape=jax.ShapeDtypeStruct((N * OH, OW, CP), x.dtype),
        grid=(N,),
        in_specs=[pl.BlockSpec((OH, s, OW, s * CP), lambda n: (n, 0, 0, 0))],
        out_specs=pl.BlockSpec((OH, OW, CP), lambda n: (n, 0, 0)),
        compiler_params=pltpu.CompilerParams(dimension_semantics=("parallel",)),
    )(xv)
    return out.reshape(N, OH, OW, CP)


# ------------------------- parameter construction ---------------------------

def _init_bn(key, c):
    k1, k2, k3, k4 = jax.random.split(key, 4)
    gamma = 1.0 + 0.1 * jax.random.normal(k1, (c,), jnp.float32)
    beta = 0.1 * jax.random.normal(k2, (c,), jnp.float32)
    rmean = 0.1 * jax.random.normal(k3, (c,), jnp.float32)
    rvar = 1.0 + 0.1 * jax.random.uniform(k4, (c,), jnp.float32)
    scale = gamma / jnp.sqrt(rvar + 1e-5)   # inference-mode BN folded to affine
    shift = beta - rmean * scale
    return scale, shift


def init_conv3x3_bn(key, cin, cout):
    kw, kb = jax.random.split(key)
    std = 1.0 / math.sqrt(9 * cin)
    w = std * jax.random.normal(kw, (3, 3, cin, cout), jnp.float32)
    scale, shift = _init_bn(kb, cout)
    kp, cpo = _cp(3 * cin), _cp(cout)
    # K-packed weights: per row-tap ki a (Kp, CPo) matrix whose K rows are the
    # 3 column taps' cin channels back-to-back (kj-major), matching the prepack.
    w3 = jnp.zeros((3, kp, cpo), jnp.float32).at[:, :3 * cin, :cout].set(
        w.reshape(3, 3 * cin, cout))
    return {"w": w3.astype(jnp.bfloat16),
            "scale": _pad_last(scale, cpo).reshape(1, cpo),
            "shift": _pad_last(shift, cpo).reshape(1, cpo),
            "cin": cin, "cout": cout}


def init_conv1x1_bn(key, cin, cout):
    kw, kb = jax.random.split(key)
    std = 1.0 / math.sqrt(cin)
    w = std * jax.random.normal(kw, (cin, cout), jnp.float32)
    scale, shift = _init_bn(kb, cout)
    cpi, cpo = _cp(cin), _cp(cout)
    w1 = jnp.zeros((cpi, cpo), jnp.float32).at[:cin, :cout].set(w)
    return {"ws": [w1.astype(jnp.bfloat16)],
            "scale": _pad_last(scale, cpo).reshape(1, cpo),
            "shift": _pad_last(shift, cpo).reshape(1, cpo),
            "cout": cout}


def init_root(key, root_dim, cout, residual, feat_channels):
    """Prepack the 1x1 root conv as per-input weight blocks (concat-free)."""
    assert sum(feat_channels) == root_dim
    kw, kb = jax.random.split(key)
    std = 1.0 / math.sqrt(root_dim)
    w = std * jax.random.normal(kw, (root_dim, cout), jnp.float32)
    scale, shift = _init_bn(kb, cout)
    cpo = _cp(cout)
    ws, off = [], 0
    for c in feat_channels:
        blk = jnp.zeros((_cp(c), cpo), jnp.float32).at[:c, :cout].set(
            w[off:off + c])
        ws.append(blk.astype(jnp.bfloat16))
        off += c
    return {"ws": ws,
            "scale": _pad_last(scale, cpo).reshape(1, cpo),
            "shift": _pad_last(shift, cpo).reshape(1, cpo),
            "cout": cout, "residual": residual}


def init_basic_block(key, cin, cout, stride):
    k1, k2 = jax.random.split(key)
    return {"conv1": init_conv3x3_bn(k1, cin, cout),
            "conv2": init_conv3x3_bn(k2, cout, cout),
            "stride": stride}


def init_tree(key, levels, in_c, out_c, stride=1, level_root=False,
              root_dim=0, root_residual=False, incoming_children=()):
    if root_dim == 0:
        root_dim = 2 * out_c
    if level_root:
        root_dim += in_c
    k1, k2, k3, k4 = jax.random.split(key, 4)
    p = {"levels": levels, "level_root": level_root, "stride": stride,
         "in_c": in_c, "out_c": out_c}
    # Channel counts of the children list this node will hold at forward time.
    children_ch = list(incoming_children) + ([in_c] if level_root else [])
    if levels == 1:
        p["tree1"] = ("block", init_basic_block(k1, in_c, out_c, stride))
        p["tree2"] = ("block", init_basic_block(k2, out_c, out_c, 1))
        p["root"] = init_root(k3, root_dim, out_c, root_residual,
                              feat_channels=[out_c, out_c] + children_ch)
    else:
        p["tree1"] = ("tree", init_tree(k1, levels - 1, in_c, out_c, stride,
                                        root_dim=0, root_residual=root_residual))
        p["tree2"] = ("tree", init_tree(k2, levels - 1, out_c, out_c, 1,
                                        root_dim=root_dim + out_c,
                                        root_residual=root_residual,
                                        incoming_children=children_ch + [out_c]))
        p["root"] = None
    p["project"] = init_conv1x1_bn(k4, in_c, out_c) if in_c != out_c else None
    return p


# ------------------------------ forward pass --------------------------------
# A feature is (array (N,H,W,CP) bf16 with zero-filled pad lanes, logical C).

def basic_block_forward(p, x, residual=None):
    if residual is None:
        residual = x
    arr, _ = x
    c1, c2 = p["conv1"], p["conv2"]
    y = conv3x3_bn(arr, c1["cin"], c1, stride=p["stride"], relu=True)
    y = conv3x3_bn(y, c2["cin"], c2, stride=1, residual=residual[0], relu=True)
    return (y, c2["cout"])


def root_forward(p, feats):
    # conv1x1(cat(feats)) == sum_i feats[i] @ W_i -> concat never materialized.
    res = feats[0][0] if p["residual"] else None   # Root adds children[0] (= x2)
    y = pointwise_bn([a for a, _ in feats], p["ws"], p["scale"], p["shift"],
                     residual=res, relu=True)
    return (y, p["cout"])


def _child_forward(child, x, residual=None, children=None):
    kind, sub = child
    if kind == "block":
        return basic_block_forward(sub, x, residual)
    return tree_forward(sub, x, residual, children)


def tree_forward(p, x, residual=None, children=None):
    children = [] if children is None else children
    bottom = (maxpool(x[0], p["stride"]), x[1]) if p["stride"] > 1 else x
    # Mirrors the reference: incoming `residual` is always overridden here.
    if p["project"] is not None:
        pr = p["project"]
        residual = (pointwise_bn([bottom[0]], pr["ws"], pr["scale"], pr["shift"],
                                 relu=False), pr["cout"])
    else:
        residual = bottom
    if p["level_root"]:
        children.append(bottom)
    x1 = _child_forward(p["tree1"], x, residual)
    if p["levels"] == 1:
        x2 = _child_forward(p["tree2"], x1, None)
        out = root_forward(p["root"], [x2, x1] + children)
    else:
        children.append(x1)
        out = _child_forward(p["tree2"], x1, None, children)
    return out


def tree_apply(params, x_nhwc):
    cin = x_nhwc.shape[-1]
    xp = _pad_last(x_nhwc, _cp(cin)).astype(jnp.bfloat16)
    arr, c = tree_forward(params, (xp, cin))
    return arr[..., :c].astype(jnp.float32)


# ----------------------------------- main ------------------------------------

if __name__ == "__main__":
    key = jax.random.PRNGKey(0)
    kp, kx = jax.random.split(key)

    # Tree(levels=2, BasicBlock, 32 -> 64, stride=2, level_root=True,
    #      root_residual=True), like a DLA stage.
    in_channels, out_channels = 32, 64
    levels, stride, level_root = 2, 2, True
    params = init_tree(kp, levels, in_channels, out_channels,
                       stride=stride, level_root=level_root,
                       root_residual=True)

    # Input in NHWC (NCHW equivalent: (2, 32, 32, 32)).
    N, H, W = 2, 32, 32
    x = jax.random.normal(kx, (N, H, W, in_channels), jnp.float32)

    fwd = jax.jit(lambda inp: tree_apply(params, inp))
    out = jax.block_until_ready(fwd(x))

    assert out.shape == (N, H // stride, W // stride, out_channels), out.shape
    assert bool(jnp.all(out >= 0.0))        # Tree output ends with the Root's ReLU
    assert bool(jnp.all(jnp.isfinite(out)))
    print("KERNEL_OK")
</pallas_src>

<mosaic_0001>
module attributes {stable_mosaic.version = 11 : i64} {
  func.func @_maxpool_kernel(%arg0: i32, %arg1: memref<16x2x16x256xbf16, #tpu.memory_space<vmem>>, %arg2: memref<16x16x128xbf16, #tpu.memory_space<vmem>>) attributes {dimension_semantics = [#tpu.dimension_semantics<parallel>], iteration_bounds = array<i64: 2>, scalar_prefetch = 0 : i64, scratch_operands = 0 : i64, tpu.core_type = #tpu.core_type<tc>, window_params = [{transform_indices = @transform_0, window_bounds = array<i64: 16, 2, 16, 256>}, {transform_indices = @transform_1, window_bounds = array<i64: 16, 16, 128>}]} {
    %c0 = arith.constant 0 : index
    %c0_0 = arith.constant 0 : index
    %c0_1 = arith.constant 0 : index
    %c0_2 = arith.constant 0 : index
    %0 = vector.load %arg1[%c0, %c0_0, %c0_1, %c0_2] : memref<16x2x16x256xbf16, #tpu.memory_space<vmem>>, vector<16x1x16x128xbf16>
    %1 = vector.shape_cast %0 : vector<16x1x16x128xbf16> to vector<16x16x128xbf16>
    %c0_3 = arith.constant 0 : index
    %c0_4 = arith.constant 0 : index
    %c0_5 = arith.constant 0 : index
    %c128 = arith.constant 128 : index
    %2 = vector.load %arg1[%c0_3, %c0_4, %c0_5, %c128] : memref<16x2x16x256xbf16, #tpu.memory_space<vmem>>, vector<16x1x16x128xbf16>
    %3 = vector.shape_cast %2 : vector<16x1x16x128xbf16> to vector<16x16x128xbf16>
    %4 = arith.maximumf %1, %3 : vector<16x16x128xbf16>
    %c0_6 = arith.constant 0 : index
    %c1 = arith.constant 1 : index
    %c0_7 = arith.constant 0 : index
    %c0_8 = arith.constant 0 : index
    %5 = vector.load %arg1[%c0_6, %c1, %c0_7, %c0_8] : memref<16x2x16x256xbf16, #tpu.memory_space<vmem>>, vector<16x1x16x128xbf16>
    %6 = vector.shape_cast %5 : vector<16x1x16x128xbf16> to vector<16x16x128xbf16>
    %7 = arith.maximumf %4, %6 : vector<16x16x128xbf16>
    %c0_9 = arith.constant 0 : index
    %c1_10 = arith.constant 1 : index
    %c0_11 = arith.constant 0 : index
    %c128_12 = arith.constant 128 : index
    %8 = vector.load %arg1[%c0_9, %c1_10, %c0_11, %c128_12] : memref<16x2x16x256xbf16, #tpu.memory_space<vmem>>, vector<16x1x16x128xbf16>
    %9 = vector.shape_cast %8 : vector<16x1x16x128xbf16> to vector<16x16x128xbf16>
    %10 = arith.maximumf %7, %9 : vector<16x16x128xbf16>
    %c0_13 = arith.constant 0 : index
    %c0_14 = arith.constant 0 : index
    %c0_15 = arith.constant 0 : index
    %11 = vector.load %arg2[%c0_13, %c0_14, %c0_15] : memref<16x16x128xbf16, #tpu.memory_space<vmem>>, vector<16x16x128xbf16>
    tpu.vector_store %arg2[%c0_13, %c0_14, %c0_15], %10 {strides = array<i32>} : memref<16x16x128xbf16, #tpu.memory_space<vmem>>, vector<16x16x128xbf16>,
    return
  }
  func.func @transform_0(%arg0: i32) -> (i32, i32, i32, i32) {
    %c0_i32 = arith.constant 0 : i32
    %c0_i32_0 = arith.constant 0 : i32
    %c0_i32_1 = arith.constant 0 : i32
    %c0_i32_2 = arith.constant 0 : i32
    return %arg0, %c0_i32, %c0_i32_0, %c0_i32_1 : i32, i32, i32, i32
  }
  func.func @transform_1(%arg0: i32) -> (i32, i32, i32) {
    %c0_i32 = arith.constant 0 : i32
    %c0_i32_0 = arith.constant 0 : i32
    %c0_i32_1 = arith.constant 0 : i32
    return %arg0, %c0_i32, %c0_i32_0 : i32, i32, i32
  }
}

module attributes {stable_mosaic.version = 11 : i64} {
  func.func @_pointwise_kernel(%arg0: i32, %arg1: memref<512x128xbf16, #tpu.memory_space<vmem>>, %arg2: memref<128x128xbf16, #tpu.memory_space<vmem>>, %arg3: memref<1x128xf32, #tpu.memory_space<vmem>>, %arg4: memref<1x128xf32, #tpu.memory_space<vmem>>, %arg5: memref<512x128xbf16, #tpu.memory_space<vmem>>) attributes {dimension_semantics = [#tpu.dimension_semantics<parallel>], iteration_bounds = array<i64: 1>, scalar_prefetch = 0 : i64, scratch_operands = 0 : i64, tpu.core_type = #tpu.core_type<tc>, window_params = [{transform_indices = @transform_0, window_bounds = array<i64: 512, 128>}, {pipeline_mode = #tpu.pipeline_mode<synchronous>, transform_indices = @transform_1, window_bounds = array<i64: 128, 128>}, {pipeline_mode = #tpu.pipeline_mode<synchronous>, transform_indices = @transform_2, window_bounds = array<i64: 1, 128>}, {pipeline_mode = #tpu.pipeline_mode<synchronous>, transform_indices = @transform_3, window_bounds = array<i64: 1, 128>}, {transform_indices = @transform_4, window_bounds = array<i64: 512, 128>}]} {
    %c0 = arith.constant 0 : index
    %c0_0 = arith.constant 0 : index
    %0 = vector.load %arg1[%c0, %c0_0] : memref<512x128xbf16, #tpu.memory_space<vmem>>, vector<512x128xbf16>
    %c0_1 = arith.constant 0 : index
    %c0_2 = arith.constant 0 : index
    %1 = vector.load %arg2[%c0_1, %c0_2] : memref<128x128xbf16, #tpu.memory_space<vmem>>, vector<128x128xbf16>
    %cst = arith.constant dense<0.000000e+00> : vector<512x128xf32>
    %2 = tpu.matmul %0, %1, %cst {dimension_numbers = #tpu.dot_dimension_numbers<[1], [0], [0], [1], [0, 0, 1, 1], [], []>} : vector<512x128xbf16>, vector<128x128xbf16>, vector<512x128xf32> -> vector<512x128xf32>
    %c0_3 = arith.constant 0 : index
    %c0_4 = arith.constant 0 : index
    %3 = vector.load %arg3[%c0_3, %c0_4] : memref<1x128xf32, #tpu.memory_space<vmem>>, vector<1x128xf32>
    %4 = vector.broadcast %3 : vector<1x128xf32> to vector<512x128xf32>
    %5 = arith.mulf %2, %4 : vector<512x128xf32>
    %c0_5 = arith.constant 0 : index
    %c0_6 = arith.constant 0 : index
    %6 = vector.load %arg4[%c0_5, %c0_6] : memref<1x128xf32, #tpu.memory_space<vmem>>, vector<1x128xf32>
    %7 = vector.broadcast %6 : vector<1x128xf32> to vector<512x128xf32>
    %8 = arith.addf %5, %7 : vector<512x128xf32>
    %9 = arith.truncf %8 : vector<512x128xf32> to vector<512x128xbf16>
    %c0_7 = arith.constant 0 : index
    %c0_8 = arith.constant 0 : index
    %10 = vector.load %arg5[%c0_7, %c0_8] : memref<512x128xbf16, #tpu.memory_space<vmem>>, vector<512x128xbf16>
    tpu.vector_store %arg5[%c0_7, %c0_8], %9 {strides = array<i32>} : memref<512x128xbf16, #tpu.memory_space<vmem>>, vector<512x128xbf16>,
    return
  }
  func.func @transform_0(%arg0: i32) -> (i32, i32) {
    %c0_i32 = arith.constant 0 : i32
    %c0_i32_0 = arith.constant 0 : i32
    return %arg0, %c0_i32 : i32, i32
  }
  func.func @transform_1(%arg0: i32) -> (i32, i32) {
    %c0_i32 = arith.constant 0 : i32
    %c0_i32_0 = arith.constant 0 : i32
    %c0_i32_1 = arith.constant 0 : i32
    return %c0_i32, %c0_i32_0 : i32, i32
  }
  func.func @transform_2(%arg0: i32) -> (i32, i32) {
    %c0_i32 = arith.constant 0 : i32
    %c0_i32_0 = arith.constant 0 : i32
    %c0_i32_1 = arith.constant 0 : i32
    return %c0_i32, %c0_i32_0 : i32, i32
  }
  func.func @transform_3(%arg0: i32) -> (i32, i32) {
    %c0_i32 = arith.constant 0 : i32
    %c0_i32_0 = arith.constant 0 : i32
    %c0_i32_1 = arith.constant 0 : i32
    return %c0_i32, %c0_i32_0 : i32, i32
  }
  func.func @transform_4(%arg0: i32) -> (i32, i32) {
    %c0_i32 = arith.constant 0 : i32
    %c0_i32_0 = arith.constant 0 : i32
    return %arg0, %c0_i32 : i32, i32
  }
}

module attributes {stable_mosaic.version = 11 : i64} {
  func.func @_conv3x3_kernel(%arg0: i32, %arg1: i32, %arg2: memref<1x33x16x128xbf16, #tpu.memory_space<vmem>>, %arg3: memref<3x128x128xbf16, #tpu.memory_space<vmem>>, %arg4: memref<1x128xf32, #tpu.memory_space<vmem>>, %arg5: memref<1x128xf32, #tpu.memory_space<vmem>>, %arg6: memref<1x16x16x128xbf16, #tpu.memory_space<vmem>>) attributes {dimension_semantics = [#tpu.dimension_semantics<parallel>, #tpu.dimension_semantics<arbitrary>], iteration_bounds = array<i64: 2, 1>, scalar_prefetch = 0 : i64, scratch_operands = 0 : i64, tpu.core_type = #tpu.core_type<tc>, window_params = [{transform_indices = @transform_0, window_bounds = array<i64: 1, 33, 16, 128>}, {pipeline_mode = #tpu.pipeline_mode<synchronous>, transform_indices = @transform_1, window_bounds = array<i64: 3, 128, 128>}, {pipeline_mode = #tpu.pipeline_mode<synchronous>, transform_indices = @transform_2, window_bounds = array<i64: 1, 128>}, {pipeline_mode = #tpu.pipeline_mode<synchronous>, transform_indices = @transform_3, window_bounds = array<i64: 1, 128>}, {transform_indices = @transform_4, window_bounds = array<i64: 1, 16, 16, 128>}]} {
    %c16_i32 = arith.constant 16 : i32
    %0 = arith.muli %arg1, %c16_i32 : i32
    %c0_i32 = arith.constant 0 : i32
    %1 = arith.addi %0, %c0_i32 : i32
    %c0 = arith.constant 0 : index
    %2 = arith.index_cast %1 : i32 to index
    %c0_0 = arith.constant 0 : index
    %c0_1 = arith.constant 0 : index
    %3 = vector.load %arg2[%c0, %2, %c0_0, %c0_1] : memref<1x33x16x128xbf16, #tpu.memory_space<vmem>>, vector<1x16x16x128xbf16>
    %4 = vector.shape_cast %3 : vector<1x16x16x128xbf16> to vector<16x16x128xbf16>
    %5 = vector.shape_cast %4 : vector<16x16x128xbf16> to vector<256x128xbf16>
    %c0_2 = arith.constant 0 : index
    %c0_3 = arith.constant 0 : index
    %c0_4 = arith.constant 0 : index
    %6 = vector.load %arg3[%c0_2, %c0_3, %c0_4] : memref<3x128x128xbf16, #tpu.memory_space<vmem>>, vector<1x128x128xbf16>
    %7 = vector.shape_cast %6 : vector<1x128x128xbf16> to vector<128x128xbf16>
    %cst = arith.constant dense<0.000000e+00> : vector<256x128xf32>
    %8 = tpu.matmul %5, %7, %cst {dimension_numbers = #tpu.dot_dimension_numbers<[1], [0], [0], [1], [0, 0, 1, 1], [], []>} : vector<256x128xbf16>, vector<128x128xbf16>, vector<256x128xf32> -> vector<256x128xf32>
    %c17_i32 = arith.constant 17 : i32
    %9 = arith.addi %0, %c17_i32 : i32
    %c0_5 = arith.constant 0 : index
    %10 = arith.index_cast %9 : i32 to index
    %c0_6 = arith.constant 0 : index
    %c0_7 = arith.constant 0 : index
    %11 = vector.load %arg2[%c0_5, %10, %c0_6, %c0_7] : memref<1x33x16x128xbf16, #tpu.memory_space<vmem>>, vector<1x16x16x128xbf16>
    %12 = vector.shape_cast %11 : vector<1x16x16x128xbf16> to vector<16x16x128xbf16>
    %13 = vector.shape_cast %12 : vector<16x16x128xbf16> to vector<256x128xbf16>
    %c1 = arith.constant 1 : index
    %c0_8 = arith.constant 0 : index
    %c0_9 = arith.constant 0 : index
    %14 = vector.load %arg3[%c1, %c0_8, %c0_9] : memref<3x128x128xbf16, #tpu.memory_space<vmem>>, vector<1x128x128xbf16>
    %15 = vector.shape_cast %14 : vector<1x128x128xbf16> to vector<128x128xbf16>
    %cst_10 = arith.constant dense<0.000000e+00> : vector<256x128xf32>
    %16 = tpu.matmul %13, %15, %cst_10 {dimension_numbers = #tpu.dot_dimension_numbers<[1], [0], [0], [1], [0, 0, 1, 1], [], []>} : vector<256x128xbf16>, vector<128x128xbf16>, vector<256x128xf32> -> vector<256x128xf32>
    %17 = arith.addf %8, %16 : vector<256x128xf32>
    %c1_i32 = arith.constant 1 : i32
    %18 = arith.addi %0, %c1_i32 : i32
    %c0_11 = arith.constant 0 : index
    %19 = arith.index_cast %18 : i32 to index
    %c0_12 = arith.constant 0 : index
    %c0_13 = arith.constant 0 : index
    %20 = vector.load %arg2[%c0_11, %19, %c0_12, %c0_13] : memref<1x33x16x128xbf16, #tpu.memory_space<vmem>>, vector<1x16x16x128xbf16>
    %21 = vector.shape_cast %20 : vector<1x16x16x128xbf16> to vector<16x16x128xbf16>
    %22 = vector.shape_cast %21 : vector<16x16x128xbf16> to vector<256x128xbf16>
    %c2 = arith.constant 2 : index
    %c0_14 = arith.constant 0 : index
    %c0_15 = arith.constant 0 : index
    %23 = vector.load %arg3[%c2, %c0_14, %c0_15] : memref<3x128x128xbf16, #tpu.memory_space<vmem>>, vector<1x128x128xbf16>
    %24 = vector.shape_cast %23 : vector<1x128x128xbf16> to vector<128x128xbf16>
    %cst_16 = arith.constant dense<0.000000e+00> : vector<256x128xf32>
    %25 = tpu.matmul %22, %24, %cst_16 {dimension_numbers = #tpu.dot_dimension_numbers<[1], [0], [0], [1], [0, 0, 1, 1], [], []>} : vector<256x128xbf16>, vector<128x128xbf16>, vector<256x128xf32> -> vector<256x128xf32>
    %26 = arith.addf %17, %25 : vector<256x128xf32>
    %c0_17 = arith.constant 0 : index
    %c0_18 = arith.constant 0 : index
    %27 = vector.load %arg4[%c0_17, %c0_18] : memref<1x128xf32, #tpu.memory_space<vmem>>, vector<1x128xf32>
    %28 = vector.broadcast %27 : vector<1x128xf32> to vector<256x128xf32>
    %29 = arith.mulf %26, %28 : vector<256x128xf32>
    %c0_19 = arith.constant 0 : index
    %c0_20 = arith.constant 0 : index
    %30 = vector.load %arg5[%c0_19, %c0_20] : memref<1x128xf32, #tpu.memory_space<vmem>>, vector<1x128xf32>
    %31 = vector.broadcast %30 : vector<1x128xf32> to vector<256x128xf32>
    %32 = arith.addf %29, %31 : vector<256x128xf32>
    %cst_21 = arith.constant 0.000000e+00 : f32
    %33 = vector.broadcast %cst_21 : f32 to vector<256x128xf32>
    %34 = arith.maximumf %32, %33 : vector<256x128xf32>
    %35 = vector.shape_cast %34 : vector<256x128xf32> to vector<1x16x16x128xf32>
    %36 = arith.truncf %35 : vector<1x16x16x128xf32> to vector<1x16x16x128xbf16>
    %c0_22 = arith.constant 0 : index
    %c0_23 = arith.constant 0 : index
    %c0_24 = arith.constant 0 : index
    %c0_25 = arith.constant 0 : index
    %37 = vector.load %arg6[%c0_22, %c0_23, %c0_24, %c0_25] : memref<1x16x16x128xbf16, #tpu.memory_space<vmem>>, vector<1x16x16x128xbf16>
    tpu.vector_store %arg6[%c0_22, %c0_23, %c0_24, %c0_25], %36 {strides = array<i32>} : memref<1x16x16x128xbf16, #tpu.memory_space<vmem>>, vector<1x16x16x128xbf16>,
    return
  }
  func.func @transform_0(%arg0: i32, %arg1: i32) -> (i32, i32, i32, i32) {
    %c0_i32 = arith.constant 0 : i32
    %c0_i32_0 = arith.constant 0 : i32
    %c0_i32_1 = arith.constant 0 : i32
    %c0_i32_2 = arith.constant 0 : i32
    return %arg0, %c0_i32, %c0_i32_0, %c0_i32_1 : i32, i32, i32, i32
  }
  func.func @transform_1(%arg0: i32, %arg1: i32) -> (i32, i32, i32) {
    %c0_i32 = arith.constant 0 : i32
    %c0_i32_0 = arith.constant 0 : i32
    %c0_i32_1 = arith.constant 0 : i32
    %c0_i32_2 = arith.constant 0 : i32
    return %c0_i32, %c0_i32_0, %c0_i32_1 : i32, i32, i32
  }
  func.func @transform_2(%arg0: i32, %arg1: i32) -> (i32, i32) {
    %c0_i32 = arith.constant 0 : i32
    %c0_i32_0 = arith.constant 0 : i32
    %c0_i32_1 = arith.constant 0 : i32
    return %c0_i32, %c0_i32_0 : i32, i32
  }
  func.func @transform_3(%arg0: i32, %arg1: i32) -> (i32, i32) {
    %c0_i32 = arith.constant 0 : i32
    %c0_i32_0 = arith.constant 0 : i32
    %c0_i32_1 = arith.constant 0 : i32
    return %c0_i32, %c0_i32_0 : i32, i32
  }
  func.func @transform_4(%arg0: i32, %arg1: i32) -> (i32, i32, i32, i32) {
    %c0_i32 = arith.constant 0 : i32
    %c0_i32_0 = arith.constant 0 : i32
    %c0_i32_1 = arith.constant 0 : i32
    return %arg0, %arg1, %c0_i32, %c0_i32_0 : i32, i32, i32, i32
  }
}

module attributes {stable_mosaic.version = 11 : i64} {
  func.func @_conv3x3_kernel(%arg0: i32, %arg1: i32, %arg2: memref<1x18x16x256xbf16, #tpu.memory_space<vmem>>, %arg3: memref<3x256x128xbf16, #tpu.memory_space<vmem>>, %arg4: memref<1x128xf32, #tpu.memory_space<vmem>>, %arg5: memref<1x128xf32, #tpu.memory_space<vmem>>, %arg6: memref<1x16x16x128xbf16, #tpu.memory_space<vmem>>, %arg7: memref<1x16x16x128xbf16, #tpu.memory_space<vmem>>) attributes {dimension_semantics = [#tpu.dimension_semantics<parallel>, #tpu.dimension_semantics<arbitrary>], iteration_bounds = array<i64: 2, 1>, scalar_prefetch = 0 : i64, scratch_operands = 0 : i64, tpu.core_type = #tpu.core_type<tc>, window_params = [{transform_indices = @transform_0, window_bounds = array<i64: 1, 18, 16, 256>}, {pipeline_mode = #tpu.pipeline_mode<synchronous>, transform_indices = @transform_1, window_bounds = array<i64: 3, 256, 128>}, {pipeline_mode = #tpu.pipeline_mode<synchronous>, transform_indices = @transform_2, window_bounds = array<i64: 1, 128>}, {pipeline_mode = #tpu.pipeline_mode<synchronous>, transform_indices = @transform_3, window_bounds = array<i64: 1, 128>}, {transform_indices = @transform_4, window_bounds = array<i64: 1, 16, 16, 128>}, {transform_indices = @transform_5, window_bounds = array<i64: 1, 16, 16, 128>}]} {
    %c16_i32 = arith.constant 16 : i32
    %0 = arith.muli %arg1, %c16_i32 : i32
    %c0_i32 = arith.constant 0 : i32
    %1 = arith.addi %0, %c0_i32 : i32
    %c0 = arith.constant 0 : index
    %2 = arith.index_cast %1 : i32 to index
    %c0_0 = arith.constant 0 : index
    %c0_1 = arith.constant 0 : index
    %3 = vector.load %arg2[%c0, %2, %c0_0, %c0_1] : memref<1x18x16x256xbf16, #tpu.memory_space<vmem>>, vector<1x16x16x256xbf16>
    %4 = vector.shape_cast %3 : vector<1x16x16x256xbf16> to vector<16x16x256xbf16>
    %5 = vector.shape_cast %4 : vector<16x16x256xbf16> to vector<256x256xbf16>
    %c0_2 = arith.constant 0 : index
    %c0_3 = arith.constant 0 : index
    %c0_4 = arith.constant 0 : index
    %6 = vector.load %arg3[%c0_2, %c0_3, %c0_4] : memref<3x256x128xbf16, #tpu.memory_space<vmem>>, vector<1x256x128xbf16>
    %7 = vector.shape_cast %6 : vector<1x256x128xbf16> to vector<256x128xbf16>
    %cst = arith.constant dense<0.000000e+00> : vector<256x128xf32>
    %8 = tpu.matmul %5, %7, %cst {dimension_numbers = #tpu.dot_dimension_numbers<[1], [0], [0], [1], [0, 0, 1, 1], [], []>} : vector<256x256xbf16>, vector<256x128xbf16>, vector<256x128xf32> -> vector<256x128xf32>
    %c1_i32 = arith.constant 1 : i32
    %9 = arith.addi %0, %c1_i32 : i32
    %c0_5 = arith.constant 0 : index
    %10 = arith.index_cast %9 : i32 to index
    %c0_6 = arith.constant 0 : index
    %c0_7 = arith.constant 0 : index
    %11 = vector.load %arg2[%c0_5, %10, %c0_6, %c0_7] : memref<1x18x16x256xbf16, #tpu.memory_space<vmem>>, vector<1x16x16x256xbf16>
    %12 = vector.shape_cast %11 : vector<1x16x16x256xbf16> to vector<16x16x256xbf16>
    %13 = vector.shape_cast %12 : vector<16x16x256xbf16> to vector<256x256xbf16>
    %c1 = arith.constant 1 : index
    %c0_8 = arith.constant 0 : index
    %c0_9 = arith.constant 0 : index
    %14 = vector.load %arg3[%c1, %c0_8, %c0_9] : memref<3x256x128xbf16, #tpu.memory_space<vmem>>, vector<1x256x128xbf16>
    %15 = vector.shape_cast %14 : vector<1x256x128xbf16> to vector<256x128xbf16>
    %cst_10 = arith.constant dense<0.000000e+00> : vector<256x128xf32>
    %16 = tpu.matmul %13, %15, %cst_10 {dimension_numbers = #tpu.dot_dimension_numbers<[1], [0], [0], [1], [0, 0, 1, 1], [], []>} : vector<256x256xbf16>, vector<256x128xbf16>, vector<256x128xf32> -> vector<256x128xf32>
    %17 = arith.addf %8, %16 : vector<256x128xf32>
    %c2_i32 = arith.constant 2 : i32
    %18 = arith.addi %0, %c2_i32 : i32
    %c0_11 = arith.constant 0 : index
    %19 = arith.index_cast %18 : i32 to index
    %c0_12 = arith.constant 0 : index
    %c0_13 = arith.constant 0 : index
    %20 = vector.load %arg2[%c0_11, %19, %c0_12, %c0_13] : memref<1x18x16x256xbf16, #tpu.memory_space<vmem>>, vector<1x16x16x256xbf16>
    %21 = vector.shape_cast %20 : vector<1x16x16x256xbf16> to vector<16x16x256xbf16>
    %22 = vector.shape_cast %21 : vector<16x16x256xbf16> to vector<256x256xbf16>
    %c2 = arith.constant 2 : index
    %c0_14 = arith.constant 0 : index
    %c0_15 = arith.constant 0 : index
    %23 = vector.load %arg3[%c2, %c0_14, %c0_15] : memref<3x256x128xbf16, #tpu.memory_space<vmem>>, vector<1x256x128xbf16>
    %24 = vector.shape_cast %23 : vector<1x256x128xbf16> to vector<256x128xbf16>
    %cst_16 = arith.constant dense<0.000000e+00> : vector<256x128xf32>
    %25 = tpu.matmul %22, %24, %cst_16 {dimension_numbers = #tpu.dot_dimension_numbers<[1], [0], [0], [1], [0, 0, 1, 1], [], []>} : vector<256x256xbf16>, vector<256x128xbf16>, vector<256x128xf32> -> vector<256x128xf32>
    %26 = arith.addf %17, %25 : vector<256x128xf32>
    %c0_17 = arith.constant 0 : index
    %c0_18 = arith.constant 0 : index
    %27 = vector.load %arg4[%c0_17, %c0_18] : memref<1x128xf32, #tpu.memory_space<vmem>>, vector<1x128xf32>
    %28 = vector.broadcast %27 : vector<1x128xf32> to vector<256x128xf32>
    %29 = arith.mulf %26, %28 : vector<256x128xf32>
    %c0_19 = arith.constant 0 : index
    %c0_20 = arith.constant 0 : index
    %30 = vector.load %arg5[%c0_19, %c0_20] : memref<1x128xf32, #tpu.memory_space<vmem>>, vector<1x128xf32>
    %31 = vector.broadcast %30 : vector<1x128xf32> to vector<256x128xf32>
    %32 = arith.addf %29, %31 : vector<256x128xf32>
    %c0_21 = arith.constant 0 : index
    %c0_22 = arith.constant 0 : index
    %c0_23 = arith.constant 0 : index
    %c0_24 = arith.constant 0 : index
    %33 = vector.load %arg6[%c0_21, %c0_22, %c0_23, %c0_24] : memref<1x16x16x128xbf16, #tpu.memory_space<vmem>>, vector<1x16x16x128xbf16>
    %34 = vector.shape_cast %33 : vector<1x16x16x128xbf16> to vector<256x128xbf16>
    %35 = arith.extf %34 : vector<256x128xbf16> to vector<256x128xf32>
    %36 = arith.addf %32, %35 : vector<256x128xf32>
    %cst_25 = arith.constant 0.000000e+00 : f32
    %37 = vector.broadcast %cst_25 : f32 to vector<256x128xf32>
    %38 = arith.maximumf %36, %37 : vector<256x128xf32>
    %39 = vector.shape_cast %38 : vector<256x128xf32> to vector<1x16x16x128xf32>
    %40 = arith.truncf %39 : vector<1x16x16x128xf32> to vector<1x16x16x128xbf16>
    %c0_26 = arith.constant 0 : index
    %c0_27 = arith.constant 0 : index
    %c0_28 = arith.constant 0 : index
    %c0_29 = arith.constant 0 : index
    %41 = vector.load %arg7[%c0_26, %c0_27, %c0_28, %c0_29] : memref<1x16x16x128xbf16, #tpu.memory_space<vmem>>, vector<1x16x16x128xbf16>
    tpu.vector_store %arg7[%c0_26, %c0_27, %c0_28, %c0_29], %40 {strides = array<i32>} : memref<1x16x16x128xbf16, #tpu.memory_space<vmem>>, vector<1x16x16x128xbf16>,
    return
  }
  func.func @transform_0(%arg0: i32, %arg1: i32) -> (i32, i32, i32, i32) {
    %c0_i32 = arith.constant 0 : i32
    %c0_i32_0 = arith.constant 0 : i32
    %c0_i32_1 = arith.constant 0 : i32
    %c0_i32_2 = arith.constant 0 : i32
    return %arg0, %c0_i32, %c0_i32_0, %c0_i32_1 : i32, i32, i32, i32
  }
  func.func @transform_1(%arg0: i32, %arg1: i32) -> (i32, i32, i32) {
    %c0_i32 = arith.constant 0 : i32
    %c0_i32_0 = arith.constant 0 : i32
    %c0_i32_1 = arith.constant 0 : i32
    %c0_i32_2 = arith.constant 0 : i32
    return %c0_i32, %c0_i32_0, %c0_i32_1 : i32, i32, i32
  }
  func.func @transform_2(%arg0: i32, %arg1: i32) -> (i32, i32) {
    %c0_i32 = arith.constant 0 : i32
    %c0_i32_0 = arith.constant 0 : i32
    %c0_i32_1 = arith.constant 0 : i32
    return %c0_i32, %c0_i32_0 : i32, i32
  }
  func.func @transform_3(%arg0: i32, %arg1: i32) -> (i32, i32) {
    %c0_i32 = arith.constant 0 : i32
    %c0_i32_0 = arith.constant 0 : i32
    %c0_i32_1 = arith.constant 0 : i32
    return %c0_i32, %c0_i32_0 : i32, i32
  }
  func.func @transform_4(%arg0: i32, %arg1: i32) -> (i32, i32, i32, i32) {
    %c0_i32 = arith.constant 0 : i32
    %c0_i32_0 = arith.constant 0 : i32
    %c0_i32_1 = arith.constant 0 : i32
    return %arg0, %arg1, %c0_i32, %c0_i32_0 : i32, i32, i32, i32
  }
  func.func @transform_5(%arg0: i32, %arg1: i32) -> (i32, i32, i32, i32) {
    %c0_i32 = arith.constant 0 : i32
    %c0_i32_0 = arith.constant 0 : i32
    %c0_i32_1 = arith.constant 0 : i32
    return %arg0, %arg1, %c0_i32, %c0_i32_0 : i32, i32, i32, i32
  }
}

module attributes {stable_mosaic.version = 11 : i64} {
  func.func @_conv3x3_kernel(%arg0: i32, %arg1: i32, %arg2: memref<1x18x16x256xbf16, #tpu.memory_space<vmem>>, %arg3: memref<3x256x128xbf16, #tpu.memory_space<vmem>>, %arg4: memref<1x128xf32, #tpu.memory_space<vmem>>, %arg5: memref<1x128xf32, #tpu.memory_space<vmem>>, %arg6: memref<1x16x16x128xbf16, #tpu.memory_space<vmem>>) attributes {dimension_semantics = [#tpu.dimension_semantics<parallel>, #tpu.dimension_semantics<arbitrary>], iteration_bounds = array<i64: 2, 1>, scalar_prefetch = 0 : i64, scratch_operands = 0 : i64, tpu.core_type = #tpu.core_type<tc>, window_params = [{transform_indices = @transform_0, window_bounds = array<i64: 1, 18, 16, 256>}, {pipeline_mode = #tpu.pipeline_mode<synchronous>, transform_indices = @transform_1, window_bounds = array<i64: 3, 256, 128>}, {pipeline_mode = #tpu.pipeline_mode<synchronous>, transform_indices = @transform_2, window_bounds = array<i64: 1, 128>}, {pipeline_mode = #tpu.pipeline_mode<synchronous>, transform_indices = @transform_3, window_bounds = array<i64: 1, 128>}, {transform_indices = @transform_4, window_bounds = array<i64: 1, 16, 16, 128>}]} {
    %c16_i32 = arith.constant 16 : i32
    %0 = arith.muli %arg1, %c16_i32 : i32
    %c0_i32 = arith.constant 0 : i32
    %1 = arith.addi %0, %c0_i32 : i32
    %c0 = arith.constant 0 : index
    %2 = arith.index_cast %1 : i32 to index
    %c0_0 = arith.constant 0 : index
    %c0_1 = arith.constant 0 : index
    %3 = vector.load %arg2[%c0, %2, %c0_0, %c0_1] : memref<1x18x16x256xbf16, #tpu.memory_space<vmem>>, vector<1x16x16x256xbf16>
    %4 = vector.shape_cast %3 : vector<1x16x16x256xbf16> to vector<16x16x256xbf16>
    %5 = vector.shape_cast %4 : vector<16x16x256xbf16> to vector<256x256xbf16>
    %c0_2 = arith.constant 0 : index
    %c0_3 = arith.constant 0 : index
    %c0_4 = arith.constant 0 : index
    %6 = vector.load %arg3[%c0_2, %c0_3, %c0_4] : memref<3x256x128xbf16, #tpu.memory_space<vmem>>, vector<1x256x128xbf16>
    %7 = vector.shape_cast %6 : vector<1x256x128xbf16> to vector<256x128xbf16>
    %cst = arith.constant dense<0.000000e+00> : vector<256x128xf32>
    %8 = tpu.matmul %5, %7, %cst {dimension_numbers = #tpu.dot_dimension_numbers<[1], [0], [0], [1], [0, 0, 1, 1], [], []>} : vector<256x256xbf16>, vector<256x128xbf16>, vector<256x128xf32> -> vector<256x128xf32>
    %c1_i32 = arith.constant 1 : i32
    %9 = arith.addi %0, %c1_i32 : i32
    %c0_5 = arith.constant 0 : index
    %10 = arith.index_cast %9 : i32 to index
    %c0_6 = arith.constant 0 : index
    %c0_7 = arith.constant 0 : index
    %11 = vector.load %arg2[%c0_5, %10, %c0_6, %c0_7] : memref<1x18x16x256xbf16, #tpu.memory_space<vmem>>, vector<1x16x16x256xbf16>
    %12 = vector.shape_cast %11 : vector<1x16x16x256xbf16> to vector<16x16x256xbf16>
    %13 = vector.shape_cast %12 : vector<16x16x256xbf16> to vector<256x256xbf16>
    %c1 = arith.constant 1 : index
    %c0_8 = arith.constant 0 : index
    %c0_9 = arith.constant 0 : index
    %14 = vector.load %arg3[%c1, %c0_8, %c0_9] : memref<3x256x128xbf16, #tpu.memory_space<vmem>>, vector<1x256x128xbf16>
    %15 = vector.shape_cast %14 : vector<1x256x128xbf16> to vector<256x128xbf16>
    %cst_10 = arith.constant dense<0.000000e+00> : vector<256x128xf32>
    %16 = tpu.matmul %13, %15, %cst_10 {dimension_numbers = #tpu.dot_dimension_numbers<[1], [0], [0], [1], [0, 0, 1, 1], [], []>} : vector<256x256xbf16>, vector<256x128xbf16>, vector<256x128xf32> -> vector<256x128xf32>
    %17 = arith.addf %8, %16 : vector<256x128xf32>
    %c2_i32 = arith.constant 2 : i32
    %18 = arith.addi %0, %c2_i32 : i32
    %c0_11 = arith.constant 0 : index
    %19 = arith.index_cast %18 : i32 to index
    %c0_12 = arith.constant 0 : index
    %c0_13 = arith.constant 0 : index
    %20 = vector.load %arg2[%c0_11, %19, %c0_12, %c0_13] : memref<1x18x16x256xbf16, #tpu.memory_space<vmem>>, vector<1x16x16x256xbf16>
    %21 = vector.shape_cast %20 : vector<1x16x16x256xbf16> to vector<16x16x256xbf16>
    %22 = vector.shape_cast %21 : vector<16x16x256xbf16> to vector<256x256xbf16>
    %c2 = arith.constant 2 : index
    %c0_14 = arith.constant 0 : index
    %c0_15 = arith.constant 0 : index
    %23 = vector.load %arg3[%c2, %c0_14, %c0_15] : memref<3x256x128xbf16, #tpu.memory_space<vmem>>, vector<1x256x128xbf16>
    %24 = vector.shape_cast %23 : vector<1x256x128xbf16> to vector<256x128xbf16>
    %cst_16 = arith.constant dense<0.000000e+00> : vector<256x128xf32>
    %25 = tpu.matmul %22, %24, %cst_16 {dimension_numbers = #tpu.dot_dimension_numbers<[1], [0], [0], [1], [0, 0, 1, 1], [], []>} : vector<256x256xbf16>, vector<256x128xbf16>, vector<256x128xf32> -> vector<256x128xf32>
    %26 = arith.addf %17, %25 : vector<256x128xf32>
    %c0_17 = arith.constant 0 : index
    %c0_18 = arith.constant 0 : index
    %27 = vector.load %arg4[%c0_17, %c0_18] : memref<1x128xf32, #tpu.memory_space<vmem>>, vector<1x128xf32>
    %28 = vector.broadcast %27 : vector<1x128xf32> to vector<256x128xf32>
    %29 = arith.mulf %26, %28 : vector<256x128xf32>
    %c0_19 = arith.constant 0 : index
    %c0_20 = arith.constant 0 : index
    %30 = vector.load %arg5[%c0_19, %c0_20] : memref<1x128xf32, #tpu.memory_space<vmem>>, vector<1x128xf32>
    %31 = vector.broadcast %30 : vector<1x128xf32> to vector<256x128xf32>
    %32 = arith.addf %29, %31 : vector<256x128xf32>
    %cst_21 = arith.constant 0.000000e+00 : f32
    %33 = vector.broadcast %cst_21 : f32 to vector<256x128xf32>
    %34 = arith.maximumf %32, %33 : vector<256x128xf32>
    %35 = vector.shape_cast %34 : vector<256x128xf32> to vector<1x16x16x128xf32>
    %36 = arith.truncf %35 : vector<1x16x16x128xf32> to vector<1x16x16x128xbf16>
    %c0_22 = arith.constant 0 : index
    %c0_23 = arith.constant 0 : index
    %c0_24 = arith.constant 0 : index
    %c0_25 = arith.constant 0 : index
    %37 = vector.load %arg6[%c0_22, %c0_23, %c0_24, %c0_25] : memref<1x16x16x128xbf16, #tpu.memory_space<vmem>>, vector<1x16x16x128xbf16>
    tpu.vector_store %arg6[%c0_22, %c0_23, %c0_24, %c0_25], %36 {strides = array<i32>} : memref<1x16x16x128xbf16, #tpu.memory_space<vmem>>, vector<1x16x16x128xbf16>,
    return
  }
  func.func @transform_0(%arg0: i32, %arg1: i32) -> (i32, i32, i32, i32) {
    %c0_i32 = arith.constant 0 : i32
    %c0_i32_0 = arith.constant 0 : i32
    %c0_i32_1 = arith.constant 0 : i32
    %c0_i32_2 = arith.constant 0 : i32
    return %arg0, %c0_i32, %c0_i32_0, %c0_i32_1 : i32, i32, i32, i32
  }
  func.func @transform_1(%arg0: i32, %arg1: i32) -> (i32, i32, i32) {
    %c0_i32 = arith.constant 0 : i32
    %c0_i32_0 = arith.constant 0 : i32
    %c0_i32_1 = arith.constant 0 : i32
    %c0_i32_2 = arith.constant 0 : i32
    return %c0_i32, %c0_i32_0, %c0_i32_1 : i32, i32, i32
  }
  func.func @transform_2(%arg0: i32, %arg1: i32) -> (i32, i32) {
    %c0_i32 = arith.constant 0 : i32
    %c0_i32_0 = arith.constant 0 : i32
    %c0_i32_1 = arith.constant 0 : i32
    return %c0_i32, %c0_i32_0 : i32, i32
  }
  func.func @transform_3(%arg0: i32, %arg1: i32) -> (i32, i32) {
    %c0_i32 = arith.constant 0 : i32
    %c0_i32_0 = arith.constant 0 : i32
    %c0_i32_1 = arith.constant 0 : i32
    return %c0_i32, %c0_i32_0 : i32, i32
  }
  func.func @transform_4(%arg0: i32, %arg1: i32) -> (i32, i32, i32, i32) {
    %c0_i32 = arith.constant 0 : i32
    %c0_i32_0 = arith.constant 0 : i32
    %c0_i32_1 = arith.constant 0 : i32
    return %arg0, %arg1, %c0_i32, %c0_i32_0 : i32, i32, i32, i32
  }
}

module attributes {stable_mosaic.version = 11 : i64} {
  func.func @_pointwise_kernel(%arg0: i32, %arg1: memref<512x128xbf16, #tpu.memory_space<vmem>>, %arg2: memref<512x128xbf16, #tpu.memory_space<vmem>>, %arg3: memref<128x128xbf16, #tpu.memory_space<vmem>>, %arg4: memref<128x128xbf16, #tpu.memory_space<vmem>>, %arg5: memref<1x128xf32, #tpu.memory_space<vmem>>, %arg6: memref<1x128xf32, #tpu.memory_space<vmem>>, %arg7: memref<512x128xbf16, #tpu.memory_space<vmem>>, %arg8: memref<512x128xbf16, #tpu.memory_space<vmem>>) attributes {dimension_semantics = [#tpu.dimension_semantics<parallel>], iteration_bounds = array<i64: 1>, scalar_prefetch = 0 : i64, scratch_operands = 0 : i64, tpu.core_type = #tpu.core_type<tc>, window_params = [{transform_indices = @transform_0, window_bounds = array<i64: 512, 128>}, {transform_indices = @transform_1, window_bounds = array<i64: 512, 128>}, {pipeline_mode = #tpu.pipeline_mode<synchronous>, transform_indices = @transform_2, window_bounds = array<i64: 128, 128>}, {pipeline_mode = #tpu.pipeline_mode<synchronous>, transform_indices = @transform_3, window_bounds = array<i64: 128, 128>}, {pipeline_mode = #tpu.pipeline_mode<synchronous>, transform_indices = @transform_4, window_bounds = array<i64: 1, 128>}, {pipeline_mode = #tpu.pipeline_mode<synchronous>, transform_indices = @transform_5, window_bounds = array<i64: 1, 128>}, {transform_indices = @transform_6, window_bounds = array<i64: 512, 128>}, {transform_indices = @transform_7, window_bounds = array<i64: 512, 128>}]} {
    %c0 = arith.constant 0 : index
    %c0_0 = arith.constant 0 : index
    %0 = vector.load %arg1[%c0, %c0_0] : memref<512x128xbf16, #tpu.memory_space<vmem>>, vector<512x128xbf16>
    %c0_1 = arith.constant 0 : index
    %c0_2 = arith.constant 0 : index
    %1 = vector.load %arg3[%c0_1, %c0_2] : memref<128x128xbf16, #tpu.memory_space<vmem>>, vector<128x128xbf16>
    %cst = arith.constant dense<0.000000e+00> : vector<512x128xf32>
    %2 = tpu.matmul %0, %1, %cst {dimension_numbers = #tpu.dot_dimension_numbers<[1], [0], [0], [1], [0, 0, 1, 1], [], []>} : vector<512x128xbf16>, vector<128x128xbf16>, vector<512x128xf32> -> vector<512x128xf32>
    %c0_3 = arith.constant 0 : index
    %c0_4 = arith.constant 0 : index
    %3 = vector.load %arg2[%c0_3, %c0_4] : memref<512x128xbf16, #tpu.memory_space<vmem>>, vector<512x128xbf16>
    %c0_5 = arith.constant 0 : index
    %c0_6 = arith.constant 0 : index
    %4 = vector.load %arg4[%c0_5, %c0_6] : memref<128x128xbf16, #tpu.memory_space<vmem>>, vector<128x128xbf16>
    %cst_7 = arith.constant dense<0.000000e+00> : vector<512x128xf32>
    %5 = tpu.matmul %3, %4, %cst_7 {dimension_numbers = #tpu.dot_dimension_numbers<[1], [0], [0], [1], [0, 0, 1, 1], [], []>} : vector<512x128xbf16>, vector<128x128xbf16>, vector<512x128xf32> -> vector<512x128xf32>
    %6 = arith.addf %2, %5 : vector<512x128xf32>
    %c0_8 = arith.constant 0 : index
    %c0_9 = arith.constant 0 : index
    %7 = vector.load %arg5[%c0_8, %c0_9] : memref<1x128xf32, #tpu.memory_space<vmem>>, vector<1x128xf32>
    %8 = vector.broadcast %7 : vector<1x128xf32> to vector<512x128xf32>
    %9 = arith.mulf %6, %8 : vector<512x128xf32>
    %c0_10 = arith.constant 0 : index
    %c0_11 = arith.constant 0 : index
    %10 = vector.load %arg6[%c0_10, %c0_11] : memref<1x128xf32, #tpu.memory_space<vmem>>, vector<1x128xf32>
    %11 = vector.broadcast %10 : vector<1x128xf32> to vector<512x128xf32>
    %12 = arith.addf %9, %11 : vector<512x128xf32>
    %c0_12 = arith.constant 0 : index
    %c0_13 = arith.constant 0 : index
    %13 = vector.load %arg7[%c0_12, %c0_13] : memref<512x128xbf16, #tpu.memory_space<vmem>>, vector<512x128xbf16>
    %14 = arith.extf %13 : vector<512x128xbf16> to vector<512x128xf32>
    %15 = arith.addf %12, %14 : vector<512x128xf32>
    %cst_14 = arith.constant 0.000000e+00 : f32
    %16 = vector.broadcast %cst_14 : f32 to vector<512x128xf32>
    %17 = arith.maximumf %15, %16 : vector<512x128xf32>
    %18 = arith.truncf %17 : vector<512x128xf32> to vector<512x128xbf16>
    %c0_15 = arith.constant 0 : index
    %c0_16 = arith.constant 0 : index
    %19 = vector.load %arg8[%c0_15, %c0_16] : memref<512x128xbf16, #tpu.memory_space<vmem>>, vector<512x128xbf16>
    tpu.vector_store %arg8[%c0_15, %c0_16], %18 {strides = array<i32>} : memref<512x128xbf16, #tpu.memory_space<vmem>>, vector<512x128xbf16>,
    return
  }
  func.func @transform_0(%arg0: i32) -> (i32, i32) {
    %c0_i32 = arith.constant 0 : i32
    %c0_i32_0 = arith.constant 0 : i32
    return %arg0, %c0_i32 : i32, i32
  }
  func.func @transform_1(%arg0: i32) -> (i32, i32) {
    %c0_i32 = arith.constant 0 : i32
    %c0_i32_0 = arith.constant 0 : i32
    return %arg0, %c0_i32 : i32, i32
  }
  func.func @transform_2(%arg0: i32) -> (i32, i32) {
    %c0_i32 = arith.constant 0 : i32
    %c0_i32_0 = arith.constant 0 : i32
    %c0_i32_1 = arith.constant 0 : i32
    return %c0_i32, %c0_i32_0 : i32, i32
  }
  func.func @transform_3(%arg0: i32) -> (i32, i32) {
    %c0_i32 = arith.constant 0 : i32
    %c0_i32_0 = arith.constant 0 : i32
    %c0_i32_1 = arith.constant 0 : i32
    return %c0_i32, %c0_i32_0 : i32, i32
  }
  func.func @transform_4(%arg0: i32) -> (i32, i32) {
    %c0_i32 = arith.constant 0 : i32
    %c0_i32_0 = arith.constant 0 : i32
    %c0_i32_1 = arith.constant 0 : i32
    return %c0_i32, %c0_i32_0 : i32, i32
  }
  func.func @transform_5(%arg0: i32) -> (i32, i32) {
    %c0_i32 = arith.constant 0 : i32
    %c0_i32_0 = arith.constant 0 : i32
    %c0_i32_1 = arith.constant 0 : i32
    return %c0_i32, %c0_i32_0 : i32, i32
  }
  func.func @transform_6(%arg0: i32) -> (i32, i32) {
    %c0_i32 = arith.constant 0 : i32
    %c0_i32_0 = arith.constant 0 : i32
    return %arg0, %c0_i32 : i32, i32
  }
  func.func @transform_7(%arg0: i32) -> (i32, i32) {
    %c0_i32 = arith.constant 0 : i32
    %c0_i32_0 = arith.constant 0 : i32
    return %arg0, %c0_i32 : i32, i32
  }
}

module attributes {stable_mosaic.version = 11 : i64} {
  func.func @_pointwise_kernel(%arg0: i32, %arg1: memref<512x128xbf16, #tpu.memory_space<vmem>>, %arg2: memref<512x128xbf16, #tpu.memory_space<vmem>>, %arg3: memref<512x128xbf16, #tpu.memory_space<vmem>>, %arg4: memref<512x128xbf16, #tpu.memory_space<vmem>>, %arg5: memref<128x128xbf16, #tpu.memory_space<vmem>>, %arg6: memref<128x128xbf16, #tpu.memory_space<vmem>>, %arg7: memref<128x128xbf16, #tpu.memory_space<vmem>>, %arg8: memref<128x128xbf16, #tpu.memory_space<vmem>>, %arg9: memref<1x128xf32, #tpu.memory_space<vmem>>, %arg10: memref<1x128xf32, #tpu.memory_space<vmem>>, %arg11: memref<512x128xbf16, #tpu.memory_space<vmem>>, %arg12: memref<512x128xbf16, #tpu.memory_space<vmem>>) attributes {dimension_semantics = [#tpu.dimension_semantics<parallel>], iteration_bounds = array<i64: 1>, scalar_prefetch = 0 : i64, scratch_operands = 0 : i64, tpu.core_type = #tpu.core_type<tc>, window_params = [{transform_indices = @transform_0, window_bounds = array<i64: 512, 128>}, {transform_indices = @transform_1, window_bounds = array<i64: 512, 128>}, {transform_indices = @transform_2, window_bounds = array<i64: 512, 128>}, {transform_indices = @transform_3, window_bounds = array<i64: 512, 128>}, {pipeline_mode = #tpu.pipeline_mode<synchronous>, transform_indices = @transform_4, window_bounds = array<i64: 128, 128>}, {pipeline_mode = #tpu.pipeline_mode<synchronous>, transform_indices = @transform_5, window_bounds = array<i64: 128, 128>}, {pipeline_mode = #tpu.pipeline_mode<synchronous>, transform_indices = @transform_6, window_bounds = array<i64: 128, 128>}, {pipeline_mode = #tpu.pipeline_mode<synchronous>, transform_indices = @transform_7, window_bounds = array<i64: 128, 128>}, {pipeline_mode = #tpu.pipeline_mode<synchronous>, transform_indices = @transform_8, window_bounds = array<i64: 1, 128>}, {pipeline_mode = #tpu.pipeline_mode<synchronous>, transform_indices = @transform_9, window_bounds = array<i64: 1, 128>}, {transform_indices = @transform_10, window_bounds = array<i64: 512, 128>}, {transform_indices = @transform_11, window_bounds = array<i64: 512, 128>}]} {
    %c0 = arith.constant 0 : index
    %c0_0 = arith.constant 0 : index
    %0 = vector.load %arg1[%c0, %c0_0] : memref<512x128xbf16, #tpu.memory_space<vmem>>, vector<512x128xbf16>
    %c0_1 = arith.constant 0 : index
    %c0_2 = arith.constant 0 : index
    %1 = vector.load %arg5[%c0_1, %c0_2] : memref<128x128xbf16, #tpu.memory_space<vmem>>, vector<128x128xbf16>
    %cst = arith.constant dense<0.000000e+00> : vector<512x128xf32>
    %2 = tpu.matmul %0, %1, %cst {dimension_numbers = #tpu.dot_dimension_numbers<[1], [0], [0], [1], [0, 0, 1, 1], [], []>} : vector<512x128xbf16>, vector<128x128xbf16>, vector<512x128xf32> -> vector<512x128xf32>
    %c0_3 = arith.constant 0 : index
    %c0_4 = arith.constant 0 : index
    %3 = vector.load %arg2[%c0_3, %c0_4] : memref<512x128xbf16, #tpu.memory_space<vmem>>, vector<512x128xbf16>
    %c0_5 = arith.constant 0 : index
    %c0_6 = arith.constant 0 : index
    %4 = vector.load %arg6[%c0_5, %c0_6] : memref<128x128xbf16, #tpu.memory_space<vmem>>, vector<128x128xbf16>
    %cst_7 = arith.constant dense<0.000000e+00> : vector<512x128xf32>
    %5 = tpu.matmul %3, %4, %cst_7 {dimension_numbers = #tpu.dot_dimension_numbers<[1], [0], [0], [1], [0, 0, 1, 1], [], []>} : vector<512x128xbf16>, vector<128x128xbf16>, vector<512x128xf32> -> vector<512x128xf32>
    %6 = arith.addf %2, %5 : vector<512x128xf32>
    %c0_8 = arith.constant 0 : index
    %c0_9 = arith.constant 0 : index
    %7 = vector.load %arg3[%c0_8, %c0_9] : memref<512x128xbf16, #tpu.memory_space<vmem>>, vector<512x128xbf16>
    %c0_10 = arith.constant 0 : index
    %c0_11 = arith.constant 0 : index
    %8 = vector.load %arg7[%c0_10, %c0_11] : memref<128x128xbf16, #tpu.memory_space<vmem>>, vector<128x128xbf16>
    %cst_12 = arith.constant dense<0.000000e+00> : vector<512x128xf32>
    %9 = tpu.matmul %7, %8, %cst_12 {dimension_numbers = #tpu.dot_dimension_numbers<[1], [0], [0], [1], [0, 0, 1, 1], [], []>} : vector<512x128xbf16>, vector<128x128xbf16>, vector<512x128xf32> -> vector<512x128xf32>
    %10 = arith.addf %6, %9 : vector<512x128xf32>
    %c0_13 = arith.constant 0 : index
    %c0_14 = arith.constant 0 : index
    %11 = vector.load %arg4[%c0_13, %c0_14] : memref<512x128xbf16, #tpu.memory_space<vmem>>, vector<512x128xbf16>
    %c0_15 = arith.constant 0 : index
    %c0_16 = arith.constant 0 : index
    %12 = vector.load %arg8[%c0_15, %c0_16] : memref<128x128xbf16, #tpu.memory_space<vmem>>, vector<128x128xbf16>
    %cst_17 = arith.constant dense<0.000000e+00> : vector<512x128xf32>
    %13 = tpu.matmul %11, %12, %cst_17 {dimension_numbers = #tpu.dot_dimension_numbers<[1], [0], [0], [1], [0, 0, 1, 1], [], []>} : vector<512x128xbf16>, vector<128x128xbf16>, vector<512x128xf32> -> vector<512x128xf32>
    %14 = arith.addf %10, %13 : vector<512x128xf32>
    %c0_18 = arith.constant 0 : index
    %c0_19 = arith.constant 0 : index
    %15 = vector.load %arg9[%c0_18, %c0_19] : memref<1x128xf32, #tpu.memory_space<vmem>>, vector<1x128xf32>
    %16 = vector.broadcast %15 : vector<1x128xf32> to vector<512x128xf32>
    %17 = arith.mulf %14, %16 : vector<512x128xf32>
    %c0_20 = arith.constant 0 : index
    %c0_21 = arith.constant 0 : index
    %18 = vector.load %arg10[%c0_20, %c0_21] : memref<1x128xf32, #tpu.memory_space<vmem>>, vector<1x128xf32>
    %19 = vector.broadcast %18 : vector<1x128xf32> to vector<512x128xf32>
    %20 = arith.addf %17, %19 : vector<512x128xf32>
    %c0_22 = arith.constant 0 : index
    %c0_23 = arith.constant 0 : index
    %21 = vector.load %arg11[%c0_22, %c0_23] : memref<512x128xbf16, #tpu.memory_space<vmem>>, vector<512x128xbf16>
    %22 = arith.extf %21 : vector<512x128xbf16> to vector<512x128xf32>
    %23 = arith.addf %20, %22 : vector<512x128xf32>
    %cst_24 = arith.constant 0.000000e+00 : f32
    %24 = vector.broadcast %cst_24 : f32 to vector<512x128xf32>
    %25 = arith.maximumf %23, %24 : vector<512x128xf32>
    %26 = arith.truncf %25 : vector<512x128xf32> to vector<512x128xbf16>
    %c0_25 = arith.constant 0 : index
    %c0_26 = arith.constant 0 : index
    %27 = vector.load %arg12[%c0_25, %c0_26] : memref<512x128xbf16, #tpu.memory_space<vmem>>, vector<512x128xbf16>
    tpu.vector_store %arg12[%c0_25, %c0_26], %26 {strides = array<i32>} : memref<512x128xbf16, #tpu.memory_space<vmem>>, vector<512x128xbf16>,
    return
  }
  func.func @transform_0(%arg0: i32) -> (i32, i32) {
    %c0_i32 = arith.constant 0 : i32
    %c0_i32_0 = arith.constant 0 : i32
    return %arg0, %c0_i32 : i32, i32
  }
  func.func @transform_1(%arg0: i32) -> (i32, i32) {
    %c0_i32 = arith.constant 0 : i32
    %c0_i32_0 = arith.constant 0 : i32
    return %arg0, %c0_i32 : i32, i32
  }
  func.func @transform_2(%arg0: i32) -> (i32, i32) {
    %c0_i32 = arith.constant 0 : i32
    %c0_i32_0 = arith.constant 0 : i32
    return %arg0, %c0_i32 : i32, i32
  }
  func.func @transform_3(%arg0: i32) -> (i32, i32) {
    %c0_i32 = arith.constant 0 : i32
    %c0_i32_0 = arith.constant 0 : i32
    return %arg0, %c0_i32 : i32, i32
  }
  func.func @transform_4(%arg0: i32) -> (i32, i32) {
    %c0_i32 = arith.constant 0 : i32
    %c0_i32_0 = arith.constant 0 : i32
    %c0_i32_1 = arith.constant 0 : i32
    return %c0_i32, %c0_i32_0 : i32, i32
  }
  func.func @transform_5(%arg0: i32) -> (i32, i32) {
    %c0_i32 = arith.constant 0 : i32
    %c0_i32_0 = arith.constant 0 : i32
    %c0_i32_1 = arith.constant 0 : i32
    return %c0_i32, %c0_i32_0 : i32, i32
  }
  func.func @transform_6(%arg0: i32) -> (i32, i32) {
    %c0_i32 = arith.constant 0 : i32
    %c0_i32_0 = arith.constant 0 : i32
    %c0_i32_1 = arith.constant 0 : i32
    return %c0_i32, %c0_i32_0 : i32, i32
  }
  func.func @transform_7(%arg0: i32) -> (i32, i32) {
    %c0_i32 = arith.constant 0 : i32
    %c0_i32_0 = arith.constant 0 : i32
    %c0_i32_1 = arith.constant 0 : i32
    return %c0_i32, %c0_i32_0 : i32, i32
  }
  func.func @transform_8(%arg0: i32) -> (i32, i32) {
    %c0_i32 = arith.constant 0 : i32
    %c0_i32_0 = arith.constant 0 : i32
    %c0_i32_1 = arith.constant 0 : i32
    return %c0_i32, %c0_i32_0 : i32, i32
  }
  func.func @transform_9(%arg0: i32) -> (i32, i32) {
    %c0_i32 = arith.constant 0 : i32
    %c0_i32_0 = arith.constant 0 : i32
    %c0_i32_1 = arith.constant 0 : i32
    return %c0_i32, %c0_i32_0 : i32, i32
  }
  func.func @transform_10(%arg0: i32) -> (i32, i32) {
    %c0_i32 = arith.constant 0 : i32
    %c0_i32_0 = arith.constant 0 : i32
    return %arg0, %c0_i32 : i32, i32
  }
  func.func @transform_11(%arg0: i32) -> (i32, i32) {
    %c0_i32 = arith.constant 0 : i32
    %c0_i32_0 = arith.constant 0 : i32
    return %arg0, %c0_i32 : i32, i32
  }
}

</mosaic_0001>

<llo_original>
// kernel: _lambda_.13
$region0: #{_lambda_.13}
  #allocation0 [shape = 'u32[]', space=smem, size = 0x4, offset = 0x4, fixed_abs, tag = 'smem constant byte address 0x4 - core index']
  #allocation1 [shape = 'u32[144,128]{1,0:T(1,128)}', space=vmem, size = 0x12000, scoped, tag = 'internal scratch']
  %s0 = inlined_call_operand.vmem [shape: bf16[32,2,16,256], index: 0, kind: input, shape index: {}]
  %s1 = inlined_call_operand.vmem [shape: bf16[32,16,128], index: 1, kind: output, shape index: {}]
  %s2 = sld [smem:[#allocation0]]
  $region37: #{_lambda_.13} parent=0
    _
  %s4 = ssub.s32 1, %s2
  %s5 = scalar_select 0, %s4, %s2
  loop: start=0, step=1, limit=4
  $region2: #{_lambda_.13} parent=0 // loop_pre_header
    _
  $region3: #{_lambda_.13} parent=0 // loop_header
    %s7 = sphi 0, %s11
    %p8 = scmp.ge.s32.totalorder %s7, 4
    %s17 = sphi 0, %s19
    %s20 = sphi 0, %s17
    %s21 = sphi 0, %s20
    %s37 = sphi 0, %s21
    %s43 = sphi 0, %s45
    %s46 = sphi 0, %s43
    %s47 = sphi 0, %s46
    %s63 = sphi 0, %s47
  $region4: #{_lambda_.13} parent=0 // loop_header_branch
    %10 = sbr.rel (%p8) target = $region8
  $region5: #{_lambda_.13} parent=0 // loop_body
    %s12 = ssub.s32 %s7, 1
    %s13 = ssub.s32 %s7, 2
    %s14 = sadd.s32 %s7, 1
    %s15 = ssub.s32 %s7, %s14
    %p16 = scmp.eq.s32.totalorder %s15, 0
    %s18 = sadd.s32 %s17, 1
    %s19 = scalar_select %p16, %s17, %s18
    %p22 = pneg %p16
    %p23 = scmp.eq.s32.totalorder %s7, 1
    %p24 = por %p22, %p23
    %p25 = scmp.ne.s32.totalorder %s17, %s20
    %p26 = scmp.eq.s32.totalorder %s7, 0
    %p27 = por %p25, %p26
    %p28 = scmp.ne.s32.totalorder %s17, %s20
    %p29 = scmp.eq.s32.totalorder %s12, 1
    %p30 = por %p28, %p29
    %p31 = scmp.ne.s32.totalorder %s20, %s21
    %p32 = scmp.eq.s32.totalorder %s12, 0
    %p33 = por %p31, %p32
    %p34 = scmp.ne.s32.totalorder %s20, %s21
    %p35 = scmp.eq.s32.totalorder %s13, 1
    %p36 = por %p34, %p35
    %p38 = scmp.ne.s32.totalorder %s21, %s37
    %p39 = scmp.eq.s32.totalorder %s13, 0
    %p40 = por %p38, %p39
    %s41 = ssub.s32 %s7, %s14
    %p42 = scmp.eq.s32.totalorder %s41, 0
    %s44 = sadd.s32 %s43, 1
    %s45 = scalar_select %p42, %s43, %s44
    %p48 = pneg %p42
    %p49 = scmp.eq.s32.totalorder %s7, 1
    %p50 = por %p48, %p49
    %p51 = scmp.ne.s32.totalorder %s43, %s46
    %p52 = scmp.eq.s32.totalorder %s7, 0
    %p53 = por %p51, %p52
    %p54 = scmp.ne.s32.totalorder %s43, %s46
    %p55 = scmp.eq.s32.totalorder %s12, 1
    %p56 = por %p54, %p55
    %p57 = scmp.ne.s32.totalorder %s46, %s47
    %p58 = scmp.eq.s32.totalorder %s12, 0
    %p59 = por %p57, %p58
    %p60 = scmp.ne.s32.totalorder %s46, %s47
    %p61 = scmp.eq.s32.totalorder %s13, 1
    %p62 = por %p60, %p61
    %p64 = scmp.ne.s32.totalorder %s47, %s63
    %p65 = scmp.eq.s32.totalorder %s13, 0
    %p66 = por %p64, %p65
    %p67 = scmp.le.s32.totalorder 1, %s7
    %p68 = scmp.lt.s32.totalorder %s7, 3
    %p69 = pnand %p67, %p68
    %p70 = pneg %p69
    // Predicated region
    $region9: #{_lambda_.13} parent=5 // pred_check
      _
    $region10: #{_lambda_.13} parent=5 // pred_check_branch
      %72 = sbr.rel (%p69) target = $region12
    $region11: #{_lambda_.13} parent=5 // pred_region
      %s73 = ssub.s32 %s7, 1
    $region12: #{_lambda_.13} parent=5 // pred_fallthru
      _
    %p74 = scmp.lt.s32.totalorder %s7, 2
    // Predicated region
    $region13: #{_lambda_.13} parent=5 // pred_check
      %p75 = pneg %p74
    $region14: #{_lambda_.13} parent=5 // pred_check_branch
      %77 = sbr.rel (%p75) target = $region16
    $region15: #{_lambda_.13} parent=5 // pred_region
      // Predicated region
      $region17: #{_lambda_.13} parent=15 // pred_check
        %p78 = pneg %p27
      $region18: #{_lambda_.13} parent=15 // pred_check_branch
        %80 = sbr.rel (%p78) target = $region20
      $region19: #{_lambda_.13} parent=15 // pred_region
        %s81 = smul.u32 16, %s7
        %p82 = scmp.lt.s32.totalorder %s81, 31
        %s83 = scalar_select %p82, %s81, 31
        %s84 = smul.addr %s83, 8
        %s85 = smul.addr %s84, 4
        %s86 = scalar_lea.vmem %s0, %s85
        %s87 = smul.u32 16, %s7
      $region20: #{_lambda_.13} parent=15 // pred_fallthru
        _
    $region16: #{_lambda_.13} parent=5 // pred_fallthru
      _
    %p88 = scmp.le.s32.totalorder 1, %s7
    %p89 = scmp.lt.s32.totalorder %s7, 3
    %p90 = pnand %p88, %p89
    %p91 = pneg %p90
    // Predicated region
    $region21: #{_lambda_.13} parent=5 // pred_check
      _
    $region22: #{_lambda_.13} parent=5 // pred_check_branch
      %93 = sbr.rel (%p90) target = $region24
    $region23: #{_lambda_.13} parent=5 // pred_region
      %s94 = ssub.s32 %s7, 1
      %s95 = smul.u32 16, %s12
      %p96 = scmp.lt.s32.totalorder %s95, 31
      %s97 = scalar_select %p96, %s95, 31
      %s98 = smul.addr %s97, 8
      %s99 = smul.addr %s98, 4
      %s100 = scalar_lea.vmem %s0, %s99
      %p101 = pneg %p33
      %p102 = pneg %p30
      %p103 = pneg %p59
      %p104 = pneg %p56
      %s105 = smul.u32 16, %s12
      %p106 = scmp.lt.s32.totalorder %s105, 31
      %s107 = scalar_select %p106, %s105, 31
      %s108 = smul.addr %s107, 2
      %s109 = smul.addr %s108, 4
      %s110 = scalar_lea.vmem %s1, %s109
      %s111 = smul.u32 16, %s12
      %p112 = scmp.lt.s32.totalorder %s111, 31
      %s113 = scalar_select %p112, %s111, 31
      %s114 = smul.addr %s113, 8
      %s115 = smul.addr %s114, 4
      %s116 = scalar_lea.vmem %s0, %s115
      %s117 = smul.u32 16, %s12
      %s118 = smul.u32 16, %s12
      %p119 = scmp.lt.s32.totalorder %s118, 31
      %s120 = scalar_select %p119, %s118, 31
      %s121 = smul.addr %s120, 2
      %s122 = smul.addr %s121, 4
      %s123 = scalar_lea.vmem %s1, %s122
      %s124 = smul.u32 16, %s12
      %v125 = vld [vmem:[%s116] sm:$0xf]
      %v126 = vld [vmem:[%s116 + $0x8] sm:$0xf]
      %v127 = vld [vmem:[%s116 + $0x20] sm:$0xf]
      %v128 = vld [vmem:[%s116 + $0x28] sm:$0xf]
      %v129 = vld [vmem:[%s116 + $0x40] sm:$0xf]
      %v130 = vld [vmem:[%s116 + $0x48] sm:$0xf]
      %v131 = vld [vmem:[%s116 + $0x60] sm:$0xf]
      %v132 = vld [vmem:[%s116 + $0x68] sm:$0xf]
      %v133 = vld [vmem:[%s116 + $0x80] sm:$0xf]
      %v134 = vld [vmem:[%s116 + $0x88] sm:$0xf]
      %v135 = vld [vmem:[%s116 + $0xa0] sm:$0xf]
      %v136 = vld [vmem:[%s116 + $0xa8] sm:$0xf]
      %v137 = vld [vmem:[%s116 + $0xc0] sm:$0xf]
      %v138 = vld [vmem:[%s116 + $0xc8] sm:$0xf]
      %v139 = vld [vmem:[%s116 + $0xe0] sm:$0xf]
      %v140 = vld [vmem:[%s116 + $0xe8] sm:$0xf]
      %v141 = vld [vmem:[%s116 + $0x100] sm:$0xf]
      %v142 = vld [vmem:[%s116 + $0x108] sm:$0xf]
      %v143 = vld [vmem:[%s116 + $0x120] sm:$0xf]
      %v144 = vld [vmem:[%s116 + $0x128] sm:$0xf]
      %v145 = vld [vmem:[%s116 + $0x140] sm:$0xf]
      %v146 = vld [vmem:[%s116 + $0x148] sm:$0xf]
      %v147 = vld [vmem:[%s116 + $0x160] sm:$0xf]
      %v148 = vld [vmem:[%s116 + $0x168] sm:$0xf]
      %v149 = vld [vmem:[%s116 + $0x180] sm:$0xf]
      %v150 = vld [vmem:[%s116 + $0x188] sm:$0xf]
      %v151 = vld [vmem:[%s116 + $0x1a0] sm:$0xf]
      %v152 = vld [vmem:[%s116 + $0x1a8] sm:$0xf]
      %v153 = vld [vmem:[%s116 + $0x1c0] sm:$0xf]
      %v154 = vld [vmem:[%s116 + $0x1c8] sm:$0xf]
      %v155 = vld [vmem:[%s116 + $0x1e0] sm:$0xf]
      %v156 = vld [vmem:[%s116 + $0x1e8] sm:$0xf]
      %v157 = vld [vmem:[%s116 + $0x4] sm:$0xf]
      %v158 = vld [vmem:[%s116 + $0xc] sm:$0xf]
      %v159 = vld [vmem:[%s116 + $0x24] sm:$0xf]
      %v160 = vld [vmem:[%s116 + $0x2c] sm:$0xf]
      %v161 = vld [vmem:[%s116 + $0x44] sm:$0xf]
      %v162 = vld [vmem:[%s116 + $0x4c] sm:$0xf]
      %v163 = vld [vmem:[%s116 + $0x64] sm:$0xf]
      %v164 = vld [vmem:[%s116 + $0x6c] sm:$0xf]
      %v165 = vld [vmem:[%s116 + $0x84] sm:$0xf]
      %v166 = vld [vmem:[%s116 + $0x8c] sm:$0xf]
      %v167 = vld [vmem:[%s116 + $0xa4] sm:$0xf]
      %v168 = vld [vmem:[%s116 + $0xac] sm:$0xf]
      %v169 = vld [vmem:[%s116 + $0xc4] sm:$0xf]
      %v170 = vld [vmem:[%s116 + $0xcc] sm:$0xf]
      %v171 = vld [vmem:[%s116 + $0xe4] sm:$0xf]
      %v172 = vld [vmem:[%s116 + $0xec] sm:$0xf]
      %v173 = vld [vmem:[%s116 + $0x104] sm:$0xf]
      %v174 = vld [vmem:[%s116 + $0x10c] sm:$0xf]
      %v175 = vld [vmem:[%s116 + $0x124] sm:$0xf]
      %v176 = vld [vmem:[%s116 + $0x12c] sm:$0xf]
      %v177 = vld [vmem:[%s116 + $0x144] sm:$0xf]
      %v178 = vld [vmem:[%s116 + $0x14c] sm:$0xf]
      %v179 = vld [vmem:[%s116 + $0x164] sm:$0xf]
      %v180 = vld [vmem:[%s116 + $0x16c] sm:$0xf]
      %v181 = vld [vmem:[%s116 + $0x184] sm:$0xf]
      %v182 = vld [vmem:[%s116 + $0x18c] sm:$0xf]
      %v183 = vld [vmem:[%s116 + $0x1a4] sm:$0xf]
      %v184 = vld [vmem:[%s116 + $0x1ac] sm:$0xf]
      %v185 = vld [vmem:[%s116 + $0x1c4] sm:$0xf]
      %v186 = vld [vmem:[%s116 + $0x1cc] sm:$0xf]
      %v187 = vld [vmem:[%s116 + $0x1e4] sm:$0xf]
      %v188 = vld [vmem:[%s116 + $0x1ec] sm:$0xf]
      %v189 = vmax.bf16 %v125, %v157
      %v190 = vmax.bf16 %v126, %v158
      %v191 = vmax.bf16 %v127, %v159
      %v192 = vmax.bf16 %v128, %v160
      %v193 = vmax.bf16 %v129, %v161
      %v194 = vmax.bf16 %v130, %v162
      %v195 = vmax.bf16 %v131, %v163
      %v196 = vmax.bf16 %v132, %v164
      %v197 = vmax.bf16 %v133, %v165
      %v198 = vmax.bf16 %v134, %v166
      %v199 = vmax.bf16 %v135, %v167
      %v200 = vmax.bf16 %v136, %v168
      %v201 = vmax.bf16 %v137, %v169
      %v202 = vmax.bf16 %v138, %v170
      %v203 = vmax.bf16 %v139, %v171
      %v204 = vmax.bf16 %v140, %v172
      %v205 = vmax.bf16 %v141, %v173
      %v206 = vmax.bf16 %v142, %v174
      %v207 = vmax.bf16 %v143, %v175
      %v208 = vmax.bf16 %v144, %v176
      %v209 = vmax.bf16 %v145, %v177
      %v210 = vmax.bf16 %v146, %v178
      %v211 = vmax.bf16 %v147, %v179
      %v212 = vmax.bf16 %v148, %v180
      %v213 = vmax.bf16 %v149, %v181
      %v214 = vmax.bf16 %v150, %v182
      %v215 = vmax.bf16 %v151, %v183
      %v216 = vmax.bf16 %v152, %v184
      %v217 = vmax.bf16 %v153, %v185
      %v218 = vmax.bf16 %v154, %v186
      %v219 = vmax.bf16 %v155, %v187
      %v220 = vmax.bf16 %v156, %v188
      %s221 = scalar_lea.vmem %s116, 16
      %v222 = vld [vmem:[%s221] sm:$0xf]
      %v223 = vld [vmem:[%s221 + $0x8] sm:$0xf]
      %v224 = vld [vmem:[%s221 + $0x20] sm:$0xf]
      %v225 = vld [vmem:[%s221 + $0x28] sm:$0xf]
      %v226 = vld [vmem:[%s221 + $0x40] sm:$0xf]
      %v227 = vld [vmem:[%s221 + $0x48] sm:$0xf]
      %v228 = vld [vmem:[%s221 + $0x60] sm:$0xf]
      %v229 = vld [vmem:[%s221 + $0x68] sm:$0xf]
      %v230 = vld [vmem:[%s221 + $0x80] sm:$0xf]
      %v231 = vld [vmem:[%s221 + $0x88] sm:$0xf]
      %v232 = vld [vmem:[%s221 + $0xa0] sm:$0xf]
      %v233 = vld [vmem:[%s221 + $0xa8] sm:$0xf]
      %v234 = vld [vmem:[%s221 + $0xc0] sm:$0xf]
      %v235 = vld [vmem:[%s221 + $0xc8] sm:$0xf]
      %v236 = vld [vmem:[%s221 + $0xe0] sm:$0xf]
      %v237 = vld [vmem:[%s221 + $0xe8] sm:$0xf]
      %v238 = vld [vmem:[%s221 + $0x100] sm:$0xf]
      %v239 = vld [vmem:[%s221 + $0x108] sm:$0xf]
      %v240 = vld [vmem:[%s221 + $0x120] sm:$0xf]
      %v241 = vld [vmem:[%s221 + $0x128] sm:$0xf]
      %v242 = vld [vmem:[%s221 + $0x140] sm:$0xf]
      %v243 = vld [vmem:[%s221 + $0x148] sm:$0xf]
      %v244 = vld [vmem:[%s221 + $0x160] sm:$0xf]
      %v245 = vld [vmem:[%s221 + $0x168] sm:$0xf]
      %v246 = vld [vmem:[%s221 + $0x180] sm:$0xf]
      %v247 = vld [vmem:[%s221 + $0x188] sm:$0xf]
      %v248 = vld [vmem:[%s221 + $0x1a0] sm:$0xf]
      %v249 = vld [vmem:[%s221 + $0x1a8] sm:$0xf]
      %v250 = vld [vmem:[%s221 + $0x1c0] sm:$0xf]
      %v251 = vld [vmem:[%s221 + $0x1c8] sm:$0xf]
      %v252 = vld [vmem:[%s221 + $0x1e0] sm:$0xf]
      %v253 = vld [vmem:[%s221 + $0x1e8] sm:$0xf]
      %v254 = vmax.bf16 %v189, %v222
      %v255 = vmax.bf16 %v190, %v223
      %v256 = vmax.bf16 %v191, %v224
      %v257 = vmax.bf16 %v192, %v225
      %v258 = vmax.bf16 %v193, %v226
      %v259 = vmax.bf16 %v194, %v227
      %v260 = vmax.bf16 %v195, %v228
      %v261 = vmax.bf16 %v196, %v229
      %v262 = vmax.bf16 %v197, %v230
      %v263 = vmax.bf16 %v198, %v231
      %v264 = vmax.bf16 %v199, %v232
      %v265 = vmax.bf16 %v200, %v233
      %v266 = vmax.bf16 %v201, %v234
      %v267 = vmax.bf16 %v202, %v235
      %v268 = vmax.bf16 %v203, %v236
      %v269 = vmax.bf16 %v204, %v237
      %v270 = vmax.bf16 %v205, %v238
      %v271 = vmax.bf16 %v206, %v239
      %v272 = vmax.bf16 %v207, %v240
      %v273 = vmax.bf16 %v208, %v241
      %v274 = vmax.bf16 %v209, %v242
      %v275 = vmax.bf16 %v210, %v243
      %v276 = vmax.bf16 %v211, %v244
      %v277 = vmax.bf16 %v212, %v245
      %v278 = vmax.bf16 %v213, %v246
      %v279 = vmax.bf16 %v214, %v247
      %v280 = vmax.bf16 %v215, %v248
      %v281 = vmax.bf16 %v216, %v249
      %v282 = vmax.bf16 %v217, %v250
      %v283 = vmax.bf16 %v218, %v251
      %v284 = vmax.bf16 %v219, %v252
      %v285 = vmax.bf16 %v220, %v253
      %v286 = vld [vmem:[%s221 + $0x4] sm:$0xf]
      %v287 = vld [vmem:[%s221 + $0xc] sm:$0xf]
      %v288 = vld [vmem:[%s221 + $0x24] sm:$0xf]
      %v289 = vld [vmem:[%s221 + $0x2c] sm:$0xf]
      %v290 = vld [vmem:[%s221 + $0x44] sm:$0xf]
      %v291 = vld [vmem:[%s221 + $0x4c] sm:$0xf]
      %v292 = vld [vmem:[%s221 + $0x64] sm:$0xf]
      %v293 = vld [vmem:[%s221 + $0x6c] sm:$0xf]
      %v294 = vld [vmem:[%s221 + $0x84] sm:$0xf]
      %v295 = vld [vmem:[%s221 + $0x8c] sm:$0xf]
      %v296 = vld [vmem:[%s221 + $0xa4] sm:$0xf]
      %v297 = vld [vmem:[%s221 + $0xac] sm:$0xf]
      %v298 = vld [vmem:[%s221 + $0xc4] sm:$0xf]
      %v299 = vld [vmem:[%s221 + $0xcc] sm:$0xf]
      %v300 = vld [vmem:[%s221 + $0xe4] sm:$0xf]
      %v301 = vld [vmem:[%s221 + $0xec] sm:$0xf]
      %v302 = vld [vmem:[%s221 + $0x104] sm:$0xf]
      %v303 = vld [vmem:[%s221 + $0x10c] sm:$0xf]
      %v304 = vld [vmem:[%s221 + $0x124] sm:$0xf]
      %v305 = vld [vmem:[%s221 + $0x12c] sm:$0xf]
      %v306 = vld [vmem:[%s221 + $0x144] sm:$0xf]
      %v307 = vld [vmem:[%s221 + $0x14c] sm:$0xf]
      %v308 = vld [vmem:[%s221 + $0x164] sm:$0xf]
      %v309 = vld [vmem:[%s221 + $0x16c] sm:$0xf]
      %v310 = vld [vmem:[%s221 + $0x184] sm:$0xf]
      %v311 = vld [vmem:[%s221 + $0x18c] sm:$0xf]
      %v312 = vld [vmem:[%s221 + $0x1a4] sm:$0xf]
      %v313 = vld [vmem:[%s221 + $0x1ac] sm:$0xf]
      %v314 = vld [vmem:[%s221 + $0x1c4] sm:$0xf]
      %v315 = vld [vmem:[%s221 + $0x1cc] sm:$0xf]
      %v316 = vld [vmem:[%s221 + $0x1e4] sm:$0xf]
      %v317 = vld [vmem:[%s221 + $0x1ec] sm:$0xf]
      %v318 = vmax.bf16 %v254, %v286
      %v319 = vmax.bf16 %v255, %v287
      %v320 = vmax.bf16 %v256, %v288
      %v321 = vmax.bf16 %v257, %v289
      %v322 = vmax.bf16 %v258, %v290
      %v323 = vmax.bf16 %v259, %v291
      %v324 = vmax.bf16 %v260, %v292
      %v325 = vmax.bf16 %v261, %v293
      %v326 = vmax.bf16 %v262, %v294
      %v327 = vmax.bf16 %v263, %v295
      %v328 = vmax.bf16 %v264, %v296
      %v329 = vmax.bf16 %v265, %v297
      %v330 = vmax.bf16 %v266, %v298
      %v331 = vmax.bf16 %v267, %v299
      %v332 = vmax.bf16 %v268, %v300
      %v333 = vmax.bf16 %v269, %v301
      %v334 = vmax.bf16 %v270, %v302
      %v335 = vmax.bf16 %v271, %v303
      %v336 = vmax.bf16 %v272, %v304
      %v337 = vmax.bf16 %v273, %v305
      %v338 = vmax.bf16 %v274, %v306
      %v339 = vmax.bf16 %v275, %v307
      %v340 = vmax.bf16 %v276, %v308
      %v341 = vmax.bf16 %v277, %v309
      %v342 = vmax.bf16 %v278, %v310
      %v343 = vmax.bf16 %v279, %v311
      %v344 = vmax.bf16 %v280, %v312
      %v345 = vmax.bf16 %v281, %v313
      %v346 = vmax.bf16 %v282, %v314
      %v347 = vmax.bf16 %v283, %v315
      %v348 = vmax.bf16 %v284, %v316
      %v349 = vmax.bf16 %v285, %v317
      %350 = vst [vmem:[%s123] sm:$0xf] %v318
      %351 = vst [vmem:[%s123 + $0x4] sm:$0xf] %v319
      %352 = vst [vmem:[%s123 + $0x8] sm:$0xf] %v320
      %353 = vst [vmem:[%s123 + $0xc] sm:$0xf] %v321
      %354 = vst [vmem:[%s123 + $0x10] sm:$0xf] %v322
      %355 = vst [vmem:[%s123 + $0x14] sm:$0xf] %v323
      %356 = vst [vmem:[%s123 + $0x18] sm:$0xf] %v324
      %357 = vst [vmem:[%s123 + $0x1c] sm:$0xf] %v325
      %358 = vst [vmem:[%s123 + $0x20] sm:$0xf] %v326
      %359 = vst [vmem:[%s123 + $0x24] sm:$0xf] %v327
      %360 = vst [vmem:[%s123 + $0x28] sm:$0xf] %v328
      %361 = vst [vmem:[%s123 + $0x2c] sm:$0xf] %v329
      %362 = vst [vmem:[%s123 + $0x30] sm:$0xf] %v330
      %363 = vst [vmem:[%s123 + $0x34] sm:$0xf] %v331
      %364 = vst [vmem:[%s123 + $0x38] sm:$0xf] %v332
      %365 = vst [vmem:[%s123 + $0x3c] sm:$0xf] %v333
      %366 = vst [vmem:[%s123 + $0x40] sm:$0xf] %v334
      %367 = vst [vmem:[%s123 + $0x44] sm:$0xf] %v335
      %368 = vst [vmem:[%s123 + $0x48] sm:$0xf] %v336
      %369 = vst [vmem:[%s123 + $0x4c] sm:$0xf] %v337
      %370 = vst [vmem:[%s123 + $0x50] sm:$0xf] %v338
      %371 = vst [vmem:[%s123 + $0x54] sm:$0xf] %v339
      %372 = vst [vmem:[%s123 + $0x58] sm:$0xf] %v340
      %373 = vst [vmem:[%s123 + $0x5c] sm:$0xf] %v341
      %374 = vst [vmem:[%s123 + $0x60] sm:$0xf] %v342
      %375 = vst [vmem:[%s123 + $0x64] sm:$0xf] %v343
      %376 = vst [vmem:[%s123 + $0x68] sm:$0xf] %v344
      %377 = vst [vmem:[%s123 + $0x6c] sm:$0xf] %v345
      %378 = vst [vmem:[%s123 + $0x70] sm:$0xf] %v346
      %379 = vst [vmem:[%s123 + $0x74] sm:$0xf] %v347
      %380 = vst [vmem:[%s123 + $0x78] sm:$0xf] %v348
      %381 = vst [vmem:[%s123 + $0x7c] sm:$0xf] %v349
      %s382 = smul.u32 16, %s12
      %p383 = scmp.lt.s32.totalorder %s382, 31
      %s384 = scalar_select %p383, %s382, 31
      %s385 = smul.addr %s384, 2
      %s386 = smul.addr %s385, 4
      %s387 = scalar_lea.vmem %s1, %s386
      // Predicated region
      $region25: #{_lambda_.13} parent=23 // pred_check
        %p388 = pneg %p56
      $region26: #{_lambda_.13} parent=23 // pred_check_branch
        %390 = sbr.rel (%p388) target = $region28
      $region27: #{_lambda_.13} parent=23 // pred_region
        %s391 = smul.u32 16, %s12
      $region28: #{_lambda_.13} parent=23 // pred_fallthru
        _
    $region24: #{_lambda_.13} parent=5 // pred_fallthru
      _
    %p392 = scmp.le.s32.totalorder 2, %s7
    // Predicated region
    $region29: #{_lambda_.13} parent=5 // pred_check
      %p393 = pneg %p392
    $region30: #{_lambda_.13} parent=5 // pred_check_branch
      %395 = sbr.rel (%p393) target = $region32
    $region31: #{_lambda_.13} parent=5 // pred_region
      %s396 = ssub.s32 %s7, 2
      // Predicated region
      $region33: #{_lambda_.13} parent=31 // pred_check
        %p397 = pneg %p62
      $region34: #{_lambda_.13} parent=31 // pred_check_branch
        %399 = sbr.rel (%p397) target = $region36
      $region35: #{_lambda_.13} parent=31 // pred_region
        %s400 = smul.u32 16, %s13
        %p401 = scmp.lt.s32.totalorder %s400, 31
        %s402 = scalar_select %p401, %s400, 31
        %s403 = smul.addr %s402, 2
        %s404 = smul.addr %s403, 4
        %s405 = scalar_lea.vmem %s1, %s404
      $region36: #{_lambda_.13} parent=31 // pred_fallthru
        _
    $region32: #{_lambda_.13} parent=5 // pred_fallthru
      _
  $region6: #{_lambda_.13} parent=0 // loop_footer
    %s11 = sadd.s32 1, %s7
  $region7: #{_lambda_.13} parent=0 // loop_footer_branch
    %6 = sbr.rel target = $region3
  $region8: #{_lambda_.13} parent=0 // loop_exit
    _

// kernel: _lambda_.14
$region0: #{_lambda_.14}
  #allocation0 [shape = 'u32[]', space=smem, size = 0x4, offset = 0x4, fixed_abs, tag = 'smem constant byte address 0x4 - core index']
  #allocation1 [shape = 'u32[144,128]{1,0:T(1,128)}', space=vmem, size = 0x12000, scoped, tag = 'internal scratch']
  %s0 = inlined_call_operand.vmem [shape: bf16[512,128], index: 0, kind: input, shape index: {}]
  %s1 = inlined_call_operand.vmem [shape: bf16[128,128], index: 1, kind: input, shape index: {}]
  %s2 = inlined_call_operand.vmem [shape: f32[1,128], index: 2, kind: input, shape index: {}]
  %s3 = inlined_call_operand.vmem [shape: f32[1,128], index: 3, kind: input, shape index: {}]
  %s4 = inlined_call_operand.vmem [shape: bf16[512,128], index: 4, kind: output, shape index: {}]
  %s5 = sld [smem:[#allocation0]]
  $region26: #{_lambda_.14} parent=0
    _
  %s7 = ssub.s32 1, %s5
  %s8 = scalar_select 0, %s7, %s5
  // Predicated region
  $region2: #{_lambda_.14} parent=0 // pred_check
    _
  $region3: #{_lambda_.14} parent=0 // pred_check_branch
    %10 = sbr.rel (0) target = $region5
  $region4: #{_lambda_.14} parent=0 // pred_region
    _
  $region5: #{_lambda_.14} parent=0 // pred_fallthru
    _
  // Predicated region
  $region6: #{_lambda_.14} parent=0 // pred_check
    _
  $region7: #{_lambda_.14} parent=0 // pred_check_branch
    %12 = sbr.rel (0) target = $region9
  $region8: #{_lambda_.14} parent=0 // pred_region
    _
  $region9: #{_lambda_.14} parent=0 // pred_fallthru
    _
  // Predicated region
  $region10: #{_lambda_.14} parent=0 // pred_check
    _
  $region11: #{_lambda_.14} parent=0 // pred_check_branch
    %14 = sbr.rel (0) target = $region13
  $region12: #{_lambda_.14} parent=0 // pred_region
    _
  $region13: #{_lambda_.14} parent=0 // pred_fallthru
    _
  // Predicated region
  $region14: #{_lambda_.14} parent=0 // pred_check
    _
  $region15: #{_lambda_.14} parent=0 // pred_check_branch
    %16 = sbr.rel (0) target = $region17
  $region16: #{_lambda_.14} parent=0 // pred_region
    _
  $region17: #{_lambda_.14} parent=0 // pred_fallthru
    _
  %v18 = vld [vmem:[%s0] sm:$0xf]
  %v19 = vld [vmem:[%s0 + $0x4] sm:$0xf]
  %v20 = vld [vmem:[%s0 + $0x8] sm:$0xf]
  %v21 = vld [vmem:[%s0 + $0xc] sm:$0xf]
  %v22 = vld [vmem:[%s0 + $0x10] sm:$0xf]
  %v23 = vld [vmem:[%s0 + $0x14] sm:$0xf]
  %v24 = vld [vmem:[%s0 + $0x18] sm:$0xf]
  %v25 = vld [vmem:[%s0 + $0x1c] sm:$0xf]
  %v26 = vld [vmem:[%s0 + $0x20] sm:$0xf]
  %v27 = vld [vmem:[%s0 + $0x24] sm:$0xf]
  %v28 = vld [vmem:[%s0 + $0x28] sm:$0xf]
  %v29 = vld [vmem:[%s0 + $0x2c] sm:$0xf]
  %v30 = vld [vmem:[%s0 + $0x30] sm:$0xf]
  %v31 = vld [vmem:[%s0 + $0x34] sm:$0xf]
  %v32 = vld [vmem:[%s0 + $0x38] sm:$0xf]
  %v33 = vld [vmem:[%s0 + $0x3c] sm:$0xf]
  %v34 = vld [vmem:[%s0 + $0x40] sm:$0xf]
  %v35 = vld [vmem:[%s0 + $0x44] sm:$0xf]
  %v36 = vld [vmem:[%s0 + $0x48] sm:$0xf]
  %v37 = vld [vmem:[%s0 + $0x4c] sm:$0xf]
  %v38 = vld [vmem:[%s0 + $0x50] sm:$0xf]
  %v39 = vld [vmem:[%s0 + $0x54] sm:$0xf]
  %v40 = vld [vmem:[%s0 + $0x58] sm:$0xf]
  %v41 = vld [vmem:[%s0 + $0x5c] sm:$0xf]
  %v42 = vld [vmem:[%s0 + $0x60] sm:$0xf]
  %v43 = vld [vmem:[%s0 + $0x64] sm:$0xf]
  %v44 = vld [vmem:[%s0 + $0x68] sm:$0xf]
  %v45 = vld [vmem:[%s0 + $0x6c] sm:$0xf]
  %v46 = vld [vmem:[%s0 + $0x70] sm:$0xf]
  %v47 = vld [vmem:[%s0 + $0x74] sm:$0xf]
  %v48 = vld [vmem:[%s0 + $0x78] sm:$0xf]
  %v49 = vld [vmem:[%s0 + $0x7c] sm:$0xf]
  %v50 = vld [vmem:[%s0 + $0x80] sm:$0xf]
  %v51 = vld [vmem:[%s0 + $0x84] sm:$0xf]
  %v52 = vld [vmem:[%s0 + $0x88] sm:$0xf]
  %v53 = vld [vmem:[%s0 + $0x8c] sm:$0xf]
  %v54 = vld [vmem:[%s0 + $0x90] sm:$0xf]
  %v55 = vld [vmem:[%s0 + $0x94] sm:$0xf]
  %v56 = vld [vmem:[%s0 + $0x98] sm:$0xf]
  %v57 = vld [vmem:[%s0 + $0x9c] sm:$0xf]
  %v58 = vld [vmem:[%s0 + $0xa0] sm:$0xf]
  %v59 = vld [vmem:[%s0 + $0xa4] sm:$0xf]
  %v60 = vld [vmem:[%s0 + $0xa8] sm:$0xf]
  %v61 = vld [vmem:[%s0 + $0xac] sm:$0xf]
  %v62 = vld [vmem:[%s0 + $0xb0] sm:$0xf]
  %v63 = vld [vmem:[%s0 + $0xb4] sm:$0xf]
  %v64 = vld [vmem:[%s0 + $0xb8] sm:$0xf]
  %v65 = vld [vmem:[%s0 + $0xbc] sm:$0xf]
  %v66 = vld [vmem:[%s0 + $0xc0] sm:$0xf]
  %v67 = vld [vmem:[%s0 + $0xc4] sm:$0xf]
  %v68 = vld [vmem:[%s0 + $0xc8] sm:$0xf]
  %v69 = vld [vmem:[%s0 + $0xcc] sm:$0xf]
  %v70 = vld [vmem:[%s0 + $0xd0] sm:$0xf]
  %v71 = vld [vmem:[%s0 + $0xd4] sm:$0xf]
  %v72 = vld [vmem:[%s0 + $0xd8] sm:$0xf]
  %v73 = vld [vmem:[%s0 + $0xdc] sm:$0xf]
  %v74 = vld [vmem:[%s0 + $0xe0] sm:$0xf]
  %v75 = vld [vmem:[%s0 + $0xe4] sm:$0xf]
  %v76 = vld [vmem:[%s0 + $0xe8] sm:$0xf]
  %v77 = vld [vmem:[%s0 + $0xec] sm:$0xf]
  %v78 = vld [vmem:[%s0 + $0xf0] sm:$0xf]
  %v79 = vld [vmem:[%s0 + $0xf4] sm:$0xf]
  %v80 = vld [vmem:[%s0 + $0xf8] sm:$0xf]
  %v81 = vld [vmem:[%s0 + $0xfc] sm:$0xf]
  %v82 = vld [vmem:[%s1] sm:$0xf]
  %v83 = vld [vmem:[%s1 + $0x4] sm:$0xf]
  %v84 = vld [vmem:[%s1 + $0x8] sm:$0xf]
  %v85 = vld [vmem:[%s1 + $0xc] sm:$0xf]
  %v86 = vld [vmem:[%s1 + $0x10] sm:$0xf]
  %v87 = vld [vmem:[%s1 + $0x14] sm:$0xf]
  %v88 = vld [vmem:[%s1 + $0x18] sm:$0xf]
  %v89 = vld [vmem:[%s1 + $0x1c] sm:$0xf]
  %v90 = vld [vmem:[%s1 + $0x20] sm:$0xf]
  %v91 = vld [vmem:[%s1 + $0x24] sm:$0xf]
  %v92 = vld [vmem:[%s1 + $0x28] sm:$0xf]
  %v93 = vld [vmem:[%s1 + $0x2c] sm:$0xf]
  %v94 = vld [vmem:[%s1 + $0x30] sm:$0xf]
  %v95 = vld [vmem:[%s1 + $0x34] sm:$0xf]
  %v96 = vld [vmem:[%s1 + $0x38] sm:$0xf]
  %v97 = vld [vmem:[%s1 + $0x3c] sm:$0xf]
  %v162 = vunpack.c.l.b16 %v18
  %v163 = vunpack.c.l.b16 %v19
  %v164 = vunpack.c.l.b16 %v20
  %v165 = vunpack.c.l.b16 %v21
  %v166 = vunpack.c.l.b16 %v22
  %v167 = vunpack.c.l.b16 %v23
  %v168 = vunpack.c.l.b16 %v24
  %v169 = vunpack.c.l.b16 %v25
  %v170 = vunpack.c.l.b16 %v26
  %v171 = vunpack.c.l.b16 %v27
  %v172 = vunpack.c.l.b16 %v28
  %v173 = vunpack.c.l.b16 %v29
  %v174 = vunpack.c.l.b16 %v30
  %v175 = vunpack.c.l.b16 %v31
  %v176 = vunpack.c.l.b16 %v32
  %v177 = vunpack.c.l.b16 %v33
  %v178 = vunpack.c.l.b16 %v34
  %v179 = vunpack.c.l.b16 %v35
  %v180 = vunpack.c.l.b16 %v36
  %v181 = vunpack.c.l.b16 %v37
  %v182 = vunpack.c.l.b16 %v38
  %v183 = vunpack.c.l.b16 %v39
  %v184 = vunpack.c.l.b16 %v40
  %v185 = vunpack.c.l.b16 %v41
  %v186 = vunpack.c.l.b16 %v42
  %v187 = vunpack.c.l.b16 %v43
  %v188 = vunpack.c.l.b16 %v44
  %v189 = vunpack.c.l.b16 %v45
  %v190 = vunpack.c.l.b16 %v46
  %v191 = vunpack.c.l.b16 %v47
  %v192 = vunpack.c.l.b16 %v48
  %v193 = vunpack.c.l.b16 %v49
  %v194 = vunpack.c.l.b16 %v50
  %v195 = vunpack.c.l.b16 %v51
  %v196 = vunpack.c.l.b16 %v52
  %v197 = vunpack.c.l.b16 %v53
  %v198 = vunpack.c.l.b16 %v54
  %v199 = vunpack.c.l.b16 %v55
  %v200 = vunpack.c.l.b16 %v56
  %v201 = vunpack.c.l.b16 %v57
  %v202 = vunpack.c.l.b16 %v58
  %v203 = vunpack.c.l.b16 %v59
  %v204 = vunpack.c.l.b16 %v60
  %v205 = vunpack.c.l.b16 %v61
  %v206 = vunpack.c.l.b16 %v62
  %v207 = vunpack.c.l.b16 %v63
  %v208 = vunpack.c.l.b16 %v64
  %v209 = vunpack.c.l.b16 %v65
  %v210 = vunpack.c.l.b16 %v66
  %v211 = vunpack.c.l.b16 %v67
  %v212 = vunpack.c.l.b16 %v68
  %v213 = vunpack.c.l.b16 %v69
  %v214 = vunpack.c.l.b16 %v70
  %v215 = vunpack.c.l.b16 %v71
  %v216 = vunpack.c.l.b16 %v72
  %v217 = vunpack.c.l.b16 %v73
  %v218 = vunpack.c.l.b16 %v74
  %v219 = vunpack.c.l.b16 %v75
  %v220 = vunpack.c.l.b16 %v76
  %v221 = vunpack.c.l.b16 %v77
  %v222 = vunpack.c.l.b16 %v78
  %v223 = vunpack.c.l.b16 %v79
  %v224 = vunpack.c.l.b16 %v80
  %v225 = vunpack.c.l.b16 %v81
  %v226 = vpack.c.b16 %v163, %v162
  %v227 = vpack.c.b16 %v165, %v164
  %v228 = vpack.c.b16 %v167, %v166
  %v229 = vpack.c.b16 %v169, %v168
  %v230 = vpack.c.b16 %v171, %v170
  %v231 = vpack.c.b16 %v173, %v172
  %v232 = vpack.c.b16 %v175, %v174
  %v233 = vpack.c.b16 %v177, %v176
  %v234 = vpack.c.b16 %v179, %v178
  %v235 = vpack.c.b16 %v181, %v180
  %v236 = vpack.c.b16 %v183, %v182
  %v237 = vpack.c.b16 %v185, %v184
  %v238 = vpack.c.b16 %v187, %v186
  %v239 = vpack.c.b16 %v189, %v188
  %v240 = vpack.c.b16 %v191, %v190
  %v241 = vpack.c.b16 %v193, %v192
  %v242 = vpack.c.b16 %v195, %v194
  %v243 = vpack.c.b16 %v197, %v196
  %v244 = vpack.c.b16 %v199, %v198
  %v245 = vpack.c.b16 %v201, %v200
  %v246 = vpack.c.b16 %v203, %v202
  %v247 = vpack.c.b16 %v205, %v204
  %v248 = vpack.c.b16 %v207, %v206
  %v249 = vpack.c.b16 %v209, %v208
  %v250 = vpack.c.b16 %v211, %v210
  %v251 = vpack.c.b16 %v213, %v212
  %v252 = vpack.c.b16 %v215, %v214
  %v253 = vpack.c.b16 %v217, %v216
  %v254 = vpack.c.b16 %v219, %v218
  %v255 = vpack.c.b16 %v221, %v220
  %v256 = vpack.c.b16 %v223, %v222
  %v257 = vpack.c.b16 %v225, %v224
  %v306 = vunpack.c.l.b16 %v82
  %v307 = vunpack.c.l.b16 %v83
  %v308 = vunpack.c.l.b16 %v84
  %v309 = vunpack.c.l.b16 %v85
  %v310 = vunpack.c.l.b16 %v86
  %v311 = vunpack.c.l.b16 %v87
  %v312 = vunpack.c.l.b16 %v88
  %v313 = vunpack.c.l.b16 %v89
  %v314 = vunpack.c.l.b16 %v90
  %v315 = vunpack.c.l.b16 %v91
  %v316 = vunpack.c.l.b16 %v92
  %v317 = vunpack.c.l.b16 %v93
  %v318 = vunpack.c.l.b16 %v94
  %v319 = vunpack.c.l.b16 %v95
  %v320 = vunpack.c.l.b16 %v96
  %v321 = vunpack.c.l.b16 %v97
  %v322 = vpack.c.b16 %v307, %v306
  %v323 = vpack.c.b16 %v309, %v308
  %v324 = vpack.c.b16 %v311, %v310
  %v325 = vpack.c.b16 %v313, %v312
  %v326 = vpack.c.b16 %v315, %v314
  %v327 = vpack.c.b16 %v317, %v316
  %v328 = vpack.c.b16 %v319, %v318
  %v329 = vpack.c.b16 %v321, %v320
  %338 = vmatprep.subr.bf16.mxu0 0
  %339 = vmatpush1.bf16.msra.mxu0 %v329
  %340 = vmatprep.subr.bf16.mxu0 0
  %341 = vmatpush1.bf16.msra.mxu0 %v328
  %342 = vmatprep.subr.bf16.mxu0 0
  %343 = vmatpush1.bf16.msra.mxu0 %v327
  %344 = vmatprep.subr.bf16.mxu0 0
  %345 = vmatpush1.bf16.msra.mxu0 %v326
  %346 = vmatprep.subr.bf16.mxu0 0
  %347 = vmatpush1.bf16.msra.mxu0 %v325
  %348 = vmatprep.subr.bf16.mxu0 0
  %349 = vmatpush1.bf16.msra.mxu0 %v324
  %350 = vmatprep.subr.bf16.mxu0 0
  %351 = vmatpush1.bf16.msra.mxu0 %v323
  %352 = vmatprep.subr.bf16.mxu0 0
  %353 = vmatpush1.bf16.msra.mxu0 %v322
  %354 = vmatprep.subr.bf16.mxu0 0
  %355 = vmatpush2.bf16.msra.mxu0 0
  %356 = vmatprep.subr.bf16.mxu0 0
  %357 = vmatpush2.bf16.msra.mxu0 0
  %358 = vmatprep.subr.bf16.mxu0 0
  %359 = vmatpush2.bf16.msra.mxu0 0
  %360 = vmatprep.subr.bf16.mxu0 0
  %361 = vmatpush2.bf16.msra.mxu0 0
  %362 = vmatprep.subr.bf16.mxu0 0
  %363 = vmatpush2.bf16.msra.mxu0 0
  %364 = vmatprep.subr.bf16.mxu0 0
  %365 = vmatpush2.bf16.msra.mxu0 0
  %366 = vmatprep.subr.bf16.mxu0 0
  %367 = vmatpush2.bf16.msra.mxu0 0
  %368 = vmatprep.subr.bf16.mxu0 0
  %369 = vmatpush2.bf16.msra.mxu0 0
  %370 = vmatprep.mubr.bf16.mxu0 0
  %371 = vmatmul.mubr.bf16.gmra.mxu0 %v226
  %v372 = vpop.f32.mrf.mxu0
  %v373 = vadd.f32 0.0, %v372
  %v374 = vpop.f32.mrf.mxu0
  %v375 = vpop.f32.mrf.mxu0
  %v376 = vadd.f32 0.0, %v375
  %v377 = vpop.f32.mrf.mxu0
  %378 = vmatprep.mubr.bf16.mxu0 0
  %379 = vmatmul.mubr.bf16.gmra.mxu0 %v227
  %v380 = vpop.f32.mrf.mxu0
  %v381 = vadd.f32 0.0, %v380
  %v382 = vpop.f32.mrf.mxu0
  %v383 = vpop.f32.mrf.mxu0
  %v384 = vadd.f32 0.0, %v383
  %v385 = vpop.f32.mrf.mxu0
  %386 = vmatprep.mubr.bf16.mxu0 0
  %387 = vmatmul.mubr.bf16.gmra.mxu0 %v228
  %v388 = vpop.f32.mrf.mxu0
  %v389 = vadd.f32 0.0, %v388
  %v390 = vpop.f32.mrf.mxu0
  %v391 = vpop.f32.mrf.mxu0
  %v392 = vadd.f32 0.0, %v391
  %v393 = vpop.f32.mrf.mxu0
  %394 = vmatprep.mubr.bf16.mxu0 0
  %395 = vmatmul.mubr.bf16.gmra.mxu0 %v229
  %v396 = vpop.f32.mrf.mxu0
  %v397 = vadd.f32 0.0, %v396
  %v398 = vpop.f32.mrf.mxu0
  %v399 = vpop.f32.mrf.mxu0
  %v400 = vadd.f32 0.0, %v399
  %v401 = vpop.f32.mrf.mxu0
  %402 = vmatprep.mubr.bf16.mxu0 0
  %403 = vmatmul.mubr.bf16.gmra.mxu0 %v230
  %v404 = vpop.f32.mrf.mxu0
  %v405 = vadd.f32 0.0, %v404
  %v406 = vpop.f32.mrf.mxu0
  %v407 = vpop.f32.mrf.mxu0
  %v408 = vadd.f32 0.0, %v407
  %v409 = vpop.f32.mrf.mxu0
  %410 = vmatprep.mubr.bf16.mxu0 0
  %411 = vmatmul.mubr.bf16.gmra.mxu0 %v231
  %v412 = vpop.f32.mrf.mxu0
  %v413 = vadd.f32 0.0, %v412
  %v414 = vpop.f32.mrf.mxu0
  %v415 = vpop.f32.mrf.mxu0
  %v416 = vadd.f32 0.0, %v415
  %v417 = vpop.f32.mrf.mxu0
  %418 = vmatprep.mubr.bf16.mxu0 0
  %419 = vmatmul.mubr.bf16.gmra.mxu0 %v232
  %v420 = vpop.f32.mrf.mxu0
  %v421 = vadd.f32 0.0, %v420
  %v422 = vpop.f32.mrf.mxu0
  %v423 = vpop.f32.mrf.mxu0
  %v424 = vadd.f32 0.0, %v423
  %v425 = vpop.f32.mrf.mxu0
  %426 = vmatprep.mubr.bf16.mxu0 0
  %427 = vmatmul.mubr.bf16.gmra.mxu0 %v233
  %v428 = vpop.f32.mrf.mxu0
  %v429 = vadd.f32 0.0, %v428
  %v430 = vpop.f32.mrf.mxu0
  %v431 = vpop.f32.mrf.mxu0
  %v432 = vadd.f32 0.0, %v431
  %v433 = vpop.f32.mrf.mxu0
  %434 = vmatprep.mubr.bf16.mxu0 0
  %435 = vmatmul.mubr.bf16.gmra.mxu0 %v234
  %v436 = vpop.f32.mrf.mxu0
  %v437 = vadd.f32 0.0, %v436
  %v438 = vpop.f32.mrf.mxu0
  %v439 = vpop.f32.mrf.mxu0
  %v440 = vadd.f32 0.0, %v439
  %v441 = vpop.f32.mrf.mxu0
  %442 = vmatprep.mubr.bf16.mxu0 0
  %443 = vmatmul.mubr.bf16.gmra.mxu0 %v235
  %v444 = vpop.f32.mrf.mxu0
  %v445 = vadd.f32 0.0, %v444
  %v446 = vpop.f32.mrf.mxu0
  %v447 = vpop.f32.mrf.mxu0
  %v448 = vadd.f32 0.0, %v447
  %v449 = vpop.f32.mrf.mxu0
  %450 = vmatprep.mubr.bf16.mxu0 0
  %451 = vmatmul.mubr.bf16.gmra.mxu0 %v236
  %v452 = vpop.f32.mrf.mxu0
  %v453 = vadd.f32 0.0, %v452
  %v454 = vpop.f32.mrf.mxu0
  %v455 = vpop.f32.mrf.mxu0
  %v456 = vadd.f32 0.0, %v455
  %v457 = vpop.f32.mrf.mxu0
  %458 = vmatprep.mubr.bf16.mxu0 0
  %459 = vmatmul.mubr.bf16.gmra.mxu0 %v237
  %v460 = vpop.f32.mrf.mxu0
  %v461 = vadd.f32 0.0, %v460
  %v462 = vpop.f32.mrf.mxu0
  %v463 = vpop.f32.mrf.mxu0
  %v464 = vadd.f32 0.0, %v463
  %v465 = vpop.f32.mrf.mxu0
  %466 = vmatprep.mubr.bf16.mxu0 0
  %467 = vmatmul.mubr.bf16.gmra.mxu0 %v238
  %v468 = vpop.f32.mrf.mxu0
  %v469 = vadd.f32 0.0, %v468
  %v470 = vpop.f32.mrf.mxu0
  %v471 = vpop.f32.mrf.mxu0
  %v472 = vadd.f32 0.0, %v471
  %v473 = vpop.f32.mrf.mxu0
  %474 = vmatprep.mubr.bf16.mxu0 0
  %475 = vmatmul.mubr.bf16.gmra.mxu0 %v239
  %v476 = vpop.f32.mrf.mxu0
  %v477 = vadd.f32 0.0, %v476
  %v478 = vpop.f32.mrf.mxu0
  %v479 = vpop.f32.mrf.mxu0
  %v480 = vadd.f32 0.0, %v479
  %v481 = vpop.f32.mrf.mxu0
  %482 = vmatprep.mubr.bf16.mxu0 0
  %483 = vmatmul.mubr.bf16.gmra.mxu0 %v240
  %v484 = vpop.f32.mrf.mxu0
  %v485 = vadd.f32 0.0, %v484
  %v486 = vpop.f32.mrf.mxu0
  %v487 = vpop.f32.mrf.mxu0
  %v488 = vadd.f32 0.0, %v487
  %v489 = vpop.f32.mrf.mxu0
  %490 = vmatprep.mubr.bf16.mxu0 0
  %491 = vmatmul.mubr.bf16.gmra.mxu0 %v241
  %v492 = vpop.f32.mrf.mxu0
  %v493 = vadd.f32 0.0, %v492
  %v494 = vpop.f32.mrf.mxu0
  %v495 = vpop.f32.mrf.mxu0
  %v496 = vadd.f32 0.0, %v495
  %v497 = vpop.f32.mrf.mxu0
  %498 = vmatprep.mubr.bf16.mxu0 0
  %499 = vmatmul.mubr.bf16.gmra.mxu0 %v242
  %v500 = vpop.f32.mrf.mxu0
  %v501 = vadd.f32 0.0, %v500
  %v502 = vpop.f32.mrf.mxu0
  %v503 = vpop.f32.mrf.mxu0
  %v504 = vadd.f32 0.0, %v503
  %v505 = vpop.f32.mrf.mxu0
  %506 = vmatprep.mubr.bf16.mxu0 0
  %507 = vmatmul.mubr.bf16.gmra.mxu0 %v243
  %v508 = vpop.f32.mrf.mxu0
  %v509 = vadd.f32 0.0, %v508
  %v510 = vpop.f32.mrf.mxu0
  %v511 = vpop.f32.mrf.mxu0
  %v512 = vadd.f32 0.0, %v511
  %v513 = vpop.f32.mrf.mxu0
  %514 = vmatprep.mubr.bf16.mxu0 0
  %515 = vmatmul.mubr.bf16.gmra.mxu0 %v244
  %v516 = vpop.f32.mrf.mxu0
  %v517 = vadd.f32 0.0, %v516
  %v518 = vpop.f32.mrf.mxu0
  %v519 = vpop.f32.mrf.mxu0
  %v520 = vadd.f32 0.0, %v519
  %v521 = vpop.f32.mrf.mxu0
  %522 = vmatprep.mubr.bf16.mxu0 0
  %523 = vmatmul.mubr.bf16.gmra.mxu0 %v245
  %v524 = vpop.f32.mrf.mxu0
  %v525 = vadd.f32 0.0, %v524
  %v526 = vpop.f32.mrf.mxu0
  %v527 = vpop.f32.mrf.mxu0
  %v528 = vadd.f32 0.0, %v527
  %v529 = vpop.f32.mrf.mxu0
  %530 = vmatprep.mubr.bf16.mxu0 0
  %531 = vmatmul.mubr.bf16.gmra.mxu0 %v246
  %v532 = vpop.f32.mrf.mxu0
  %v533 = vadd.f32 0.0, %v532
  %v534 = vpop.f32.mrf.mxu0
  %v535 = vpop.f32.mrf.mxu0
  %v536 = vadd.f32 0.0, %v535
  %v537 = vpop.f32.mrf.mxu0
  %538 = vmatprep.mubr.bf16.mxu0 0
  %539 = vmatmul.mubr.bf16.gmra.mxu0 %v247
  %v540 = vpop.f32.mrf.mxu0
  %v541 = vadd.f32 0.0, %v540
  %v542 = vpop.f32.mrf.mxu0
  %v543 = vpop.f32.mrf.mxu0
  %v544 = vadd.f32 0.0, %v543
  %v545 = vpop.f32.mrf.mxu0
  %546 = vmatprep.mubr.bf16.mxu0 0
  %547 = vmatmul.mubr.bf16.gmra.mxu0 %v248
  %v548 = vpop.f32.mrf.mxu0
  %v549 = vadd.f32 0.0, %v548
  %v550 = vpop.f32.mrf.mxu0
  %v551 = vpop.f32.mrf.mxu0
  %v552 = vadd.f32 0.0, %v551
  %v553 = vpop.f32.mrf.mxu0
  %554 = vmatprep.mubr.bf16.mxu0 0
  %555 = vmatmul.mubr.bf16.gmra.mxu0 %v249
  %v556 = vpop.f32.mrf.mxu0
  %v557 = vadd.f32 0.0, %v556
  %v558 = vpop.f32.mrf.mxu0
  %v559 = vpop.f32.mrf.mxu0
  %v560 = vadd.f32 0.0, %v559
  %v561 = vpop.f32.mrf.mxu0
  %562 = vmatprep.mubr.bf16.mxu0 0
  %563 = vmatmul.mubr.bf16.gmra.mxu0 %v250
  %v564 = vpop.f32.mrf.mxu0
  %v565 = vadd.f32 0.0, %v564
  %v566 = vpop.f32.mrf.mxu0
  %v567 = vpop.f32.mrf.mxu0
  %v568 = vadd.f32 0.0, %v567
  %v569 = vpop.f32.mrf.mxu0
  %570 = vmatprep.mubr.bf16.mxu0 0
  %571 = vmatmul.mubr.bf16.gmra.mxu0 %v251
  %v572 = vpop.f32.mrf.mxu0
  %v573 = vadd.f32 0.0, %v572
  %v574 = vpop.f32.mrf.mxu0
  %v575 = vpop.f32.mrf.mxu0
  %v576 = vadd.f32 0.0, %v575
  %v577 = vpop.f32.mrf.mxu0
  %578 = vmatprep.mubr.bf16.mxu0 0
  %579 = vmatmul.mubr.bf16.gmra.mxu0 %v252
  %v580 = vpop.f32.mrf.mxu0
  %v581 = vadd.f32 0.0, %v580
  %v582 = vpop.f32.mrf.mxu0
  %v583 = vpop.f32.mrf.mxu0
  %v584 = vadd.f32 0.0, %v583
  %v585 = vpop.f32.mrf.mxu0
  %586 = vmatprep.mubr.bf16.mxu0 0
  %587 = vmatmul.mubr.bf16.gmra.mxu0 %v253
  %v588 = vpop.f32.mrf.mxu0
  %v589 = vadd.f32 0.0, %v588
  %v590 = vpop.f32.mrf.mxu0
  %v591 = vpop.f32.mrf.mxu0
  %v592 = vadd.f32 0.0, %v591
  %v593 = vpop.f32.mrf.mxu0
  %594 = vmatprep.mubr.bf16.mxu0 0
  %595 = vmatmul.mubr.bf16.gmra.mxu0 %v254
  %v596 = vpop.f32.mrf.mxu0
  %v597 = vadd.f32 0.0, %v596
  %v598 = vpop.f32.mrf.mxu0
  %v599 = vpop.f32.mrf.mxu0
  %v600 = vadd.f32 0.0, %v599
  %v601 = vpop.f32.mrf.mxu0
  %602 = vmatprep.mubr.bf16.mxu0 0
  %603 = vmatmul.mubr.bf16.gmra.mxu0 %v255
  %v604 = vpop.f32.mrf.mxu0
  %v605 = vadd.f32 0.0, %v604
  %v606 = vpop.f32.mrf.mxu0
  %v607 = vpop.f32.mrf.mxu0
  %v608 = vadd.f32 0.0, %v607
  %v609 = vpop.f32.mrf.mxu0
  %610 = vmatprep.mubr.bf16.mxu0 0
  %611 = vmatmul.mubr.bf16.gmra.mxu0 %v256
  %v612 = vpop.f32.mrf.mxu0
  %v613 = vadd.f32 0.0, %v612
  %v614 = vpop.f32.mrf.mxu0
  %v615 = vpop.f32.mrf.mxu0
  %v616 = vadd.f32 0.0, %v615
  %v617 = vpop.f32.mrf.mxu0
  %618 = vmatprep.mubr.bf16.mxu0 0
  %619 = vmatmul.mubr.bf16.gmra.mxu0 %v257
  %v620 = vpop.f32.mrf.mxu0
  %v621 = vadd.f32 0.0, %v620
  %v622 = vpop.f32.mrf.mxu0
  %v623 = vpop.f32.mrf.mxu0
  %v624 = vadd.f32 0.0, %v623
  %v625 = vpop.f32.mrf.mxu0
  %626 = vdwg.mxu0
  %v627 = vld [vmem:[%s2] sm:$0x1]
  %v629 = vlaneseq
  %v630 = vshrl.u32 %v629, 7
  %v631 = vsub.s32 0, %v630
  %v632 = vrot.slane %v627, %v631
  %v634 = vmul.f32 %v373, %v632
  %v635 = vmul.f32 %v376, %v632
  %v636 = vmul.f32 %v381, %v632
  %v637 = vmul.f32 %v384, %v632
  %v638 = vmul.f32 %v389, %v632
  %v639 = vmul.f32 %v392, %v632
  %v640 = vmul.f32 %v397, %v632
  %v641 = vmul.f32 %v400, %v632
  %v642 = vmul.f32 %v405, %v632
  %v643 = vmul.f32 %v408, %v632
  %v644 = vmul.f32 %v413, %v632
  %v645 = vmul.f32 %v416, %v632
  %v646 = vmul.f32 %v421, %v632
  %v647 = vmul.f32 %v424, %v632
  %v648 = vmul.f32 %v429, %v632
  %v649 = vmul.f32 %v432, %v632
  %v650 = vmul.f32 %v437, %v632
  %v651 = vmul.f32 %v440, %v632
  %v652 = vmul.f32 %v445, %v632
  %v653 = vmul.f32 %v448, %v632
  %v654 = vmul.f32 %v453, %v632
  %v655 = vmul.f32 %v456, %v632
  %v656 = vmul.f32 %v461, %v632
  %v657 = vmul.f32 %v464, %v632
  %v658 = vmul.f32 %v469, %v632
  %v659 = vmul.f32 %v472, %v632
  %v660 = vmul.f32 %v477, %v632
  %v661 = vmul.f32 %v480, %v632
  %v662 = vmul.f32 %v485, %v632
  %v663 = vmul.f32 %v488, %v632
  %v664 = vmul.f32 %v493, %v632
  %v665 = vmul.f32 %v496, %v632
  %v666 = vmul.f32 %v501, %v632
  %v667 = vmul.f32 %v504, %v632
  %v668 = vmul.f32 %v509, %v632
  %v669 = vmul.f32 %v512, %v632
  %v670 = vmul.f32 %v517, %v632
  %v671 = vmul.f32 %v520, %v632
  %v672 = vmul.f32 %v525, %v632
  %v673 = vmul.f32 %v528, %v632
  %v674 = vmul.f32 %v533, %v632
  %v675 = vmul.f32 %v536, %v632
  %v676 = vmul.f32 %v541, %v632
  %v677 = vmul.f32 %v544, %v632
  %v678 = vmul.f32 %v549, %v632
  %v679 = vmul.f32 %v552, %v632
  %v680 = vmul.f32 %v557, %v632
  %v681 = vmul.f32 %v560, %v632
  %v682 = vmul.f32 %v565, %v632
  %v683 = vmul.f32 %v568, %v632
  %v684 = vmul.f32 %v573, %v632
  %v685 = vmul.f32 %v576, %v632
  %v686 = vmul.f32 %v581, %v632
  %v687 = vmul.f32 %v584, %v632
  %v688 = vmul.f32 %v589, %v632
  %v689 = vmul.f32 %v592, %v632
  %v690 = vmul.f32 %v597, %v632
  %v691 = vmul.f32 %v600, %v632
  %v692 = vmul.f32 %v605, %v632
  %v693 = vmul.f32 %v608, %v632
  %v694 = vmul.f32 %v613, %v632
  %v695 = vmul.f32 %v616, %v632
  %v696 = vmul.f32 %v621, %v632
  %v697 = vmul.f32 %v624, %v632
  %v698 = vld [vmem:[%s3] sm:$0x1]
  %v700 = vlaneseq
  %v701 = vshrl.u32 %v700, 7
  %v702 = vsub.s32 0, %v701
  %v703 = vrot.slane %v698, %v702
  %v705 = vadd.f32 %v634, %v703
  %v706 = vadd.f32 %v635, %v703
  %v707 = vadd.f32 %v636, %v703
  %v708 = vadd.f32 %v637, %v703
  %v709 = vadd.f32 %v638, %v703
  %v710 = vadd.f32 %v639, %v703
  %v711 = vadd.f32 %v640, %v703
  %v712 = vadd.f32 %v641, %v703
  %v713 = vadd.f32 %v642, %v703
  %v714 = vadd.f32 %v643, %v703
  %v715 = vadd.f32 %v644, %v703
  %v716 = vadd.f32 %v645, %v703
  %v717 = vadd.f32 %v646, %v703
  %v718 = vadd.f32 %v647, %v703
  %v719 = vadd.f32 %v648, %v703
  %v720 = vadd.f32 %v649, %v703
  %v721 = vadd.f32 %v650, %v703
  %v722 = vadd.f32 %v651, %v703
  %v723 = vadd.f32 %v652, %v703
  %v724 = vadd.f32 %v653, %v703
  %v725 = vadd.f32 %v654, %v703
  %v726 = vadd.f32 %v655, %v703
  %v727 = vadd.f32 %v656, %v703
  %v728 = vadd.f32 %v657, %v703
  %v729 = vadd.f32 %v658, %v703
  %v730 = vadd.f32 %v659, %v703
  %v731 = vadd.f32 %v660, %v703
  %v732 = vadd.f32 %v661, %v703
  %v733 = vadd.f32 %v662, %v703
  %v734 = vadd.f32 %v663, %v703
  %v735 = vadd.f32 %v664, %v703
  %v736 = vadd.f32 %v665, %v703
  %v737 = vadd.f32 %v666, %v703
  %v738 = vadd.f32 %v667, %v703
  %v739 = vadd.f32 %v668, %v703
  %v740 = vadd.f32 %v669, %v703
  %v741 = vadd.f32 %v670, %v703
  %v742 = vadd.f32 %v671, %v703
  %v743 = vadd.f32 %v672, %v703
  %v744 = vadd.f32 %v673, %v703
  %v745 = vadd.f32 %v674, %v703
  %v746 = vadd.f32 %v675, %v703
  %v747 = vadd.f32 %v676, %v703
  %v748 = vadd.f32 %v677, %v703
  %v749 = vadd.f32 %v678, %v703
  %v750 = vadd.f32 %v679, %v703
  %v751 = vadd.f32 %v680, %v703
  %v752 = vadd.f32 %v681, %v703
  %v753 = vadd.f32 %v682, %v703
  %v754 = vadd.f32 %v683, %v703
  %v755 = vadd.f32 %v684, %v703
  %v756 = vadd.f32 %v685, %v703
  %v757 = vadd.f32 %v686, %v703
  %v758 = vadd.f32 %v687, %v703
  %v759 = vadd.f32 %v688, %v703
  %v760 = vadd.f32 %v689, %v703
  %v761 = vadd.f32 %v690, %v703
  %v762 = vadd.f32 %v691, %v703
  %v763 = vadd.f32 %v692, %v703
  %v764 = vadd.f32 %v693, %v703
  %v765 = vadd.f32 %v694, %v703
  %v766 = vadd.f32 %v695, %v703
  %v767 = vadd.f32 %v696, %v703
  %v768 = vadd.f32 %v697, %v703
  %v769 = vpack.c.bf16 %v706, %v705
  %v770 = vpack.c.bf16 %v708, %v707
  %v771 = vpack.c.bf16 %v710, %v709
  %v772 = vpack.c.bf16 %v712, %v711
  %v773 = vpack.c.bf16 %v714, %v713
  %v774 = vpack.c.bf16 %v716, %v715
  %v775 = vpack.c.bf16 %v718, %v717
  %v776 = vpack.c.bf16 %v720, %v719
  %v777 = vpack.c.bf16 %v722, %v721
  %v778 = vpack.c.bf16 %v724, %v723
  %v779 = vpack.c.bf16 %v726, %v725
  %v780 = vpack.c.bf16 %v728, %v727
  %v781 = vpack.c.bf16 %v730, %v729
  %v782 = vpack.c.bf16 %v732, %v731
  %v783 = vpack.c.bf16 %v734, %v733
  %v784 = vpack.c.bf16 %v736, %v735
  %v785 = vpack.c.bf16 %v738, %v737
  %v786 = vpack.c.bf16 %v740, %v739
  %v787 = vpack.c.bf16 %v742, %v741
  %v788 = vpack.c.bf16 %v744, %v743
  %v789 = vpack.c.bf16 %v746, %v745
  %v790 = vpack.c.bf16 %v748, %v747
  %v791 = vpack.c.bf16 %v750, %v749
  %v792 = vpack.c.bf16 %v752, %v751
  %v793 = vpack.c.bf16 %v754, %v753
  %v794 = vpack.c.bf16 %v756, %v755
  %v795 = vpack.c.bf16 %v758, %v757
  %v796 = vpack.c.bf16 %v760, %v759
  %v797 = vpack.c.bf16 %v762, %v761
  %v798 = vpack.c.bf16 %v764, %v763
  %v799 = vpack.c.bf16 %v766, %v765
  %v800 = vpack.c.bf16 %v768, %v767
  %v833 = vunpack.c.l.b16 %v769
  %v834 = vunpack.c.h.b16 %v769
  %v835 = vunpack.c.l.b16 %v770
  %v836 = vunpack.c.h.b16 %v770
  %v837 = vunpack.c.l.b16 %v771
  %v838 = vunpack.c.h.b16 %v771
  %v839 = vunpack.c.l.b16 %v772
  %v840 = vunpack.c.h.b16 %v772
  %v841 = vunpack.c.l.b16 %v773
  %v842 = vunpack.c.h.b16 %v773
  %v843 = vunpack.c.l.b16 %v774
  %v844 = vunpack.c.h.b16 %v774
  %v845 = vunpack.c.l.b16 %v775
  %v846 = vunpack.c.h.b16 %v775
  %v847 = vunpack.c.l.b16 %v776
  %v848 = vunpack.c.h.b16 %v776
  %v849 = vunpack.c.l.b16 %v777
  %v850 = vunpack.c.h.b16 %v777
  %v851 = vunpack.c.l.b16 %v778
  %v852 = vunpack.c.h.b16 %v778
  %v853 = vunpack.c.l.b16 %v779
  %v854 = vunpack.c.h.b16 %v779
  %v855 = vunpack.c.l.b16 %v780
  %v856 = vunpack.c.h.b16 %v780
  %v857 = vunpack.c.l.b16 %v781
  %v858 = vunpack.c.h.b16 %v781
  %v859 = vunpack.c.l.b16 %v782
  %v860 = vunpack.c.h.b16 %v782
  %v861 = vunpack.c.l.b16 %v783
  %v862 = vunpack.c.h.b16 %v783
  %v863 = vunpack.c.l.b16 %v784
  %v864 = vunpack.c.h.b16 %v784
  %v865 = vunpack.c.l.b16 %v785
  %v866 = vunpack.c.h.b16 %v785
  %v867 = vunpack.c.l.b16 %v786
  %v868 = vunpack.c.h.b16 %v786
  %v869 = vunpack.c.l.b16 %v787
  %v870 = vunpack.c.h.b16 %v787
  %v871 = vunpack.c.l.b16 %v788
  %v872 = vunpack.c.h.b16 %v788
  %v873 = vunpack.c.l.b16 %v789
  %v874 = vunpack.c.h.b16 %v789
  %v875 = vunpack.c.l.b16 %v790
  %v876 = vunpack.c.h.b16 %v790
  %v877 = vunpack.c.l.b16 %v791
  %v878 = vunpack.c.h.b16 %v791
  %v879 = vunpack.c.l.b16 %v792
  %v880 = vunpack.c.h.b16 %v792
  %v881 = vunpack.c.l.b16 %v793
  %v882 = vunpack.c.h.b16 %v793
  %v883 = vunpack.c.l.b16 %v794
  %v884 = vunpack.c.h.b16 %v794
  %v885 = vunpack.c.l.b16 %v795
  %v886 = vunpack.c.h.b16 %v795
  %v887 = vunpack.c.l.b16 %v796
  %v888 = vunpack.c.h.b16 %v796
  %v889 = vunpack.c.l.b16 %v797
  %v890 = vunpack.c.h.b16 %v797
  %v891 = vunpack.c.l.b16 %v798
  %v892 = vunpack.c.h.b16 %v798
  %v893 = vunpack.c.l.b16 %v799
  %v894 = vunpack.c.h.b16 %v799
  %v895 = vunpack.c.l.b16 %v800
  %v896 = vunpack.c.h.b16 %v800
  %v897 = vpack.c.b16 %v833, %v833
  %v898 = vpack.c.b16 %v834, %v834
  %v899 = vpack.c.b16 %v835, %v835
  %v900 = vpack.c.b16 %v836, %v836
  %v901 = vpack.c.b16 %v837, %v837
  %v902 = vpack.c.b16 %v838, %v838
  %v903 = vpack.c.b16 %v839, %v839
  %v904 = vpack.c.b16 %v840, %v840
  %v905 = vpack.c.b16 %v841, %v841
  %v906 = vpack.c.b16 %v842, %v842
  %v907 = vpack.c.b16 %v843, %v843
  %v908 = vpack.c.b16 %v844, %v844
  %v909 = vpack.c.b16 %v845, %v845
  %v910 = vpack.c.b16 %v846, %v846
  %v911 = vpack.c.b16 %v847, %v847
  %v912 = vpack.c.b16 %v848, %v848
  %v913 = vpack.c.b16 %v849, %v849
  %v914 = vpack.c.b16 %v850, %v850
  %v915 = vpack.c.b16 %v851, %v851
  %v916 = vpack.c.b16 %v852, %v852
  %v917 = vpack.c.b16 %v853, %v853
  %v918 = vpack.c.b16 %v854, %v854
  %v919 = vpack.c.b16 %v855, %v855
  %v920 = vpack.c.b16 %v856, %v856
  %v921 = vpack.c.b16 %v857, %v857
  %v922 = vpack.c.b16 %v858, %v858
  %v923 = vpack.c.b16 %v859, %v859
  %v924 = vpack.c.b16 %v860, %v860
  %v925 = vpack.c.b16 %v861, %v861
  %v926 = vpack.c.b16 %v862, %v862
  %v927 = vpack.c.b16 %v863, %v863
  %v928 = vpack.c.b16 %v864, %v864
  %v929 = vpack.c.b16 %v865, %v865
  %v930 = vpack.c.b16 %v866, %v866
  %v931 = vpack.c.b16 %v867, %v867
  %v932 = vpack.c.b16 %v868, %v868
  %v933 = vpack.c.b16 %v869, %v869
  %v934 = vpack.c.b16 %v870, %v870
  %v935 = vpack.c.b16 %v871, %v871
  %v936 = vpack.c.b16 %v872, %v872
  %v937 = vpack.c.b16 %v873, %v873
  %v938 = vpack.c.b16 %v874, %v874
  %v939 = vpack.c.b16 %v875, %v875
  %v940 = vpack.c.b16 %v876, %v876
  %v941 = vpack.c.b16 %v877, %v877
  %v942 = vpack.c.b16 %v878, %v878
  %v943 = vpack.c.b16 %v879, %v879
  %v944 = vpack.c.b16 %v880, %v880
  %v945 = vpack.c.b16 %v881, %v881
  %v946 = vpack.c.b16 %v882, %v882
  %v947 = vpack.c.b16 %v883, %v883
  %v948 = vpack.c.b16 %v884, %v884
  %v949 = vpack.c.b16 %v885, %v885
  %v950 = vpack.c.b16 %v886, %v886
  %v951 = vpack.c.b16 %v887, %v887
  %v952 = vpack.c.b16 %v888, %v888
  %v953 = vpack.c.b16 %v889, %v889
  %v954 = vpack.c.b16 %v890, %v890
  %v955 = vpack.c.b16 %v891, %v891
  %v956 = vpack.c.b16 %v892, %v892
  %v957 = vpack.c.b16 %v893, %v893
  %v958 = vpack.c.b16 %v894, %v894
  %v959 = vpack.c.b16 %v895, %v895
  %v960 = vpack.c.b16 %v896, %v896
  %1025 = vst [vmem:[%s4] sm:$0xf] %v897
  %1026 = vst [vmem:[%s4 + $0x4] sm:$0xf] %v898
  %1027 = vst [vmem:[%s4 + $0x8] sm:$0xf] %v899
  %1028 = vst [vmem:[%s4 + $0xc] sm:$0xf] %v900
  %1029 = vst [vmem:[%s4 + $0x10] sm:$0xf] %v901
  %1030 = vst [vmem:[%s4 + $0x14] sm:$0xf] %v902
  %1031 = vst [vmem:[%s4 + $0x18] sm:$0xf] %v903
  %1032 = vst [vmem:[%s4 + $0x1c] sm:$0xf] %v904
  %1033 = vst [vmem:[%s4 + $0x20] sm:$0xf] %v905
  %1034 = vst [vmem:[%s4 + $0x24] sm:$0xf] %v906
  %1035 = vst [vmem:[%s4 + $0x28] sm:$0xf] %v907
  %1036 = vst [vmem:[%s4 + $0x2c] sm:$0xf] %v908
  %1037 = vst [vmem:[%s4 + $0x30] sm:$0xf] %v909
  %1038 = vst [vmem:[%s4 + $0x34] sm:$0xf] %v910
  %1039 = vst [vmem:[%s4 + $0x38] sm:$0xf] %v911
  %1040 = vst [vmem:[%s4 + $0x3c] sm:$0xf] %v912
  %1041 = vst [vmem:[%s4 + $0x40] sm:$0xf] %v913
  %1042 = vst [vmem:[%s4 + $0x44] sm:$0xf] %v914
  %1043 = vst [vmem:[%s4 + $0x48] sm:$0xf] %v915
  %1044 = vst [vmem:[%s4 + $0x4c] sm:$0xf] %v916
  %1045 = vst [vmem:[%s4 + $0x50] sm:$0xf] %v917
  %1046 = vst [vmem:[%s4 + $0x54] sm:$0xf] %v918
  %1047 = vst [vmem:[%s4 + $0x58] sm:$0xf] %v919
  %1048 = vst [vmem:[%s4 + $0x5c] sm:$0xf] %v920
  %1049 = vst [vmem:[%s4 + $0x60] sm:$0xf] %v921
  %1050 = vst [vmem:[%s4 + $0x64] sm:$0xf] %v922
  %1051 = vst [vmem:[%s4 + $0x68] sm:$0xf] %v923
  %1052 = vst [vmem:[%s4 + $0x6c] sm:$0xf] %v924
  %1053 = vst [vmem:[%s4 + $0x70] sm:$0xf] %v925
  %1054 = vst [vmem:[%s4 + $0x74] sm:$0xf] %v926
  %1055 = vst [vmem:[%s4 + $0x78] sm:$0xf] %v927
  %1056 = vst [vmem:[%s4 + $0x7c] sm:$0xf] %v928
  %1057 = vst [vmem:[%s4 + $0x80] sm:$0xf] %v929
  %1058 = vst [vmem:[%s4 + $0x84] sm:$0xf] %v930
  %1059 = vst [vmem:[%s4 + $0x88] sm:$0xf] %v931
  %1060 = vst [vmem:[%s4 + $0x8c] sm:$0xf] %v932
  %1061 = vst [vmem:[%s4 + $0x90] sm:$0xf] %v933
  %1062 = vst [vmem:[%s4 + $0x94] sm:$0xf] %v934
  %1063 = vst [vmem:[%s4 + $0x98] sm:$0xf] %v935
  %1064 = vst [vmem:[%s4 + $0x9c] sm:$0xf] %v936
  %1065 = vst [vmem:[%s4 + $0xa0] sm:$0xf] %v937
  %1066 = vst [vmem:[%s4 + $0xa4] sm:$0xf] %v938
  %1067 = vst [vmem:[%s4 + $0xa8] sm:$0xf] %v939
  %1068 = vst [vmem:[%s4 + $0xac] sm:$0xf] %v940
  %1069 = vst [vmem:[%s4 + $0xb0] sm:$0xf] %v941
  %1070 = vst [vmem:[%s4 + $0xb4] sm:$0xf] %v942
  %1071 = vst [vmem:[%s4 + $0xb8] sm:$0xf] %v943
  %1072 = vst [vmem:[%s4 + $0xbc] sm:$0xf] %v944
  %1073 = vst [vmem:[%s4 + $0xc0] sm:$0xf] %v945
  %1074 = vst [vmem:[%s4 + $0xc4] sm:$0xf] %v946
  %1075 = vst [vmem:[%s4 + $0xc8] sm:$0xf] %v947
  %1076 = vst [vmem:[%s4 + $0xcc] sm:$0xf] %v948
  %1077 = vst [vmem:[%s4 + $0xd0] sm:$0xf] %v949
  %1078 = vst [vmem:[%s4 + $0xd4] sm:$0xf] %v950
  %1079 = vst [vmem:[%s4 + $0xd8] sm:$0xf] %v951
  %1080 = vst [vmem:[%s4 + $0xdc] sm:$0xf] %v952
  %1081 = vst [vmem:[%s4 + $0xe0] sm:$0xf] %v953
  %1082 = vst [vmem:[%s4 + $0xe4] sm:$0xf] %v954
  %1083 = vst [vmem:[%s4 + $0xe8] sm:$0xf] %v955
  %1084 = vst [vmem:[%s4 + $0xec] sm:$0xf] %v956
  %1085 = vst [vmem:[%s4 + $0xf0] sm:$0xf] %v957
  %1086 = vst [vmem:[%s4 + $0xf4] sm:$0xf] %v958
  %1087 = vst [vmem:[%s4 + $0xf8] sm:$0xf] %v959
  %1088 = vst [vmem:[%s4 + $0xfc] sm:$0xf] %v960
  // Predicated region
  $region18: #{_lambda_.14} parent=0 // pred_check
    _
  $region19: #{_lambda_.14} parent=0 // pred_check_branch
    %1090 = sbr.rel (0) target = $region21
  $region20: #{_lambda_.14} parent=0 // pred_region
    _
  $region21: #{_lambda_.14} parent=0 // pred_fallthru
    _
  // Predicated region
  $region22: #{_lambda_.14} parent=0 // pred_check
    _
  $region23: #{_lambda_.14} parent=0 // pred_check_branch
    %1092 = sbr.rel (0) target = $region25
  $region24: #{_lambda_.14} parent=0 // pred_region
    _
  $region25: #{_lambda_.14} parent=0 // pred_fallthru
    _

// kernel: _lambda_.15
$region0: #{_lambda_.15}
  #allocation0 [shape = 'u32[]', space=smem, size = 0x4, offset = 0x4, fixed_abs, tag = 'smem constant byte address 0x4 - core index']
  #allocation1 [shape = 'u32[144,128]{1,0:T(1,128)}', space=vmem, size = 0x12000, scoped, tag = 'internal scratch']
  %s0 = inlined_call_operand.vmem [shape: bf16[2,33,16,128], index: 0, kind: input, shape index: {}]
  %s1 = inlined_call_operand.vmem [shape: bf16[3,128,128], index: 1, kind: input, shape index: {}]
  %s2 = inlined_call_operand.vmem [shape: f32[1,128], index: 2, kind: input, shape index: {}]
  %s3 = inlined_call_operand.vmem [shape: f32[1,128], index: 3, kind: input, shape index: {}]
  %s4 = inlined_call_operand.vmem [shape: bf16[2,16,16,128], index: 4, kind: output, shape index: {}]
  %s5 = sld [smem:[#allocation0]]
  $region49: #{_lambda_.15} parent=0
    _
  %s7 = ssub.s32 1, %s5
  %s8 = scalar_select 0, %s7, %s5
  loop: start=0, step=1, limit=4
  $region2: #{_lambda_.15} parent=0 // loop_pre_header
    _
  $region3: #{_lambda_.15} parent=0 // loop_header
    %s10 = sphi 0, %s14
    %p11 = scmp.ge.s32.totalorder %s10, 4
    %s17 = sphi 0, %s29
    %s18 = sphi 0, %s25
    %s19 = sphi 0, %s17
    %s20 = sphi 0, %s18
    %s21 = sphi 0, %s19
    %s22 = sphi 0, %s20
    %s32 = sphi 0, %s34
    %s35 = sphi 0, %s32
    %s36 = sphi 0, %s35
    %s52 = sphi 0, %s36
    %s56 = sphi 0, %s56
    %s58 = sphi 0, %s56
    %s59 = sphi 0, %s58
    %s73 = sphi 0, %s59
    %s77 = sphi 0, %s77
    %s79 = sphi 0, %s77
    %s80 = sphi 0, %s79
    %s94 = sphi 0, %s80
    %s98 = sphi 0, %s98
    %s100 = sphi 0, %s98
    %s101 = sphi 0, %s100
    %s115 = sphi 0, %s101
    %s123 = sphi 0, %s125
    %s126 = sphi 0, %s123
    %s127 = sphi 0, %s126
    %s143 = sphi 0, %s127
  $region4: #{_lambda_.15} parent=0 // loop_header_branch
    %13 = sbr.rel (%p11) target = $region8
  $region5: #{_lambda_.15} parent=0 // loop_body
    %s15 = ssub.s32 %s10, 1
    %s16 = ssub.s32 %s10, 2
    %s23 = sadd.s32 1, %s18
    %p24 = scmp.ge.s32.totalorder %s23, 1
    %s25 = scalar_select %p24, 0, %s23
    %s26 = sadd.s32 1, %s17
    %s27 = scalar_select %p24, %s26, %s17
    %p28 = scmp.ge.s32.totalorder %s27, 2
    %s29 = scalar_select %p28, 0, %s27
    %s30 = ssub.s32 %s17, %s29
    %p31 = scmp.eq.s32.totalorder %s30, 0
    %s33 = sadd.s32 %s32, 1
    %s34 = scalar_select %p31, %s32, %s33
    %p37 = pneg %p31
    %p38 = scmp.eq.s32.totalorder %s10, 1
    %p39 = por %p37, %p38
    %p40 = scmp.ne.s32.totalorder %s32, %s35
    %p41 = scmp.eq.s32.totalorder %s10, 0
    %p42 = por %p40, %p41
    %p43 = scmp.ne.s32.totalorder %s32, %s35
    %p44 = scmp.eq.s32.totalorder %s15, 1
    %p45 = por %p43, %p44
    %p46 = scmp.ne.s32.totalorder %s35, %s36
    %p47 = scmp.eq.s32.totalorder %s15, 0
    %p48 = por %p46, %p47
    %p49 = scmp.ne.s32.totalorder %s35, %s36
    %p50 = scmp.eq.s32.totalorder %s16, 1
    %p51 = por %p49, %p50
    %p53 = scmp.ne.s32.totalorder %s36, %s52
    %p54 = scmp.eq.s32.totalorder %s16, 0
    %p55 = por %p53, %p54
    %s57 = sadd.s32 %s56, 1
    %p60 = scmp.eq.s32.totalorder %s10, 1
    %p61 = scmp.ne.s32.totalorder %s56, %s58
    %p62 = scmp.eq.s32.totalorder %s10, 0
    %p63 = por %p61, %p62
    %p64 = scmp.ne.s32.totalorder %s56, %s58
    %p65 = scmp.eq.s32.totalorder %s15, 1
    %p66 = por %p64, %p65
    %p67 = scmp.ne.s32.totalorder %s58, %s59
    %p68 = scmp.eq.s32.totalorder %s15, 0
    %p69 = por %p67, %p68
    %p70 = scmp.ne.s32.totalorder %s58, %s59
    %p71 = scmp.eq.s32.totalorder %s16, 1
    %p72 = por %p70, %p71
    %p74 = scmp.ne.s32.totalorder %s59, %s73
    %p75 = scmp.eq.s32.totalorder %s16, 0
    %p76 = por %p74, %p75
    %s78 = sadd.s32 %s77, 1
    %p81 = scmp.eq.s32.totalorder %s10, 1
    %p82 = scmp.ne.s32.totalorder %s77, %s79
    %p83 = scmp.eq.s32.totalorder %s10, 0
    %p84 = por %p82, %p83
    %p85 = scmp.ne.s32.totalorder %s77, %s79
    %p86 = scmp.eq.s32.totalorder %s15, 1
    %p87 = por %p85, %p86
    %p88 = scmp.ne.s32.totalorder %s79, %s80
    %p89 = scmp.eq.s32.totalorder %s15, 0
    %p90 = por %p88, %p89
    %p91 = scmp.ne.s32.totalorder %s79, %s80
    %p92 = scmp.eq.s32.totalorder %s16, 1
    %p93 = por %p91, %p92
    %p95 = scmp.ne.s32.totalorder %s80, %s94
    %p96 = scmp.eq.s32.totalorder %s16, 0
    %p97 = por %p95, %p96
    %s99 = sadd.s32 %s98, 1
    %p102 = scmp.eq.s32.totalorder %s10, 1
    %p103 = scmp.ne.s32.totalorder %s98, %s100
    %p104 = scmp.eq.s32.totalorder %s10, 0
    %p105 = por %p103, %p104
    %p106 = scmp.ne.s32.totalorder %s98, %s100
    %p107 = scmp.eq.s32.totalorder %s15, 1
    %p108 = por %p106, %p107
    %p109 = scmp.ne.s32.totalorder %s100, %s101
    %p110 = scmp.eq.s32.totalorder %s15, 0
    %p111 = por %p109, %p110
    %p112 = scmp.ne.s32.totalorder %s100, %s101
    %p113 = scmp.eq.s32.totalorder %s16, 1
    %p114 = por %p112, %p113
    %p116 = scmp.ne.s32.totalorder %s101, %s115
    %p117 = scmp.eq.s32.totalorder %s16, 0
    %p118 = por %p116, %p117
    %s119 = ssub.s32 %s17, %s29
    %s120 = ssub.s32 %s18, %s25
    %s121 = sor.u32 %s119, %s120
    %p122 = scmp.eq.s32.totalorder %s121, 0
    %s124 = sadd.s32 %s123, 1
    %s125 = scalar_select %p122, %s123, %s124
    %p128 = pneg %p122
    %p129 = scmp.eq.s32.totalorder %s10, 1
    %p130 = por %p128, %p129
    %p131 = scmp.ne.s32.totalorder %s123, %s126
    %p132 = scmp.eq.s32.totalorder %s10, 0
    %p133 = por %p131, %p132
    %p134 = scmp.ne.s32.totalorder %s123, %s126
    %p135 = scmp.eq.s32.totalorder %s15, 1
    %p136 = por %p134, %p135
    %p137 = scmp.ne.s32.totalorder %s126, %s127
    %p138 = scmp.eq.s32.totalorder %s15, 0
    %p139 = por %p137, %p138
    %p140 = scmp.ne.s32.totalorder %s126, %s127
    %p141 = scmp.eq.s32.totalorder %s16, 1
    %p142 = por %p140, %p141
    %p144 = scmp.ne.s32.totalorder %s127, %s143
    %p145 = scmp.eq.s32.totalorder %s16, 0
    %p146 = por %p144, %p145
    %p147 = scmp.le.s32.totalorder 1, %s10
    %p148 = scmp.lt.s32.totalorder %s10, 3
    %p149 = pnand %p147, %p148
    %p150 = pneg %p149
    // Predicated region
    $region9: #{_lambda_.15} parent=5 // pred_check
      _
    $region10: #{_lambda_.15} parent=5 // pred_check_branch
      %152 = sbr.rel (%p149) target = $region12
    $region11: #{_lambda_.15} parent=5 // pred_region
      %s153 = ssub.s32 %s10, 1
      // Predicated region
      $region13: #{_lambda_.15} parent=11 // pred_check
        %p154 = pneg %p69
      $region14: #{_lambda_.15} parent=11 // pred_check_branch
        %156 = sbr.rel (%p154) target = $region16
      $region15: #{_lambda_.15} parent=11 // pred_region
        _
      $region16: #{_lambda_.15} parent=11 // pred_fallthru
        _
      // Predicated region
      $region17: #{_lambda_.15} parent=11 // pred_check
        %p157 = pneg %p90
      $region18: #{_lambda_.15} parent=11 // pred_check_branch
        %159 = sbr.rel (%p157) target = $region20
      $region19: #{_lambda_.15} parent=11 // pred_region
        _
      $region20: #{_lambda_.15} parent=11 // pred_fallthru
        _
      // Predicated region
      $region21: #{_lambda_.15} parent=11 // pred_check
        %p160 = pneg %p111
      $region22: #{_lambda_.15} parent=11 // pred_check_branch
        %162 = sbr.rel (%p160) target = $region24
      $region23: #{_lambda_.15} parent=11 // pred_region
        _
      $region24: #{_lambda_.15} parent=11 // pred_fallthru
        _
    $region12: #{_lambda_.15} parent=5 // pred_fallthru
      _
    %p163 = scmp.lt.s32.totalorder %s10, 2
    // Predicated region
    $region25: #{_lambda_.15} parent=5 // pred_check
      %p164 = pneg %p163
    $region26: #{_lambda_.15} parent=5 // pred_check_branch
      %166 = sbr.rel (%p164) target = $region28
    $region27: #{_lambda_.15} parent=5 // pred_region
      // Predicated region
      $region29: #{_lambda_.15} parent=27 // pred_check
        %p167 = pneg %p42
      $region30: #{_lambda_.15} parent=27 // pred_check_branch
        %169 = sbr.rel (%p167) target = $region32
      $region31: #{_lambda_.15} parent=27 // pred_region
        %p170 = scmp.lt.s32.totalorder %s17, 1
        %s171 = scalar_select %p170, %s17, 1
        %s172 = smul.addr %s171, 66
        %s173 = smul.addr %s172, 4
        %s174 = scalar_lea.vmem %s0, %s173
      $region32: #{_lambda_.15} parent=27 // pred_fallthru
        _
    $region28: #{_lambda_.15} parent=5 // pred_fallthru
      _
    %p175 = scmp.le.s32.totalorder 1, %s10
    %p176 = scmp.lt.s32.totalorder %s10, 3
    %p177 = pnand %p175, %p176
    %p178 = pneg %p177
    // Predicated region
    $region33: #{_lambda_.15} parent=5 // pred_check
      _
    $region34: #{_lambda_.15} parent=5 // pred_check_branch
      %180 = sbr.rel (%p177) target = $region36
    $region35: #{_lambda_.15} parent=5 // pred_region
      %s181 = ssub.s32 %s10, 1
      %p182 = scmp.lt.s32.totalorder %s19, 1
      %s183 = scalar_select %p182, %s19, 1
      %s184 = smul.addr %s183, 66
      %s185 = smul.addr %s184, 4
      %s186 = scalar_lea.vmem %s0, %s185
      %p187 = pneg %p48
      %p188 = pneg %p45
      %p189 = pneg %p69
      %p190 = pneg %p66
      %p191 = pneg %p90
      %p192 = pneg %p87
      %p193 = pneg %p111
      %p194 = pneg %p108
      %p195 = pneg %p139
      %p196 = pneg %p136
      %s197 = smul.u32 16, %s20
      %p198 = scmp.lt.s32.totalorder %s19, 1
      %s199 = scalar_select %p198, %s19, 1
      %p200 = scmp.lt.s32.totalorder %s197, 15
      %s201 = scalar_select %p200, %s197, 15
      %s202 = smul.addr %s201, 2
      %s203 = smul.addr %s199, 32
      %s204 = sadd.s32 %s202, %s203
      %s205 = smul.addr %s204, 4
      %s206 = scalar_lea.vmem %s4, %s205
      %p207 = scmp.lt.s32.totalorder %s19, 1
      %s208 = scalar_select %p207, %s19, 1
      %s209 = smul.addr %s208, 66
      %s210 = smul.addr %s209, 4
      %s211 = scalar_lea.vmem %s0, %s210
      %s212 = smul.u32 16, %s20
      %p213 = scmp.lt.s32.totalorder %s19, 1
      %s214 = scalar_select %p213, %s19, 1
      %p215 = scmp.lt.s32.totalorder %s212, 15
      %s216 = scalar_select %p215, %s212, 15
      %s217 = smul.addr %s216, 2
      %s218 = smul.addr %s214, 32
      %s219 = sadd.s32 %s217, %s218
      %s220 = smul.addr %s219, 4
      %s221 = scalar_lea.vmem %s4, %s220
      %s222 = smul.u32 16, %s20
      %s224 = smul.u32 %s20, 16
      %s225 = smul.u32 %s224, 2
      %s226 = smul.addr %s225, 4
      %s227 = scalar_lea.vmem %s211, %s226
      %v228 = vld [vmem:[%s227] sm:$0xf]
      %v229 = vld [vmem:[%s227 + $0x4] sm:$0xf]
      %v230 = vld [vmem:[%s227 + $0x8] sm:$0xf]
      %v231 = vld [vmem:[%s227 + $0xc] sm:$0xf]
      %v232 = vld [vmem:[%s227 + $0x10] sm:$0xf]
      %v233 = vld [vmem:[%s227 + $0x14] sm:$0xf]
      %v234 = vld [vmem:[%s227 + $0x18] sm:$0xf]
      %v235 = vld [vmem:[%s227 + $0x1c] sm:$0xf]
      %v236 = vld [vmem:[%s227 + $0x20] sm:$0xf]
      %v237 = vld [vmem:[%s227 + $0x24] sm:$0xf]
      %v238 = vld [vmem:[%s227 + $0x28] sm:$0xf]
      %v239 = vld [vmem:[%s227 + $0x2c] sm:$0xf]
      %v240 = vld [vmem:[%s227 + $0x30] sm:$0xf]
      %v241 = vld [vmem:[%s227 + $0x34] sm:$0xf]
      %v242 = vld [vmem:[%s227 + $0x38] sm:$0xf]
      %v243 = vld [vmem:[%s227 + $0x3c] sm:$0xf]
      %v244 = vld [vmem:[%s227 + $0x40] sm:$0xf]
      %v245 = vld [vmem:[%s227 + $0x44] sm:$0xf]
      %v246 = vld [vmem:[%s227 + $0x48] sm:$0xf]
      %v247 = vld [vmem:[%s227 + $0x4c] sm:$0xf]
      %v248 = vld [vmem:[%s227 + $0x50] sm:$0xf]
      %v249 = vld [vmem:[%s227 + $0x54] sm:$0xf]
      %v250 = vld [vmem:[%s227 + $0x58] sm:$0xf]
      %v251 = vld [vmem:[%s227 + $0x5c] sm:$0xf]
      %v252 = vld [vmem:[%s227 + $0x60] sm:$0xf]
      %v253 = vld [vmem:[%s227 + $0x64] sm:$0xf]
      %v254 = vld [vmem:[%s227 + $0x68] sm:$0xf]
      %v255 = vld [vmem:[%s227 + $0x6c] sm:$0xf]
      %v256 = vld [vmem:[%s227 + $0x70] sm:$0xf]
      %v257 = vld [vmem:[%s227 + $0x74] sm:$0xf]
      %v258 = vld [vmem:[%s227 + $0x78] sm:$0xf]
      %v259 = vld [vmem:[%s227 + $0x7c] sm:$0xf]
      %v260 = vld [vmem:[%s1] sm:$0xf]
      %v261 = vld [vmem:[%s1 + $0x4] sm:$0xf]
      %v262 = vld [vmem:[%s1 + $0x8] sm:$0xf]
      %v263 = vld [vmem:[%s1 + $0xc] sm:$0xf]
      %v264 = vld [vmem:[%s1 + $0x10] sm:$0xf]
      %v265 = vld [vmem:[%s1 + $0x14] sm:$0xf]
      %v266 = vld [vmem:[%s1 + $0x18] sm:$0xf]
      %v267 = vld [vmem:[%s1 + $0x1c] sm:$0xf]
      %v268 = vld [vmem:[%s1 + $0x20] sm:$0xf]
      %v269 = vld [vmem:[%s1 + $0x24] sm:$0xf]
      %v270 = vld [vmem:[%s1 + $0x28] sm:$0xf]
      %v271 = vld [vmem:[%s1 + $0x2c] sm:$0xf]
      %v272 = vld [vmem:[%s1 + $0x30] sm:$0xf]
      %v273 = vld [vmem:[%s1 + $0x34] sm:$0xf]
      %v274 = vld [vmem:[%s1 + $0x38] sm:$0xf]
      %v275 = vld [vmem:[%s1 + $0x3c] sm:$0xf]
      %s276 = sadd.s32 %s224, 17
      %s277 = smul.u32 %s276, 2
      %s278 = smul.addr %s277, 4
      %s279 = scalar_lea.vmem %s211, %s278
      %v280 = vld [vmem:[%s279] sm:$0xf]
      %v281 = vld [vmem:[%s279 + $0x4] sm:$0xf]
      %v282 = vld [vmem:[%s279 + $0x8] sm:$0xf]
      %v283 = vld [vmem:[%s279 + $0xc] sm:$0xf]
      %v284 = vld [vmem:[%s279 + $0x10] sm:$0xf]
      %v285 = vld [vmem:[%s279 + $0x14] sm:$0xf]
      %v286 = vld [vmem:[%s279 + $0x18] sm:$0xf]
      %v287 = vld [vmem:[%s279 + $0x1c] sm:$0xf]
      %v288 = vld [vmem:[%s279 + $0x20] sm:$0xf]
      %v289 = vld [vmem:[%s279 + $0x24] sm:$0xf]
      %v290 = vld [vmem:[%s279 + $0x28] sm:$0xf]
      %v291 = vld [vmem:[%s279 + $0x2c] sm:$0xf]
      %v292 = vld [vmem:[%s279 + $0x30] sm:$0xf]
      %v293 = vld [vmem:[%s279 + $0x34] sm:$0xf]
      %v294 = vld [vmem:[%s279 + $0x38] sm:$0xf]
      %v295 = vld [vmem:[%s279 + $0x3c] sm:$0xf]
      %v296 = vld [vmem:[%s279 + $0x40] sm:$0xf]
      %v297 = vld [vmem:[%s279 + $0x44] sm:$0xf]
      %v298 = vld [vmem:[%s279 + $0x48] sm:$0xf]
      %v299 = vld [vmem:[%s279 + $0x4c] sm:$0xf]
      %v300 = vld [vmem:[%s279 + $0x50] sm:$0xf]
      %v301 = vld [vmem:[%s279 + $0x54] sm:$0xf]
      %v302 = vld [vmem:[%s279 + $0x58] sm:$0xf]
      %v303 = vld [vmem:[%s279 + $0x5c] sm:$0xf]
      %v304 = vld [vmem:[%s279 + $0x60] sm:$0xf]
      %v305 = vld [vmem:[%s279 + $0x64] sm:$0xf]
      %v306 = vld [vmem:[%s279 + $0x68] sm:$0xf]
      %v307 = vld [vmem:[%s279 + $0x6c] sm:$0xf]
      %v308 = vld [vmem:[%s279 + $0x70] sm:$0xf]
      %v309 = vld [vmem:[%s279 + $0x74] sm:$0xf]
      %v310 = vld [vmem:[%s279 + $0x78] sm:$0xf]
      %v311 = vld [vmem:[%s279 + $0x7c] sm:$0xf]
      %s312 = scalar_lea.vmem %s1, 64
      %v313 = vld [vmem:[%s312] sm:$0xf]
      %v314 = vld [vmem:[%s312 + $0x4] sm:$0xf]
      %v315 = vld [vmem:[%s312 + $0x8] sm:$0xf]
      %v316 = vld [vmem:[%s312 + $0xc] sm:$0xf]
      %v317 = vld [vmem:[%s312 + $0x10] sm:$0xf]
      %v318 = vld [vmem:[%s312 + $0x14] sm:$0xf]
      %v319 = vld [vmem:[%s312 + $0x18] sm:$0xf]
      %v320 = vld [vmem:[%s312 + $0x1c] sm:$0xf]
      %v321 = vld [vmem:[%s312 + $0x20] sm:$0xf]
      %v322 = vld [vmem:[%s312 + $0x24] sm:$0xf]
      %v323 = vld [vmem:[%s312 + $0x28] sm:$0xf]
      %v324 = vld [vmem:[%s312 + $0x2c] sm:$0xf]
      %v325 = vld [vmem:[%s312 + $0x30] sm:$0xf]
      %v326 = vld [vmem:[%s312 + $0x34] sm:$0xf]
      %v327 = vld [vmem:[%s312 + $0x38] sm:$0xf]
      %v328 = vld [vmem:[%s312 + $0x3c] sm:$0xf]
      %v361 = vunpack.c.l.b16 %v280
      %v362 = vunpack.c.l.b16 %v281
      %v363 = vunpack.c.l.b16 %v282
      %v364 = vunpack.c.l.b16 %v283
      %v365 = vunpack.c.l.b16 %v284
      %v366 = vunpack.c.l.b16 %v285
      %v367 = vunpack.c.l.b16 %v286
      %v368 = vunpack.c.l.b16 %v287
      %v369 = vunpack.c.l.b16 %v288
      %v370 = vunpack.c.l.b16 %v289
      %v371 = vunpack.c.l.b16 %v290
      %v372 = vunpack.c.l.b16 %v291
      %v373 = vunpack.c.l.b16 %v292
      %v374 = vunpack.c.l.b16 %v293
      %v375 = vunpack.c.l.b16 %v294
      %v376 = vunpack.c.l.b16 %v295
      %v377 = vunpack.c.l.b16 %v296
      %v378 = vunpack.c.l.b16 %v297
      %v379 = vunpack.c.l.b16 %v298
      %v380 = vunpack.c.l.b16 %v299
      %v381 = vunpack.c.l.b16 %v300
      %v382 = vunpack.c.l.b16 %v301
      %v383 = vunpack.c.l.b16 %v302
      %v384 = vunpack.c.l.b16 %v303
      %v385 = vunpack.c.l.b16 %v304
      %v386 = vunpack.c.l.b16 %v305
      %v387 = vunpack.c.l.b16 %v306
      %v388 = vunpack.c.l.b16 %v307
      %v389 = vunpack.c.l.b16 %v308
      %v390 = vunpack.c.l.b16 %v309
      %v391 = vunpack.c.l.b16 %v310
      %v392 = vunpack.c.l.b16 %v311
      %v393 = vpack.c.b16 %v362, %v361
      %v394 = vpack.c.b16 %v364, %v363
      %v395 = vpack.c.b16 %v366, %v365
      %v396 = vpack.c.b16 %v368, %v367
      %v397 = vpack.c.b16 %v370, %v369
      %v398 = vpack.c.b16 %v372, %v371
      %v399 = vpack.c.b16 %v374, %v373
      %v400 = vpack.c.b16 %v376, %v375
      %v401 = vpack.c.b16 %v378, %v377
      %v402 = vpack.c.b16 %v380, %v379
      %v403 = vpack.c.b16 %v382, %v381
      %v404 = vpack.c.b16 %v384, %v383
      %v405 = vpack.c.b16 %v386, %v385
      %v406 = vpack.c.b16 %v388, %v387
      %v407 = vpack.c.b16 %v390, %v389
      %v408 = vpack.c.b16 %v392, %v391
      %v441 = vunpack.c.l.b16 %v313
      %v442 = vunpack.c.l.b16 %v314
      %v443 = vunpack.c.l.b16 %v315
      %v444 = vunpack.c.l.b16 %v316
      %v445 = vunpack.c.l.b16 %v317
      %v446 = vunpack.c.l.b16 %v318
      %v447 = vunpack.c.l.b16 %v319
      %v448 = vunpack.c.l.b16 %v320
      %v449 = vunpack.c.l.b16 %v321
      %v450 = vunpack.c.l.b16 %v322
      %v451 = vunpack.c.l.b16 %v323
      %v452 = vunpack.c.l.b16 %v324
      %v453 = vunpack.c.l.b16 %v325
      %v454 = vunpack.c.l.b16 %v326
      %v455 = vunpack.c.l.b16 %v327
      %v456 = vunpack.c.l.b16 %v328
      %v457 = vpack.c.b16 %v442, %v441
      %v458 = vpack.c.b16 %v444, %v443
      %v459 = vpack.c.b16 %v446, %v445
      %v460 = vpack.c.b16 %v448, %v447
      %v461 = vpack.c.b16 %v450, %v449
      %v462 = vpack.c.b16 %v452, %v451
      %v463 = vpack.c.b16 %v454, %v453
      %v464 = vpack.c.b16 %v456, %v455
      %473 = vmatprep.subr.bf16.mxu0 0
      %474 = vmatpush1.bf16.msra.mxu0 %v464
      %475 = vmatprep.subr.bf16.mxu0 0
      %476 = vmatpush1.bf16.msra.mxu0 %v463
      %477 = vmatprep.subr.bf16.mxu0 0
      %478 = vmatpush1.bf16.msra.mxu0 %v462
      %479 = vmatprep.subr.bf16.mxu0 0
      %480 = vmatpush1.bf16.msra.mxu0 %v461
      %481 = vmatprep.subr.bf16.mxu0 0
      %482 = vmatpush1.bf16.msra.mxu0 %v460
      %483 = vmatprep.subr.bf16.mxu0 0
      %484 = vmatpush1.bf16.msra.mxu0 %v459
      %485 = vmatprep.subr.bf16.mxu0 0
      %486 = vmatpush1.bf16.msra.mxu0 %v458
      %487 = vmatprep.subr.bf16.mxu0 0
      %488 = vmatpush1.bf16.msra.mxu0 %v457
      %489 = vmatprep.subr.bf16.mxu0 0
      %490 = vmatpush2.bf16.msra.mxu0 0
      %491 = vmatprep.subr.bf16.mxu0 0
      %492 = vmatpush2.bf16.msra.mxu0 0
      %493 = vmatprep.subr.bf16.mxu0 0
      %494 = vmatpush2.bf16.msra.mxu0 0
      %495 = vmatprep.subr.bf16.mxu0 0
      %496 = vmatpush2.bf16.msra.mxu0 0
      %497 = vmatprep.subr.bf16.mxu0 0
      %498 = vmatpush2.bf16.msra.mxu0 0
      %499 = vmatprep.subr.bf16.mxu0 0
      %500 = vmatpush2.bf16.msra.mxu0 0
      %501 = vmatprep.subr.bf16.mxu0 0
      %502 = vmatpush2.bf16.msra.mxu0 0
      %503 = vmatprep.subr.bf16.mxu0 0
      %504 = vmatpush2.bf16.msra.mxu0 0
      %505 = vmatprep.mubr.bf16.mxu0 0
      %506 = vmatmul.mubr.bf16.gmra.mxu0 %v393
      %v507 = vpop.f32.mrf.mxu0
      %v508 = vadd.f32 0.0, %v507
      %v509 = vpop.f32.mrf.mxu0
      %v510 = vpop.f32.mrf.mxu0
      %v511 = vadd.f32 0.0, %v510
      %v512 = vpop.f32.mrf.mxu0
      %513 = vmatprep.mubr.bf16.mxu0 0
      %514 = vmatmul.mubr.bf16.gmra.mxu0 %v394
      %v515 = vpop.f32.mrf.mxu0
      %v516 = vadd.f32 0.0, %v515
      %v517 = vpop.f32.mrf.mxu0
      %v518 = vpop.f32.mrf.mxu0
      %v519 = vadd.f32 0.0, %v518
      %v520 = vpop.f32.mrf.mxu0
      %521 = vmatprep.mubr.bf16.mxu0 0
      %522 = vmatmul.mubr.bf16.gmra.mxu0 %v395
      %v523 = vpop.f32.mrf.mxu0
      %v524 = vadd.f32 0.0, %v523
      %v525 = vpop.f32.mrf.mxu0
      %v526 = vpop.f32.mrf.mxu0
      %v527 = vadd.f32 0.0, %v526
      %v528 = vpop.f32.mrf.mxu0
      %529 = vmatprep.mubr.bf16.mxu0 0
      %530 = vmatmul.mubr.bf16.gmra.mxu0 %v396
      %v531 = vpop.f32.mrf.mxu0
      %v532 = vadd.f32 0.0, %v531
      %v533 = vpop.f32.mrf.mxu0
      %v534 = vpop.f32.mrf.mxu0
      %v535 = vadd.f32 0.0, %v534
      %v536 = vpop.f32.mrf.mxu0
      %537 = vmatprep.mubr.bf16.mxu0 0
      %538 = vmatmul.mubr.bf16.gmra.mxu0 %v397
      %v539 = vpop.f32.mrf.mxu0
      %v540 = vadd.f32 0.0, %v539
      %v541 = vpop.f32.mrf.mxu0
      %v542 = vpop.f32.mrf.mxu0
      %v543 = vadd.f32 0.0, %v542
      %v544 = vpop.f32.mrf.mxu0
      %545 = vmatprep.mubr.bf16.mxu0 0
      %546 = vmatmul.mubr.bf16.gmra.mxu0 %v398
      %v547 = vpop.f32.mrf.mxu0
      %v548 = vadd.f32 0.0, %v547
      %v549 = vpop.f32.mrf.mxu0
      %v550 = vpop.f32.mrf.mxu0
      %v551 = vadd.f32 0.0, %v550
      %v552 = vpop.f32.mrf.mxu0
      %553 = vmatprep.mubr.bf16.mxu0 0
      %554 = vmatmul.mubr.bf16.gmra.mxu0 %v399
      %v555 = vpop.f32.mrf.mxu0
      %v556 = vadd.f32 0.0, %v555
      %v557 = vpop.f32.mrf.mxu0
      %v558 = vpop.f32.mrf.mxu0
      %v559 = vadd.f32 0.0, %v558
      %v560 = vpop.f32.mrf.mxu0
      %561 = vmatprep.mubr.bf16.mxu0 0
      %562 = vmatmul.mubr.bf16.gmra.mxu0 %v400
      %v563 = vpop.f32.mrf.mxu0
      %v564 = vadd.f32 0.0, %v563
      %v565 = vpop.f32.mrf.mxu0
      %v566 = vpop.f32.mrf.mxu0
      %v567 = vadd.f32 0.0, %v566
      %v568 = vpop.f32.mrf.mxu0
      %569 = vmatprep.mubr.bf16.mxu0 0
      %570 = vmatmul.mubr.bf16.gmra.mxu0 %v401
      %v571 = vpop.f32.mrf.mxu0
      %v572 = vadd.f32 0.0, %v571
      %v573 = vpop.f32.mrf.mxu0
      %v574 = vpop.f32.mrf.mxu0
      %v575 = vadd.f32 0.0, %v574
      %v576 = vpop.f32.mrf.mxu0
      %577 = vmatprep.mubr.bf16.mxu0 0
      %578 = vmatmul.mubr.bf16.gmra.mxu0 %v402
      %v579 = vpop.f32.mrf.mxu0
      %v580 = vadd.f32 0.0, %v579
      %v581 = vpop.f32.mrf.mxu0
      %v582 = vpop.f32.mrf.mxu0
      %v583 = vadd.f32 0.0, %v582
      %v584 = vpop.f32.mrf.mxu0
      %585 = vmatprep.mubr.bf16.mxu0 0
      %586 = vmatmul.mubr.bf16.gmra.mxu0 %v403
      %v587 = vpop.f32.mrf.mxu0
      %v588 = vadd.f32 0.0, %v587
      %v589 = vpop.f32.mrf.mxu0
      %v590 = vpop.f32.mrf.mxu0
      %v591 = vadd.f32 0.0, %v590
      %v592 = vpop.f32.mrf.mxu0
      %593 = vmatprep.mubr.bf16.mxu0 0
      %594 = vmatmul.mubr.bf16.gmra.mxu0 %v404
      %v595 = vpop.f32.mrf.mxu0
      %v596 = vadd.f32 0.0, %v595
      %v597 = vpop.f32.mrf.mxu0
      %v598 = vpop.f32.mrf.mxu0
      %v599 = vadd.f32 0.0, %v598
      %v600 = vpop.f32.mrf.mxu0
      %601 = vmatprep.mubr.bf16.mxu0 0
      %602 = vmatmul.mubr.bf16.gmra.mxu0 %v405
      %v603 = vpop.f32.mrf.mxu0
      %v604 = vadd.f32 0.0, %v603
      %v605 = vpop.f32.mrf.mxu0
      %v606 = vpop.f32.mrf.mxu0
      %v607 = vadd.f32 0.0, %v606
      %v608 = vpop.f32.mrf.mxu0
      %609 = vmatprep.mubr.bf16.mxu0 0
      %610 = vmatmul.mubr.bf16.gmra.mxu0 %v406
      %v611 = vpop.f32.mrf.mxu0
      %v612 = vadd.f32 0.0, %v611
      %v613 = vpop.f32.mrf.mxu0
      %v614 = vpop.f32.mrf.mxu0
      %v615 = vadd.f32 0.0, %v614
      %v616 = vpop.f32.mrf.mxu0
      %617 = vmatprep.mubr.bf16.mxu0 0
      %618 = vmatmul.mubr.bf16.gmra.mxu0 %v407
      %v619 = vpop.f32.mrf.mxu0
      %v620 = vadd.f32 0.0, %v619
      %v621 = vpop.f32.mrf.mxu0
      %v622 = vpop.f32.mrf.mxu0
      %v623 = vadd.f32 0.0, %v622
      %v624 = vpop.f32.mrf.mxu0
      %625 = vmatprep.mubr.bf16.mxu0 0
      %626 = vmatmul.mubr.bf16.gmra.mxu0 %v408
      %v627 = vpop.f32.mrf.mxu0
      %v628 = vadd.f32 0.0, %v627
      %v629 = vpop.f32.mrf.mxu0
      %v630 = vpop.f32.mrf.mxu0
      %v631 = vadd.f32 0.0, %v630
      %v632 = vpop.f32.mrf.mxu0
      %633 = vdwg.mxu0
      %v666 = vunpack.c.l.b16 %v228
      %v667 = vunpack.c.l.b16 %v229
      %v668 = vunpack.c.l.b16 %v230
      %v669 = vunpack.c.l.b16 %v231
      %v670 = vunpack.c.l.b16 %v232
      %v671 = vunpack.c.l.b16 %v233
      %v672 = vunpack.c.l.b16 %v234
      %v673 = vunpack.c.l.b16 %v235
      %v674 = vunpack.c.l.b16 %v236
      %v675 = vunpack.c.l.b16 %v237
      %v676 = vunpack.c.l.b16 %v238
      %v677 = vunpack.c.l.b16 %v239
      %v678 = vunpack.c.l.b16 %v240
      %v679 = vunpack.c.l.b16 %v241
      %v680 = vunpack.c.l.b16 %v242
      %v681 = vunpack.c.l.b16 %v243
      %v682 = vunpack.c.l.b16 %v244
      %v683 = vunpack.c.l.b16 %v245
      %v684 = vunpack.c.l.b16 %v246
      %v685 = vunpack.c.l.b16 %v247
      %v686 = vunpack.c.l.b16 %v248
      %v687 = vunpack.c.l.b16 %v249
      %v688 = vunpack.c.l.b16 %v250
      %v689 = vunpack.c.l.b16 %v251
      %v690 = vunpack.c.l.b16 %v252
      %v691 = vunpack.c.l.b16 %v253
      %v692 = vunpack.c.l.b16 %v254
      %v693 = vunpack.c.l.b16 %v255
      %v694 = vunpack.c.l.b16 %v256
      %v695 = vunpack.c.l.b16 %v257
      %v696 = vunpack.c.l.b16 %v258
      %v697 = vunpack.c.l.b16 %v259
      %v698 = vpack.c.b16 %v667, %v666
      %v699 = vpack.c.b16 %v669, %v668
      %v700 = vpack.c.b16 %v671, %v670
      %v701 = vpack.c.b16 %v673, %v672
      %v702 = vpack.c.b16 %v675, %v674
      %v703 = vpack.c.b16 %v677, %v676
      %v704 = vpack.c.b16 %v679, %v678
      %v705 = vpack.c.b16 %v681, %v680
      %v706 = vpack.c.b16 %v683, %v682
      %v707 = vpack.c.b16 %v685, %v684
      %v708 = vpack.c.b16 %v687, %v686
      %v709 = vpack.c.b16 %v689, %v688
      %v710 = vpack.c.b16 %v691, %v690
      %v711 = vpack.c.b16 %v693, %v692
      %v712 = vpack.c.b16 %v695, %v694
      %v713 = vpack.c.b16 %v697, %v696
      %v746 = vunpack.c.l.b16 %v260
      %v747 = vunpack.c.l.b16 %v261
      %v748 = vunpack.c.l.b16 %v262
      %v749 = vunpack.c.l.b16 %v263
      %v750 = vunpack.c.l.b16 %v264
      %v751 = vunpack.c.l.b16 %v265
      %v752 = vunpack.c.l.b16 %v266
      %v753 = vunpack.c.l.b16 %v267
      %v754 = vunpack.c.l.b16 %v268
      %v755 = vunpack.c.l.b16 %v269
      %v756 = vunpack.c.l.b16 %v270
      %v757 = vunpack.c.l.b16 %v271
      %v758 = vunpack.c.l.b16 %v272
      %v759 = vunpack.c.l.b16 %v273
      %v760 = vunpack.c.l.b16 %v274
      %v761 = vunpack.c.l.b16 %v275
      %v762 = vpack.c.b16 %v747, %v746
      %v763 = vpack.c.b16 %v749, %v748
      %v764 = vpack.c.b16 %v751, %v750
      %v765 = vpack.c.b16 %v753, %v752
      %v766 = vpack.c.b16 %v755, %v754
      %v767 = vpack.c.b16 %v757, %v756
      %v768 = vpack.c.b16 %v759, %v758
      %v769 = vpack.c.b16 %v761, %v760
      %778 = vmatprep.subr.bf16.mxu0 0
      %779 = vmatpush1.bf16.msra.mxu0 %v769
      %780 = vmatprep.subr.bf16.mxu0 0
      %781 = vmatpush1.bf16.msra.mxu0 %v768
      %782 = vmatprep.subr.bf16.mxu0 0
      %783 = vmatpush1.bf16.msra.mxu0 %v767
      %784 = vmatprep.subr.bf16.mxu0 0
      %785 = vmatpush1.bf16.msra.mxu0 %v766
      %786 = vmatprep.subr.bf16.mxu0 0
      %787 = vmatpush1.bf16.msra.mxu0 %v765
      %788 = vmatprep.subr.bf16.mxu0 0
      %789 = vmatpush1.bf16.msra.mxu0 %v764
      %790 = vmatprep.subr.bf16.mxu0 0
      %791 = vmatpush1.bf16.msra.mxu0 %v763
      %792 = vmatprep.subr.bf16.mxu0 0
      %793 = vmatpush1.bf16.msra.mxu0 %v762
      %794 = vmatprep.subr.bf16.mxu0 0
      %795 = vmatpush2.bf16.msra.mxu0 0
      %796 = vmatprep.subr.bf16.mxu0 0
      %797 = vmatpush2.bf16.msra.mxu0 0
      %798 = vmatprep.subr.bf16.mxu0 0
      %799 = vmatpush2.bf16.msra.mxu0 0
      %800 = vmatprep.subr.bf16.mxu0 0
      %801 = vmatpush2.bf16.msra.mxu0 0
      %802 = vmatprep.subr.bf16.mxu0 0
      %803 = vmatpush2.bf16.msra.mxu0 0
      %804 = vmatprep.subr.bf16.mxu0 0
      %805 = vmatpush2.bf16.msra.mxu0 0
      %806 = vmatprep.subr.bf16.mxu0 0
      %807 = vmatpush2.bf16.msra.mxu0 0
      %808 = vmatprep.subr.bf16.mxu0 0
      %809 = vmatpush2.bf16.msra.mxu0 0
      %810 = vmatprep.mubr.bf16.mxu0 0
      %811 = vmatmul.mubr.bf16.gmra.mxu0 %v698
      %v812 = vpop.f32.mrf.mxu0
      %v813 = vadd.f32 %v508, %v812
      %v814 = vpop.f32.mrf.mxu0
      %v815 = vpop.f32.mrf.mxu0
      %v816 = vadd.f32 %v511, %v815
      %v817 = vpop.f32.mrf.mxu0
      %818 = vmatprep.mubr.bf16.mxu0 0
      %819 = vmatmul.mubr.bf16.gmra.mxu0 %v699
      %v820 = vpop.f32.mrf.mxu0
      %v821 = vadd.f32 %v516, %v820
      %v822 = vpop.f32.mrf.mxu0
      %v823 = vpop.f32.mrf.mxu0
      %v824 = vadd.f32 %v519, %v823
      %v825 = vpop.f32.mrf.mxu0
      %826 = vmatprep.mubr.bf16.mxu0 0
      %827 = vmatmul.mubr.bf16.gmra.mxu0 %v700
      %v828 = vpop.f32.mrf.mxu0
      %v829 = vadd.f32 %v524, %v828
      %v830 = vpop.f32.mrf.mxu0
      %v831 = vpop.f32.mrf.mxu0
      %v832 = vadd.f32 %v527, %v831
      %v833 = vpop.f32.mrf.mxu0
      %834 = vmatprep.mubr.bf16.mxu0 0
      %835 = vmatmul.mubr.bf16.gmra.mxu0 %v701
      %v836 = vpop.f32.mrf.mxu0
      %v837 = vadd.f32 %v532, %v836
      %v838 = vpop.f32.mrf.mxu0
      %v839 = vpop.f32.mrf.mxu0
      %v840 = vadd.f32 %v535, %v839
      %v841 = vpop.f32.mrf.mxu0
      %842 = vmatprep.mubr.bf16.mxu0 0
      %843 = vmatmul.mubr.bf16.gmra.mxu0 %v702
      %v844 = vpop.f32.mrf.mxu0
      %v845 = vadd.f32 %v540, %v844
      %v846 = vpop.f32.mrf.mxu0
      %v847 = vpop.f32.mrf.mxu0
      %v848 = vadd.f32 %v543, %v847
      %v849 = vpop.f32.mrf.mxu0
      %850 = vmatprep.mubr.bf16.mxu0 0
      %851 = vmatmul.mubr.bf16.gmra.mxu0 %v703
      %v852 = vpop.f32.mrf.mxu0
      %v853 = vadd.f32 %v548, %v852
      %v854 = vpop.f32.mrf.mxu0
      %v855 = vpop.f32.mrf.mxu0
      %v856 = vadd.f32 %v551, %v855
      %v857 = vpop.f32.mrf.mxu0
      %858 = vmatprep.mubr.bf16.mxu0 0
      %859 = vmatmul.mubr.bf16.gmra.mxu0 %v704
      %v860 = vpop.f32.mrf.mxu0
      %v861 = vadd.f32 %v556, %v860
      %v862 = vpop.f32.mrf.mxu0
      %v863 = vpop.f32.mrf.mxu0
      %v864 = vadd.f32 %v559, %v863
      %v865 = vpop.f32.mrf.mxu0
      %866 = vmatprep.mubr.bf16.mxu0 0
      %867 = vmatmul.mubr.bf16.gmra.mxu0 %v705
      %v868 = vpop.f32.mrf.mxu0
      %v869 = vadd.f32 %v564, %v868
      %v870 = vpop.f32.mrf.mxu0
      %v871 = vpop.f32.mrf.mxu0
      %v872 = vadd.f32 %v567, %v871
      %v873 = vpop.f32.mrf.mxu0
      %874 = vmatprep.mubr.bf16.mxu0 0
      %875 = vmatmul.mubr.bf16.gmra.mxu0 %v706
      %v876 = vpop.f32.mrf.mxu0
      %v877 = vadd.f32 %v572, %v876
      %v878 = vpop.f32.mrf.mxu0
      %v879 = vpop.f32.mrf.mxu0
      %v880 = vadd.f32 %v575, %v879
      %v881 = vpop.f32.mrf.mxu0
      %882 = vmatprep.mubr.bf16.mxu0 0
      %883 = vmatmul.mubr.bf16.gmra.mxu0 %v707
      %v884 = vpop.f32.mrf.mxu0
      %v885 = vadd.f32 %v580, %v884
      %v886 = vpop.f32.mrf.mxu0
      %v887 = vpop.f32.mrf.mxu0
      %v888 = vadd.f32 %v583, %v887
      %v889 = vpop.f32.mrf.mxu0
      %890 = vmatprep.mubr.bf16.mxu0 0
      %891 = vmatmul.mubr.bf16.gmra.mxu0 %v708
      %v892 = vpop.f32.mrf.mxu0
      %v893 = vadd.f32 %v588, %v892
      %v894 = vpop.f32.mrf.mxu0
      %v895 = vpop.f32.mrf.mxu0
      %v896 = vadd.f32 %v591, %v895
      %v897 = vpop.f32.mrf.mxu0
      %898 = vmatprep.mubr.bf16.mxu0 0
      %899 = vmatmul.mubr.bf16.gmra.mxu0 %v709
      %v900 = vpop.f32.mrf.mxu0
      %v901 = vadd.f32 %v596, %v900
      %v902 = vpop.f32.mrf.mxu0
      %v903 = vpop.f32.mrf.mxu0
      %v904 = vadd.f32 %v599, %v903
      %v905 = vpop.f32.mrf.mxu0
      %906 = vmatprep.mubr.bf16.mxu0 0
      %907 = vmatmul.mubr.bf16.gmra.mxu0 %v710
      %v908 = vpop.f32.mrf.mxu0
      %v909 = vadd.f32 %v604, %v908
      %v910 = vpop.f32.mrf.mxu0
      %v911 = vpop.f32.mrf.mxu0
      %v912 = vadd.f32 %v607, %v911
      %v913 = vpop.f32.mrf.mxu0
      %914 = vmatprep.mubr.bf16.mxu0 0
      %915 = vmatmul.mubr.bf16.gmra.mxu0 %v711
      %v916 = vpop.f32.mrf.mxu0
      %v917 = vadd.f32 %v612, %v916
      %v918 = vpop.f32.mrf.mxu0
      %v919 = vpop.f32.mrf.mxu0
      %v920 = vadd.f32 %v615, %v919
      %v921 = vpop.f32.mrf.mxu0
      %922 = vmatprep.mubr.bf16.mxu0 0
      %923 = vmatmul.mubr.bf16.gmra.mxu0 %v712
      %v924 = vpop.f32.mrf.mxu0
      %v925 = vadd.f32 %v620, %v924
      %v926 = vpop.f32.mrf.mxu0
      %v927 = vpop.f32.mrf.mxu0
      %v928 = vadd.f32 %v623, %v927
      %v929 = vpop.f32.mrf.mxu0
      %930 = vmatprep.mubr.bf16.mxu0 0
      %931 = vmatmul.mubr.bf16.gmra.mxu0 %v713
      %v932 = vpop.f32.mrf.mxu0
      %v933 = vadd.f32 %v628, %v932
      %v934 = vpop.f32.mrf.mxu0
      %v935 = vpop.f32.mrf.mxu0
      %v936 = vadd.f32 %v631, %v935
      %v937 = vpop.f32.mrf.mxu0
      %938 = vdwg.mxu0
      %s939 = sadd.s32 %s224, 1
      %s940 = smul.u32 %s939, 2
      %s941 = smul.addr %s940, 4
      %s942 = scalar_lea.vmem %s211, %s941
      %v943 = vld [vmem:[%s942] sm:$0xf]
      %v944 = vld [vmem:[%s942 + $0x4] sm:$0xf]
      %v945 = vld [vmem:[%s942 + $0x8] sm:$0xf]
      %v946 = vld [vmem:[%s942 + $0xc] sm:$0xf]
      %v947 = vld [vmem:[%s942 + $0x10] sm:$0xf]
      %v948 = vld [vmem:[%s942 + $0x14] sm:$0xf]
      %v949 = vld [vmem:[%s942 + $0x18] sm:$0xf]
      %v950 = vld [vmem:[%s942 + $0x1c] sm:$0xf]
      %v951 = vld [vmem:[%s942 + $0x20] sm:$0xf]
      %v952 = vld [vmem:[%s942 + $0x24] sm:$0xf]
      %v953 = vld [vmem:[%s942 + $0x28] sm:$0xf]
      %v954 = vld [vmem:[%s942 + $0x2c] sm:$0xf]
      %v955 = vld [vmem:[%s942 + $0x30] sm:$0xf]
      %v956 = vld [vmem:[%s942 + $0x34] sm:$0xf]
      %v957 = vld [vmem:[%s942 + $0x38] sm:$0xf]
      %v958 = vld [vmem:[%s942 + $0x3c] sm:$0xf]
      %v959 = vld [vmem:[%s942 + $0x40] sm:$0xf]
      %v960 = vld [vmem:[%s942 + $0x44] sm:$0xf]
      %v961 = vld [vmem:[%s942 + $0x48] sm:$0xf]
      %v962 = vld [vmem:[%s942 + $0x4c] sm:$0xf]
      %v963 = vld [vmem:[%s942 + $0x50] sm:$0xf]
      %v964 = vld [vmem:[%s942 + $0x54] sm:$0xf]
      %v965 = vld [vmem:[%s942 + $0x58] sm:$0xf]
      %v966 = vld [vmem:[%s942 + $0x5c] sm:$0xf]
      %v967 = vld [vmem:[%s942 + $0x60] sm:$0xf]
      %v968 = vld [vmem:[%s942 + $0x64] sm:$0xf]
      %v969 = vld [vmem:[%s942 + $0x68] sm:$0xf]
      %v970 = vld [vmem:[%s942 + $0x6c] sm:$0xf]
      %v971 = vld [vmem:[%s942 + $0x70] sm:$0xf]
      %v972 = vld [vmem:[%s942 + $0x74] sm:$0xf]
      %v973 = vld [vmem:[%s942 + $0x78] sm:$0xf]
      %v974 = vld [vmem:[%s942 + $0x7c] sm:$0xf]
      %s975 = scalar_lea.vmem %s1, 128
      %v976 = vld [vmem:[%s975] sm:$0xf]
      %v977 = vld [vmem:[%s975 + $0x4] sm:$0xf]
      %v978 = vld [vmem:[%s975 + $0x8] sm:$0xf]
      %v979 = vld [vmem:[%s975 + $0xc] sm:$0xf]
      %v980 = vld [vmem:[%s975 + $0x10] sm:$0xf]
      %v981 = vld [vmem:[%s975 + $0x14] sm:$0xf]
      %v982 = vld [vmem:[%s975 + $0x18] sm:$0xf]
      %v983 = vld [vmem:[%s975 + $0x1c] sm:$0xf]
      %v984 = vld [vmem:[%s975 + $0x20] sm:$0xf]
      %v985 = vld [vmem:[%s975 + $0x24] sm:$0xf]
      %v986 = vld [vmem:[%s975 + $0x28] sm:$0xf]
      %v987 = vld [vmem:[%s975 + $0x2c] sm:$0xf]
      %v988 = vld [vmem:[%s975 + $0x30] sm:$0xf]
      %v989 = vld [vmem:[%s975 + $0x34] sm:$0xf]
      %v990 = vld [vmem:[%s975 + $0x38] sm:$0xf]
      %v991 = vld [vmem:[%s975 + $0x3c] sm:$0xf]
      %v1024 = vunpack.c.l.b16 %v943
      %v1025 = vunpack.c.l.b16 %v944
      %v1026 = vunpack.c.l.b16 %v945
      %v1027 = vunpack.c.l.b16 %v946
      %v1028 = vunpack.c.l.b16 %v947
      %v1029 = vunpack.c.l.b16 %v948
      %v1030 = vunpack.c.l.b16 %v949
      %v1031 = vunpack.c.l.b16 %v950
      %v1032 = vunpack.c.l.b16 %v951
      %v1033 = vunpack.c.l.b16 %v952
      %v1034 = vunpack.c.l.b16 %v953
      %v1035 = vunpack.c.l.b16 %v954
      %v1036 = vunpack.c.l.b16 %v955
      %v1037 = vunpack.c.l.b16 %v956
      %v1038 = vunpack.c.l.b16 %v957
      %v1039 = vunpack.c.l.b16 %v958
      %v1040 = vunpack.c.l.b16 %v959
      %v1041 = vunpack.c.l.b16 %v960
      %v1042 = vunpack.c.l.b16 %v961
      %v1043 = vunpack.c.l.b16 %v962
      %v1044 = vunpack.c.l.b16 %v963
      %v1045 = vunpack.c.l.b16 %v964
      %v1046 = vunpack.c.l.b16 %v965
      %v1047 = vunpack.c.l.b16 %v966
      %v1048 = vunpack.c.l.b16 %v967
      %v1049 = vunpack.c.l.b16 %v968
      %v1050 = vunpack.c.l.b16 %v969
      %v1051 = vunpack.c.l.b16 %v970
      %v1052 = vunpack.c.l.b16 %v971
      %v1053 = vunpack.c.l.b16 %v972
      %v1054 = vunpack.c.l.b16 %v973
      %v1055 = vunpack.c.l.b16 %v974
      %v1056 = vpack.c.b16 %v1025, %v1024
      %v1057 = vpack.c.b16 %v1027, %v1026
      %v1058 = vpack.c.b16 %v1029, %v1028
      %v1059 = vpack.c.b16 %v1031, %v1030
      %v1060 = vpack.c.b16 %v1033, %v1032
      %v1061 = vpack.c.b16 %v1035, %v1034
      %v1062 = vpack.c.b16 %v1037, %v1036
      %v1063 = vpack.c.b16 %v1039, %v1038
      %v1064 = vpack.c.b16 %v1041, %v1040
      %v1065 = vpack.c.b16 %v1043, %v1042
      %v1066 = vpack.c.b16 %v1045, %v1044
      %v1067 = vpack.c.b16 %v1047, %v1046
      %v1068 = vpack.c.b16 %v1049, %v1048
      %v1069 = vpack.c.b16 %v1051, %v1050
      %v1070 = vpack.c.b16 %v1053, %v1052
      %v1071 = vpack.c.b16 %v1055, %v1054
      %v1104 = vunpack.c.l.b16 %v976
      %v1105 = vunpack.c.l.b16 %v977
      %v1106 = vunpack.c.l.b16 %v978
      %v1107 = vunpack.c.l.b16 %v979
      %v1108 = vunpack.c.l.b16 %v980
      %v1109 = vunpack.c.l.b16 %v981
      %v1110 = vunpack.c.l.b16 %v982
      %v1111 = vunpack.c.l.b16 %v983
      %v1112 = vunpack.c.l.b16 %v984
      %v1113 = vunpack.c.l.b16 %v985
      %v1114 = vunpack.c.l.b16 %v986
      %v1115 = vunpack.c.l.b16 %v987
      %v1116 = vunpack.c.l.b16 %v988
      %v1117 = vunpack.c.l.b16 %v989
      %v1118 = vunpack.c.l.b16 %v990
      %v1119 = vunpack.c.l.b16 %v991
      %v1120 = vpack.c.b16 %v1105, %v1104
      %v1121 = vpack.c.b16 %v1107, %v1106
      %v1122 = vpack.c.b16 %v1109, %v1108
      %v1123 = vpack.c.b16 %v1111, %v1110
      %v1124 = vpack.c.b16 %v1113, %v1112
      %v1125 = vpack.c.b16 %v1115, %v1114
      %v1126 = vpack.c.b16 %v1117, %v1116
      %v1127 = vpack.c.b16 %v1119, %v1118
      %1136 = vmatprep.subr.bf16.mxu0 0
      %1137 = vmatpush1.bf16.msra.mxu0 %v1127
      %1138 = vmatprep.subr.bf16.mxu0 0
      %1139 = vmatpush1.bf16.msra.mxu0 %v1126
      %1140 = vmatprep.subr.bf16.mxu0 0
      %1141 = vmatpush1.bf16.msra.mxu0 %v1125
      %1142 = vmatprep.subr.bf16.mxu0 0
      %1143 = vmatpush1.bf16.msra.mxu0 %v1124
      %1144 = vmatprep.subr.bf16.mxu0 0
      %1145 = vmatpush1.bf16.msra.mxu0 %v1123
      %1146 = vmatprep.subr.bf16.mxu0 0
      %1147 = vmatpush1.bf16.msra.mxu0 %v1122
      %1148 = vmatprep.subr.bf16.mxu0 0
      %1149 = vmatpush1.bf16.msra.mxu0 %v1121
      %1150 = vmatprep.subr.bf16.mxu0 0
      %1151 = vmatpush1.bf16.msra.mxu0 %v1120
      %1152 = vmatprep.subr.bf16.mxu0 0
      %1153 = vmatpush2.bf16.msra.mxu0 0
      %1154 = vmatprep.subr.bf16.mxu0 0
      %1155 = vmatpush2.bf16.msra.mxu0 0
      %1156 = vmatprep.subr.bf16.mxu0 0
      %1157 = vmatpush2.bf16.msra.mxu0 0
      %1158 = vmatprep.subr.bf16.mxu0 0
      %1159 = vmatpush2.bf16.msra.mxu0 0
      %1160 = vmatprep.subr.bf16.mxu0 0
      %1161 = vmatpush2.bf16.msra.mxu0 0
      %1162 = vmatprep.subr.bf16.mxu0 0
      %1163 = vmatpush2.bf16.msra.mxu0 0
      %1164 = vmatprep.subr.bf16.mxu0 0
      %1165 = vmatpush2.bf16.msra.mxu0 0
      %1166 = vmatprep.subr.bf16.mxu0 0
      %1167 = vmatpush2.bf16.msra.mxu0 0
      %1168 = vmatprep.mubr.bf16.mxu0 0
      %1169 = vmatmul.mubr.bf16.gmra.mxu0 %v1056
      %v1170 = vpop.f32.mrf.mxu0
      %v1171 = vadd.f32 0.0, %v1170
      %v1172 = vpop.f32.mrf.mxu0
      %v1173 = vpop.f32.mrf.mxu0
      %v1174 = vadd.f32 0.0, %v1173
      %v1175 = vpop.f32.mrf.mxu0
      %1176 = vmatprep.mubr.bf16.mxu0 0
      %1177 = vmatmul.mubr.bf16.gmra.mxu0 %v1057
      %v1178 = vpop.f32.mrf.mxu0
      %v1179 = vadd.f32 0.0, %v1178
      %v1180 = vpop.f32.mrf.mxu0
      %v1181 = vpop.f32.mrf.mxu0
      %v1182 = vadd.f32 0.0, %v1181
      %v1183 = vpop.f32.mrf.mxu0
      %1184 = vmatprep.mubr.bf16.mxu0 0
      %1185 = vmatmul.mubr.bf16.gmra.mxu0 %v1058
      %v1186 = vpop.f32.mrf.mxu0
      %v1187 = vadd.f32 0.0, %v1186
      %v1188 = vpop.f32.mrf.mxu0
      %v1189 = vpop.f32.mrf.mxu0
      %v1190 = vadd.f32 0.0, %v1189
      %v1191 = vpop.f32.mrf.mxu0
      %1192 = vmatprep.mubr.bf16.mxu0 0
      %1193 = vmatmul.mubr.bf16.gmra.mxu0 %v1059
      %v1194 = vpop.f32.mrf.mxu0
      %v1195 = vadd.f32 0.0, %v1194
      %v1196 = vpop.f32.mrf.mxu0
      %v1197 = vpop.f32.mrf.mxu0
      %v1198 = vadd.f32 0.0, %v1197
      %v1199 = vpop.f32.mrf.mxu0
      %1200 = vmatprep.mubr.bf16.mxu0 0
      %1201 = vmatmul.mubr.bf16.gmra.mxu0 %v1060
      %v1202 = vpop.f32.mrf.mxu0
      %v1203 = vadd.f32 0.0, %v1202
      %v1204 = vpop.f32.mrf.mxu0
      %v1205 = vpop.f32.mrf.mxu0
      %v1206 = vadd.f32 0.0, %v1205
      %v1207 = vpop.f32.mrf.mxu0
      %1208 = vmatprep.mubr.bf16.mxu0 0
      %1209 = vmatmul.mubr.bf16.gmra.mxu0 %v1061
      %v1210 = vpop.f32.mrf.mxu0
      %v1211 = vadd.f32 0.0, %v1210
      %v1212 = vpop.f32.mrf.mxu0
      %v1213 = vpop.f32.mrf.mxu0
      %v1214 = vadd.f32 0.0, %v1213
      %v1215 = vpop.f32.mrf.mxu0
      %1216 = vmatprep.mubr.bf16.mxu0 0
      %1217 = vmatmul.mubr.bf16.gmra.mxu0 %v1062
      %v1218 = vpop.f32.mrf.mxu0
      %v1219 = vadd.f32 0.0, %v1218
      %v1220 = vpop.f32.mrf.mxu0
      %v1221 = vpop.f32.mrf.mxu0
      %v1222 = vadd.f32 0.0, %v1221
      %v1223 = vpop.f32.mrf.mxu0
      %1224 = vmatprep.mubr.bf16.mxu0 0
      %1225 = vmatmul.mubr.bf16.gmra.mxu0 %v1063
      %v1226 = vpop.f32.mrf.mxu0
      %v1227 = vadd.f32 0.0, %v1226
      %v1228 = vpop.f32.mrf.mxu0
      %v1229 = vpop.f32.mrf.mxu0
      %v1230 = vadd.f32 0.0, %v1229
      %v1231 = vpop.f32.mrf.mxu0
      %1232 = vmatprep.mubr.bf16.mxu0 0
      %1233 = vmatmul.mubr.bf16.gmra.mxu0 %v1064
      %v1234 = vpop.f32.mrf.mxu0
      %v1235 = vadd.f32 0.0, %v1234
      %v1236 = vpop.f32.mrf.mxu0
      %v1237 = vpop.f32.mrf.mxu0
      %v1238 = vadd.f32 0.0, %v1237
      %v1239 = vpop.f32.mrf.mxu0
      %1240 = vmatprep.mubr.bf16.mxu0 0
      %1241 = vmatmul.mubr.bf16.gmra.mxu0 %v1065
      %v1242 = vpop.f32.mrf.mxu0
      %v1243 = vadd.f32 0.0, %v1242
      %v1244 = vpop.f32.mrf.mxu0
      %v1245 = vpop.f32.mrf.mxu0
      %v1246 = vadd.f32 0.0, %v1245
      %v1247 = vpop.f32.mrf.mxu0
      %1248 = vmatprep.mubr.bf16.mxu0 0
      %1249 = vmatmul.mubr.bf16.gmra.mxu0 %v1066
      %v1250 = vpop.f32.mrf.mxu0
      %v1251 = vadd.f32 0.0, %v1250
      %v1252 = vpop.f32.mrf.mxu0
      %v1253 = vpop.f32.mrf.mxu0
      %v1254 = vadd.f32 0.0, %v1253
      %v1255 = vpop.f32.mrf.mxu0
      %1256 = vmatprep.mubr.bf16.mxu0 0
      %1257 = vmatmul.mubr.bf16.gmra.mxu0 %v1067
      %v1258 = vpop.f32.mrf.mxu0
      %v1259 = vadd.f32 0.0, %v1258
      %v1260 = vpop.f32.mrf.mxu0
      %v1261 = vpop.f32.mrf.mxu0
      %v1262 = vadd.f32 0.0, %v1261
      %v1263 = vpop.f32.mrf.mxu0
      %1264 = vmatprep.mubr.bf16.mxu0 0
      %1265 = vmatmul.mubr.bf16.gmra.mxu0 %v1068
      %v1266 = vpop.f32.mrf.mxu0
      %v1267 = vadd.f32 0.0, %v1266
      %v1268 = vpop.f32.mrf.mxu0
      %v1269 = vpop.f32.mrf.mxu0
      %v1270 = vadd.f32 0.0, %v1269
      %v1271 = vpop.f32.mrf.mxu0
      %1272 = vmatprep.mubr.bf16.mxu0 0
      %1273 = vmatmul.mubr.bf16.gmra.mxu0 %v1069
      %v1274 = vpop.f32.mrf.mxu0
      %v1275 = vadd.f32 0.0, %v1274
      %v1276 = vpop.f32.mrf.mxu0
      %v1277 = vpop.f32.mrf.mxu0
      %v1278 = vadd.f32 0.0, %v1277
      %v1279 = vpop.f32.mrf.mxu0
      %1280 = vmatprep.mubr.bf16.mxu0 0
      %1281 = vmatmul.mubr.bf16.gmra.mxu0 %v1070
      %v1282 = vpop.f32.mrf.mxu0
      %v1283 = vadd.f32 0.0, %v1282
      %v1284 = vpop.f32.mrf.mxu0
      %v1285 = vpop.f32.mrf.mxu0
      %v1286 = vadd.f32 0.0, %v1285
      %v1287 = vpop.f32.mrf.mxu0
      %1288 = vmatprep.mubr.bf16.mxu0 0
      %1289 = vmatmul.mubr.bf16.gmra.mxu0 %v1071
      %v1290 = vpop.f32.mrf.mxu0
      %v1291 = vadd.f32 0.0, %v1290
      %v1292 = vpop.f32.mrf.mxu0
      %v1293 = vpop.f32.mrf.mxu0
      %v1294 = vadd.f32 0.0, %v1293
      %v1295 = vpop.f32.mrf.mxu0
      %1296 = vdwg.mxu0
      %v1297 = vadd.f32 %v813, %v1171
      %v1298 = vadd.f32 %v816, %v1174
      %v1299 = vadd.f32 %v821, %v1179
      %v1300 = vadd.f32 %v824, %v1182
      %v1301 = vadd.f32 %v829, %v1187
      %v1302 = vadd.f32 %v832, %v1190
      %v1303 = vadd.f32 %v837, %v1195
      %v1304 = vadd.f32 %v840, %v1198
      %v1305 = vadd.f32 %v845, %v1203
      %v1306 = vadd.f32 %v848, %v1206
      %v1307 = vadd.f32 %v853, %v1211
      %v1308 = vadd.f32 %v856, %v1214
      %v1309 = vadd.f32 %v861, %v1219
      %v1310 = vadd.f32 %v864, %v1222
      %v1311 = vadd.f32 %v869, %v1227
      %v1312 = vadd.f32 %v872, %v1230
      %v1313 = vadd.f32 %v877, %v1235
      %v1314 = vadd.f32 %v880, %v1238
      %v1315 = vadd.f32 %v885, %v1243
      %v1316 = vadd.f32 %v888, %v1246
      %v1317 = vadd.f32 %v893, %v1251
      %v1318 = vadd.f32 %v896, %v1254
      %v1319 = vadd.f32 %v901, %v1259
      %v1320 = vadd.f32 %v904, %v1262
      %v1321 = vadd.f32 %v909, %v1267
      %v1322 = vadd.f32 %v912, %v1270
      %v1323 = vadd.f32 %v917, %v1275
      %v1324 = vadd.f32 %v920, %v1278
      %v1325 = vadd.f32 %v925, %v1283
      %v1326 = vadd.f32 %v928, %v1286
      %v1327 = vadd.f32 %v933, %v1291
      %v1328 = vadd.f32 %v936, %v1294
      %v1329 = vld [vmem:[%s2] sm:$0x1]
      %v1331 = vlaneseq
      %v1332 = vshrl.u32 %v1331, 7
      %v1333 = vsub.s32 0, %v1332
      %v1334 = vrot.slane %v1329, %v1333
      %v1336 = vmul.f32 %v1297, %v1334
      %v1337 = vmul.f32 %v1298, %v1334
      %v1338 = vmul.f32 %v1299, %v1334
      %v1339 = vmul.f32 %v1300, %v1334
      %v1340 = vmul.f32 %v1301, %v1334
      %v1341 = vmul.f32 %v1302, %v1334
      %v1342 = vmul.f32 %v1303, %v1334
      %v1343 = vmul.f32 %v1304, %v1334
      %v1344 = vmul.f32 %v1305, %v1334
      %v1345 = vmul.f32 %v1306, %v1334
      %v1346 = vmul.f32 %v1307, %v1334
      %v1347 = vmul.f32 %v1308, %v1334
      %v1348 = vmul.f32 %v1309, %v1334
      %v1349 = vmul.f32 %v1310, %v1334
      %v1350 = vmul.f32 %v1311, %v1334
      %v1351 = vmul.f32 %v1312, %v1334
      %v1352 = vmul.f32 %v1313, %v1334
      %v1353 = vmul.f32 %v1314, %v1334
      %v1354 = vmul.f32 %v1315, %v1334
      %v1355 = vmul.f32 %v1316, %v1334
      %v1356 = vmul.f32 %v1317, %v1334
      %v1357 = vmul.f32 %v1318, %v1334
      %v1358 = vmul.f32 %v1319, %v1334
      %v1359 = vmul.f32 %v1320, %v1334
      %v1360 = vmul.f32 %v1321, %v1334
      %v1361 = vmul.f32 %v1322, %v1334
      %v1362 = vmul.f32 %v1323, %v1334
      %v1363 = vmul.f32 %v1324, %v1334
      %v1364 = vmul.f32 %v1325, %v1334
      %v1365 = vmul.f32 %v1326, %v1334
      %v1366 = vmul.f32 %v1327, %v1334
      %v1367 = vmul.f32 %v1328, %v1334
      %v1368 = vld [vmem:[%s3] sm:$0x1]
      %v1370 = vlaneseq
      %v1371 = vshrl.u32 %v1370, 7
      %v1372 = vsub.s32 0, %v1371
      %v1373 = vrot.slane %v1368, %v1372
      %v1375 = vadd.f32 %v1336, %v1373
      %v1376 = vadd.f32 %v1337, %v1373
      %v1377 = vadd.f32 %v1338, %v1373
      %v1378 = vadd.f32 %v1339, %v1373
      %v1379 = vadd.f32 %v1340, %v1373
      %v1380 = vadd.f32 %v1341, %v1373
      %v1381 = vadd.f32 %v1342, %v1373
      %v1382 = vadd.f32 %v1343, %v1373
      %v1383 = vadd.f32 %v1344, %v1373
      %v1384 = vadd.f32 %v1345, %v1373
      %v1385 = vadd.f32 %v1346, %v1373
      %v1386 = vadd.f32 %v1347, %v1373
      %v1387 = vadd.f32 %v1348, %v1373
      %v1388 = vadd.f32 %v1349, %v1373
      %v1389 = vadd.f32 %v1350, %v1373
      %v1390 = vadd.f32 %v1351, %v1373
      %v1391 = vadd.f32 %v1352, %v1373
      %v1392 = vadd.f32 %v1353, %v1373
      %v1393 = vadd.f32 %v1354, %v1373
      %v1394 = vadd.f32 %v1355, %v1373
      %v1395 = vadd.f32 %v1356, %v1373
      %v1396 = vadd.f32 %v1357, %v1373
      %v1397 = vadd.f32 %v1358, %v1373
      %v1398 = vadd.f32 %v1359, %v1373
      %v1399 = vadd.f32 %v1360, %v1373
      %v1400 = vadd.f32 %v1361, %v1373
      %v1401 = vadd.f32 %v1362, %v1373
      %v1402 = vadd.f32 %v1363, %v1373
      %v1403 = vadd.f32 %v1364, %v1373
      %v1404 = vadd.f32 %v1365, %v1373
      %v1405 = vadd.f32 %v1366, %v1373
      %v1406 = vadd.f32 %v1367, %v1373
      %v1407 = vmax.f32 %v1375, 0.0
      %v1408 = vmax.f32 %v1376, 0.0
      %v1409 = vmax.f32 %v1377, 0.0
      %v1410 = vmax.f32 %v1378, 0.0
      %v1411 = vmax.f32 %v1379, 0.0
      %v1412 = vmax.f32 %v1380, 0.0
      %v1413 = vmax.f32 %v1381, 0.0
      %v1414 = vmax.f32 %v1382, 0.0
      %v1415 = vmax.f32 %v1383, 0.0
      %v1416 = vmax.f32 %v1384, 0.0
      %v1417 = vmax.f32 %v1385, 0.0
      %v1418 = vmax.f32 %v1386, 0.0
      %v1419 = vmax.f32 %v1387, 0.0
      %v1420 = vmax.f32 %v1388, 0.0
      %v1421 = vmax.f32 %v1389, 0.0
      %v1422 = vmax.f32 %v1390, 0.0
      %v1423 = vmax.f32 %v1391, 0.0
      %v1424 = vmax.f32 %v1392, 0.0
      %v1425 = vmax.f32 %v1393, 0.0
      %v1426 = vmax.f32 %v1394, 0.0
      %v1427 = vmax.f32 %v1395, 0.0
      %v1428 = vmax.f32 %v1396, 0.0
      %v1429 = vmax.f32 %v1397, 0.0
      %v1430 = vmax.f32 %v1398, 0.0
      %v1431 = vmax.f32 %v1399, 0.0
      %v1432 = vmax.f32 %v1400, 0.0
      %v1433 = vmax.f32 %v1401, 0.0
      %v1434 = vmax.f32 %v1402, 0.0
      %v1435 = vmax.f32 %v1403, 0.0
      %v1436 = vmax.f32 %v1404, 0.0
      %v1437 = vmax.f32 %v1405, 0.0
      %v1438 = vmax.f32 %v1406, 0.0
      %v1439 = vpack.c.bf16 %v1408, %v1407
      %v1440 = vpack.c.bf16 %v1410, %v1409
      %v1441 = vpack.c.bf16 %v1412, %v1411
      %v1442 = vpack.c.bf16 %v1414, %v1413
      %v1443 = vpack.c.bf16 %v1416, %v1415
      %v1444 = vpack.c.bf16 %v1418, %v1417
      %v1445 = vpack.c.bf16 %v1420, %v1419
      %v1446 = vpack.c.bf16 %v1422, %v1421
      %v1447 = vpack.c.bf16 %v1424, %v1423
      %v1448 = vpack.c.bf16 %v1426, %v1425
      %v1449 = vpack.c.bf16 %v1428, %v1427
      %v1450 = vpack.c.bf16 %v1430, %v1429
      %v1451 = vpack.c.bf16 %v1432, %v1431
      %v1452 = vpack.c.bf16 %v1434, %v1433
      %v1453 = vpack.c.bf16 %v1436, %v1435
      %v1454 = vpack.c.bf16 %v1438, %v1437
      %v1471 = vunpack.c.l.b16 %v1439
      %v1472 = vunpack.c.h.b16 %v1439
      %v1473 = vunpack.c.l.b16 %v1440
      %v1474 = vunpack.c.h.b16 %v1440
      %v1475 = vunpack.c.l.b16 %v1441
      %v1476 = vunpack.c.h.b16 %v1441
      %v1477 = vunpack.c.l.b16 %v1442
      %v1478 = vunpack.c.h.b16 %v1442
      %v1479 = vunpack.c.l.b16 %v1443
      %v1480 = vunpack.c.h.b16 %v1443
      %v1481 = vunpack.c.l.b16 %v1444
      %v1482 = vunpack.c.h.b16 %v1444
      %v1483 = vunpack.c.l.b16 %v1445
      %v1484 = vunpack.c.h.b16 %v1445
      %v1485 = vunpack.c.l.b16 %v1446
      %v1486 = vunpack.c.h.b16 %v1446
      %v1487 = vunpack.c.l.b16 %v1447
      %v1488 = vunpack.c.h.b16 %v1447
      %v1489 = vunpack.c.l.b16 %v1448
      %v1490 = vunpack.c.h.b16 %v1448
      %v1491 = vunpack.c.l.b16 %v1449
      %v1492 = vunpack.c.h.b16 %v1449
      %v1493 = vunpack.c.l.b16 %v1450
      %v1494 = vunpack.c.h.b16 %v1450
      %v1495 = vunpack.c.l.b16 %v1451
      %v1496 = vunpack.c.h.b16 %v1451
      %v1497 = vunpack.c.l.b16 %v1452
      %v1498 = vunpack.c.h.b16 %v1452
      %v1499 = vunpack.c.l.b16 %v1453
      %v1500 = vunpack.c.h.b16 %v1453
      %v1501 = vunpack.c.l.b16 %v1454
      %v1502 = vunpack.c.h.b16 %v1454
      %v1503 = vpack.c.b16 %v1471, %v1471
      %v1504 = vpack.c.b16 %v1472, %v1472
      %v1505 = vpack.c.b16 %v1473, %v1473
      %v1506 = vpack.c.b16 %v1474, %v1474
      %v1507 = vpack.c.b16 %v1475, %v1475
      %v1508 = vpack.c.b16 %v1476, %v1476
      %v1509 = vpack.c.b16 %v1477, %v1477
      %v1510 = vpack.c.b16 %v1478, %v1478
      %v1511 = vpack.c.b16 %v1479, %v1479
      %v1512 = vpack.c.b16 %v1480, %v1480
      %v1513 = vpack.c.b16 %v1481, %v1481
      %v1514 = vpack.c.b16 %v1482, %v1482
      %v1515 = vpack.c.b16 %v1483, %v1483
      %v1516 = vpack.c.b16 %v1484, %v1484
      %v1517 = vpack.c.b16 %v1485, %v1485
      %v1518 = vpack.c.b16 %v1486, %v1486
      %v1519 = vpack.c.b16 %v1487, %v1487
      %v1520 = vpack.c.b16 %v1488, %v1488
      %v1521 = vpack.c.b16 %v1489, %v1489
      %v1522 = vpack.c.b16 %v1490, %v1490
      %v1523 = vpack.c.b16 %v1491, %v1491
      %v1524 = vpack.c.b16 %v1492, %v1492
      %v1525 = vpack.c.b16 %v1493, %v1493
      %v1526 = vpack.c.b16 %v1494, %v1494
      %v1527 = vpack.c.b16 %v1495, %v1495
      %v1528 = vpack.c.b16 %v1496, %v1496
      %v1529 = vpack.c.b16 %v1497, %v1497
      %v1530 = vpack.c.b16 %v1498, %v1498
      %v1531 = vpack.c.b16 %v1499, %v1499
      %v1532 = vpack.c.b16 %v1500, %v1500
      %v1533 = vpack.c.b16 %v1501, %v1501
      %v1534 = vpack.c.b16 %v1502, %v1502
      %1567 = vst [vmem:[%s221] sm:$0xf] %v1503
      %1568 = vst [vmem:[%s221 + $0x4] sm:$0xf] %v1504
      %1569 = vst [vmem:[%s221 + $0x8] sm:$0xf] %v1505
      %1570 = vst [vmem:[%s221 + $0xc] sm:$0xf] %v1506
      %1571 = vst [vmem:[%s221 + $0x10] sm:$0xf] %v1507
      %1572 = vst [vmem:[%s221 + $0x14] sm:$0xf] %v1508
      %1573 = vst [vmem:[%s221 + $0x18] sm:$0xf] %v1509
      %1574 = vst [vmem:[%s221 + $0x1c] sm:$0xf] %v1510
      %1575 = vst [vmem:[%s221 + $0x20] sm:$0xf] %v1511
      %1576 = vst [vmem:[%s221 + $0x24] sm:$0xf] %v1512
      %1577 = vst [vmem:[%s221 + $0x28] sm:$0xf] %v1513
      %1578 = vst [vmem:[%s221 + $0x2c] sm:$0xf] %v1514
      %1579 = vst [vmem:[%s221 + $0x30] sm:$0xf] %v1515
      %1580 = vst [vmem:[%s221 + $0x34] sm:$0xf] %v1516
      %1581 = vst [vmem:[%s221 + $0x38] sm:$0xf] %v1517
      %1582 = vst [vmem:[%s221 + $0x3c] sm:$0xf] %v1518
      %1583 = vst [vmem:[%s221 + $0x40] sm:$0xf] %v1519
      %1584 = vst [vmem:[%s221 + $0x44] sm:$0xf] %v1520
      %1585 = vst [vmem:[%s221 + $0x48] sm:$0xf] %v1521
      %1586 = vst [vmem:[%s221 + $0x4c] sm:$0xf] %v1522
      %1587 = vst [vmem:[%s221 + $0x50] sm:$0xf] %v1523
      %1588 = vst [vmem:[%s221 + $0x54] sm:$0xf] %v1524
      %1589 = vst [vmem:[%s221 + $0x58] sm:$0xf] %v1525
      %1590 = vst [vmem:[%s221 + $0x5c] sm:$0xf] %v1526
      %1591 = vst [vmem:[%s221 + $0x60] sm:$0xf] %v1527
      %1592 = vst [vmem:[%s221 + $0x64] sm:$0xf] %v1528
      %1593 = vst [vmem:[%s221 + $0x68] sm:$0xf] %v1529
      %1594 = vst [vmem:[%s221 + $0x6c] sm:$0xf] %v1530
      %1595 = vst [vmem:[%s221 + $0x70] sm:$0xf] %v1531
      %1596 = vst [vmem:[%s221 + $0x74] sm:$0xf] %v1532
      %1597 = vst [vmem:[%s221 + $0x78] sm:$0xf] %v1533
      %1598 = vst [vmem:[%s221 + $0x7c] sm:$0xf] %v1534
      %s1599 = smul.u32 16, %s20
      %p1600 = scmp.lt.s32.totalorder %s19, 1
      %s1601 = scalar_select %p1600, %s19, 1
      %p1602 = scmp.lt.s32.totalorder %s1599, 15
      %s1603 = scalar_select %p1602, %s1599, 15
      %s1604 = smul.addr %s1603, 2
      %s1605 = smul.addr %s1601, 32
      %s1606 = sadd.s32 %s1604, %s1605
      %s1607 = smul.addr %s1606, 4
      %s1608 = scalar_lea.vmem %s4, %s1607
      // Predicated region
      $region37: #{_lambda_.15} parent=35 // pred_check
        %p1609 = pneg %p136
      $region38: #{_lambda_.15} parent=35 // pred_check_branch
        %1611 = sbr.rel (%p1609) target = $region40
      $region39: #{_lambda_.15} parent=35 // pred_region
        %s1612 = smul.u32 16, %s20
      $region40: #{_lambda_.15} parent=35 // pred_fallthru
        _
    $region36: #{_lambda_.15} parent=5 // pred_fallthru
      _
    %p1613 = scmp.le.s32.totalorder 2, %s10
    // Predicated region
    $region41: #{_lambda_.15} parent=5 // pred_check
      %p1614 = pneg %p1613
    $region42: #{_lambda_.15} parent=5 // pred_check_branch
      %1616 = sbr.rel (%p1614) target = $region44
    $region43: #{_lambda_.15} parent=5 // pred_region
      %s1617 = ssub.s32 %s10, 2
      // Predicated region
      $region45: #{_lambda_.15} parent=43 // pred_check
        %p1618 = pneg %p142
      $region46: #{_lambda_.15} parent=43 // pred_check_branch
        %1620 = sbr.rel (%p1618) target = $region48
      $region47: #{_lambda_.15} parent=43 // pred_region
        %s1621 = smul.u32 16, %s22
        %p1622 = scmp.lt.s32.totalorder %s21, 1
        %s1623 = scalar_select %p1622, %s21, 1
        %p1624 = scmp.lt.s32.totalorder %s1621, 15
        %s1625 = scalar_select %p1624, %s1621, 15
        %s1626 = smul.addr %s1625, 2
        %s1627 = smul.addr %s1623, 32
        %s1628 = sadd.s32 %s1626, %s1627
        %s1629 = smul.addr %s1628, 4
        %s1630 = scalar_lea.vmem %s4, %s1629
      $region48: #{_lambda_.15} parent=43 // pred_fallthru
        _
    $region44: #{_lambda_.15} parent=5 // pred_fallthru
      _
  $region6: #{_lambda_.15} parent=0 // loop_footer
    %s14 = sadd.s32 1, %s10
  $region7: #{_lambda_.15} parent=0 // loop_footer_branch
    %9 = sbr.rel target = $region3
  $region8: #{_lambda_.15} parent=0 // loop_exit
    _

// kernel: _lambda_.17
$region0: #{_lambda_.17}
  #allocation0 [shape = 'u32[]', space=smem, size = 0x4, offset = 0x4, fixed_abs, tag = 'smem constant byte address 0x4 - core index']
  #allocation1 [shape = 'u32[144,128]{1,0:T(1,128)}', space=vmem, size = 0x12000, scoped, tag = 'internal scratch']
  %s0 = inlined_call_operand.vmem [shape: bf16[2,18,16,256], index: 0, kind: input, shape index: {}]
  %s1 = inlined_call_operand.vmem [shape: bf16[3,256,128], index: 1, kind: input, shape index: {}]
  %s2 = inlined_call_operand.vmem [shape: f32[1,128], index: 2, kind: input, shape index: {}]
  %s3 = inlined_call_operand.vmem [shape: f32[1,128], index: 3, kind: input, shape index: {}]
  %s4 = inlined_call_operand.vmem [shape: bf16[2,16,16,128], index: 4, kind: output, shape index: {}]
  %s5 = sld [smem:[#allocation0]]
  $region49: #{_lambda_.17} parent=0
    _
  %s7 = ssub.s32 1, %s5
  %s8 = scalar_select 0, %s7, %s5
  loop: start=0, step=1, limit=4
  $region2: #{_lambda_.17} parent=0 // loop_pre_header
    _
  $region3: #{_lambda_.17} parent=0 // loop_header
    %s10 = sphi 0, %s14
    %p11 = scmp.ge.s32.totalorder %s10, 4
    %s17 = sphi 0, %s29
    %s18 = sphi 0, %s25
    %s19 = sphi 0, %s17
    %s20 = sphi 0, %s18
    %s21 = sphi 0, %s19
    %s22 = sphi 0, %s20
    %s32 = sphi 0, %s34
    %s35 = sphi 0, %s32
    %s36 = sphi 0, %s35
    %s52 = sphi 0, %s36
    %s56 = sphi 0, %s56
    %s58 = sphi 0, %s56
    %s59 = sphi 0, %s58
    %s73 = sphi 0, %s59
    %s77 = sphi 0, %s77
    %s79 = sphi 0, %s77
    %s80 = sphi 0, %s79
    %s94 = sphi 0, %s80
    %s98 = sphi 0, %s98
    %s100 = sphi 0, %s98
    %s101 = sphi 0, %s100
    %s115 = sphi 0, %s101
    %s123 = sphi 0, %s125
    %s126 = sphi 0, %s123
    %s127 = sphi 0, %s126
    %s143 = sphi 0, %s127
  $region4: #{_lambda_.17} parent=0 // loop_header_branch
    %13 = sbr.rel (%p11) target = $region8
  $region5: #{_lambda_.17} parent=0 // loop_body
    %s15 = ssub.s32 %s10, 1
    %s16 = ssub.s32 %s10, 2
    %s23 = sadd.s32 1, %s18
    %p24 = scmp.ge.s32.totalorder %s23, 1
    %s25 = scalar_select %p24, 0, %s23
    %s26 = sadd.s32 1, %s17
    %s27 = scalar_select %p24, %s26, %s17
    %p28 = scmp.ge.s32.totalorder %s27, 2
    %s29 = scalar_select %p28, 0, %s27
    %s30 = ssub.s32 %s17, %s29
    %p31 = scmp.eq.s32.totalorder %s30, 0
    %s33 = sadd.s32 %s32, 1
    %s34 = scalar_select %p31, %s32, %s33
    %p37 = pneg %p31
    %p38 = scmp.eq.s32.totalorder %s10, 1
    %p39 = por %p37, %p38
    %p40 = scmp.ne.s32.totalorder %s32, %s35
    %p41 = scmp.eq.s32.totalorder %s10, 0
    %p42 = por %p40, %p41
    %p43 = scmp.ne.s32.totalorder %s32, %s35
    %p44 = scmp.eq.s32.totalorder %s15, 1
    %p45 = por %p43, %p44
    %p46 = scmp.ne.s32.totalorder %s35, %s36
    %p47 = scmp.eq.s32.totalorder %s15, 0
    %p48 = por %p46, %p47
    %p49 = scmp.ne.s32.totalorder %s35, %s36
    %p50 = scmp.eq.s32.totalorder %s16, 1
    %p51 = por %p49, %p50
    %p53 = scmp.ne.s32.totalorder %s36, %s52
    %p54 = scmp.eq.s32.totalorder %s16, 0
    %p55 = por %p53, %p54
    %s57 = sadd.s32 %s56, 1
    %p60 = scmp.eq.s32.totalorder %s10, 1
    %p61 = scmp.ne.s32.totalorder %s56, %s58
    %p62 = scmp.eq.s32.totalorder %s10, 0
    %p63 = por %p61, %p62
    %p64 = scmp.ne.s32.totalorder %s56, %s58
    %p65 = scmp.eq.s32.totalorder %s15, 1
    %p66 = por %p64, %p65
    %p67 = scmp.ne.s32.totalorder %s58, %s59
    %p68 = scmp.eq.s32.totalorder %s15, 0
    %p69 = por %p67, %p68
    %p70 = scmp.ne.s32.totalorder %s58, %s59
    %p71 = scmp.eq.s32.totalorder %s16, 1
    %p72 = por %p70, %p71
    %p74 = scmp.ne.s32.totalorder %s59, %s73
    %p75 = scmp.eq.s32.totalorder %s16, 0
    %p76 = por %p74, %p75
    %s78 = sadd.s32 %s77, 1
    %p81 = scmp.eq.s32.totalorder %s10, 1
    %p82 = scmp.ne.s32.totalorder %s77, %s79
    %p83 = scmp.eq.s32.totalorder %s10, 0
    %p84 = por %p82, %p83
    %p85 = scmp.ne.s32.totalorder %s77, %s79
    %p86 = scmp.eq.s32.totalorder %s15, 1
    %p87 = por %p85, %p86
    %p88 = scmp.ne.s32.totalorder %s79, %s80
    %p89 = scmp.eq.s32.totalorder %s15, 0
    %p90 = por %p88, %p89
    %p91 = scmp.ne.s32.totalorder %s79, %s80
    %p92 = scmp.eq.s32.totalorder %s16, 1
    %p93 = por %p91, %p92
    %p95 = scmp.ne.s32.totalorder %s80, %s94
    %p96 = scmp.eq.s32.totalorder %s16, 0
    %p97 = por %p95, %p96
    %s99 = sadd.s32 %s98, 1
    %p102 = scmp.eq.s32.totalorder %s10, 1
    %p103 = scmp.ne.s32.totalorder %s98, %s100
    %p104 = scmp.eq.s32.totalorder %s10, 0
    %p105 = por %p103, %p104
    %p106 = scmp.ne.s32.totalorder %s98, %s100
    %p107 = scmp.eq.s32.totalorder %s15, 1
    %p108 = por %p106, %p107
    %p109 = scmp.ne.s32.totalorder %s100, %s101
    %p110 = scmp.eq.s32.totalorder %s15, 0
    %p111 = por %p109, %p110
    %p112 = scmp.ne.s32.totalorder %s100, %s101
    %p113 = scmp.eq.s32.totalorder %s16, 1
    %p114 = por %p112, %p113
    %p116 = scmp.ne.s32.totalorder %s101, %s115
    %p117 = scmp.eq.s32.totalorder %s16, 0
    %p118 = por %p116, %p117
    %s119 = ssub.s32 %s17, %s29
    %s120 = ssub.s32 %s18, %s25
    %s121 = sor.u32 %s119, %s120
    %p122 = scmp.eq.s32.totalorder %s121, 0
    %s124 = sadd.s32 %s123, 1
    %s125 = scalar_select %p122, %s123, %s124
    %p128 = pneg %p122
    %p129 = scmp.eq.s32.totalorder %s10, 1
    %p130 = por %p128, %p129
    %p131 = scmp.ne.s32.totalorder %s123, %s126
    %p132 = scmp.eq.s32.totalorder %s10, 0
    %p133 = por %p131, %p132
    %p134 = scmp.ne.s32.totalorder %s123, %s126
    %p135 = scmp.eq.s32.totalorder %s15, 1
    %p136 = por %p134, %p135
    %p137 = scmp.ne.s32.totalorder %s126, %s127
    %p138 = scmp.eq.s32.totalorder %s15, 0
    %p139 = por %p137, %p138
    %p140 = scmp.ne.s32.totalorder %s126, %s127
    %p141 = scmp.eq.s32.totalorder %s16, 1
    %p142 = por %p140, %p141
    %p144 = scmp.ne.s32.totalorder %s127, %s143
    %p145 = scmp.eq.s32.totalorder %s16, 0
    %p146 = por %p144, %p145
    %p147 = scmp.le.s32.totalorder 1, %s10
    %p148 = scmp.lt.s32.totalorder %s10, 3
    %p149 = pnand %p147, %p148
    %p150 = pneg %p149
    // Predicated region
    $region9: #{_lambda_.17} parent=5 // pred_check
      _
    $region10: #{_lambda_.17} parent=5 // pred_check_branch
      %152 = sbr.rel (%p149) target = $region12
    $region11: #{_lambda_.17} parent=5 // pred_region
      %s153 = ssub.s32 %s10, 1
      // Predicated region
      $region13: #{_lambda_.17} parent=11 // pred_check
        %p154 = pneg %p69
      $region14: #{_lambda_.17} parent=11 // pred_check_branch
        %156 = sbr.rel (%p154) target = $region16
      $region15: #{_lambda_.17} parent=11 // pred_region
        _
      $region16: #{_lambda_.17} parent=11 // pred_fallthru
        _
      // Predicated region
      $region17: #{_lambda_.17} parent=11 // pred_check
        %p157 = pneg %p90
      $region18: #{_lambda_.17} parent=11 // pred_check_branch
        %159 = sbr.rel (%p157) target = $region20
      $region19: #{_lambda_.17} parent=11 // pred_region
        _
      $region20: #{_lambda_.17} parent=11 // pred_fallthru
        _
      // Predicated region
      $region21: #{_lambda_.17} parent=11 // pred_check
        %p160 = pneg %p111
      $region22: #{_lambda_.17} parent=11 // pred_check_branch
        %162 = sbr.rel (%p160) target = $region24
      $region23: #{_lambda_.17} parent=11 // pred_region
        _
      $region24: #{_lambda_.17} parent=11 // pred_fallthru
        _
    $region12: #{_lambda_.17} parent=5 // pred_fallthru
      _
    %p163 = scmp.lt.s32.totalorder %s10, 2
    // Predicated region
    $region25: #{_lambda_.17} parent=5 // pred_check
      %p164 = pneg %p163
    $region26: #{_lambda_.17} parent=5 // pred_check_branch
      %166 = sbr.rel (%p164) target = $region28
    $region27: #{_lambda_.17} parent=5 // pred_region
      // Predicated region
      $region29: #{_lambda_.17} parent=27 // pred_check
        %p167 = pneg %p42
      $region30: #{_lambda_.17} parent=27 // pred_check_branch
        %169 = sbr.rel (%p167) target = $region32
      $region31: #{_lambda_.17} parent=27 // pred_region
        %p170 = scmp.lt.s32.totalorder %s17, 1
        %s171 = scalar_select %p170, %s17, 1
        %s172 = smul.addr %s171, 72
        %s173 = smul.addr %s172, 4
        %s174 = scalar_lea.vmem %s0, %s173
      $region32: #{_lambda_.17} parent=27 // pred_fallthru
        _
    $region28: #{_lambda_.17} parent=5 // pred_fallthru
      _
    %p175 = scmp.le.s32.totalorder 1, %s10
    %p176 = scmp.lt.s32.totalorder %s10, 3
    %p177 = pnand %p175, %p176
    %p178 = pneg %p177
    // Predicated region
    $region33: #{_lambda_.17} parent=5 // pred_check
      _
    $region34: #{_lambda_.17} parent=5 // pred_check_branch
      %180 = sbr.rel (%p177) target = $region36
    $region35: #{_lambda_.17} parent=5 // pred_region
      %s181 = ssub.s32 %s10, 1
      %p182 = scmp.lt.s32.totalorder %s19, 1
      %s183 = scalar_select %p182, %s19, 1
      %s184 = smul.addr %s183, 72
      %s185 = smul.addr %s184, 4
      %s186 = scalar_lea.vmem %s0, %s185
      %p187 = pneg %p48
      %p188 = pneg %p45
      %p189 = pneg %p69
      %p190 = pneg %p66
      %p191 = pneg %p90
      %p192 = pneg %p87
      %p193 = pneg %p111
      %p194 = pneg %p108
      %p195 = pneg %p139
      %p196 = pneg %p136
      %s197 = smul.u32 16, %s20
      %p198 = scmp.lt.s32.totalorder %s19, 1
      %s199 = scalar_select %p198, %s19, 1
      %p200 = scmp.lt.s32.totalorder %s197, 15
      %s201 = scalar_select %p200, %s197, 15
      %s202 = smul.addr %s201, 2
      %s203 = smul.addr %s199, 32
      %s204 = sadd.s32 %s202, %s203
      %s205 = smul.addr %s204, 4
      %s206 = scalar_lea.vmem %s4, %s205
      %p207 = scmp.lt.s32.totalorder %s19, 1
      %s208 = scalar_select %p207, %s19, 1
      %s209 = smul.addr %s208, 72
      %s210 = smul.addr %s209, 4
      %s211 = scalar_lea.vmem %s0, %s210
      %s212 = smul.u32 16, %s20
      %p213 = scmp.lt.s32.totalorder %s19, 1
      %s214 = scalar_select %p213, %s19, 1
      %p215 = scmp.lt.s32.totalorder %s212, 15
      %s216 = scalar_select %p215, %s212, 15
      %s217 = smul.addr %s216, 2
      %s218 = smul.addr %s214, 32
      %s219 = sadd.s32 %s217, %s218
      %s220 = smul.addr %s219, 4
      %s221 = scalar_lea.vmem %s4, %s220
      %s222 = smul.u32 16, %s20
      %s224 = smul.u32 %s20, 16
      %s225 = smul.u32 %s224, 4
      %s226 = smul.addr %s225, 4
      %s227 = scalar_lea.vmem %s211, %s226
      %v228 = vld [vmem:[%s227] sm:$0xff]
      %v229 = vld [vmem:[%s227 + $0x8] sm:$0xff]
      %v230 = vld [vmem:[%s227 + $0x10] sm:$0xff]
      %v231 = vld [vmem:[%s227 + $0x18] sm:$0xff]
      %v232 = vld [vmem:[%s227 + $0x20] sm:$0xff]
      %v233 = vld [vmem:[%s227 + $0x28] sm:$0xff]
      %v234 = vld [vmem:[%s227 + $0x30] sm:$0xff]
      %v235 = vld [vmem:[%s227 + $0x38] sm:$0xff]
      %v236 = vld [vmem:[%s227 + $0x40] sm:$0xff]
      %v237 = vld [vmem:[%s227 + $0x48] sm:$0xff]
      %v238 = vld [vmem:[%s227 + $0x50] sm:$0xff]
      %v239 = vld [vmem:[%s227 + $0x58] sm:$0xff]
      %v240 = vld [vmem:[%s227 + $0x60] sm:$0xff]
      %v241 = vld [vmem:[%s227 + $0x68] sm:$0xff]
      %v242 = vld [vmem:[%s227 + $0x70] sm:$0xff]
      %v243 = vld [vmem:[%s227 + $0x78] sm:$0xff]
      %v244 = vld [vmem:[%s227 + $0x80] sm:$0xff]
      %v245 = vld [vmem:[%s227 + $0x88] sm:$0xff]
      %v246 = vld [vmem:[%s227 + $0x90] sm:$0xff]
      %v247 = vld [vmem:[%s227 + $0x98] sm:$0xff]
      %v248 = vld [vmem:[%s227 + $0xa0] sm:$0xff]
      %v249 = vld [vmem:[%s227 + $0xa8] sm:$0xff]
      %v250 = vld [vmem:[%s227 + $0xb0] sm:$0xff]
      %v251 = vld [vmem:[%s227 + $0xb8] sm:$0xff]
      %v252 = vld [vmem:[%s227 + $0xc0] sm:$0xff]
      %v253 = vld [vmem:[%s227 + $0xc8] sm:$0xff]
      %v254 = vld [vmem:[%s227 + $0xd0] sm:$0xff]
      %v255 = vld [vmem:[%s227 + $0xd8] sm:$0xff]
      %v256 = vld [vmem:[%s227 + $0xe0] sm:$0xff]
      %v257 = vld [vmem:[%s227 + $0xe8] sm:$0xff]
      %v258 = vld [vmem:[%s227 + $0xf0] sm:$0xff]
      %v259 = vld [vmem:[%s227 + $0xf8] sm:$0xff]
      %v260 = vld [vmem:[%s1] sm:$0xf]
      %v261 = vld [vmem:[%s1 + $0x4] sm:$0xf]
      %v262 = vld [vmem:[%s1 + $0x8] sm:$0xf]
      %v263 = vld [vmem:[%s1 + $0xc] sm:$0xf]
      %v264 = vld [vmem:[%s1 + $0x10] sm:$0xf]
      %v265 = vld [vmem:[%s1 + $0x14] sm:$0xf]
      %v266 = vld [vmem:[%s1 + $0x18] sm:$0xf]
      %v267 = vld [vmem:[%s1 + $0x1c] sm:$0xf]
      %v268 = vld [vmem:[%s1 + $0x20] sm:$0xf]
      %v269 = vld [vmem:[%s1 + $0x24] sm:$0xf]
      %v270 = vld [vmem:[%s1 + $0x28] sm:$0xf]
      %v271 = vld [vmem:[%s1 + $0x2c] sm:$0xf]
      %v272 = vld [vmem:[%s1 + $0x30] sm:$0xf]
      %v273 = vld [vmem:[%s1 + $0x34] sm:$0xf]
      %v274 = vld [vmem:[%s1 + $0x38] sm:$0xf]
      %v275 = vld [vmem:[%s1 + $0x3c] sm:$0xf]
      %v276 = vld [vmem:[%s1 + $0x40] sm:$0xf]
      %v277 = vld [vmem:[%s1 + $0x44] sm:$0xf]
      %v278 = vld [vmem:[%s1 + $0x48] sm:$0xf]
      %v279 = vld [vmem:[%s1 + $0x4c] sm:$0xf]
      %v280 = vld [vmem:[%s1 + $0x50] sm:$0xf]
      %v281 = vld [vmem:[%s1 + $0x54] sm:$0xf]
      %v282 = vld [vmem:[%s1 + $0x58] sm:$0xf]
      %v283 = vld [vmem:[%s1 + $0x5c] sm:$0xf]
      %v284 = vld [vmem:[%s1 + $0x60] sm:$0xf]
      %v285 = vld [vmem:[%s1 + $0x64] sm:$0xf]
      %v286 = vld [vmem:[%s1 + $0x68] sm:$0xf]
      %v287 = vld [vmem:[%s1 + $0x6c] sm:$0xf]
      %v288 = vld [vmem:[%s1 + $0x70] sm:$0xf]
      %v289 = vld [vmem:[%s1 + $0x74] sm:$0xf]
      %v290 = vld [vmem:[%s1 + $0x78] sm:$0xf]
      %v291 = vld [vmem:[%s1 + $0x7c] sm:$0xf]
      %s292 = sadd.s32 %s224, 1
      %s293 = smul.u32 %s292, 4
      %s294 = smul.addr %s293, 4
      %s295 = scalar_lea.vmem %s211, %s294
      %v296 = vld [vmem:[%s295] sm:$0xff]
      %v297 = vld [vmem:[%s295 + $0x8] sm:$0xff]
      %v298 = vld [vmem:[%s295 + $0x10] sm:$0xff]
      %v299 = vld [vmem:[%s295 + $0x18] sm:$0xff]
      %v300 = vld [vmem:[%s295 + $0x20] sm:$0xff]
      %v301 = vld [vmem:[%s295 + $0x28] sm:$0xff]
      %v302 = vld [vmem:[%s295 + $0x30] sm:$0xff]
      %v303 = vld [vmem:[%s295 + $0x38] sm:$0xff]
      %v304 = vld [vmem:[%s295 + $0x40] sm:$0xff]
      %v305 = vld [vmem:[%s295 + $0x48] sm:$0xff]
      %v306 = vld [vmem:[%s295 + $0x50] sm:$0xff]
      %v307 = vld [vmem:[%s295 + $0x58] sm:$0xff]
      %v308 = vld [vmem:[%s295 + $0x60] sm:$0xff]
      %v309 = vld [vmem:[%s295 + $0x68] sm:$0xff]
      %v310 = vld [vmem:[%s295 + $0x70] sm:$0xff]
      %v311 = vld [vmem:[%s295 + $0x78] sm:$0xff]
      %v312 = vld [vmem:[%s295 + $0x80] sm:$0xff]
      %v313 = vld [vmem:[%s295 + $0x88] sm:$0xff]
      %v314 = vld [vmem:[%s295 + $0x90] sm:$0xff]
      %v315 = vld [vmem:[%s295 + $0x98] sm:$0xff]
      %v316 = vld [vmem:[%s295 + $0xa0] sm:$0xff]
      %v317 = vld [vmem:[%s295 + $0xa8] sm:$0xff]
      %v318 = vld [vmem:[%s295 + $0xb0] sm:$0xff]
      %v319 = vld [vmem:[%s295 + $0xb8] sm:$0xff]
      %v320 = vld [vmem:[%s295 + $0xc0] sm:$0xff]
      %v321 = vld [vmem:[%s295 + $0xc8] sm:$0xff]
      %v322 = vld [vmem:[%s295 + $0xd0] sm:$0xff]
      %v323 = vld [vmem:[%s295 + $0xd8] sm:$0xff]
      %v324 = vld [vmem:[%s295 + $0xe0] sm:$0xff]
      %v325 = vld [vmem:[%s295 + $0xe8] sm:$0xff]
      %v326 = vld [vmem:[%s295 + $0xf0] sm:$0xff]
      %v327 = vld [vmem:[%s295 + $0xf8] sm:$0xff]
      %s328 = scalar_lea.vmem %s1, 128
      %v329 = vld [vmem:[%s328] sm:$0xf]
      %v330 = vld [vmem:[%s328 + $0x4] sm:$0xf]
      %v331 = vld [vmem:[%s328 + $0x8] sm:$0xf]
      %v332 = vld [vmem:[%s328 + $0xc] sm:$0xf]
      %v333 = vld [vmem:[%s328 + $0x10] sm:$0xf]
      %v334 = vld [vmem:[%s328 + $0x14] sm:$0xf]
      %v335 = vld [vmem:[%s328 + $0x18] sm:$0xf]
      %v336 = vld [vmem:[%s328 + $0x1c] sm:$0xf]
      %v337 = vld [vmem:[%s328 + $0x20] sm:$0xf]
      %v338 = vld [vmem:[%s328 + $0x24] sm:$0xf]
      %v339 = vld [vmem:[%s328 + $0x28] sm:$0xf]
      %v340 = vld [vmem:[%s328 + $0x2c] sm:$0xf]
      %v341 = vld [vmem:[%s328 + $0x30] sm:$0xf]
      %v342 = vld [vmem:[%s328 + $0x34] sm:$0xf]
      %v343 = vld [vmem:[%s328 + $0x38] sm:$0xf]
      %v344 = vld [vmem:[%s328 + $0x3c] sm:$0xf]
      %v345 = vld [vmem:[%s328 + $0x40] sm:$0xf]
      %v346 = vld [vmem:[%s328 + $0x44] sm:$0xf]
      %v347 = vld [vmem:[%s328 + $0x48] sm:$0xf]
      %v348 = vld [vmem:[%s328 + $0x4c] sm:$0xf]
      %v349 = vld [vmem:[%s328 + $0x50] sm:$0xf]
      %v350 = vld [vmem:[%s328 + $0x54] sm:$0xf]
      %v351 = vld [vmem:[%s328 + $0x58] sm:$0xf]
      %v352 = vld [vmem:[%s328 + $0x5c] sm:$0xf]
      %v353 = vld [vmem:[%s328 + $0x60] sm:$0xf]
      %v354 = vld [vmem:[%s328 + $0x64] sm:$0xf]
      %v355 = vld [vmem:[%s328 + $0x68] sm:$0xf]
      %v356 = vld [vmem:[%s328 + $0x6c] sm:$0xf]
      %v357 = vld [vmem:[%s328 + $0x70] sm:$0xf]
      %v358 = vld [vmem:[%s328 + $0x74] sm:$0xf]
      %v359 = vld [vmem:[%s328 + $0x78] sm:$0xf]
      %v360 = vld [vmem:[%s328 + $0x7c] sm:$0xf]
      %v393 = vunpack.c.l.b16 %v296
      %v394 = vunpack.c.h.b16 %v296
      %v395 = vunpack.c.l.b16 %v297
      %v396 = vunpack.c.h.b16 %v297
      %v397 = vunpack.c.l.b16 %v298
      %v398 = vunpack.c.h.b16 %v298
      %v399 = vunpack.c.l.b16 %v299
      %v400 = vunpack.c.h.b16 %v299
      %v401 = vunpack.c.l.b16 %v300
      %v402 = vunpack.c.h.b16 %v300
      %v403 = vunpack.c.l.b16 %v301
      %v404 = vunpack.c.h.b16 %v301
      %v405 = vunpack.c.l.b16 %v302
      %v406 = vunpack.c.h.b16 %v302
      %v407 = vunpack.c.l.b16 %v303
      %v408 = vunpack.c.h.b16 %v303
      %v409 = vunpack.c.l.b16 %v304
      %v410 = vunpack.c.h.b16 %v304
      %v411 = vunpack.c.l.b16 %v305
      %v412 = vunpack.c.h.b16 %v305
      %v413 = vunpack.c.l.b16 %v306
      %v414 = vunpack.c.h.b16 %v306
      %v415 = vunpack.c.l.b16 %v307
      %v416 = vunpack.c.h.b16 %v307
      %v417 = vunpack.c.l.b16 %v308
      %v418 = vunpack.c.h.b16 %v308
      %v419 = vunpack.c.l.b16 %v309
      %v420 = vunpack.c.h.b16 %v309
      %v421 = vunpack.c.l.b16 %v310
      %v422 = vunpack.c.h.b16 %v310
      %v423 = vunpack.c.l.b16 %v311
      %v424 = vunpack.c.h.b16 %v311
      %v425 = vunpack.c.l.b16 %v312
      %v426 = vunpack.c.h.b16 %v312
      %v427 = vunpack.c.l.b16 %v313
      %v428 = vunpack.c.h.b16 %v313
      %v429 = vunpack.c.l.b16 %v314
      %v430 = vunpack.c.h.b16 %v314
      %v431 = vunpack.c.l.b16 %v315
      %v432 = vunpack.c.h.b16 %v315
      %v433 = vunpack.c.l.b16 %v316
      %v434 = vunpack.c.h.b16 %v316
      %v435 = vunpack.c.l.b16 %v317
      %v436 = vunpack.c.h.b16 %v317
      %v437 = vunpack.c.l.b16 %v318
      %v438 = vunpack.c.h.b16 %v318
      %v439 = vunpack.c.l.b16 %v319
      %v440 = vunpack.c.h.b16 %v319
      %v441 = vunpack.c.l.b16 %v320
      %v442 = vunpack.c.h.b16 %v320
      %v443 = vunpack.c.l.b16 %v321
      %v444 = vunpack.c.h.b16 %v321
      %v445 = vunpack.c.l.b16 %v322
      %v446 = vunpack.c.h.b16 %v322
      %v447 = vunpack.c.l.b16 %v323
      %v448 = vunpack.c.h.b16 %v323
      %v449 = vunpack.c.l.b16 %v324
      %v450 = vunpack.c.h.b16 %v324
      %v451 = vunpack.c.l.b16 %v325
      %v452 = vunpack.c.h.b16 %v325
      %v453 = vunpack.c.l.b16 %v326
      %v454 = vunpack.c.h.b16 %v326
      %v455 = vunpack.c.l.b16 %v327
      %v456 = vunpack.c.h.b16 %v327
      %v457 = vpack.c.b16 %v395, %v393
      %v458 = vpack.c.b16 %v396, %v394
      %v459 = vpack.c.b16 %v399, %v397
      %v460 = vpack.c.b16 %v400, %v398
      %v461 = vpack.c.b16 %v403, %v401
      %v462 = vpack.c.b16 %v404, %v402
      %v463 = vpack.c.b16 %v407, %v405
      %v464 = vpack.c.b16 %v408, %v406
      %v465 = vpack.c.b16 %v411, %v409
      %v466 = vpack.c.b16 %v412, %v410
      %v467 = vpack.c.b16 %v415, %v413
      %v468 = vpack.c.b16 %v416, %v414
      %v469 = vpack.c.b16 %v419, %v417
      %v470 = vpack.c.b16 %v420, %v418
      %v471 = vpack.c.b16 %v423, %v421
      %v472 = vpack.c.b16 %v424, %v422
      %v473 = vpack.c.b16 %v427, %v425
      %v474 = vpack.c.b16 %v428, %v426
      %v475 = vpack.c.b16 %v431, %v429
      %v476 = vpack.c.b16 %v432, %v430
      %v477 = vpack.c.b16 %v435, %v433
      %v478 = vpack.c.b16 %v436, %v434
      %v479 = vpack.c.b16 %v439, %v437
      %v480 = vpack.c.b16 %v440, %v438
      %v481 = vpack.c.b16 %v443, %v441
      %v482 = vpack.c.b16 %v444, %v442
      %v483 = vpack.c.b16 %v447, %v445
      %v484 = vpack.c.b16 %v448, %v446
      %v485 = vpack.c.b16 %v451, %v449
      %v486 = vpack.c.b16 %v452, %v450
      %v487 = vpack.c.b16 %v455, %v453
      %v488 = vpack.c.b16 %v456, %v454
      %v553 = vunpack.c.l.b16 %v329
      %v554 = vunpack.c.l.b16 %v330
      %v555 = vunpack.c.l.b16 %v331
      %v556 = vunpack.c.l.b16 %v332
      %v557 = vunpack.c.l.b16 %v333
      %v558 = vunpack.c.l.b16 %v334
      %v559 = vunpack.c.l.b16 %v335
      %v560 = vunpack.c.l.b16 %v336
      %v561 = vunpack.c.l.b16 %v337
      %v562 = vunpack.c.l.b16 %v338
      %v563 = vunpack.c.l.b16 %v339
      %v564 = vunpack.c.l.b16 %v340
      %v565 = vunpack.c.l.b16 %v341
      %v566 = vunpack.c.l.b16 %v342
      %v567 = vunpack.c.l.b16 %v343
      %v568 = vunpack.c.l.b16 %v344
      %v569 = vunpack.c.l.b16 %v345
      %v570 = vunpack.c.l.b16 %v346
      %v571 = vunpack.c.l.b16 %v347
      %v572 = vunpack.c.l.b16 %v348
      %v573 = vunpack.c.l.b16 %v349
      %v574 = vunpack.c.l.b16 %v350
      %v575 = vunpack.c.l.b16 %v351
      %v576 = vunpack.c.l.b16 %v352
      %v577 = vunpack.c.l.b16 %v353
      %v578 = vunpack.c.l.b16 %v354
      %v579 = vunpack.c.l.b16 %v355
      %v580 = vunpack.c.l.b16 %v356
      %v581 = vunpack.c.l.b16 %v357
      %v582 = vunpack.c.l.b16 %v358
      %v583 = vunpack.c.l.b16 %v359
      %v584 = vunpack.c.l.b16 %v360
      %v585 = vpack.c.b16 %v554, %v553
      %v586 = vpack.c.b16 %v556, %v555
      %v587 = vpack.c.b16 %v558, %v557
      %v588 = vpack.c.b16 %v560, %v559
      %v589 = vpack.c.b16 %v562, %v561
      %v590 = vpack.c.b16 %v564, %v563
      %v591 = vpack.c.b16 %v566, %v565
      %v592 = vpack.c.b16 %v568, %v567
      %v593 = vpack.c.b16 %v570, %v569
      %v594 = vpack.c.b16 %v572, %v571
      %v595 = vpack.c.b16 %v574, %v573
      %v596 = vpack.c.b16 %v576, %v575
      %v597 = vpack.c.b16 %v578, %v577
      %v598 = vpack.c.b16 %v580, %v579
      %v599 = vpack.c.b16 %v582, %v581
      %v600 = vpack.c.b16 %v584, %v583
      %617 = vmatprep.subr.bf16.mxu0 0
      %618 = vmatpush1.bf16.msra.mxu0 %v592
      %619 = vmatprep.subr.bf16.mxu0 0
      %620 = vmatpush1.bf16.msra.mxu0 %v591
      %621 = vmatprep.subr.bf16.mxu0 0
      %622 = vmatpush1.bf16.msra.mxu0 %v590
      %623 = vmatprep.subr.bf16.mxu0 0
      %624 = vmatpush1.bf16.msra.mxu0 %v589
      %625 = vmatprep.subr.bf16.mxu0 0
      %626 = vmatpush1.bf16.msra.mxu0 %v588
      %627 = vmatprep.subr.bf16.mxu0 0
      %628 = vmatpush1.bf16.msra.mxu0 %v587
      %629 = vmatprep.subr.bf16.mxu0 0
      %630 = vmatpush1.bf16.msra.mxu0 %v586
      %631 = vmatprep.subr.bf16.mxu0 0
      %632 = vmatpush1.bf16.msra.mxu0 %v585
      %633 = vmatprep.subr.bf16.mxu0 0
      %634 = vmatpush2.bf16.msra.mxu0 %v600
      %635 = vmatprep.subr.bf16.mxu0 0
      %636 = vmatpush2.bf16.msra.mxu0 %v599
      %637 = vmatprep.subr.bf16.mxu0 0
      %638 = vmatpush2.bf16.msra.mxu0 %v598
      %639 = vmatprep.subr.bf16.mxu0 0
      %640 = vmatpush2.bf16.msra.mxu0 %v597
      %641 = vmatprep.subr.bf16.mxu0 0
      %642 = vmatpush2.bf16.msra.mxu0 %v596
      %643 = vmatprep.subr.bf16.mxu0 0
      %644 = vmatpush2.bf16.msra.mxu0 %v595
      %645 = vmatprep.subr.bf16.mxu0 0
      %646 = vmatpush2.bf16.msra.mxu0 %v594
      %647 = vmatprep.subr.bf16.mxu0 0
      %648 = vmatpush2.bf16.msra.mxu0 %v593
      %649 = vmatprep.mubr.bf16.mxu0 %v458
      %650 = vmatmul.mubr.bf16.gmra.mxu0 %v457
      %v651 = vpop.f32.mrf.mxu0
      %v652 = vadd.f32 0.0, %v651
      %v653 = vpop.f32.mrf.mxu0
      %v654 = vpop.f32.mrf.mxu0
      %v655 = vadd.f32 0.0, %v654
      %v656 = vpop.f32.mrf.mxu0
      %657 = vmatprep.mubr.bf16.mxu0 %v460
      %658 = vmatmul.mubr.bf16.gmra.mxu0 %v459
      %v659 = vpop.f32.mrf.mxu0
      %v660 = vadd.f32 0.0, %v659
      %v661 = vpop.f32.mrf.mxu0
      %v662 = vpop.f32.mrf.mxu0
      %v663 = vadd.f32 0.0, %v662
      %v664 = vpop.f32.mrf.mxu0
      %665 = vmatprep.mubr.bf16.mxu0 %v462
      %666 = vmatmul.mubr.bf16.gmra.mxu0 %v461
      %v667 = vpop.f32.mrf.mxu0
      %v668 = vadd.f32 0.0, %v667
      %v669 = vpop.f32.mrf.mxu0
      %v670 = vpop.f32.mrf.mxu0
      %v671 = vadd.f32 0.0, %v670
      %v672 = vpop.f32.mrf.mxu0
      %673 = vmatprep.mubr.bf16.mxu0 %v464
      %674 = vmatmul.mubr.bf16.gmra.mxu0 %v463
      %v675 = vpop.f32.mrf.mxu0
      %v676 = vadd.f32 0.0, %v675
      %v677 = vpop.f32.mrf.mxu0
      %v678 = vpop.f32.mrf.mxu0
      %v679 = vadd.f32 0.0, %v678
      %v680 = vpop.f32.mrf.mxu0
      %681 = vmatprep.mubr.bf16.mxu0 %v466
      %682 = vmatmul.mubr.bf16.gmra.mxu0 %v465
      %v683 = vpop.f32.mrf.mxu0
      %v684 = vadd.f32 0.0, %v683
      %v685 = vpop.f32.mrf.mxu0
      %v686 = vpop.f32.mrf.mxu0
      %v687 = vadd.f32 0.0, %v686
      %v688 = vpop.f32.mrf.mxu0
      %689 = vmatprep.mubr.bf16.mxu0 %v468
      %690 = vmatmul.mubr.bf16.gmra.mxu0 %v467
      %v691 = vpop.f32.mrf.mxu0
      %v692 = vadd.f32 0.0, %v691
      %v693 = vpop.f32.mrf.mxu0
      %v694 = vpop.f32.mrf.mxu0
      %v695 = vadd.f32 0.0, %v694
      %v696 = vpop.f32.mrf.mxu0
      %697 = vmatprep.mubr.bf16.mxu0 %v470
      %698 = vmatmul.mubr.bf16.gmra.mxu0 %v469
      %v699 = vpop.f32.mrf.mxu0
      %v700 = vadd.f32 0.0, %v699
      %v701 = vpop.f32.mrf.mxu0
      %v702 = vpop.f32.mrf.mxu0
      %v703 = vadd.f32 0.0, %v702
      %v704 = vpop.f32.mrf.mxu0
      %705 = vmatprep.mubr.bf16.mxu0 %v472
      %706 = vmatmul.mubr.bf16.gmra.mxu0 %v471
      %v707 = vpop.f32.mrf.mxu0
      %v708 = vadd.f32 0.0, %v707
      %v709 = vpop.f32.mrf.mxu0
      %v710 = vpop.f32.mrf.mxu0
      %v711 = vadd.f32 0.0, %v710
      %v712 = vpop.f32.mrf.mxu0
      %713 = vmatprep.mubr.bf16.mxu0 %v474
      %714 = vmatmul.mubr.bf16.gmra.mxu0 %v473
      %v715 = vpop.f32.mrf.mxu0
      %v716 = vadd.f32 0.0, %v715
      %v717 = vpop.f32.mrf.mxu0
      %v718 = vpop.f32.mrf.mxu0
      %v719 = vadd.f32 0.0, %v718
      %v720 = vpop.f32.mrf.mxu0
      %721 = vmatprep.mubr.bf16.mxu0 %v476
      %722 = vmatmul.mubr.bf16.gmra.mxu0 %v475
      %v723 = vpop.f32.mrf.mxu0
      %v724 = vadd.f32 0.0, %v723
      %v725 = vpop.f32.mrf.mxu0
      %v726 = vpop.f32.mrf.mxu0
      %v727 = vadd.f32 0.0, %v726
      %v728 = vpop.f32.mrf.mxu0
      %729 = vmatprep.mubr.bf16.mxu0 %v478
      %730 = vmatmul.mubr.bf16.gmra.mxu0 %v477
      %v731 = vpop.f32.mrf.mxu0
      %v732 = vadd.f32 0.0, %v731
      %v733 = vpop.f32.mrf.mxu0
      %v734 = vpop.f32.mrf.mxu0
      %v735 = vadd.f32 0.0, %v734
      %v736 = vpop.f32.mrf.mxu0
      %737 = vmatprep.mubr.bf16.mxu0 %v480
      %738 = vmatmul.mubr.bf16.gmra.mxu0 %v479
      %v739 = vpop.f32.mrf.mxu0
      %v740 = vadd.f32 0.0, %v739
      %v741 = vpop.f32.mrf.mxu0
      %v742 = vpop.f32.mrf.mxu0
      %v743 = vadd.f32 0.0, %v742
      %v744 = vpop.f32.mrf.mxu0
      %745 = vmatprep.mubr.bf16.mxu0 %v482
      %746 = vmatmul.mubr.bf16.gmra.mxu0 %v481
      %v747 = vpop.f32.mrf.mxu0
      %v748 = vadd.f32 0.0, %v747
      %v749 = vpop.f32.mrf.mxu0
      %v750 = vpop.f32.mrf.mxu0
      %v751 = vadd.f32 0.0, %v750
      %v752 = vpop.f32.mrf.mxu0
      %753 = vmatprep.mubr.bf16.mxu0 %v484
      %754 = vmatmul.mubr.bf16.gmra.mxu0 %v483
      %v755 = vpop.f32.mrf.mxu0
      %v756 = vadd.f32 0.0, %v755
      %v757 = vpop.f32.mrf.mxu0
      %v758 = vpop.f32.mrf.mxu0
      %v759 = vadd.f32 0.0, %v758
      %v760 = vpop.f32.mrf.mxu0
      %761 = vmatprep.mubr.bf16.mxu0 %v486
      %762 = vmatmul.mubr.bf16.gmra.mxu0 %v485
      %v763 = vpop.f32.mrf.mxu0
      %v764 = vadd.f32 0.0, %v763
      %v765 = vpop.f32.mrf.mxu0
      %v766 = vpop.f32.mrf.mxu0
      %v767 = vadd.f32 0.0, %v766
      %v768 = vpop.f32.mrf.mxu0
      %769 = vmatprep.mubr.bf16.mxu0 %v488
      %770 = vmatmul.mubr.bf16.gmra.mxu0 %v487
      %v771 = vpop.f32.mrf.mxu0
      %v772 = vadd.f32 0.0, %v771
      %v773 = vpop.f32.mrf.mxu0
      %v774 = vpop.f32.mrf.mxu0
      %v775 = vadd.f32 0.0, %v774
      %v776 = vpop.f32.mrf.mxu0
      %777 = vdwg.mxu0
      %v810 = vunpack.c.l.b16 %v228
      %v811 = vunpack.c.h.b16 %v228
      %v812 = vunpack.c.l.b16 %v229
      %v813 = vunpack.c.h.b16 %v229
      %v814 = vunpack.c.l.b16 %v230
      %v815 = vunpack.c.h.b16 %v230
      %v816 = vunpack.c.l.b16 %v231
      %v817 = vunpack.c.h.b16 %v231
      %v818 = vunpack.c.l.b16 %v232
      %v819 = vunpack.c.h.b16 %v232
      %v820 = vunpack.c.l.b16 %v233
      %v821 = vunpack.c.h.b16 %v233
      %v822 = vunpack.c.l.b16 %v234
      %v823 = vunpack.c.h.b16 %v234
      %v824 = vunpack.c.l.b16 %v235
      %v825 = vunpack.c.h.b16 %v235
      %v826 = vunpack.c.l.b16 %v236
      %v827 = vunpack.c.h.b16 %v236
      %v828 = vunpack.c.l.b16 %v237
      %v829 = vunpack.c.h.b16 %v237
      %v830 = vunpack.c.l.b16 %v238
      %v831 = vunpack.c.h.b16 %v238
      %v832 = vunpack.c.l.b16 %v239
      %v833 = vunpack.c.h.b16 %v239
      %v834 = vunpack.c.l.b16 %v240
      %v835 = vunpack.c.h.b16 %v240
      %v836 = vunpack.c.l.b16 %v241
      %v837 = vunpack.c.h.b16 %v241
      %v838 = vunpack.c.l.b16 %v242
      %v839 = vunpack.c.h.b16 %v242
      %v840 = vunpack.c.l.b16 %v243
      %v841 = vunpack.c.h.b16 %v243
      %v842 = vunpack.c.l.b16 %v244
      %v843 = vunpack.c.h.b16 %v244
      %v844 = vunpack.c.l.b16 %v245
      %v845 = vunpack.c.h.b16 %v245
      %v846 = vunpack.c.l.b16 %v246
      %v847 = vunpack.c.h.b16 %v246
      %v848 = vunpack.c.l.b16 %v247
      %v849 = vunpack.c.h.b16 %v247
      %v850 = vunpack.c.l.b16 %v248
      %v851 = vunpack.c.h.b16 %v248
      %v852 = vunpack.c.l.b16 %v249
      %v853 = vunpack.c.h.b16 %v249
      %v854 = vunpack.c.l.b16 %v250
      %v855 = vunpack.c.h.b16 %v250
      %v856 = vunpack.c.l.b16 %v251
      %v857 = vunpack.c.h.b16 %v251
      %v858 = vunpack.c.l.b16 %v252
      %v859 = vunpack.c.h.b16 %v252
      %v860 = vunpack.c.l.b16 %v253
      %v861 = vunpack.c.h.b16 %v253
      %v862 = vunpack.c.l.b16 %v254
      %v863 = vunpack.c.h.b16 %v254
      %v864 = vunpack.c.l.b16 %v255
      %v865 = vunpack.c.h.b16 %v255
      %v866 = vunpack.c.l.b16 %v256
      %v867 = vunpack.c.h.b16 %v256
      %v868 = vunpack.c.l.b16 %v257
      %v869 = vunpack.c.h.b16 %v257
      %v870 = vunpack.c.l.b16 %v258
      %v871 = vunpack.c.h.b16 %v258
      %v872 = vunpack.c.l.b16 %v259
      %v873 = vunpack.c.h.b16 %v259
      %v874 = vpack.c.b16 %v812, %v810
      %v875 = vpack.c.b16 %v813, %v811
      %v876 = vpack.c.b16 %v816, %v814
      %v877 = vpack.c.b16 %v817, %v815
      %v878 = vpack.c.b16 %v820, %v818
      %v879 = vpack.c.b16 %v821, %v819
      %v880 = vpack.c.b16 %v824, %v822
      %v881 = vpack.c.b16 %v825, %v823
      %v882 = vpack.c.b16 %v828, %v826
      %v883 = vpack.c.b16 %v829, %v827
      %v884 = vpack.c.b16 %v832, %v830
      %v885 = vpack.c.b16 %v833, %v831
      %v886 = vpack.c.b16 %v836, %v834
      %v887 = vpack.c.b16 %v837, %v835
      %v888 = vpack.c.b16 %v840, %v838
      %v889 = vpack.c.b16 %v841, %v839
      %v890 = vpack.c.b16 %v844, %v842
      %v891 = vpack.c.b16 %v845, %v843
      %v892 = vpack.c.b16 %v848, %v846
      %v893 = vpack.c.b16 %v849, %v847
      %v894 = vpack.c.b16 %v852, %v850
      %v895 = vpack.c.b16 %v853, %v851
      %v896 = vpack.c.b16 %v856, %v854
      %v897 = vpack.c.b16 %v857, %v855
      %v898 = vpack.c.b16 %v860, %v858
      %v899 = vpack.c.b16 %v861, %v859
      %v900 = vpack.c.b16 %v864, %v862
      %v901 = vpack.c.b16 %v865, %v863
      %v902 = vpack.c.b16 %v868, %v866
      %v903 = vpack.c.b16 %v869, %v867
      %v904 = vpack.c.b16 %v872, %v870
      %v905 = vpack.c.b16 %v873, %v871
      %v970 = vunpack.c.l.b16 %v260
      %v971 = vunpack.c.l.b16 %v261
      %v972 = vunpack.c.l.b16 %v262
      %v973 = vunpack.c.l.b16 %v263
      %v974 = vunpack.c.l.b16 %v264
      %v975 = vunpack.c.l.b16 %v265
      %v976 = vunpack.c.l.b16 %v266
      %v977 = vunpack.c.l.b16 %v267
      %v978 = vunpack.c.l.b16 %v268
      %v979 = vunpack.c.l.b16 %v269
      %v980 = vunpack.c.l.b16 %v270
      %v981 = vunpack.c.l.b16 %v271
      %v982 = vunpack.c.l.b16 %v272
      %v983 = vunpack.c.l.b16 %v273
      %v984 = vunpack.c.l.b16 %v274
      %v985 = vunpack.c.l.b16 %v275
      %v986 = vunpack.c.l.b16 %v276
      %v987 = vunpack.c.l.b16 %v277
      %v988 = vunpack.c.l.b16 %v278
      %v989 = vunpack.c.l.b16 %v279
      %v990 = vunpack.c.l.b16 %v280
      %v991 = vunpack.c.l.b16 %v281
      %v992 = vunpack.c.l.b16 %v282
      %v993 = vunpack.c.l.b16 %v283
      %v994 = vunpack.c.l.b16 %v284
      %v995 = vunpack.c.l.b16 %v285
      %v996 = vunpack.c.l.b16 %v286
      %v997 = vunpack.c.l.b16 %v287
      %v998 = vunpack.c.l.b16 %v288
      %v999 = vunpack.c.l.b16 %v289
      %v1000 = vunpack.c.l.b16 %v290
      %v1001 = vunpack.c.l.b16 %v291
      %v1002 = vpack.c.b16 %v971, %v970
      %v1003 = vpack.c.b16 %v973, %v972
      %v1004 = vpack.c.b16 %v975, %v974
      %v1005 = vpack.c.b16 %v977, %v976
      %v1006 = vpack.c.b16 %v979, %v978
      %v1007 = vpack.c.b16 %v981, %v980
      %v1008 = vpack.c.b16 %v983, %v982
      %v1009 = vpack.c.b16 %v985, %v984
      %v1010 = vpack.c.b16 %v987, %v986
      %v1011 = vpack.c.b16 %v989, %v988
      %v1012 = vpack.c.b16 %v991, %v990
      %v1013 = vpack.c.b16 %v993, %v992
      %v1014 = vpack.c.b16 %v995, %v994
      %v1015 = vpack.c.b16 %v997, %v996
      %v1016 = vpack.c.b16 %v999, %v998
      %v1017 = vpack.c.b16 %v1001, %v1000
      %1034 = vmatprep.subr.bf16.mxu0 0
      %1035 = vmatpush1.bf16.msra.mxu0 %v1009
      %1036 = vmatprep.subr.bf16.mxu0 0
      %1037 = vmatpush1.bf16.msra.mxu0 %v1008
      %1038 = vmatprep.subr.bf16.mxu0 0
      %1039 = vmatpush1.bf16.msra.mxu0 %v1007
      %1040 = vmatprep.subr.bf16.mxu0 0
      %1041 = vmatpush1.bf16.msra.mxu0 %v1006
      %1042 = vmatprep.subr.bf16.mxu0 0
      %1043 = vmatpush1.bf16.msra.mxu0 %v1005
      %1044 = vmatprep.subr.bf16.mxu0 0
      %1045 = vmatpush1.bf16.msra.mxu0 %v1004
      %1046 = vmatprep.subr.bf16.mxu0 0
      %1047 = vmatpush1.bf16.msra.mxu0 %v1003
      %1048 = vmatprep.subr.bf16.mxu0 0
      %1049 = vmatpush1.bf16.msra.mxu0 %v1002
      %1050 = vmatprep.subr.bf16.mxu0 0
      %1051 = vmatpush2.bf16.msra.mxu0 %v1017
      %1052 = vmatprep.subr.bf16.mxu0 0
      %1053 = vmatpush2.bf16.msra.mxu0 %v1016
      %1054 = vmatprep.subr.bf16.mxu0 0
      %1055 = vmatpush2.bf16.msra.mxu0 %v1015
      %1056 = vmatprep.subr.bf16.mxu0 0
      %1057 = vmatpush2.bf16.msra.mxu0 %v1014
      %1058 = vmatprep.subr.bf16.mxu0 0
      %1059 = vmatpush2.bf16.msra.mxu0 %v1013
      %1060 = vmatprep.subr.bf16.mxu0 0
      %1061 = vmatpush2.bf16.msra.mxu0 %v1012
      %1062 = vmatprep.subr.bf16.mxu0 0
      %1063 = vmatpush2.bf16.msra.mxu0 %v1011
      %1064 = vmatprep.subr.bf16.mxu0 0
      %1065 = vmatpush2.bf16.msra.mxu0 %v1010
      %1066 = vmatprep.mubr.bf16.mxu0 %v875
      %1067 = vmatmul.mubr.bf16.gmra.mxu0 %v874
      %v1068 = vpop.f32.mrf.mxu0
      %v1069 = vadd.f32 %v652, %v1068
      %v1070 = vpop.f32.mrf.mxu0
      %v1071 = vpop.f32.mrf.mxu0
      %v1072 = vadd.f32 %v655, %v1071
      %v1073 = vpop.f32.mrf.mxu0
      %1074 = vmatprep.mubr.bf16.mxu0 %v877
      %1075 = vmatmul.mubr.bf16.gmra.mxu0 %v876
      %v1076 = vpop.f32.mrf.mxu0
      %v1077 = vadd.f32 %v660, %v1076
      %v1078 = vpop.f32.mrf.mxu0
      %v1079 = vpop.f32.mrf.mxu0
      %v1080 = vadd.f32 %v663, %v1079
      %v1081 = vpop.f32.mrf.mxu0
      %1082 = vmatprep.mubr.bf16.mxu0 %v879
      %1083 = vmatmul.mubr.bf16.gmra.mxu0 %v878
      %v1084 = vpop.f32.mrf.mxu0
      %v1085 = vadd.f32 %v668, %v1084
      %v1086 = vpop.f32.mrf.mxu0
      %v1087 = vpop.f32.mrf.mxu0
      %v1088 = vadd.f32 %v671, %v1087
      %v1089 = vpop.f32.mrf.mxu0
      %1090 = vmatprep.mubr.bf16.mxu0 %v881
      %1091 = vmatmul.mubr.bf16.gmra.mxu0 %v880
      %v1092 = vpop.f32.mrf.mxu0
      %v1093 = vadd.f32 %v676, %v1092
      %v1094 = vpop.f32.mrf.mxu0
      %v1095 = vpop.f32.mrf.mxu0
      %v1096 = vadd.f32 %v679, %v1095
      %v1097 = vpop.f32.mrf.mxu0
      %1098 = vmatprep.mubr.bf16.mxu0 %v883
      %1099 = vmatmul.mubr.bf16.gmra.mxu0 %v882
      %v1100 = vpop.f32.mrf.mxu0
      %v1101 = vadd.f32 %v684, %v1100
      %v1102 = vpop.f32.mrf.mxu0
      %v1103 = vpop.f32.mrf.mxu0
      %v1104 = vadd.f32 %v687, %v1103
      %v1105 = vpop.f32.mrf.mxu0
      %1106 = vmatprep.mubr.bf16.mxu0 %v885
      %1107 = vmatmul.mubr.bf16.gmra.mxu0 %v884
      %v1108 = vpop.f32.mrf.mxu0
      %v1109 = vadd.f32 %v692, %v1108
      %v1110 = vpop.f32.mrf.mxu0
      %v1111 = vpop.f32.mrf.mxu0
      %v1112 = vadd.f32 %v695, %v1111
      %v1113 = vpop.f32.mrf.mxu0
      %1114 = vmatprep.mubr.bf16.mxu0 %v887
      %1115 = vmatmul.mubr.bf16.gmra.mxu0 %v886
      %v1116 = vpop.f32.mrf.mxu0
      %v1117 = vadd.f32 %v700, %v1116
      %v1118 = vpop.f32.mrf.mxu0
      %v1119 = vpop.f32.mrf.mxu0
      %v1120 = vadd.f32 %v703, %v1119
      %v1121 = vpop.f32.mrf.mxu0
      %1122 = vmatprep.mubr.bf16.mxu0 %v889
      %1123 = vmatmul.mubr.bf16.gmra.mxu0 %v888
      %v1124 = vpop.f32.mrf.mxu0
      %v1125 = vadd.f32 %v708, %v1124
      %v1126 = vpop.f32.mrf.mxu0
      %v1127 = vpop.f32.mrf.mxu0
      %v1128 = vadd.f32 %v711, %v1127
      %v1129 = vpop.f32.mrf.mxu0
      %1130 = vmatprep.mubr.bf16.mxu0 %v891
      %1131 = vmatmul.mubr.bf16.gmra.mxu0 %v890
      %v1132 = vpop.f32.mrf.mxu0
      %v1133 = vadd.f32 %v716, %v1132
      %v1134 = vpop.f32.mrf.mxu0
      %v1135 = vpop.f32.mrf.mxu0
      %v1136 = vadd.f32 %v719, %v1135
      %v1137 = vpop.f32.mrf.mxu0
      %1138 = vmatprep.mubr.bf16.mxu0 %v893
      %1139 = vmatmul.mubr.bf16.gmra.mxu0 %v892
      %v1140 = vpop.f32.mrf.mxu0
      %v1141 = vadd.f32 %v724, %v1140
      %v1142 = vpop.f32.mrf.mxu0
      %v1143 = vpop.f32.mrf.mxu0
      %v1144 = vadd.f32 %v727, %v1143
      %v1145 = vpop.f32.mrf.mxu0
      %1146 = vmatprep.mubr.bf16.mxu0 %v895
      %1147 = vmatmul.mubr.bf16.gmra.mxu0 %v894
      %v1148 = vpop.f32.mrf.mxu0
      %v1149 = vadd.f32 %v732, %v1148
      %v1150 = vpop.f32.mrf.mxu0
      %v1151 = vpop.f32.mrf.mxu0
      %v1152 = vadd.f32 %v735, %v1151
      %v1153 = vpop.f32.mrf.mxu0
      %1154 = vmatprep.mubr.bf16.mxu0 %v897
      %1155 = vmatmul.mubr.bf16.gmra.mxu0 %v896
      %v1156 = vpop.f32.mrf.mxu0
      %v1157 = vadd.f32 %v740, %v1156
      %v1158 = vpop.f32.mrf.mxu0
      %v1159 = vpop.f32.mrf.mxu0
      %v1160 = vadd.f32 %v743, %v1159
      %v1161 = vpop.f32.mrf.mxu0
      %1162 = vmatprep.mubr.bf16.mxu0 %v899
      %1163 = vmatmul.mubr.bf16.gmra.mxu0 %v898
      %v1164 = vpop.f32.mrf.mxu0
      %v1165 = vadd.f32 %v748, %v1164
      %v1166 = vpop.f32.mrf.mxu0
      %v1167 = vpop.f32.mrf.mxu0
      %v1168 = vadd.f32 %v751, %v1167
      %v1169 = vpop.f32.mrf.mxu0
      %1170 = vmatprep.mubr.bf16.mxu0 %v901
      %1171 = vmatmul.mubr.bf16.gmra.mxu0 %v900
      %v1172 = vpop.f32.mrf.mxu0
      %v1173 = vadd.f32 %v756, %v1172
      %v1174 = vpop.f32.mrf.mxu0
      %v1175 = vpop.f32.mrf.mxu0
      %v1176 = vadd.f32 %v759, %v1175
      %v1177 = vpop.f32.mrf.mxu0
      %1178 = vmatprep.mubr.bf16.mxu0 %v903
      %1179 = vmatmul.mubr.bf16.gmra.mxu0 %v902
      %v1180 = vpop.f32.mrf.mxu0
      %v1181 = vadd.f32 %v764, %v1180
      %v1182 = vpop.f32.mrf.mxu0
      %v1183 = vpop.f32.mrf.mxu0
      %v1184 = vadd.f32 %v767, %v1183
      %v1185 = vpop.f32.mrf.mxu0
      %1186 = vmatprep.mubr.bf16.mxu0 %v905
      %1187 = vmatmul.mubr.bf16.gmra.mxu0 %v904
      %v1188 = vpop.f32.mrf.mxu0
      %v1189 = vadd.f32 %v772, %v1188
      %v1190 = vpop.f32.mrf.mxu0
      %v1191 = vpop.f32.mrf.mxu0
      %v1192 = vadd.f32 %v775, %v1191
      %v1193 = vpop.f32.mrf.mxu0
      %1194 = vdwg.mxu0
      %s1195 = sadd.s32 %s224, 2
      %s1196 = smul.u32 %s1195, 4
      %s1197 = smul.addr %s1196, 4
      %s1198 = scalar_lea.vmem %s211, %s1197
      %v1199 = vld [vmem:[%s1198] sm:$0xff]
      %v1200 = vld [vmem:[%s1198 + $0x8] sm:$0xff]
      %v1201 = vld [vmem:[%s1198 + $0x10] sm:$0xff]
      %v1202 = vld [vmem:[%s1198 + $0x18] sm:$0xff]
      %v1203 = vld [vmem:[%s1198 + $0x20] sm:$0xff]
      %v1204 = vld [vmem:[%s1198 + $0x28] sm:$0xff]
      %v1205 = vld [vmem:[%s1198 + $0x30] sm:$0xff]
      %v1206 = vld [vmem:[%s1198 + $0x38] sm:$0xff]
      %v1207 = vld [vmem:[%s1198 + $0x40] sm:$0xff]
      %v1208 = vld [vmem:[%s1198 + $0x48] sm:$0xff]
      %v1209 = vld [vmem:[%s1198 + $0x50] sm:$0xff]
      %v1210 = vld [vmem:[%s1198 + $0x58] sm:$0xff]
      %v1211 = vld [vmem:[%s1198 + $0x60] sm:$0xff]
      %v1212 = vld [vmem:[%s1198 + $0x68] sm:$0xff]
      %v1213 = vld [vmem:[%s1198 + $0x70] sm:$0xff]
      %v1214 = vld [vmem:[%s1198 + $0x78] sm:$0xff]
      %v1215 = vld [vmem:[%s1198 + $0x80] sm:$0xff]
      %v1216 = vld [vmem:[%s1198 + $0x88] sm:$0xff]
      %v1217 = vld [vmem:[%s1198 + $0x90] sm:$0xff]
      %v1218 = vld [vmem:[%s1198 + $0x98] sm:$0xff]
      %v1219 = vld [vmem:[%s1198 + $0xa0] sm:$0xff]
      %v1220 = vld [vmem:[%s1198 + $0xa8] sm:$0xff]
      %v1221 = vld [vmem:[%s1198 + $0xb0] sm:$0xff]
      %v1222 = vld [vmem:[%s1198 + $0xb8] sm:$0xff]
      %v1223 = vld [vmem:[%s1198 + $0xc0] sm:$0xff]
      %v1224 = vld [vmem:[%s1198 + $0xc8] sm:$0xff]
      %v1225 = vld [vmem:[%s1198 + $0xd0] sm:$0xff]
      %v1226 = vld [vmem:[%s1198 + $0xd8] sm:$0xff]
      %v1227 = vld [vmem:[%s1198 + $0xe0] sm:$0xff]
      %v1228 = vld [vmem:[%s1198 + $0xe8] sm:$0xff]
      %v1229 = vld [vmem:[%s1198 + $0xf0] sm:$0xff]
      %v1230 = vld [vmem:[%s1198 + $0xf8] sm:$0xff]
      %s1231 = scalar_lea.vmem %s1, 256
      %v1232 = vld [vmem:[%s1231] sm:$0xf]
      %v1233 = vld [vmem:[%s1231 + $0x4] sm:$0xf]
      %v1234 = vld [vmem:[%s1231 + $0x8] sm:$0xf]
      %v1235 = vld [vmem:[%s1231 + $0xc] sm:$0xf]
      %v1236 = vld [vmem:[%s1231 + $0x10] sm:$0xf]
      %v1237 = vld [vmem:[%s1231 + $0x14] sm:$0xf]
      %v1238 = vld [vmem:[%s1231 + $0x18] sm:$0xf]
      %v1239 = vld [vmem:[%s1231 + $0x1c] sm:$0xf]
      %v1240 = vld [vmem:[%s1231 + $0x20] sm:$0xf]
      %v1241 = vld [vmem:[%s1231 + $0x24] sm:$0xf]
      %v1242 = vld [vmem:[%s1231 + $0x28] sm:$0xf]
      %v1243 = vld [vmem:[%s1231 + $0x2c] sm:$0xf]
      %v1244 = vld [vmem:[%s1231 + $0x30] sm:$0xf]
      %v1245 = vld [vmem:[%s1231 + $0x34] sm:$0xf]
      %v1246 = vld [vmem:[%s1231 + $0x38] sm:$0xf]
      %v1247 = vld [vmem:[%s1231 + $0x3c] sm:$0xf]
      %v1248 = vld [vmem:[%s1231 + $0x40] sm:$0xf]
      %v1249 = vld [vmem:[%s1231 + $0x44] sm:$0xf]
      %v1250 = vld [vmem:[%s1231 + $0x48] sm:$0xf]
      %v1251 = vld [vmem:[%s1231 + $0x4c] sm:$0xf]
      %v1252 = vld [vmem:[%s1231 + $0x50] sm:$0xf]
      %v1253 = vld [vmem:[%s1231 + $0x54] sm:$0xf]
      %v1254 = vld [vmem:[%s1231 + $0x58] sm:$0xf]
      %v1255 = vld [vmem:[%s1231 + $0x5c] sm:$0xf]
      %v1256 = vld [vmem:[%s1231 + $0x60] sm:$0xf]
      %v1257 = vld [vmem:[%s1231 + $0x64] sm:$0xf]
      %v1258 = vld [vmem:[%s1231 + $0x68] sm:$0xf]
      %v1259 = vld [vmem:[%s1231 + $0x6c] sm:$0xf]
      %v1260 = vld [vmem:[%s1231 + $0x70] sm:$0xf]
      %v1261 = vld [vmem:[%s1231 + $0x74] sm:$0xf]
      %v1262 = vld [vmem:[%s1231 + $0x78] sm:$0xf]
      %v1263 = vld [vmem:[%s1231 + $0x7c] sm:$0xf]
      %v1296 = vunpack.c.l.b16 %v1199
      %v1297 = vunpack.c.h.b16 %v1199
      %v1298 = vunpack.c.l.b16 %v1200
      %v1299 = vunpack.c.h.b16 %v1200
      %v1300 = vunpack.c.l.b16 %v1201
      %v1301 = vunpack.c.h.b16 %v1201
      %v1302 = vunpack.c.l.b16 %v1202
      %v1303 = vunpack.c.h.b16 %v1202
      %v1304 = vunpack.c.l.b16 %v1203
      %v1305 = vunpack.c.h.b16 %v1203
      %v1306 = vunpack.c.l.b16 %v1204
      %v1307 = vunpack.c.h.b16 %v1204
      %v1308 = vunpack.c.l.b16 %v1205
      %v1309 = vunpack.c.h.b16 %v1205
      %v1310 = vunpack.c.l.b16 %v1206
      %v1311 = vunpack.c.h.b16 %v1206
      %v1312 = vunpack.c.l.b16 %v1207
      %v1313 = vunpack.c.h.b16 %v1207
      %v1314 = vunpack.c.l.b16 %v1208
      %v1315 = vunpack.c.h.b16 %v1208
      %v1316 = vunpack.c.l.b16 %v1209
      %v1317 = vunpack.c.h.b16 %v1209
      %v1318 = vunpack.c.l.b16 %v1210
      %v1319 = vunpack.c.h.b16 %v1210
      %v1320 = vunpack.c.l.b16 %v1211
      %v1321 = vunpack.c.h.b16 %v1211
      %v1322 = vunpack.c.l.b16 %v1212
      %v1323 = vunpack.c.h.b16 %v1212
      %v1324 = vunpack.c.l.b16 %v1213
      %v1325 = vunpack.c.h.b16 %v1213
      %v1326 = vunpack.c.l.b16 %v1214
      %v1327 = vunpack.c.h.b16 %v1214
      %v1328 = vunpack.c.l.b16 %v1215
      %v1329 = vunpack.c.h.b16 %v1215
      %v1330 = vunpack.c.l.b16 %v1216
      %v1331 = vunpack.c.h.b16 %v1216
      %v1332 = vunpack.c.l.b16 %v1217
      %v1333 = vunpack.c.h.b16 %v1217
      %v1334 = vunpack.c.l.b16 %v1218
      %v1335 = vunpack.c.h.b16 %v1218
      %v1336 = vunpack.c.l.b16 %v1219
      %v1337 = vunpack.c.h.b16 %v1219
      %v1338 = vunpack.c.l.b16 %v1220
      %v1339 = vunpack.c.h.b16 %v1220
      %v1340 = vunpack.c.l.b16 %v1221
      %v1341 = vunpack.c.h.b16 %v1221
      %v1342 = vunpack.c.l.b16 %v1222
      %v1343 = vunpack.c.h.b16 %v1222
      %v1344 = vunpack.c.l.b16 %v1223
      %v1345 = vunpack.c.h.b16 %v1223
      %v1346 = vunpack.c.l.b16 %v1224
      %v1347 = vunpack.c.h.b16 %v1224
      %v1348 = vunpack.c.l.b16 %v1225
      %v1349 = vunpack.c.h.b16 %v1225
      %v1350 = vunpack.c.l.b16 %v1226
      %v1351 = vunpack.c.h.b16 %v1226
      %v1352 = vunpack.c.l.b16 %v1227
      %v1353 = vunpack.c.h.b16 %v1227
      %v1354 = vunpack.c.l.b16 %v1228
      %v1355 = vunpack.c.h.b16 %v1228
      %v1356 = vunpack.c.l.b16 %v1229
      %v1357 = vunpack.c.h.b16 %v1229
      %v1358 = vunpack.c.l.b16 %v1230
      %v1359 = vunpack.c.h.b16 %v1230
      %v1360 = vpack.c.b16 %v1298, %v1296
      %v1361 = vpack.c.b16 %v1299, %v1297
      %v1362 = vpack.c.b16 %v1302, %v1300
      %v1363 = vpack.c.b16 %v1303, %v1301
      %v1364 = vpack.c.b16 %v1306, %v1304
      %v1365 = vpack.c.b16 %v1307, %v1305
      %v1366 = vpack.c.b16 %v1310, %v1308
      %v1367 = vpack.c.b16 %v1311, %v1309
      %v1368 = vpack.c.b16 %v1314, %v1312
      %v1369 = vpack.c.b16 %v1315, %v1313
      %v1370 = vpack.c.b16 %v1318, %v1316
      %v1371 = vpack.c.b16 %v1319, %v1317
      %v1372 = vpack.c.b16 %v1322, %v1320
      %v1373 = vpack.c.b16 %v1323, %v1321
      %v1374 = vpack.c.b16 %v1326, %v1324
      %v1375 = vpack.c.b16 %v1327, %v1325
      %v1376 = vpack.c.b16 %v1330, %v1328
      %v1377 = vpack.c.b16 %v1331, %v1329
      %v1378 = vpack.c.b16 %v1334, %v1332
      %v1379 = vpack.c.b16 %v1335, %v1333
      %v1380 = vpack.c.b16 %v1338, %v1336
      %v1381 = vpack.c.b16 %v1339, %v1337
      %v1382 = vpack.c.b16 %v1342, %v1340
      %v1383 = vpack.c.b16 %v1343, %v1341
      %v1384 = vpack.c.b16 %v1346, %v1344
      %v1385 = vpack.c.b16 %v1347, %v1345
      %v1386 = vpack.c.b16 %v1350, %v1348
      %v1387 = vpack.c.b16 %v1351, %v1349
      %v1388 = vpack.c.b16 %v1354, %v1352
      %v1389 = vpack.c.b16 %v1355, %v1353
      %v1390 = vpack.c.b16 %v1358, %v1356
      %v1391 = vpack.c.b16 %v1359, %v1357
      %v1456 = vunpack.c.l.b16 %v1232
      %v1457 = vunpack.c.l.b16 %v1233
      %v1458 = vunpack.c.l.b16 %v1234
      %v1459 = vunpack.c.l.b16 %v1235
      %v1460 = vunpack.c.l.b16 %v1236
      %v1461 = vunpack.c.l.b16 %v1237
      %v1462 = vunpack.c.l.b16 %v1238
      %v1463 = vunpack.c.l.b16 %v1239
      %v1464 = vunpack.c.l.b16 %v1240
      %v1465 = vunpack.c.l.b16 %v1241
      %v1466 = vunpack.c.l.b16 %v1242
      %v1467 = vunpack.c.l.b16 %v1243
      %v1468 = vunpack.c.l.b16 %v1244
      %v1469 = vunpack.c.l.b16 %v1245
      %v1470 = vunpack.c.l.b16 %v1246
      %v1471 = vunpack.c.l.b16 %v1247
      %v1472 = vunpack.c.l.b16 %v1248
      %v1473 = vunpack.c.l.b16 %v1249
      %v1474 = vunpack.c.l.b16 %v1250
      %v1475 = vunpack.c.l.b16 %v1251
      %v1476 = vunpack.c.l.b16 %v1252
      %v1477 = vunpack.c.l.b16 %v1253
      %v1478 = vunpack.c.l.b16 %v1254
      %v1479 = vunpack.c.l.b16 %v1255
      %v1480 = vunpack.c.l.b16 %v1256
      %v1481 = vunpack.c.l.b16 %v1257
      %v1482 = vunpack.c.l.b16 %v1258
      %v1483 = vunpack.c.l.b16 %v1259
      %v1484 = vunpack.c.l.b16 %v1260
      %v1485 = vunpack.c.l.b16 %v1261
      %v1486 = vunpack.c.l.b16 %v1262
      %v1487 = vunpack.c.l.b16 %v1263
      %v1488 = vpack.c.b16 %v1457, %v1456
      %v1489 = vpack.c.b16 %v1459, %v1458
      %v1490 = vpack.c.b16 %v1461, %v1460
      %v1491 = vpack.c.b16 %v1463, %v1462
      %v1492 = vpack.c.b16 %v1465, %v1464
      %v1493 = vpack.c.b16 %v1467, %v1466
      %v1494 = vpack.c.b16 %v1469, %v1468
      %v1495 = vpack.c.b16 %v1471, %v1470
      %v1496 = vpack.c.b16 %v1473, %v1472
      %v1497 = vpack.c.b16 %v1475, %v1474
      %v1498 = vpack.c.b16 %v1477, %v1476
      %v1499 = vpack.c.b16 %v1479, %v1478
      %v1500 = vpack.c.b16 %v1481, %v1480
      %v1501 = vpack.c.b16 %v1483, %v1482
      %v1502 = vpack.c.b16 %v1485, %v1484
      %v1503 = vpack.c.b16 %v1487, %v1486
      %1520 = vmatprep.subr.bf16.mxu0 0
      %1521 = vmatpush1.bf16.msra.mxu0 %v1495
      %1522 = vmatprep.subr.bf16.mxu0 0
      %1523 = vmatpush1.bf16.msra.mxu0 %v1494
      %1524 = vmatprep.subr.bf16.mxu0 0
      %1525 = vmatpush1.bf16.msra.mxu0 %v1493
      %1526 = vmatprep.subr.bf16.mxu0 0
      %1527 = vmatpush1.bf16.msra.mxu0 %v1492
      %1528 = vmatprep.subr.bf16.mxu0 0
      %1529 = vmatpush1.bf16.msra.mxu0 %v1491
      %1530 = vmatprep.subr.bf16.mxu0 0
      %1531 = vmatpush1.bf16.msra.mxu0 %v1490
      %1532 = vmatprep.subr.bf16.mxu0 0
      %1533 = vmatpush1.bf16.msra.mxu0 %v1489
      %1534 = vmatprep.subr.bf16.mxu0 0
      %1535 = vmatpush1.bf16.msra.mxu0 %v1488
      %1536 = vmatprep.subr.bf16.mxu0 0
      %1537 = vmatpush2.bf16.msra.mxu0 %v1503
      %1538 = vmatprep.subr.bf16.mxu0 0
      %1539 = vmatpush2.bf16.msra.mxu0 %v1502
      %1540 = vmatprep.subr.bf16.mxu0 0
      %1541 = vmatpush2.bf16.msra.mxu0 %v1501
      %1542 = vmatprep.subr.bf16.mxu0 0
      %1543 = vmatpush2.bf16.msra.mxu0 %v1500
      %1544 = vmatprep.subr.bf16.mxu0 0
      %1545 = vmatpush2.bf16.msra.mxu0 %v1499
      %1546 = vmatprep.subr.bf16.mxu0 0
      %1547 = vmatpush2.bf16.msra.mxu0 %v1498
      %1548 = vmatprep.subr.bf16.mxu0 0
      %1549 = vmatpush2.bf16.msra.mxu0 %v1497
      %1550 = vmatprep.subr.bf16.mxu0 0
      %1551 = vmatpush2.bf16.msra.mxu0 %v1496
      %1552 = vmatprep.mubr.bf16.mxu0 %v1361
      %1553 = vmatmul.mubr.bf16.gmra.mxu0 %v1360
      %v1554 = vpop.f32.mrf.mxu0
      %v1555 = vadd.f32 0.0, %v1554
      %v1556 = vpop.f32.mrf.mxu0
      %v1557 = vpop.f32.mrf.mxu0
      %v1558 = vadd.f32 0.0, %v1557
      %v1559 = vpop.f32.mrf.mxu0
      %1560 = vmatprep.mubr.bf16.mxu0 %v1363
      %1561 = vmatmul.mubr.bf16.gmra.mxu0 %v1362
      %v1562 = vpop.f32.mrf.mxu0
      %v1563 = vadd.f32 0.0, %v1562
      %v1564 = vpop.f32.mrf.mxu0
      %v1565 = vpop.f32.mrf.mxu0
      %v1566 = vadd.f32 0.0, %v1565
      %v1567 = vpop.f32.mrf.mxu0
      %1568 = vmatprep.mubr.bf16.mxu0 %v1365
      %1569 = vmatmul.mubr.bf16.gmra.mxu0 %v1364
      %v1570 = vpop.f32.mrf.mxu0
      %v1571 = vadd.f32 0.0, %v1570
      %v1572 = vpop.f32.mrf.mxu0
      %v1573 = vpop.f32.mrf.mxu0
      %v1574 = vadd.f32 0.0, %v1573
      %v1575 = vpop.f32.mrf.mxu0
      %1576 = vmatprep.mubr.bf16.mxu0 %v1367
      %1577 = vmatmul.mubr.bf16.gmra.mxu0 %v1366
      %v1578 = vpop.f32.mrf.mxu0
      %v1579 = vadd.f32 0.0, %v1578
      %v1580 = vpop.f32.mrf.mxu0
      %v1581 = vpop.f32.mrf.mxu0
      %v1582 = vadd.f32 0.0, %v1581
      %v1583 = vpop.f32.mrf.mxu0
      %1584 = vmatprep.mubr.bf16.mxu0 %v1369
      %1585 = vmatmul.mubr.bf16.gmra.mxu0 %v1368
      %v1586 = vpop.f32.mrf.mxu0
      %v1587 = vadd.f32 0.0, %v1586
      %v1588 = vpop.f32.mrf.mxu0
      %v1589 = vpop.f32.mrf.mxu0
      %v1590 = vadd.f32 0.0, %v1589
      %v1591 = vpop.f32.mrf.mxu0
      %1592 = vmatprep.mubr.bf16.mxu0 %v1371
      %1593 = vmatmul.mubr.bf16.gmra.mxu0 %v1370
      %v1594 = vpop.f32.mrf.mxu0
      %v1595 = vadd.f32 0.0, %v1594
      %v1596 = vpop.f32.mrf.mxu0
      %v1597 = vpop.f32.mrf.mxu0
      %v1598 = vadd.f32 0.0, %v1597
      %v1599 = vpop.f32.mrf.mxu0
      %1600 = vmatprep.mubr.bf16.mxu0 %v1373
      %1601 = vmatmul.mubr.bf16.gmra.mxu0 %v1372
      %v1602 = vpop.f32.mrf.mxu0
      %v1603 = vadd.f32 0.0, %v1602
      %v1604 = vpop.f32.mrf.mxu0
      %v1605 = vpop.f32.mrf.mxu0
      %v1606 = vadd.f32 0.0, %v1605
      %v1607 = vpop.f32.mrf.mxu0
      %1608 = vmatprep.mubr.bf16.mxu0 %v1375
      %1609 = vmatmul.mubr.bf16.gmra.mxu0 %v1374
      %v1610 = vpop.f32.mrf.mxu0
      %v1611 = vadd.f32 0.0, %v1610
      %v1612 = vpop.f32.mrf.mxu0
      %v1613 = vpop.f32.mrf.mxu0
      %v1614 = vadd.f32 0.0, %v1613
      %v1615 = vpop.f32.mrf.mxu0
      %1616 = vmatprep.mubr.bf16.mxu0 %v1377
      %1617 = vmatmul.mubr.bf16.gmra.mxu0 %v1376
      %v1618 = vpop.f32.mrf.mxu0
      %v1619 = vadd.f32 0.0, %v1618
      %v1620 = vpop.f32.mrf.mxu0
      %v1621 = vpop.f32.mrf.mxu0
      %v1622 = vadd.f32 0.0, %v1621
      %v1623 = vpop.f32.mrf.mxu0
      %1624 = vmatprep.mubr.bf16.mxu0 %v1379
      %1625 = vmatmul.mubr.bf16.gmra.mxu0 %v1378
      %v1626 = vpop.f32.mrf.mxu0
      %v1627 = vadd.f32 0.0, %v1626
      %v1628 = vpop.f32.mrf.mxu0
      %v1629 = vpop.f32.mrf.mxu0
      %v1630 = vadd.f32 0.0, %v1629
      %v1631 = vpop.f32.mrf.mxu0
      %1632 = vmatprep.mubr.bf16.mxu0 %v1381
      %1633 = vmatmul.mubr.bf16.gmra.mxu0 %v1380
      %v1634 = vpop.f32.mrf.mxu0
      %v1635 = vadd.f32 0.0, %v1634
      %v1636 = vpop.f32.mrf.mxu0
      %v1637 = vpop.f32.mrf.mxu0
      %v1638 = vadd.f32 0.0, %v1637
      %v1639 = vpop.f32.mrf.mxu0
      %1640 = vmatprep.mubr.bf16.mxu0 %v1383
      %1641 = vmatmul.mubr.bf16.gmra.mxu0 %v1382
      %v1642 = vpop.f32.mrf.mxu0
      %v1643 = vadd.f32 0.0, %v1642
      %v1644 = vpop.f32.mrf.mxu0
      %v1645 = vpop.f32.mrf.mxu0
      %v1646 = vadd.f32 0.0, %v1645
      %v1647 = vpop.f32.mrf.mxu0
      %1648 = vmatprep.mubr.bf16.mxu0 %v1385
      %1649 = vmatmul.mubr.bf16.gmra.mxu0 %v1384
      %v1650 = vpop.f32.mrf.mxu0
      %v1651 = vadd.f32 0.0, %v1650
      %v1652 = vpop.f32.mrf.mxu0
      %v1653 = vpop.f32.mrf.mxu0
      %v1654 = vadd.f32 0.0, %v1653
      %v1655 = vpop.f32.mrf.mxu0
      %1656 = vmatprep.mubr.bf16.mxu0 %v1387
      %1657 = vmatmul.mubr.bf16.gmra.mxu0 %v1386
      %v1658 = vpop.f32.mrf.mxu0
      %v1659 = vadd.f32 0.0, %v1658
      %v1660 = vpop.f32.mrf.mxu0
      %v1661 = vpop.f32.mrf.mxu0
      %v1662 = vadd.f32 0.0, %v1661
      %v1663 = vpop.f32.mrf.mxu0
      %1664 = vmatprep.mubr.bf16.mxu0 %v1389
      %1665 = vmatmul.mubr.bf16.gmra.mxu0 %v1388
      %v1666 = vpop.f32.mrf.mxu0
      %v1667 = vadd.f32 0.0, %v1666
      %v1668 = vpop.f32.mrf.mxu0
      %v1669 = vpop.f32.mrf.mxu0
      %v1670 = vadd.f32 0.0, %v1669
      %v1671 = vpop.f32.mrf.mxu0
      %1672 = vmatprep.mubr.bf16.mxu0 %v1391
      %1673 = vmatmul.mubr.bf16.gmra.mxu0 %v1390
      %v1674 = vpop.f32.mrf.mxu0
      %v1675 = vadd.f32 0.0, %v1674
      %v1676 = vpop.f32.mrf.mxu0
      %v1677 = vpop.f32.mrf.mxu0
      %v1678 = vadd.f32 0.0, %v1677
      %v1679 = vpop.f32.mrf.mxu0
      %1680 = vdwg.mxu0
      %v1681 = vadd.f32 %v1069, %v1555
      %v1682 = vadd.f32 %v1072, %v1558
      %v1683 = vadd.f32 %v1077, %v1563
      %v1684 = vadd.f32 %v1080, %v1566
      %v1685 = vadd.f32 %v1085, %v1571
      %v1686 = vadd.f32 %v1088, %v1574
      %v1687 = vadd.f32 %v1093, %v1579
      %v1688 = vadd.f32 %v1096, %v1582
      %v1689 = vadd.f32 %v1101, %v1587
      %v1690 = vadd.f32 %v1104, %v1590
      %v1691 = vadd.f32 %v1109, %v1595
      %v1692 = vadd.f32 %v1112, %v1598
      %v1693 = vadd.f32 %v1117, %v1603
      %v1694 = vadd.f32 %v1120, %v1606
      %v1695 = vadd.f32 %v1125, %v1611
      %v1696 = vadd.f32 %v1128, %v1614
      %v1697 = vadd.f32 %v1133, %v1619
      %v1698 = vadd.f32 %v1136, %v1622
      %v1699 = vadd.f32 %v1141, %v1627
      %v1700 = vadd.f32 %v1144, %v1630
      %v1701 = vadd.f32 %v1149, %v1635
      %v1702 = vadd.f32 %v1152, %v1638
      %v1703 = vadd.f32 %v1157, %v1643
      %v1704 = vadd.f32 %v1160, %v1646
      %v1705 = vadd.f32 %v1165, %v1651
      %v1706 = vadd.f32 %v1168, %v1654
      %v1707 = vadd.f32 %v1173, %v1659
      %v1708 = vadd.f32 %v1176, %v1662
      %v1709 = vadd.f32 %v1181, %v1667
      %v1710 = vadd.f32 %v1184, %v1670
      %v1711 = vadd.f32 %v1189, %v1675
      %v1712 = vadd.f32 %v1192, %v1678
      %v1713 = vld [vmem:[%s2] sm:$0x1]
      %v1715 = vlaneseq
      %v1716 = vshrl.u32 %v1715, 7
      %v1717 = vsub.s32 0, %v1716
      %v1718 = vrot.slane %v1713, %v1717
      %v1720 = vmul.f32 %v1681, %v1718
      %v1721 = vmul.f32 %v1682, %v1718
      %v1722 = vmul.f32 %v1683, %v1718
      %v1723 = vmul.f32 %v1684, %v1718
      %v1724 = vmul.f32 %v1685, %v1718
      %v1725 = vmul.f32 %v1686, %v1718
      %v1726 = vmul.f32 %v1687, %v1718
      %v1727 = vmul.f32 %v1688, %v1718
      %v1728 = vmul.f32 %v1689, %v1718
      %v1729 = vmul.f32 %v1690, %v1718
      %v1730 = vmul.f32 %v1691, %v1718
      %v1731 = vmul.f32 %v1692, %v1718
      %v1732 = vmul.f32 %v1693, %v1718
      %v1733 = vmul.f32 %v1694, %v1718
      %v1734 = vmul.f32 %v1695, %v1718
      %v1735 = vmul.f32 %v1696, %v1718
      %v1736 = vmul.f32 %v1697, %v1718
      %v1737 = vmul.f32 %v1698, %v1718
      %v1738 = vmul.f32 %v1699, %v1718
      %v1739 = vmul.f32 %v1700, %v1718
      %v1740 = vmul.f32 %v1701, %v1718
      %v1741 = vmul.f32 %v1702, %v1718
      %v1742 = vmul.f32 %v1703, %v1718
      %v1743 = vmul.f32 %v1704, %v1718
      %v1744 = vmul.f32 %v1705, %v1718
      %v1745 = vmul.f32 %v1706, %v1718
      %v1746 = vmul.f32 %v1707, %v1718
      %v1747 = vmul.f32 %v1708, %v1718
      %v1748 = vmul.f32 %v1709, %v1718
      %v1749 = vmul.f32 %v1710, %v1718
      %v1750 = vmul.f32 %v1711, %v1718
      %v1751 = vmul.f32 %v1712, %v1718
      %v1752 = vld [vmem:[%s3] sm:$0x1]
      %v1754 = vlaneseq
      %v1755 = vshrl.u32 %v1754, 7
      %v1756 = vsub.s32 0, %v1755
      %v1757 = vrot.slane %v1752, %v1756
      %v1759 = vadd.f32 %v1720, %v1757
      %v1760 = vadd.f32 %v1721, %v1757
      %v1761 = vadd.f32 %v1722, %v1757
      %v1762 = vadd.f32 %v1723, %v1757
      %v1763 = vadd.f32 %v1724, %v1757
      %v1764 = vadd.f32 %v1725, %v1757
      %v1765 = vadd.f32 %v1726, %v1757
      %v1766 = vadd.f32 %v1727, %v1757
      %v1767 = vadd.f32 %v1728, %v1757
      %v1768 = vadd.f32 %v1729, %v1757
      %v1769 = vadd.f32 %v1730, %v1757
      %v1770 = vadd.f32 %v1731, %v1757
      %v1771 = vadd.f32 %v1732, %v1757
      %v1772 = vadd.f32 %v1733, %v1757
      %v1773 = vadd.f32 %v1734, %v1757
      %v1774 = vadd.f32 %v1735, %v1757
      %v1775 = vadd.f32 %v1736, %v1757
      %v1776 = vadd.f32 %v1737, %v1757
      %v1777 = vadd.f32 %v1738, %v1757
      %v1778 = vadd.f32 %v1739, %v1757
      %v1779 = vadd.f32 %v1740, %v1757
      %v1780 = vadd.f32 %v1741, %v1757
      %v1781 = vadd.f32 %v1742, %v1757
      %v1782 = vadd.f32 %v1743, %v1757
      %v1783 = vadd.f32 %v1744, %v1757
      %v1784 = vadd.f32 %v1745, %v1757
      %v1785 = vadd.f32 %v1746, %v1757
      %v1786 = vadd.f32 %v1747, %v1757
      %v1787 = vadd.f32 %v1748, %v1757
      %v1788 = vadd.f32 %v1749, %v1757
      %v1789 = vadd.f32 %v1750, %v1757
      %v1790 = vadd.f32 %v1751, %v1757
      %v1791 = vmax.f32 %v1759, 0.0
      %v1792 = vmax.f32 %v1760, 0.0
      %v1793 = vmax.f32 %v1761, 0.0
      %v1794 = vmax.f32 %v1762, 0.0
      %v1795 = vmax.f32 %v1763, 0.0
      %v1796 = vmax.f32 %v1764, 0.0
      %v1797 = vmax.f32 %v1765, 0.0
      %v1798 = vmax.f32 %v1766, 0.0
      %v1799 = vmax.f32 %v1767, 0.0
      %v1800 = vmax.f32 %v1768, 0.0
      %v1801 = vmax.f32 %v1769, 0.0
      %v1802 = vmax.f32 %v1770, 0.0
      %v1803 = vmax.f32 %v1771, 0.0
      %v1804 = vmax.f32 %v1772, 0.0
      %v1805 = vmax.f32 %v1773, 0.0
      %v1806 = vmax.f32 %v1774, 0.0
      %v1807 = vmax.f32 %v1775, 0.0
      %v1808 = vmax.f32 %v1776, 0.0
      %v1809 = vmax.f32 %v1777, 0.0
      %v1810 = vmax.f32 %v1778, 0.0
      %v1811 = vmax.f32 %v1779, 0.0
      %v1812 = vmax.f32 %v1780, 0.0
      %v1813 = vmax.f32 %v1781, 0.0
      %v1814 = vmax.f32 %v1782, 0.0
      %v1815 = vmax.f32 %v1783, 0.0
      %v1816 = vmax.f32 %v1784, 0.0
      %v1817 = vmax.f32 %v1785, 0.0
      %v1818 = vmax.f32 %v1786, 0.0
      %v1819 = vmax.f32 %v1787, 0.0
      %v1820 = vmax.f32 %v1788, 0.0
      %v1821 = vmax.f32 %v1789, 0.0
      %v1822 = vmax.f32 %v1790, 0.0
      %v1823 = vpack.c.bf16 %v1792, %v1791
      %v1824 = vpack.c.bf16 %v1794, %v1793
      %v1825 = vpack.c.bf16 %v1796, %v1795
      %v1826 = vpack.c.bf16 %v1798, %v1797
      %v1827 = vpack.c.bf16 %v1800, %v1799
      %v1828 = vpack.c.bf16 %v1802, %v1801
      %v1829 = vpack.c.bf16 %v1804, %v1803
      %v1830 = vpack.c.bf16 %v1806, %v1805
      %v1831 = vpack.c.bf16 %v1808, %v1807
      %v1832 = vpack.c.bf16 %v1810, %v1809
      %v1833 = vpack.c.bf16 %v1812, %v1811
      %v1834 = vpack.c.bf16 %v1814, %v1813
      %v1835 = vpack.c.bf16 %v1816, %v1815
      %v1836 = vpack.c.bf16 %v1818, %v1817
      %v1837 = vpack.c.bf16 %v1820, %v1819
      %v1838 = vpack.c.bf16 %v1822, %v1821
      %v1855 = vunpack.c.l.b16 %v1823
      %v1856 = vunpack.c.h.b16 %v1823
      %v1857 = vunpack.c.l.b16 %v1824
      %v1858 = vunpack.c.h.b16 %v1824
      %v1859 = vunpack.c.l.b16 %v1825
      %v1860 = vunpack.c.h.b16 %v1825
      %v1861 = vunpack.c.l.b16 %v1826
      %v1862 = vunpack.c.h.b16 %v1826
      %v1863 = vunpack.c.l.b16 %v1827
      %v1864 = vunpack.c.h.b16 %v1827
      %v1865 = vunpack.c.l.b16 %v1828
      %v1866 = vunpack.c.h.b16 %v1828
      %v1867 = vunpack.c.l.b16 %v1829
      %v1868 = vunpack.c.h.b16 %v1829
      %v1869 = vunpack.c.l.b16 %v1830
      %v1870 = vunpack.c.h.b16 %v1830
      %v1871 = vunpack.c.l.b16 %v1831
      %v1872 = vunpack.c.h.b16 %v1831
      %v1873 = vunpack.c.l.b16 %v1832
      %v1874 = vunpack.c.h.b16 %v1832
      %v1875 = vunpack.c.l.b16 %v1833
      %v1876 = vunpack.c.h.b16 %v1833
      %v1877 = vunpack.c.l.b16 %v1834
      %v1878 = vunpack.c.h.b16 %v1834
      %v1879 = vunpack.c.l.b16 %v1835
      %v1880 = vunpack.c.h.b16 %v1835
      %v1881 = vunpack.c.l.b16 %v1836
      %v1882 = vunpack.c.h.b16 %v1836
      %v1883 = vunpack.c.l.b16 %v1837
      %v1884 = vunpack.c.h.b16 %v1837
      %v1885 = vunpack.c.l.b16 %v1838
      %v1886 = vunpack.c.h.b16 %v1838
      %v1887 = vpack.c.b16 %v1855, %v1855
      %v1888 = vpack.c.b16 %v1856, %v1856
      %v1889 = vpack.c.b16 %v1857, %v1857
      %v1890 = vpack.c.b16 %v1858, %v1858
      %v1891 = vpack.c.b16 %v1859, %v1859
      %v1892 = vpack.c.b16 %v1860, %v1860
      %v1893 = vpack.c.b16 %v1861, %v1861
      %v1894 = vpack.c.b16 %v1862, %v1862
      %v1895 = vpack.c.b16 %v1863, %v1863
      %v1896 = vpack.c.b16 %v1864, %v1864
      %v1897 = vpack.c.b16 %v1865, %v1865
      %v1898 = vpack.c.b16 %v1866, %v1866
      %v1899 = vpack.c.b16 %v1867, %v1867
      %v1900 = vpack.c.b16 %v1868, %v1868
      %v1901 = vpack.c.b16 %v1869, %v1869
      %v1902 = vpack.c.b16 %v1870, %v1870
      %v1903 = vpack.c.b16 %v1871, %v1871
      %v1904 = vpack.c.b16 %v1872, %v1872
      %v1905 = vpack.c.b16 %v1873, %v1873
      %v1906 = vpack.c.b16 %v1874, %v1874
      %v1907 = vpack.c.b16 %v1875, %v1875
      %v1908 = vpack.c.b16 %v1876, %v1876
      %v1909 = vpack.c.b16 %v1877, %v1877
      %v1910 = vpack.c.b16 %v1878, %v1878
      %v1911 = vpack.c.b16 %v1879, %v1879
      %v1912 = vpack.c.b16 %v1880, %v1880
      %v1913 = vpack.c.b16 %v1881, %v1881
      %v1914 = vpack.c.b16 %v1882, %v1882
      %v1915 = vpack.c.b16 %v1883, %v1883
      %v1916 = vpack.c.b16 %v1884, %v1884
      %v1917 = vpack.c.b16 %v1885, %v1885
      %v1918 = vpack.c.b16 %v1886, %v1886
      %1951 = vst [vmem:[%s221] sm:$0xf] %v1887
      %1952 = vst [vmem:[%s221 + $0x4] sm:$0xf] %v1888
      %1953 = vst [vmem:[%s221 + $0x8] sm:$0xf] %v1889
      %1954 = vst [vmem:[%s221 + $0xc] sm:$0xf] %v1890
      %1955 = vst [vmem:[%s221 + $0x10] sm:$0xf] %v1891
      %1956 = vst [vmem:[%s221 + $0x14] sm:$0xf] %v1892
      %1957 = vst [vmem:[%s221 + $0x18] sm:$0xf] %v1893
      %1958 = vst [vmem:[%s221 + $0x1c] sm:$0xf] %v1894
      %1959 = vst [vmem:[%s221 + $0x20] sm:$0xf] %v1895
      %1960 = vst [vmem:[%s221 + $0x24] sm:$0xf] %v1896
      %1961 = vst [vmem:[%s221 + $0x28] sm:$0xf] %v1897
      %1962 = vst [vmem:[%s221 + $0x2c] sm:$0xf] %v1898
      %1963 = vst [vmem:[%s221 + $0x30] sm:$0xf] %v1899
      %1964 = vst [vmem:[%s221 + $0x34] sm:$0xf] %v1900
      %1965 = vst [vmem:[%s221 + $0x38] sm:$0xf] %v1901
      %1966 = vst [vmem:[%s221 + $0x3c] sm:$0xf] %v1902
      %1967 = vst [vmem:[%s221 + $0x40] sm:$0xf] %v1903
      %1968 = vst [vmem:[%s221 + $0x44] sm:$0xf] %v1904
      %1969 = vst [vmem:[%s221 + $0x48] sm:$0xf] %v1905
      %1970 = vst [vmem:[%s221 + $0x4c] sm:$0xf] %v1906
      %1971 = vst [vmem:[%s221 + $0x50] sm:$0xf] %v1907
      %1972 = vst [vmem:[%s221 + $0x54] sm:$0xf] %v1908
      %1973 = vst [vmem:[%s221 + $0x58] sm:$0xf] %v1909
      %1974 = vst [vmem:[%s221 + $0x5c] sm:$0xf] %v1910
      %1975 = vst [vmem:[%s221 + $0x60] sm:$0xf] %v1911
      %1976 = vst [vmem:[%s221 + $0x64] sm:$0xf] %v1912
      %1977 = vst [vmem:[%s221 + $0x68] sm:$0xf] %v1913
      %1978 = vst [vmem:[%s221 + $0x6c] sm:$0xf] %v1914
      %1979 = vst [vmem:[%s221 + $0x70] sm:$0xf] %v1915
      %1980 = vst [vmem:[%s221 + $0x74] sm:$0xf] %v1916
      %1981 = vst [vmem:[%s221 + $0x78] sm:$0xf] %v1917
      %1982 = vst [vmem:[%s221 + $0x7c] sm:$0xf] %v1918
      %s1983 = smul.u32 16, %s20
      %p1984 = scmp.lt.s32.totalorder %s19, 1
      %s1985 = scalar_select %p1984, %s19, 1
      %p1986 = scmp.lt.s32.totalorder %s1983, 15
      %s1987 = scalar_select %p1986, %s1983, 15
      %s1988 = smul.addr %s1987, 2
      %s1989 = smul.addr %s1985, 32
      %s1990 = sadd.s32 %s1988, %s1989
      %s1991 = smul.addr %s1990, 4
      %s1992 = scalar_lea.vmem %s4, %s1991
      // Predicated region
      $region37: #{_lambda_.17} parent=35 // pred_check
        %p1993 = pneg %p136
      $region38: #{_lambda_.17} parent=35 // pred_check_branch
        %1995 = sbr.rel (%p1993) target = $region40
      $region39: #{_lambda_.17} parent=35 // pred_region
        %s1996 = smul.u32 16, %s20
      $region40: #{_lambda_.17} parent=35 // pred_fallthru
        _
    $region36: #{_lambda_.17} parent=5 // pred_fallthru
      _
    %p1997 = scmp.le.s32.totalorder 2, %s10
    // Predicated region
    $region41: #{_lambda_.17} parent=5 // pred_check
      %p1998 = pneg %p1997
    $region42: #{_lambda_.17} parent=5 // pred_check_branch
      %2000 = sbr.rel (%p1998) target = $region44
    $region43: #{_lambda_.17} parent=5 // pred_region
      %s2001 = ssub.s32 %s10, 2
      // Predicated region
      $region45: #{_lambda_.17} parent=43 // pred_check
        %p2002 = pneg %p142
      $region46: #{_lambda_.17} parent=43 // pred_check_branch
        %2004 = sbr.rel (%p2002) target = $region48
      $region47: #{_lambda_.17} parent=43 // pred_region
        %s2005 = smul.u32 16, %s22
        %p2006 = scmp.lt.s32.totalorder %s21, 1
        %s2007 = scalar_select %p2006, %s21, 1
        %p2008 = scmp.lt.s32.totalorder %s2005, 15
        %s2009 = scalar_select %p2008, %s2005, 15
        %s2010 = smul.addr %s2009, 2
        %s2011 = smul.addr %s2007, 32
        %s2012 = sadd.s32 %s2010, %s2011
        %s2013 = smul.addr %s2012, 4
        %s2014 = scalar_lea.vmem %s4, %s2013
      $region48: #{_lambda_.17} parent=43 // pred_fallthru
        _
    $region44: #{_lambda_.17} parent=5 // pred_fallthru
      _
  $region6: #{_lambda_.17} parent=0 // loop_footer
    %s14 = sadd.s32 1, %s10
  $region7: #{_lambda_.17} parent=0 // loop_footer_branch
    %9 = sbr.rel target = $region3
  $region8: #{_lambda_.17} parent=0 // loop_exit
    _

// kernel: _lambda_.16
$region0: #{_lambda_.16}
  #allocation0 [shape = 'u32[]', space=smem, size = 0x4, offset = 0x4, fixed_abs, tag = 'smem constant byte address 0x4 - core index']
  #allocation1 [shape = 'u32[144,128]{1,0:T(1,128)}', space=vmem, size = 0x12000, scoped, tag = 'internal scratch']
  %s0 = inlined_call_operand.vmem [shape: bf16[2,18,16,256], index: 0, kind: input, shape index: {}]
  %s1 = inlined_call_operand.vmem [shape: bf16[3,256,128], index: 1, kind: input, shape index: {}]
  %s2 = inlined_call_operand.vmem [shape: f32[1,128], index: 2, kind: input, shape index: {}]
  %s3 = inlined_call_operand.vmem [shape: f32[1,128], index: 3, kind: input, shape index: {}]
  %s4 = inlined_call_operand.vmem [shape: bf16[2,16,16,128], index: 4, kind: input, shape index: {}]
  %s5 = inlined_call_operand.vmem [shape: bf16[2,16,16,128], index: 5, kind: output, shape index: {}]
  %s6 = sld [smem:[#allocation0]]
  $region53: #{_lambda_.16} parent=0
    _
  %s8 = ssub.s32 1, %s6
  %s9 = scalar_select 0, %s8, %s6
  loop: start=0, step=1, limit=4
  $region2: #{_lambda_.16} parent=0 // loop_pre_header
    _
  $region3: #{_lambda_.16} parent=0 // loop_header
    %s11 = sphi 0, %s15
    %p12 = scmp.ge.s32.totalorder %s11, 4
    %s18 = sphi 0, %s30
    %s19 = sphi 0, %s26
    %s20 = sphi 0, %s18
    %s21 = sphi 0, %s19
    %s22 = sphi 0, %s20
    %s23 = sphi 0, %s21
    %s33 = sphi 0, %s35
    %s36 = sphi 0, %s33
    %s37 = sphi 0, %s36
    %s53 = sphi 0, %s37
    %s57 = sphi 0, %s57
    %s59 = sphi 0, %s57
    %s60 = sphi 0, %s59
    %s74 = sphi 0, %s60
    %s78 = sphi 0, %s78
    %s80 = sphi 0, %s78
    %s81 = sphi 0, %s80
    %s95 = sphi 0, %s81
    %s99 = sphi 0, %s99
    %s101 = sphi 0, %s99
    %s102 = sphi 0, %s101
    %s116 = sphi 0, %s102
    %s124 = sphi 0, %s126
    %s127 = sphi 0, %s124
    %s128 = sphi 0, %s127
    %s144 = sphi 0, %s128
    %s152 = sphi 0, %s154
    %s155 = sphi 0, %s152
    %s156 = sphi 0, %s155
    %s172 = sphi 0, %s156
  $region4: #{_lambda_.16} parent=0 // loop_header_branch
    %14 = sbr.rel (%p12) target = $region8
  $region5: #{_lambda_.16} parent=0 // loop_body
    %s16 = ssub.s32 %s11, 1
    %s17 = ssub.s32 %s11, 2
    %s24 = sadd.s32 1, %s19
    %p25 = scmp.ge.s32.totalorder %s24, 1
    %s26 = scalar_select %p25, 0, %s24
    %s27 = sadd.s32 1, %s18
    %s28 = scalar_select %p25, %s27, %s18
    %p29 = scmp.ge.s32.totalorder %s28, 2
    %s30 = scalar_select %p29, 0, %s28
    %s31 = ssub.s32 %s18, %s30
    %p32 = scmp.eq.s32.totalorder %s31, 0
    %s34 = sadd.s32 %s33, 1
    %s35 = scalar_select %p32, %s33, %s34
    %p38 = pneg %p32
    %p39 = scmp.eq.s32.totalorder %s11, 1
    %p40 = por %p38, %p39
    %p41 = scmp.ne.s32.totalorder %s33, %s36
    %p42 = scmp.eq.s32.totalorder %s11, 0
    %p43 = por %p41, %p42
    %p44 = scmp.ne.s32.totalorder %s33, %s36
    %p45 = scmp.eq.s32.totalorder %s16, 1
    %p46 = por %p44, %p45
    %p47 = scmp.ne.s32.totalorder %s36, %s37
    %p48 = scmp.eq.s32.totalorder %s16, 0
    %p49 = por %p47, %p48
    %p50 = scmp.ne.s32.totalorder %s36, %s37
    %p51 = scmp.eq.s32.totalorder %s17, 1
    %p52 = por %p50, %p51
    %p54 = scmp.ne.s32.totalorder %s37, %s53
    %p55 = scmp.eq.s32.totalorder %s17, 0
    %p56 = por %p54, %p55
    %s58 = sadd.s32 %s57, 1
    %p61 = scmp.eq.s32.totalorder %s11, 1
    %p62 = scmp.ne.s32.totalorder %s57, %s59
    %p63 = scmp.eq.s32.totalorder %s11, 0
    %p64 = por %p62, %p63
    %p65 = scmp.ne.s32.totalorder %s57, %s59
    %p66 = scmp.eq.s32.totalorder %s16, 1
    %p67 = por %p65, %p66
    %p68 = scmp.ne.s32.totalorder %s59, %s60
    %p69 = scmp.eq.s32.totalorder %s16, 0
    %p70 = por %p68, %p69
    %p71 = scmp.ne.s32.totalorder %s59, %s60
    %p72 = scmp.eq.s32.totalorder %s17, 1
    %p73 = por %p71, %p72
    %p75 = scmp.ne.s32.totalorder %s60, %s74
    %p76 = scmp.eq.s32.totalorder %s17, 0
    %p77 = por %p75, %p76
    %s79 = sadd.s32 %s78, 1
    %p82 = scmp.eq.s32.totalorder %s11, 1
    %p83 = scmp.ne.s32.totalorder %s78, %s80
    %p84 = scmp.eq.s32.totalorder %s11, 0
    %p85 = por %p83, %p84
    %p86 = scmp.ne.s32.totalorder %s78, %s80
    %p87 = scmp.eq.s32.totalorder %s16, 1
    %p88 = por %p86, %p87
    %p89 = scmp.ne.s32.totalorder %s80, %s81
    %p90 = scmp.eq.s32.totalorder %s16, 0
    %p91 = por %p89, %p90
    %p92 = scmp.ne.s32.totalorder %s80, %s81
    %p93 = scmp.eq.s32.totalorder %s17, 1
    %p94 = por %p92, %p93
    %p96 = scmp.ne.s32.totalorder %s81, %s95
    %p97 = scmp.eq.s32.totalorder %s17, 0
    %p98 = por %p96, %p97
    %s100 = sadd.s32 %s99, 1
    %p103 = scmp.eq.s32.totalorder %s11, 1
    %p104 = scmp.ne.s32.totalorder %s99, %s101
    %p105 = scmp.eq.s32.totalorder %s11, 0
    %p106 = por %p104, %p105
    %p107 = scmp.ne.s32.totalorder %s99, %s101
    %p108 = scmp.eq.s32.totalorder %s16, 1
    %p109 = por %p107, %p108
    %p110 = scmp.ne.s32.totalorder %s101, %s102
    %p111 = scmp.eq.s32.totalorder %s16, 0
    %p112 = por %p110, %p111
    %p113 = scmp.ne.s32.totalorder %s101, %s102
    %p114 = scmp.eq.s32.totalorder %s17, 1
    %p115 = por %p113, %p114
    %p117 = scmp.ne.s32.totalorder %s102, %s116
    %p118 = scmp.eq.s32.totalorder %s17, 0
    %p119 = por %p117, %p118
    %s120 = ssub.s32 %s18, %s30
    %s121 = ssub.s32 %s19, %s26
    %s122 = sor.u32 %s120, %s121
    %p123 = scmp.eq.s32.totalorder %s122, 0
    %s125 = sadd.s32 %s124, 1
    %s126 = scalar_select %p123, %s124, %s125
    %p129 = pneg %p123
    %p130 = scmp.eq.s32.totalorder %s11, 1
    %p131 = por %p129, %p130
    %p132 = scmp.ne.s32.totalorder %s124, %s127
    %p133 = scmp.eq.s32.totalorder %s11, 0
    %p134 = por %p132, %p133
    %p135 = scmp.ne.s32.totalorder %s124, %s127
    %p136 = scmp.eq.s32.totalorder %s16, 1
    %p137 = por %p135, %p136
    %p138 = scmp.ne.s32.totalorder %s127, %s128
    %p139 = scmp.eq.s32.totalorder %s16, 0
    %p140 = por %p138, %p139
    %p141 = scmp.ne.s32.totalorder %s127, %s128
    %p142 = scmp.eq.s32.totalorder %s17, 1
    %p143 = por %p141, %p142
    %p145 = scmp.ne.s32.totalorder %s128, %s144
    %p146 = scmp.eq.s32.totalorder %s17, 0
    %p147 = por %p145, %p146
    %s148 = ssub.s32 %s18, %s30
    %s149 = ssub.s32 %s19, %s26
    %s150 = sor.u32 %s148, %s149
    %p151 = scmp.eq.s32.totalorder %s150, 0
    %s153 = sadd.s32 %s152, 1
    %s154 = scalar_select %p151, %s152, %s153
    %p157 = pneg %p151
    %p158 = scmp.eq.s32.totalorder %s11, 1
    %p159 = por %p157, %p158
    %p160 = scmp.ne.s32.totalorder %s152, %s155
    %p161 = scmp.eq.s32.totalorder %s11, 0
    %p162 = por %p160, %p161
    %p163 = scmp.ne.s32.totalorder %s152, %s155
    %p164 = scmp.eq.s32.totalorder %s16, 1
    %p165 = por %p163, %p164
    %p166 = scmp.ne.s32.totalorder %s155, %s156
    %p167 = scmp.eq.s32.totalorder %s16, 0
    %p168 = por %p166, %p167
    %p169 = scmp.ne.s32.totalorder %s155, %s156
    %p170 = scmp.eq.s32.totalorder %s17, 1
    %p171 = por %p169, %p170
    %p173 = scmp.ne.s32.totalorder %s156, %s172
    %p174 = scmp.eq.s32.totalorder %s17, 0
    %p175 = por %p173, %p174
    %p176 = scmp.le.s32.totalorder 1, %s11
    %p177 = scmp.lt.s32.totalorder %s11, 3
    %p178 = pnand %p176, %p177
    %p179 = pneg %p178
    // Predicated region
    $region9: #{_lambda_.16} parent=5 // pred_check
      _
    $region10: #{_lambda_.16} parent=5 // pred_check_branch
      %181 = sbr.rel (%p178) target = $region12
    $region11: #{_lambda_.16} parent=5 // pred_region
      %s182 = ssub.s32 %s11, 1
      // Predicated region
      $region13: #{_lambda_.16} parent=11 // pred_check
        %p183 = pneg %p70
      $region14: #{_lambda_.16} parent=11 // pred_check_branch
        %185 = sbr.rel (%p183) target = $region16
      $region15: #{_lambda_.16} parent=11 // pred_region
        _
      $region16: #{_lambda_.16} parent=11 // pred_fallthru
        _
      // Predicated region
      $region17: #{_lambda_.16} parent=11 // pred_check
        %p186 = pneg %p91
      $region18: #{_lambda_.16} parent=11 // pred_check_branch
        %188 = sbr.rel (%p186) target = $region20
      $region19: #{_lambda_.16} parent=11 // pred_region
        _
      $region20: #{_lambda_.16} parent=11 // pred_fallthru
        _
      // Predicated region
      $region21: #{_lambda_.16} parent=11 // pred_check
        %p189 = pneg %p112
      $region22: #{_lambda_.16} parent=11 // pred_check_branch
        %191 = sbr.rel (%p189) target = $region24
      $region23: #{_lambda_.16} parent=11 // pred_region
        _
      $region24: #{_lambda_.16} parent=11 // pred_fallthru
        _
    $region12: #{_lambda_.16} parent=5 // pred_fallthru
      _
    %p192 = scmp.lt.s32.totalorder %s11, 2
    // Predicated region
    $region25: #{_lambda_.16} parent=5 // pred_check
      %p193 = pneg %p192
    $region26: #{_lambda_.16} parent=5 // pred_check_branch
      %195 = sbr.rel (%p193) target = $region28
    $region27: #{_lambda_.16} parent=5 // pred_region
      // Predicated region
      $region29: #{_lambda_.16} parent=27 // pred_check
        %p196 = pneg %p43
      $region30: #{_lambda_.16} parent=27 // pred_check_branch
        %198 = sbr.rel (%p196) target = $region32
      $region31: #{_lambda_.16} parent=27 // pred_region
        %p199 = scmp.lt.s32.totalorder %s18, 1
        %s200 = scalar_select %p199, %s18, 1
        %s201 = smul.addr %s200, 72
        %s202 = smul.addr %s201, 4
        %s203 = scalar_lea.vmem %s0, %s202
      $region32: #{_lambda_.16} parent=27 // pred_fallthru
        _
      // Predicated region
      $region33: #{_lambda_.16} parent=27 // pred_check
        %p204 = pneg %p134
      $region34: #{_lambda_.16} parent=27 // pred_check_branch
        %206 = sbr.rel (%p204) target = $region36
      $region35: #{_lambda_.16} parent=27 // pred_region
        %s207 = smul.u32 16, %s19
        %p208 = scmp.lt.s32.totalorder %s18, 1
        %s209 = scalar_select %p208, %s18, 1
        %p210 = scmp.lt.s32.totalorder %s207, 15
        %s211 = scalar_select %p210, %s207, 15
        %s212 = smul.addr %s211, 2
        %s213 = smul.addr %s209, 32
        %s214 = sadd.s32 %s212, %s213
        %s215 = smul.addr %s214, 4
        %s216 = scalar_lea.vmem %s4, %s215
        %s217 = smul.u32 16, %s19
      $region36: #{_lambda_.16} parent=27 // pred_fallthru
        _
    $region28: #{_lambda_.16} parent=5 // pred_fallthru
      _
    %p218 = scmp.le.s32.totalorder 1, %s11
    %p219 = scmp.lt.s32.totalorder %s11, 3
    %p220 = pnand %p218, %p219
    %p221 = pneg %p220
    // Predicated region
    $region37: #{_lambda_.16} parent=5 // pred_check
      _
    $region38: #{_lambda_.16} parent=5 // pred_check_branch
      %223 = sbr.rel (%p220) target = $region40
    $region39: #{_lambda_.16} parent=5 // pred_region
      %s224 = ssub.s32 %s11, 1
      %p225 = scmp.lt.s32.totalorder %s20, 1
      %s226 = scalar_select %p225, %s20, 1
      %s227 = smul.addr %s226, 72
      %s228 = smul.addr %s227, 4
      %s229 = scalar_lea.vmem %s0, %s228
      %p230 = pneg %p49
      %p231 = pneg %p46
      %p232 = pneg %p70
      %p233 = pneg %p67
      %p234 = pneg %p91
      %p235 = pneg %p88
      %p236 = pneg %p112
      %p237 = pneg %p109
      %s238 = smul.u32 16, %s21
      %p239 = scmp.lt.s32.totalorder %s20, 1
      %s240 = scalar_select %p239, %s20, 1
      %p241 = scmp.lt.s32.totalorder %s238, 15
      %s242 = scalar_select %p241, %s238, 15
      %s243 = smul.addr %s242, 2
      %s244 = smul.addr %s240, 32
      %s245 = sadd.s32 %s243, %s244
      %s246 = smul.addr %s245, 4
      %s247 = scalar_lea.vmem %s4, %s246
      %p248 = pneg %p140
      %p249 = pneg %p137
      %p250 = pneg %p168
      %p251 = pneg %p165
      %s252 = smul.u32 16, %s21
      %p253 = scmp.lt.s32.totalorder %s20, 1
      %s254 = scalar_select %p253, %s20, 1
      %p255 = scmp.lt.s32.totalorder %s252, 15
      %s256 = scalar_select %p255, %s252, 15
      %s257 = smul.addr %s256, 2
      %s258 = smul.addr %s254, 32
      %s259 = sadd.s32 %s257, %s258
      %s260 = smul.addr %s259, 4
      %s261 = scalar_lea.vmem %s5, %s260
      %p262 = scmp.lt.s32.totalorder %s20, 1
      %s263 = scalar_select %p262, %s20, 1
      %s264 = smul.addr %s263, 72
      %s265 = smul.addr %s264, 4
      %s266 = scalar_lea.vmem %s0, %s265
      %s267 = smul.u32 16, %s21
      %p268 = scmp.lt.s32.totalorder %s20, 1
      %s269 = scalar_select %p268, %s20, 1
      %p270 = scmp.lt.s32.totalorder %s267, 15
      %s271 = scalar_select %p270, %s267, 15
      %s272 = smul.addr %s271, 2
      %s273 = smul.addr %s269, 32
      %s274 = sadd.s32 %s272, %s273
      %s275 = smul.addr %s274, 4
      %s276 = scalar_lea.vmem %s4, %s275
      %s277 = smul.u32 16, %s21
      %s278 = smul.u32 16, %s21
      %p279 = scmp.lt.s32.totalorder %s20, 1
      %s280 = scalar_select %p279, %s20, 1
      %p281 = scmp.lt.s32.totalorder %s278, 15
      %s282 = scalar_select %p281, %s278, 15
      %s283 = smul.addr %s282, 2
      %s284 = smul.addr %s280, 32
      %s285 = sadd.s32 %s283, %s284
      %s286 = smul.addr %s285, 4
      %s287 = scalar_lea.vmem %s5, %s286
      %s288 = smul.u32 16, %s21
      %s290 = smul.u32 %s21, 16
      %s291 = smul.u32 %s290, 4
      %s292 = smul.addr %s291, 4
      %s293 = scalar_lea.vmem %s266, %s292
      %v294 = vld [vmem:[%s293] sm:$0xff]
      %v295 = vld [vmem:[%s293 + $0x8] sm:$0xff]
      %v296 = vld [vmem:[%s293 + $0x10] sm:$0xff]
      %v297 = vld [vmem:[%s293 + $0x18] sm:$0xff]
      %v298 = vld [vmem:[%s293 + $0x20] sm:$0xff]
      %v299 = vld [vmem:[%s293 + $0x28] sm:$0xff]
      %v300 = vld [vmem:[%s293 + $0x30] sm:$0xff]
      %v301 = vld [vmem:[%s293 + $0x38] sm:$0xff]
      %v302 = vld [vmem:[%s293 + $0x40] sm:$0xff]
      %v303 = vld [vmem:[%s293 + $0x48] sm:$0xff]
      %v304 = vld [vmem:[%s293 + $0x50] sm:$0xff]
      %v305 = vld [vmem:[%s293 + $0x58] sm:$0xff]
      %v306 = vld [vmem:[%s293 + $0x60] sm:$0xff]
      %v307 = vld [vmem:[%s293 + $0x68] sm:$0xff]
      %v308 = vld [vmem:[%s293 + $0x70] sm:$0xff]
      %v309 = vld [vmem:[%s293 + $0x78] sm:$0xff]
      %v310 = vld [vmem:[%s293 + $0x80] sm:$0xff]
      %v311 = vld [vmem:[%s293 + $0x88] sm:$0xff]
      %v312 = vld [vmem:[%s293 + $0x90] sm:$0xff]
      %v313 = vld [vmem:[%s293 + $0x98] sm:$0xff]
      %v314 = vld [vmem:[%s293 + $0xa0] sm:$0xff]
      %v315 = vld [vmem:[%s293 + $0xa8] sm:$0xff]
      %v316 = vld [vmem:[%s293 + $0xb0] sm:$0xff]
      %v317 = vld [vmem:[%s293 + $0xb8] sm:$0xff]
      %v318 = vld [vmem:[%s293 + $0xc0] sm:$0xff]
      %v319 = vld [vmem:[%s293 + $0xc8] sm:$0xff]
      %v320 = vld [vmem:[%s293 + $0xd0] sm:$0xff]
      %v321 = vld [vmem:[%s293 + $0xd8] sm:$0xff]
      %v322 = vld [vmem:[%s293 + $0xe0] sm:$0xff]
      %v323 = vld [vmem:[%s293 + $0xe8] sm:$0xff]
      %v324 = vld [vmem:[%s293 + $0xf0] sm:$0xff]
      %v325 = vld [vmem:[%s293 + $0xf8] sm:$0xff]
      %v326 = vld [vmem:[%s1] sm:$0xf]
      %v327 = vld [vmem:[%s1 + $0x4] sm:$0xf]
      %v328 = vld [vmem:[%s1 + $0x8] sm:$0xf]
      %v329 = vld [vmem:[%s1 + $0xc] sm:$0xf]
      %v330 = vld [vmem:[%s1 + $0x10] sm:$0xf]
      %v331 = vld [vmem:[%s1 + $0x14] sm:$0xf]
      %v332 = vld [vmem:[%s1 + $0x18] sm:$0xf]
      %v333 = vld [vmem:[%s1 + $0x1c] sm:$0xf]
      %v334 = vld [vmem:[%s1 + $0x20] sm:$0xf]
      %v335 = vld [vmem:[%s1 + $0x24] sm:$0xf]
      %v336 = vld [vmem:[%s1 + $0x28] sm:$0xf]
      %v337 = vld [vmem:[%s1 + $0x2c] sm:$0xf]
      %v338 = vld [vmem:[%s1 + $0x30] sm:$0xf]
      %v339 = vld [vmem:[%s1 + $0x34] sm:$0xf]
      %v340 = vld [vmem:[%s1 + $0x38] sm:$0xf]
      %v341 = vld [vmem:[%s1 + $0x3c] sm:$0xf]
      %v342 = vld [vmem:[%s1 + $0x40] sm:$0xf]
      %v343 = vld [vmem:[%s1 + $0x44] sm:$0xf]
      %v344 = vld [vmem:[%s1 + $0x48] sm:$0xf]
      %v345 = vld [vmem:[%s1 + $0x4c] sm:$0xf]
      %v346 = vld [vmem:[%s1 + $0x50] sm:$0xf]
      %v347 = vld [vmem:[%s1 + $0x54] sm:$0xf]
      %v348 = vld [vmem:[%s1 + $0x58] sm:$0xf]
      %v349 = vld [vmem:[%s1 + $0x5c] sm:$0xf]
      %v350 = vld [vmem:[%s1 + $0x60] sm:$0xf]
      %v351 = vld [vmem:[%s1 + $0x64] sm:$0xf]
      %v352 = vld [vmem:[%s1 + $0x68] sm:$0xf]
      %v353 = vld [vmem:[%s1 + $0x6c] sm:$0xf]
      %v354 = vld [vmem:[%s1 + $0x70] sm:$0xf]
      %v355 = vld [vmem:[%s1 + $0x74] sm:$0xf]
      %v356 = vld [vmem:[%s1 + $0x78] sm:$0xf]
      %v357 = vld [vmem:[%s1 + $0x7c] sm:$0xf]
      %s358 = sadd.s32 %s290, 1
      %s359 = smul.u32 %s358, 4
      %s360 = smul.addr %s359, 4
      %s361 = scalar_lea.vmem %s266, %s360
      %v362 = vld [vmem:[%s361] sm:$0xff]
      %v363 = vld [vmem:[%s361 + $0x8] sm:$0xff]
      %v364 = vld [vmem:[%s361 + $0x10] sm:$0xff]
      %v365 = vld [vmem:[%s361 + $0x18] sm:$0xff]
      %v366 = vld [vmem:[%s361 + $0x20] sm:$0xff]
      %v367 = vld [vmem:[%s361 + $0x28] sm:$0xff]
      %v368 = vld [vmem:[%s361 + $0x30] sm:$0xff]
      %v369 = vld [vmem:[%s361 + $0x38] sm:$0xff]
      %v370 = vld [vmem:[%s361 + $0x40] sm:$0xff]
      %v371 = vld [vmem:[%s361 + $0x48] sm:$0xff]
      %v372 = vld [vmem:[%s361 + $0x50] sm:$0xff]
      %v373 = vld [vmem:[%s361 + $0x58] sm:$0xff]
      %v374 = vld [vmem:[%s361 + $0x60] sm:$0xff]
      %v375 = vld [vmem:[%s361 + $0x68] sm:$0xff]
      %v376 = vld [vmem:[%s361 + $0x70] sm:$0xff]
      %v377 = vld [vmem:[%s361 + $0x78] sm:$0xff]
      %v378 = vld [vmem:[%s361 + $0x80] sm:$0xff]
      %v379 = vld [vmem:[%s361 + $0x88] sm:$0xff]
      %v380 = vld [vmem:[%s361 + $0x90] sm:$0xff]
      %v381 = vld [vmem:[%s361 + $0x98] sm:$0xff]
      %v382 = vld [vmem:[%s361 + $0xa0] sm:$0xff]
      %v383 = vld [vmem:[%s361 + $0xa8] sm:$0xff]
      %v384 = vld [vmem:[%s361 + $0xb0] sm:$0xff]
      %v385 = vld [vmem:[%s361 + $0xb8] sm:$0xff]
      %v386 = vld [vmem:[%s361 + $0xc0] sm:$0xff]
      %v387 = vld [vmem:[%s361 + $0xc8] sm:$0xff]
      %v388 = vld [vmem:[%s361 + $0xd0] sm:$0xff]
      %v389 = vld [vmem:[%s361 + $0xd8] sm:$0xff]
      %v390 = vld [vmem:[%s361 + $0xe0] sm:$0xff]
      %v391 = vld [vmem:[%s361 + $0xe8] sm:$0xff]
      %v392 = vld [vmem:[%s361 + $0xf0] sm:$0xff]
      %v393 = vld [vmem:[%s361 + $0xf8] sm:$0xff]
      %s394 = scalar_lea.vmem %s1, 128
      %v395 = vld [vmem:[%s394] sm:$0xf]
      %v396 = vld [vmem:[%s394 + $0x4] sm:$0xf]
      %v397 = vld [vmem:[%s394 + $0x8] sm:$0xf]
      %v398 = vld [vmem:[%s394 + $0xc] sm:$0xf]
      %v399 = vld [vmem:[%s394 + $0x10] sm:$0xf]
      %v400 = vld [vmem:[%s394 + $0x14] sm:$0xf]
      %v401 = vld [vmem:[%s394 + $0x18] sm:$0xf]
      %v402 = vld [vmem:[%s394 + $0x1c] sm:$0xf]
      %v403 = vld [vmem:[%s394 + $0x20] sm:$0xf]
      %v404 = vld [vmem:[%s394 + $0x24] sm:$0xf]
      %v405 = vld [vmem:[%s394 + $0x28] sm:$0xf]
      %v406 = vld [vmem:[%s394 + $0x2c] sm:$0xf]
      %v407 = vld [vmem:[%s394 + $0x30] sm:$0xf]
      %v408 = vld [vmem:[%s394 + $0x34] sm:$0xf]
      %v409 = vld [vmem:[%s394 + $0x38] sm:$0xf]
      %v410 = vld [vmem:[%s394 + $0x3c] sm:$0xf]
      %v411 = vld [vmem:[%s394 + $0x40] sm:$0xf]
      %v412 = vld [vmem:[%s394 + $0x44] sm:$0xf]
      %v413 = vld [vmem:[%s394 + $0x48] sm:$0xf]
      %v414 = vld [vmem:[%s394 + $0x4c] sm:$0xf]
      %v415 = vld [vmem:[%s394 + $0x50] sm:$0xf]
      %v416 = vld [vmem:[%s394 + $0x54] sm:$0xf]
      %v417 = vld [vmem:[%s394 + $0x58] sm:$0xf]
      %v418 = vld [vmem:[%s394 + $0x5c] sm:$0xf]
      %v419 = vld [vmem:[%s394 + $0x60] sm:$0xf]
      %v420 = vld [vmem:[%s394 + $0x64] sm:$0xf]
      %v421 = vld [vmem:[%s394 + $0x68] sm:$0xf]
      %v422 = vld [vmem:[%s394 + $0x6c] sm:$0xf]
      %v423 = vld [vmem:[%s394 + $0x70] sm:$0xf]
      %v424 = vld [vmem:[%s394 + $0x74] sm:$0xf]
      %v425 = vld [vmem:[%s394 + $0x78] sm:$0xf]
      %v426 = vld [vmem:[%s394 + $0x7c] sm:$0xf]
      %v459 = vunpack.c.l.b16 %v362
      %v460 = vunpack.c.h.b16 %v362
      %v461 = vunpack.c.l.b16 %v363
      %v462 = vunpack.c.h.b16 %v363
      %v463 = vunpack.c.l.b16 %v364
      %v464 = vunpack.c.h.b16 %v364
      %v465 = vunpack.c.l.b16 %v365
      %v466 = vunpack.c.h.b16 %v365
      %v467 = vunpack.c.l.b16 %v366
      %v468 = vunpack.c.h.b16 %v366
      %v469 = vunpack.c.l.b16 %v367
      %v470 = vunpack.c.h.b16 %v367
      %v471 = vunpack.c.l.b16 %v368
      %v472 = vunpack.c.h.b16 %v368
      %v473 = vunpack.c.l.b16 %v369
      %v474 = vunpack.c.h.b16 %v369
      %v475 = vunpack.c.l.b16 %v370
      %v476 = vunpack.c.h.b16 %v370
      %v477 = vunpack.c.l.b16 %v371
      %v478 = vunpack.c.h.b16 %v371
      %v479 = vunpack.c.l.b16 %v372
      %v480 = vunpack.c.h.b16 %v372
      %v481 = vunpack.c.l.b16 %v373
      %v482 = vunpack.c.h.b16 %v373
      %v483 = vunpack.c.l.b16 %v374
      %v484 = vunpack.c.h.b16 %v374
      %v485 = vunpack.c.l.b16 %v375
      %v486 = vunpack.c.h.b16 %v375
      %v487 = vunpack.c.l.b16 %v376
      %v488 = vunpack.c.h.b16 %v376
      %v489 = vunpack.c.l.b16 %v377
      %v490 = vunpack.c.h.b16 %v377
      %v491 = vunpack.c.l.b16 %v378
      %v492 = vunpack.c.h.b16 %v378
      %v493 = vunpack.c.l.b16 %v379
      %v494 = vunpack.c.h.b16 %v379
      %v495 = vunpack.c.l.b16 %v380
      %v496 = vunpack.c.h.b16 %v380
      %v497 = vunpack.c.l.b16 %v381
      %v498 = vunpack.c.h.b16 %v381
      %v499 = vunpack.c.l.b16 %v382
      %v500 = vunpack.c.h.b16 %v382
      %v501 = vunpack.c.l.b16 %v383
      %v502 = vunpack.c.h.b16 %v383
      %v503 = vunpack.c.l.b16 %v384
      %v504 = vunpack.c.h.b16 %v384
      %v505 = vunpack.c.l.b16 %v385
      %v506 = vunpack.c.h.b16 %v385
      %v507 = vunpack.c.l.b16 %v386
      %v508 = vunpack.c.h.b16 %v386
      %v509 = vunpack.c.l.b16 %v387
      %v510 = vunpack.c.h.b16 %v387
      %v511 = vunpack.c.l.b16 %v388
      %v512 = vunpack.c.h.b16 %v388
      %v513 = vunpack.c.l.b16 %v389
      %v514 = vunpack.c.h.b16 %v389
      %v515 = vunpack.c.l.b16 %v390
      %v516 = vunpack.c.h.b16 %v390
      %v517 = vunpack.c.l.b16 %v391
      %v518 = vunpack.c.h.b16 %v391
      %v519 = vunpack.c.l.b16 %v392
      %v520 = vunpack.c.h.b16 %v392
      %v521 = vunpack.c.l.b16 %v393
      %v522 = vunpack.c.h.b16 %v393
      %v523 = vpack.c.b16 %v461, %v459
      %v524 = vpack.c.b16 %v462, %v460
      %v525 = vpack.c.b16 %v465, %v463
      %v526 = vpack.c.b16 %v466, %v464
      %v527 = vpack.c.b16 %v469, %v467
      %v528 = vpack.c.b16 %v470, %v468
      %v529 = vpack.c.b16 %v473, %v471
      %v530 = vpack.c.b16 %v474, %v472
      %v531 = vpack.c.b16 %v477, %v475
      %v532 = vpack.c.b16 %v478, %v476
      %v533 = vpack.c.b16 %v481, %v479
      %v534 = vpack.c.b16 %v482, %v480
      %v535 = vpack.c.b16 %v485, %v483
      %v536 = vpack.c.b16 %v486, %v484
      %v537 = vpack.c.b16 %v489, %v487
      %v538 = vpack.c.b16 %v490, %v488
      %v539 = vpack.c.b16 %v493, %v491
      %v540 = vpack.c.b16 %v494, %v492
      %v541 = vpack.c.b16 %v497, %v495
      %v542 = vpack.c.b16 %v498, %v496
      %v543 = vpack.c.b16 %v501, %v499
      %v544 = vpack.c.b16 %v502, %v500
      %v545 = vpack.c.b16 %v505, %v503
      %v546 = vpack.c.b16 %v506, %v504
      %v547 = vpack.c.b16 %v509, %v507
      %v548 = vpack.c.b16 %v510, %v508
      %v549 = vpack.c.b16 %v513, %v511
      %v550 = vpack.c.b16 %v514, %v512
      %v551 = vpack.c.b16 %v517, %v515
      %v552 = vpack.c.b16 %v518, %v516
      %v553 = vpack.c.b16 %v521, %v519
      %v554 = vpack.c.b16 %v522, %v520
      %v619 = vunpack.c.l.b16 %v395
      %v620 = vunpack.c.l.b16 %v396
      %v621 = vunpack.c.l.b16 %v397
      %v622 = vunpack.c.l.b16 %v398
      %v623 = vunpack.c.l.b16 %v399
      %v624 = vunpack.c.l.b16 %v400
      %v625 = vunpack.c.l.b16 %v401
      %v626 = vunpack.c.l.b16 %v402
      %v627 = vunpack.c.l.b16 %v403
      %v628 = vunpack.c.l.b16 %v404
      %v629 = vunpack.c.l.b16 %v405
      %v630 = vunpack.c.l.b16 %v406
      %v631 = vunpack.c.l.b16 %v407
      %v632 = vunpack.c.l.b16 %v408
      %v633 = vunpack.c.l.b16 %v409
      %v634 = vunpack.c.l.b16 %v410
      %v635 = vunpack.c.l.b16 %v411
      %v636 = vunpack.c.l.b16 %v412
      %v637 = vunpack.c.l.b16 %v413
      %v638 = vunpack.c.l.b16 %v414
      %v639 = vunpack.c.l.b16 %v415
      %v640 = vunpack.c.l.b16 %v416
      %v641 = vunpack.c.l.b16 %v417
      %v642 = vunpack.c.l.b16 %v418
      %v643 = vunpack.c.l.b16 %v419
      %v644 = vunpack.c.l.b16 %v420
      %v645 = vunpack.c.l.b16 %v421
      %v646 = vunpack.c.l.b16 %v422
      %v647 = vunpack.c.l.b16 %v423
      %v648 = vunpack.c.l.b16 %v424
      %v649 = vunpack.c.l.b16 %v425
      %v650 = vunpack.c.l.b16 %v426
      %v651 = vpack.c.b16 %v620, %v619
      %v652 = vpack.c.b16 %v622, %v621
      %v653 = vpack.c.b16 %v624, %v623
      %v654 = vpack.c.b16 %v626, %v625
      %v655 = vpack.c.b16 %v628, %v627
      %v656 = vpack.c.b16 %v630, %v629
      %v657 = vpack.c.b16 %v632, %v631
      %v658 = vpack.c.b16 %v634, %v633
      %v659 = vpack.c.b16 %v636, %v635
      %v660 = vpack.c.b16 %v638, %v637
      %v661 = vpack.c.b16 %v640, %v639
      %v662 = vpack.c.b16 %v642, %v641
      %v663 = vpack.c.b16 %v644, %v643
      %v664 = vpack.c.b16 %v646, %v645
      %v665 = vpack.c.b16 %v648, %v647
      %v666 = vpack.c.b16 %v650, %v649
      %683 = vmatprep.subr.bf16.mxu0 0
      %684 = vmatpush1.bf16.msra.mxu0 %v658
      %685 = vmatprep.subr.bf16.mxu0 0
      %686 = vmatpush1.bf16.msra.mxu0 %v657
      %687 = vmatprep.subr.bf16.mxu0 0
      %688 = vmatpush1.bf16.msra.mxu0 %v656
      %689 = vmatprep.subr.bf16.mxu0 0
      %690 = vmatpush1.bf16.msra.mxu0 %v655
      %691 = vmatprep.subr.bf16.mxu0 0
      %692 = vmatpush1.bf16.msra.mxu0 %v654
      %693 = vmatprep.subr.bf16.mxu0 0
      %694 = vmatpush1.bf16.msra.mxu0 %v653
      %695 = vmatprep.subr.bf16.mxu0 0
      %696 = vmatpush1.bf16.msra.mxu0 %v652
      %697 = vmatprep.subr.bf16.mxu0 0
      %698 = vmatpush1.bf16.msra.mxu0 %v651
      %699 = vmatprep.subr.bf16.mxu0 0
      %700 = vmatpush2.bf16.msra.mxu0 %v666
      %701 = vmatprep.subr.bf16.mxu0 0
      %702 = vmatpush2.bf16.msra.mxu0 %v665
      %703 = vmatprep.subr.bf16.mxu0 0
      %704 = vmatpush2.bf16.msra.mxu0 %v664
      %705 = vmatprep.subr.bf16.mxu0 0
      %706 = vmatpush2.bf16.msra.mxu0 %v663
      %707 = vmatprep.subr.bf16.mxu0 0
      %708 = vmatpush2.bf16.msra.mxu0 %v662
      %709 = vmatprep.subr.bf16.mxu0 0
      %710 = vmatpush2.bf16.msra.mxu0 %v661
      %711 = vmatprep.subr.bf16.mxu0 0
      %712 = vmatpush2.bf16.msra.mxu0 %v660
      %713 = vmatprep.subr.bf16.mxu0 0
      %714 = vmatpush2.bf16.msra.mxu0 %v659
      %715 = vmatprep.mubr.bf16.mxu0 %v524
      %716 = vmatmul.mubr.bf16.gmra.mxu0 %v523
      %v717 = vpop.f32.mrf.mxu0
      %v718 = vadd.f32 0.0, %v717
      %v719 = vpop.f32.mrf.mxu0
      %v720 = vpop.f32.mrf.mxu0
      %v721 = vadd.f32 0.0, %v720
      %v722 = vpop.f32.mrf.mxu0
      %723 = vmatprep.mubr.bf16.mxu0 %v526
      %724 = vmatmul.mubr.bf16.gmra.mxu0 %v525
      %v725 = vpop.f32.mrf.mxu0
      %v726 = vadd.f32 0.0, %v725
      %v727 = vpop.f32.mrf.mxu0
      %v728 = vpop.f32.mrf.mxu0
      %v729 = vadd.f32 0.0, %v728
      %v730 = vpop.f32.mrf.mxu0
      %731 = vmatprep.mubr.bf16.mxu0 %v528
      %732 = vmatmul.mubr.bf16.gmra.mxu0 %v527
      %v733 = vpop.f32.mrf.mxu0
      %v734 = vadd.f32 0.0, %v733
      %v735 = vpop.f32.mrf.mxu0
      %v736 = vpop.f32.mrf.mxu0
      %v737 = vadd.f32 0.0, %v736
      %v738 = vpop.f32.mrf.mxu0
      %739 = vmatprep.mubr.bf16.mxu0 %v530
      %740 = vmatmul.mubr.bf16.gmra.mxu0 %v529
      %v741 = vpop.f32.mrf.mxu0
      %v742 = vadd.f32 0.0, %v741
      %v743 = vpop.f32.mrf.mxu0
      %v744 = vpop.f32.mrf.mxu0
      %v745 = vadd.f32 0.0, %v744
      %v746 = vpop.f32.mrf.mxu0
      %747 = vmatprep.mubr.bf16.mxu0 %v532
      %748 = vmatmul.mubr.bf16.gmra.mxu0 %v531
      %v749 = vpop.f32.mrf.mxu0
      %v750 = vadd.f32 0.0, %v749
      %v751 = vpop.f32.mrf.mxu0
      %v752 = vpop.f32.mrf.mxu0
      %v753 = vadd.f32 0.0, %v752
      %v754 = vpop.f32.mrf.mxu0
      %755 = vmatprep.mubr.bf16.mxu0 %v534
      %756 = vmatmul.mubr.bf16.gmra.mxu0 %v533
      %v757 = vpop.f32.mrf.mxu0
      %v758 = vadd.f32 0.0, %v757
      %v759 = vpop.f32.mrf.mxu0
      %v760 = vpop.f32.mrf.mxu0
      %v761 = vadd.f32 0.0, %v760
      %v762 = vpop.f32.mrf.mxu0
      %763 = vmatprep.mubr.bf16.mxu0 %v536
      %764 = vmatmul.mubr.bf16.gmra.mxu0 %v535
      %v765 = vpop.f32.mrf.mxu0
      %v766 = vadd.f32 0.0, %v765
      %v767 = vpop.f32.mrf.mxu0
      %v768 = vpop.f32.mrf.mxu0
      %v769 = vadd.f32 0.0, %v768
      %v770 = vpop.f32.mrf.mxu0
      %771 = vmatprep.mubr.bf16.mxu0 %v538
      %772 = vmatmul.mubr.bf16.gmra.mxu0 %v537
      %v773 = vpop.f32.mrf.mxu0
      %v774 = vadd.f32 0.0, %v773
      %v775 = vpop.f32.mrf.mxu0
      %v776 = vpop.f32.mrf.mxu0
      %v777 = vadd.f32 0.0, %v776
      %v778 = vpop.f32.mrf.mxu0
      %779 = vmatprep.mubr.bf16.mxu0 %v540
      %780 = vmatmul.mubr.bf16.gmra.mxu0 %v539
      %v781 = vpop.f32.mrf.mxu0
      %v782 = vadd.f32 0.0, %v781
      %v783 = vpop.f32.mrf.mxu0
      %v784 = vpop.f32.mrf.mxu0
      %v785 = vadd.f32 0.0, %v784
      %v786 = vpop.f32.mrf.mxu0
      %787 = vmatprep.mubr.bf16.mxu0 %v542
      %788 = vmatmul.mubr.bf16.gmra.mxu0 %v541
      %v789 = vpop.f32.mrf.mxu0
      %v790 = vadd.f32 0.0, %v789
      %v791 = vpop.f32.mrf.mxu0
      %v792 = vpop.f32.mrf.mxu0
      %v793 = vadd.f32 0.0, %v792
      %v794 = vpop.f32.mrf.mxu0
      %795 = vmatprep.mubr.bf16.mxu0 %v544
      %796 = vmatmul.mubr.bf16.gmra.mxu0 %v543
      %v797 = vpop.f32.mrf.mxu0
      %v798 = vadd.f32 0.0, %v797
      %v799 = vpop.f32.mrf.mxu0
      %v800 = vpop.f32.mrf.mxu0
      %v801 = vadd.f32 0.0, %v800
      %v802 = vpop.f32.mrf.mxu0
      %803 = vmatprep.mubr.bf16.mxu0 %v546
      %804 = vmatmul.mubr.bf16.gmra.mxu0 %v545
      %v805 = vpop.f32.mrf.mxu0
      %v806 = vadd.f32 0.0, %v805
      %v807 = vpop.f32.mrf.mxu0
      %v808 = vpop.f32.mrf.mxu0
      %v809 = vadd.f32 0.0, %v808
      %v810 = vpop.f32.mrf.mxu0
      %811 = vmatprep.mubr.bf16.mxu0 %v548
      %812 = vmatmul.mubr.bf16.gmra.mxu0 %v547
      %v813 = vpop.f32.mrf.mxu0
      %v814 = vadd.f32 0.0, %v813
      %v815 = vpop.f32.mrf.mxu0
      %v816 = vpop.f32.mrf.mxu0
      %v817 = vadd.f32 0.0, %v816
      %v818 = vpop.f32.mrf.mxu0
      %819 = vmatprep.mubr.bf16.mxu0 %v550
      %820 = vmatmul.mubr.bf16.gmra.mxu0 %v549
      %v821 = vpop.f32.mrf.mxu0
      %v822 = vadd.f32 0.0, %v821
      %v823 = vpop.f32.mrf.mxu0
      %v824 = vpop.f32.mrf.mxu0
      %v825 = vadd.f32 0.0, %v824
      %v826 = vpop.f32.mrf.mxu0
      %827 = vmatprep.mubr.bf16.mxu0 %v552
      %828 = vmatmul.mubr.bf16.gmra.mxu0 %v551
      %v829 = vpop.f32.mrf.mxu0
      %v830 = vadd.f32 0.0, %v829
      %v831 = vpop.f32.mrf.mxu0
      %v832 = vpop.f32.mrf.mxu0
      %v833 = vadd.f32 0.0, %v832
      %v834 = vpop.f32.mrf.mxu0
      %835 = vmatprep.mubr.bf16.mxu0 %v554
      %836 = vmatmul.mubr.bf16.gmra.mxu0 %v553
      %v837 = vpop.f32.mrf.mxu0
      %v838 = vadd.f32 0.0, %v837
      %v839 = vpop.f32.mrf.mxu0
      %v840 = vpop.f32.mrf.mxu0
      %v841 = vadd.f32 0.0, %v840
      %v842 = vpop.f32.mrf.mxu0
      %843 = vdwg.mxu0
      %v876 = vunpack.c.l.b16 %v294
      %v877 = vunpack.c.h.b16 %v294
      %v878 = vunpack.c.l.b16 %v295
      %v879 = vunpack.c.h.b16 %v295
      %v880 = vunpack.c.l.b16 %v296
      %v881 = vunpack.c.h.b16 %v296
      %v882 = vunpack.c.l.b16 %v297
      %v883 = vunpack.c.h.b16 %v297
      %v884 = vunpack.c.l.b16 %v298
      %v885 = vunpack.c.h.b16 %v298
      %v886 = vunpack.c.l.b16 %v299
      %v887 = vunpack.c.h.b16 %v299
      %v888 = vunpack.c.l.b16 %v300
      %v889 = vunpack.c.h.b16 %v300
      %v890 = vunpack.c.l.b16 %v301
      %v891 = vunpack.c.h.b16 %v301
      %v892 = vunpack.c.l.b16 %v302
      %v893 = vunpack.c.h.b16 %v302
      %v894 = vunpack.c.l.b16 %v303
      %v895 = vunpack.c.h.b16 %v303
      %v896 = vunpack.c.l.b16 %v304
      %v897 = vunpack.c.h.b16 %v304
      %v898 = vunpack.c.l.b16 %v305
      %v899 = vunpack.c.h.b16 %v305
      %v900 = vunpack.c.l.b16 %v306
      %v901 = vunpack.c.h.b16 %v306
      %v902 = vunpack.c.l.b16 %v307
      %v903 = vunpack.c.h.b16 %v307
      %v904 = vunpack.c.l.b16 %v308
      %v905 = vunpack.c.h.b16 %v308
      %v906 = vunpack.c.l.b16 %v309
      %v907 = vunpack.c.h.b16 %v309
      %v908 = vunpack.c.l.b16 %v310
      %v909 = vunpack.c.h.b16 %v310
      %v910 = vunpack.c.l.b16 %v311
      %v911 = vunpack.c.h.b16 %v311
      %v912 = vunpack.c.l.b16 %v312
      %v913 = vunpack.c.h.b16 %v312
      %v914 = vunpack.c.l.b16 %v313
      %v915 = vunpack.c.h.b16 %v313
      %v916 = vunpack.c.l.b16 %v314
      %v917 = vunpack.c.h.b16 %v314
      %v918 = vunpack.c.l.b16 %v315
      %v919 = vunpack.c.h.b16 %v315
      %v920 = vunpack.c.l.b16 %v316
      %v921 = vunpack.c.h.b16 %v316
      %v922 = vunpack.c.l.b16 %v317
      %v923 = vunpack.c.h.b16 %v317
      %v924 = vunpack.c.l.b16 %v318
      %v925 = vunpack.c.h.b16 %v318
      %v926 = vunpack.c.l.b16 %v319
      %v927 = vunpack.c.h.b16 %v319
      %v928 = vunpack.c.l.b16 %v320
      %v929 = vunpack.c.h.b16 %v320
      %v930 = vunpack.c.l.b16 %v321
      %v931 = vunpack.c.h.b16 %v321
      %v932 = vunpack.c.l.b16 %v322
      %v933 = vunpack.c.h.b16 %v322
      %v934 = vunpack.c.l.b16 %v323
      %v935 = vunpack.c.h.b16 %v323
      %v936 = vunpack.c.l.b16 %v324
      %v937 = vunpack.c.h.b16 %v324
      %v938 = vunpack.c.l.b16 %v325
      %v939 = vunpack.c.h.b16 %v325
      %v940 = vpack.c.b16 %v878, %v876
      %v941 = vpack.c.b16 %v879, %v877
      %v942 = vpack.c.b16 %v882, %v880
      %v943 = vpack.c.b16 %v883, %v881
      %v944 = vpack.c.b16 %v886, %v884
      %v945 = vpack.c.b16 %v887, %v885
      %v946 = vpack.c.b16 %v890, %v888
      %v947 = vpack.c.b16 %v891, %v889
      %v948 = vpack.c.b16 %v894, %v892
      %v949 = vpack.c.b16 %v895, %v893
      %v950 = vpack.c.b16 %v898, %v896
      %v951 = vpack.c.b16 %v899, %v897
      %v952 = vpack.c.b16 %v902, %v900
      %v953 = vpack.c.b16 %v903, %v901
      %v954 = vpack.c.b16 %v906, %v904
      %v955 = vpack.c.b16 %v907, %v905
      %v956 = vpack.c.b16 %v910, %v908
      %v957 = vpack.c.b16 %v911, %v909
      %v958 = vpack.c.b16 %v914, %v912
      %v959 = vpack.c.b16 %v915, %v913
      %v960 = vpack.c.b16 %v918, %v916
      %v961 = vpack.c.b16 %v919, %v917
      %v962 = vpack.c.b16 %v922, %v920
      %v963 = vpack.c.b16 %v923, %v921
      %v964 = vpack.c.b16 %v926, %v924
      %v965 = vpack.c.b16 %v927, %v925
      %v966 = vpack.c.b16 %v930, %v928
      %v967 = vpack.c.b16 %v931, %v929
      %v968 = vpack.c.b16 %v934, %v932
      %v969 = vpack.c.b16 %v935, %v933
      %v970 = vpack.c.b16 %v938, %v936
      %v971 = vpack.c.b16 %v939, %v937
      %v1036 = vunpack.c.l.b16 %v326
      %v1037 = vunpack.c.l.b16 %v327
      %v1038 = vunpack.c.l.b16 %v328
      %v1039 = vunpack.c.l.b16 %v329
      %v1040 = vunpack.c.l.b16 %v330
      %v1041 = vunpack.c.l.b16 %v331
      %v1042 = vunpack.c.l.b16 %v332
      %v1043 = vunpack.c.l.b16 %v333
      %v1044 = vunpack.c.l.b16 %v334
      %v1045 = vunpack.c.l.b16 %v335
      %v1046 = vunpack.c.l.b16 %v336
      %v1047 = vunpack.c.l.b16 %v337
      %v1048 = vunpack.c.l.b16 %v338
      %v1049 = vunpack.c.l.b16 %v339
      %v1050 = vunpack.c.l.b16 %v340
      %v1051 = vunpack.c.l.b16 %v341
      %v1052 = vunpack.c.l.b16 %v342
      %v1053 = vunpack.c.l.b16 %v343
      %v1054 = vunpack.c.l.b16 %v344
      %v1055 = vunpack.c.l.b16 %v345
      %v1056 = vunpack.c.l.b16 %v346
      %v1057 = vunpack.c.l.b16 %v347
      %v1058 = vunpack.c.l.b16 %v348
      %v1059 = vunpack.c.l.b16 %v349
      %v1060 = vunpack.c.l.b16 %v350
      %v1061 = vunpack.c.l.b16 %v351
      %v1062 = vunpack.c.l.b16 %v352
      %v1063 = vunpack.c.l.b16 %v353
      %v1064 = vunpack.c.l.b16 %v354
      %v1065 = vunpack.c.l.b16 %v355
      %v1066 = vunpack.c.l.b16 %v356
      %v1067 = vunpack.c.l.b16 %v357
      %v1068 = vpack.c.b16 %v1037, %v1036
      %v1069 = vpack.c.b16 %v1039, %v1038
      %v1070 = vpack.c.b16 %v1041, %v1040
      %v1071 = vpack.c.b16 %v1043, %v1042
      %v1072 = vpack.c.b16 %v1045, %v1044
      %v1073 = vpack.c.b16 %v1047, %v1046
      %v1074 = vpack.c.b16 %v1049, %v1048
      %v1075 = vpack.c.b16 %v1051, %v1050
      %v1076 = vpack.c.b16 %v1053, %v1052
      %v1077 = vpack.c.b16 %v1055, %v1054
      %v1078 = vpack.c.b16 %v1057, %v1056
      %v1079 = vpack.c.b16 %v1059, %v1058
      %v1080 = vpack.c.b16 %v1061, %v1060
      %v1081 = vpack.c.b16 %v1063, %v1062
      %v1082 = vpack.c.b16 %v1065, %v1064
      %v1083 = vpack.c.b16 %v1067, %v1066
      %1100 = vmatprep.subr.bf16.mxu0 0
      %1101 = vmatpush1.bf16.msra.mxu0 %v1075
      %1102 = vmatprep.subr.bf16.mxu0 0
      %1103 = vmatpush1.bf16.msra.mxu0 %v1074
      %1104 = vmatprep.subr.bf16.mxu0 0
      %1105 = vmatpush1.bf16.msra.mxu0 %v1073
      %1106 = vmatprep.subr.bf16.mxu0 0
      %1107 = vmatpush1.bf16.msra.mxu0 %v1072
      %1108 = vmatprep.subr.bf16.mxu0 0
      %1109 = vmatpush1.bf16.msra.mxu0 %v1071
      %1110 = vmatprep.subr.bf16.mxu0 0
      %1111 = vmatpush1.bf16.msra.mxu0 %v1070
      %1112 = vmatprep.subr.bf16.mxu0 0
      %1113 = vmatpush1.bf16.msra.mxu0 %v1069
      %1114 = vmatprep.subr.bf16.mxu0 0
      %1115 = vmatpush1.bf16.msra.mxu0 %v1068
      %1116 = vmatprep.subr.bf16.mxu0 0
      %1117 = vmatpush2.bf16.msra.mxu0 %v1083
      %1118 = vmatprep.subr.bf16.mxu0 0
      %1119 = vmatpush2.bf16.msra.mxu0 %v1082
      %1120 = vmatprep.subr.bf16.mxu0 0
      %1121 = vmatpush2.bf16.msra.mxu0 %v1081
      %1122 = vmatprep.subr.bf16.mxu0 0
      %1123 = vmatpush2.bf16.msra.mxu0 %v1080
      %1124 = vmatprep.subr.bf16.mxu0 0
      %1125 = vmatpush2.bf16.msra.mxu0 %v1079
      %1126 = vmatprep.subr.bf16.mxu0 0
      %1127 = vmatpush2.bf16.msra.mxu0 %v1078
      %1128 = vmatprep.subr.bf16.mxu0 0
      %1129 = vmatpush2.bf16.msra.mxu0 %v1077
      %1130 = vmatprep.subr.bf16.mxu0 0
      %1131 = vmatpush2.bf16.msra.mxu0 %v1076
      %1132 = vmatprep.mubr.bf16.mxu0 %v941
      %1133 = vmatmul.mubr.bf16.gmra.mxu0 %v940
      %v1134 = vpop.f32.mrf.mxu0
      %v1135 = vadd.f32 %v718, %v1134
      %v1136 = vpop.f32.mrf.mxu0
      %v1137 = vpop.f32.mrf.mxu0
      %v1138 = vadd.f32 %v721, %v1137
      %v1139 = vpop.f32.mrf.mxu0
      %1140 = vmatprep.mubr.bf16.mxu0 %v943
      %1141 = vmatmul.mubr.bf16.gmra.mxu0 %v942
      %v1142 = vpop.f32.mrf.mxu0
      %v1143 = vadd.f32 %v726, %v1142
      %v1144 = vpop.f32.mrf.mxu0
      %v1145 = vpop.f32.mrf.mxu0
      %v1146 = vadd.f32 %v729, %v1145
      %v1147 = vpop.f32.mrf.mxu0
      %1148 = vmatprep.mubr.bf16.mxu0 %v945
      %1149 = vmatmul.mubr.bf16.gmra.mxu0 %v944
      %v1150 = vpop.f32.mrf.mxu0
      %v1151 = vadd.f32 %v734, %v1150
      %v1152 = vpop.f32.mrf.mxu0
      %v1153 = vpop.f32.mrf.mxu0
      %v1154 = vadd.f32 %v737, %v1153
      %v1155 = vpop.f32.mrf.mxu0
      %1156 = vmatprep.mubr.bf16.mxu0 %v947
      %1157 = vmatmul.mubr.bf16.gmra.mxu0 %v946
      %v1158 = vpop.f32.mrf.mxu0
      %v1159 = vadd.f32 %v742, %v1158
      %v1160 = vpop.f32.mrf.mxu0
      %v1161 = vpop.f32.mrf.mxu0
      %v1162 = vadd.f32 %v745, %v1161
      %v1163 = vpop.f32.mrf.mxu0
      %1164 = vmatprep.mubr.bf16.mxu0 %v949
      %1165 = vmatmul.mubr.bf16.gmra.mxu0 %v948
      %v1166 = vpop.f32.mrf.mxu0
      %v1167 = vadd.f32 %v750, %v1166
      %v1168 = vpop.f32.mrf.mxu0
      %v1169 = vpop.f32.mrf.mxu0
      %v1170 = vadd.f32 %v753, %v1169
      %v1171 = vpop.f32.mrf.mxu0
      %1172 = vmatprep.mubr.bf16.mxu0 %v951
      %1173 = vmatmul.mubr.bf16.gmra.mxu0 %v950
      %v1174 = vpop.f32.mrf.mxu0
      %v1175 = vadd.f32 %v758, %v1174
      %v1176 = vpop.f32.mrf.mxu0
      %v1177 = vpop.f32.mrf.mxu0
      %v1178 = vadd.f32 %v761, %v1177
      %v1179 = vpop.f32.mrf.mxu0
      %1180 = vmatprep.mubr.bf16.mxu0 %v953
      %1181 = vmatmul.mubr.bf16.gmra.mxu0 %v952
      %v1182 = vpop.f32.mrf.mxu0
      %v1183 = vadd.f32 %v766, %v1182
      %v1184 = vpop.f32.mrf.mxu0
      %v1185 = vpop.f32.mrf.mxu0
      %v1186 = vadd.f32 %v769, %v1185
      %v1187 = vpop.f32.mrf.mxu0
      %1188 = vmatprep.mubr.bf16.mxu0 %v955
      %1189 = vmatmul.mubr.bf16.gmra.mxu0 %v954
      %v1190 = vpop.f32.mrf.mxu0
      %v1191 = vadd.f32 %v774, %v1190
      %v1192 = vpop.f32.mrf.mxu0
      %v1193 = vpop.f32.mrf.mxu0
      %v1194 = vadd.f32 %v777, %v1193
      %v1195 = vpop.f32.mrf.mxu0
      %1196 = vmatprep.mubr.bf16.mxu0 %v957
      %1197 = vmatmul.mubr.bf16.gmra.mxu0 %v956
      %v1198 = vpop.f32.mrf.mxu0
      %v1199 = vadd.f32 %v782, %v1198
      %v1200 = vpop.f32.mrf.mxu0
      %v1201 = vpop.f32.mrf.mxu0
      %v1202 = vadd.f32 %v785, %v1201
      %v1203 = vpop.f32.mrf.mxu0
      %1204 = vmatprep.mubr.bf16.mxu0 %v959
      %1205 = vmatmul.mubr.bf16.gmra.mxu0 %v958
      %v1206 = vpop.f32.mrf.mxu0
      %v1207 = vadd.f32 %v790, %v1206
      %v1208 = vpop.f32.mrf.mxu0
      %v1209 = vpop.f32.mrf.mxu0
      %v1210 = vadd.f32 %v793, %v1209
      %v1211 = vpop.f32.mrf.mxu0
      %1212 = vmatprep.mubr.bf16.mxu0 %v961
      %1213 = vmatmul.mubr.bf16.gmra.mxu0 %v960
      %v1214 = vpop.f32.mrf.mxu0
      %v1215 = vadd.f32 %v798, %v1214
      %v1216 = vpop.f32.mrf.mxu0
      %v1217 = vpop.f32.mrf.mxu0
      %v1218 = vadd.f32 %v801, %v1217
      %v1219 = vpop.f32.mrf.mxu0
      %1220 = vmatprep.mubr.bf16.mxu0 %v963
      %1221 = vmatmul.mubr.bf16.gmra.mxu0 %v962
      %v1222 = vpop.f32.mrf.mxu0
      %v1223 = vadd.f32 %v806, %v1222
      %v1224 = vpop.f32.mrf.mxu0
      %v1225 = vpop.f32.mrf.mxu0
      %v1226 = vadd.f32 %v809, %v1225
      %v1227 = vpop.f32.mrf.mxu0
      %1228 = vmatprep.mubr.bf16.mxu0 %v965
      %1229 = vmatmul.mubr.bf16.gmra.mxu0 %v964
      %v1230 = vpop.f32.mrf.mxu0
      %v1231 = vadd.f32 %v814, %v1230
      %v1232 = vpop.f32.mrf.mxu0
      %v1233 = vpop.f32.mrf.mxu0
      %v1234 = vadd.f32 %v817, %v1233
      %v1235 = vpop.f32.mrf.mxu0
      %1236 = vmatprep.mubr.bf16.mxu0 %v967
      %1237 = vmatmul.mubr.bf16.gmra.mxu0 %v966
      %v1238 = vpop.f32.mrf.mxu0
      %v1239 = vadd.f32 %v822, %v1238
      %v1240 = vpop.f32.mrf.mxu0
      %v1241 = vpop.f32.mrf.mxu0
      %v1242 = vadd.f32 %v825, %v1241
      %v1243 = vpop.f32.mrf.mxu0
      %1244 = vmatprep.mubr.bf16.mxu0 %v969
      %1245 = vmatmul.mubr.bf16.gmra.mxu0 %v968
      %v1246 = vpop.f32.mrf.mxu0
      %v1247 = vadd.f32 %v830, %v1246
      %v1248 = vpop.f32.mrf.mxu0
      %v1249 = vpop.f32.mrf.mxu0
      %v1250 = vadd.f32 %v833, %v1249
      %v1251 = vpop.f32.mrf.mxu0
      %1252 = vmatprep.mubr.bf16.mxu0 %v971
      %1253 = vmatmul.mubr.bf16.gmra.mxu0 %v970
      %v1254 = vpop.f32.mrf.mxu0
      %v1255 = vadd.f32 %v838, %v1254
      %v1256 = vpop.f32.mrf.mxu0
      %v1257 = vpop.f32.mrf.mxu0
      %v1258 = vadd.f32 %v841, %v1257
      %v1259 = vpop.f32.mrf.mxu0
      %1260 = vdwg.mxu0
      %s1261 = sadd.s32 %s290, 2
      %s1262 = smul.u32 %s1261, 4
      %s1263 = smul.addr %s1262, 4
      %s1264 = scalar_lea.vmem %s266, %s1263
      %v1265 = vld [vmem:[%s1264] sm:$0xff]
      %v1266 = vld [vmem:[%s1264 + $0x8] sm:$0xff]
      %v1267 = vld [vmem:[%s1264 + $0x10] sm:$0xff]
      %v1268 = vld [vmem:[%s1264 + $0x18] sm:$0xff]
      %v1269 = vld [vmem:[%s1264 + $0x20] sm:$0xff]
      %v1270 = vld [vmem:[%s1264 + $0x28] sm:$0xff]
      %v1271 = vld [vmem:[%s1264 + $0x30] sm:$0xff]
      %v1272 = vld [vmem:[%s1264 + $0x38] sm:$0xff]
      %v1273 = vld [vmem:[%s1264 + $0x40] sm:$0xff]
      %v1274 = vld [vmem:[%s1264 + $0x48] sm:$0xff]
      %v1275 = vld [vmem:[%s1264 + $0x50] sm:$0xff]
      %v1276 = vld [vmem:[%s1264 + $0x58] sm:$0xff]
      %v1277 = vld [vmem:[%s1264 + $0x60] sm:$0xff]
      %v1278 = vld [vmem:[%s1264 + $0x68] sm:$0xff]
      %v1279 = vld [vmem:[%s1264 + $0x70] sm:$0xff]
      %v1280 = vld [vmem:[%s1264 + $0x78] sm:$0xff]
      %v1281 = vld [vmem:[%s1264 + $0x80] sm:$0xff]
      %v1282 = vld [vmem:[%s1264 + $0x88] sm:$0xff]
      %v1283 = vld [vmem:[%s1264 + $0x90] sm:$0xff]
      %v1284 = vld [vmem:[%s1264 + $0x98] sm:$0xff]
      %v1285 = vld [vmem:[%s1264 + $0xa0] sm:$0xff]
      %v1286 = vld [vmem:[%s1264 + $0xa8] sm:$0xff]
      %v1287 = vld [vmem:[%s1264 + $0xb0] sm:$0xff]
      %v1288 = vld [vmem:[%s1264 + $0xb8] sm:$0xff]
      %v1289 = vld [vmem:[%s1264 + $0xc0] sm:$0xff]
      %v1290 = vld [vmem:[%s1264 + $0xc8] sm:$0xff]
      %v1291 = vld [vmem:[%s1264 + $0xd0] sm:$0xff]
      %v1292 = vld [vmem:[%s1264 + $0xd8] sm:$0xff]
      %v1293 = vld [vmem:[%s1264 + $0xe0] sm:$0xff]
      %v1294 = vld [vmem:[%s1264 + $0xe8] sm:$0xff]
      %v1295 = vld [vmem:[%s1264 + $0xf0] sm:$0xff]
      %v1296 = vld [vmem:[%s1264 + $0xf8] sm:$0xff]
      %s1297 = scalar_lea.vmem %s1, 256
      %v1298 = vld [vmem:[%s1297] sm:$0xf]
      %v1299 = vld [vmem:[%s1297 + $0x4] sm:$0xf]
      %v1300 = vld [vmem:[%s1297 + $0x8] sm:$0xf]
      %v1301 = vld [vmem:[%s1297 + $0xc] sm:$0xf]
      %v1302 = vld [vmem:[%s1297 + $0x10] sm:$0xf]
      %v1303 = vld [vmem:[%s1297 + $0x14] sm:$0xf]
      %v1304 = vld [vmem:[%s1297 + $0x18] sm:$0xf]
      %v1305 = vld [vmem:[%s1297 + $0x1c] sm:$0xf]
      %v1306 = vld [vmem:[%s1297 + $0x20] sm:$0xf]
      %v1307 = vld [vmem:[%s1297 + $0x24] sm:$0xf]
      %v1308 = vld [vmem:[%s1297 + $0x28] sm:$0xf]
      %v1309 = vld [vmem:[%s1297 + $0x2c] sm:$0xf]
      %v1310 = vld [vmem:[%s1297 + $0x30] sm:$0xf]
      %v1311 = vld [vmem:[%s1297 + $0x34] sm:$0xf]
      %v1312 = vld [vmem:[%s1297 + $0x38] sm:$0xf]
      %v1313 = vld [vmem:[%s1297 + $0x3c] sm:$0xf]
      %v1314 = vld [vmem:[%s1297 + $0x40] sm:$0xf]
      %v1315 = vld [vmem:[%s1297 + $0x44] sm:$0xf]
      %v1316 = vld [vmem:[%s1297 + $0x48] sm:$0xf]
      %v1317 = vld [vmem:[%s1297 + $0x4c] sm:$0xf]
      %v1318 = vld [vmem:[%s1297 + $0x50] sm:$0xf]
      %v1319 = vld [vmem:[%s1297 + $0x54] sm:$0xf]
      %v1320 = vld [vmem:[%s1297 + $0x58] sm:$0xf]
      %v1321 = vld [vmem:[%s1297 + $0x5c] sm:$0xf]
      %v1322 = vld [vmem:[%s1297 + $0x60] sm:$0xf]
      %v1323 = vld [vmem:[%s1297 + $0x64] sm:$0xf]
      %v1324 = vld [vmem:[%s1297 + $0x68] sm:$0xf]
      %v1325 = vld [vmem:[%s1297 + $0x6c] sm:$0xf]
      %v1326 = vld [vmem:[%s1297 + $0x70] sm:$0xf]
      %v1327 = vld [vmem:[%s1297 + $0x74] sm:$0xf]
      %v1328 = vld [vmem:[%s1297 + $0x78] sm:$0xf]
      %v1329 = vld [vmem:[%s1297 + $0x7c] sm:$0xf]
      %v1362 = vunpack.c.l.b16 %v1265
      %v1363 = vunpack.c.h.b16 %v1265
      %v1364 = vunpack.c.l.b16 %v1266
      %v1365 = vunpack.c.h.b16 %v1266
      %v1366 = vunpack.c.l.b16 %v1267
      %v1367 = vunpack.c.h.b16 %v1267
      %v1368 = vunpack.c.l.b16 %v1268
      %v1369 = vunpack.c.h.b16 %v1268
      %v1370 = vunpack.c.l.b16 %v1269
      %v1371 = vunpack.c.h.b16 %v1269
      %v1372 = vunpack.c.l.b16 %v1270
      %v1373 = vunpack.c.h.b16 %v1270
      %v1374 = vunpack.c.l.b16 %v1271
      %v1375 = vunpack.c.h.b16 %v1271
      %v1376 = vunpack.c.l.b16 %v1272
      %v1377 = vunpack.c.h.b16 %v1272
      %v1378 = vunpack.c.l.b16 %v1273
      %v1379 = vunpack.c.h.b16 %v1273
      %v1380 = vunpack.c.l.b16 %v1274
      %v1381 = vunpack.c.h.b16 %v1274
      %v1382 = vunpack.c.l.b16 %v1275
      %v1383 = vunpack.c.h.b16 %v1275
      %v1384 = vunpack.c.l.b16 %v1276
      %v1385 = vunpack.c.h.b16 %v1276
      %v1386 = vunpack.c.l.b16 %v1277
      %v1387 = vunpack.c.h.b16 %v1277
      %v1388 = vunpack.c.l.b16 %v1278
      %v1389 = vunpack.c.h.b16 %v1278
      %v1390 = vunpack.c.l.b16 %v1279
      %v1391 = vunpack.c.h.b16 %v1279
      %v1392 = vunpack.c.l.b16 %v1280
      %v1393 = vunpack.c.h.b16 %v1280
      %v1394 = vunpack.c.l.b16 %v1281
      %v1395 = vunpack.c.h.b16 %v1281
      %v1396 = vunpack.c.l.b16 %v1282
      %v1397 = vunpack.c.h.b16 %v1282
      %v1398 = vunpack.c.l.b16 %v1283
      %v1399 = vunpack.c.h.b16 %v1283
      %v1400 = vunpack.c.l.b16 %v1284
      %v1401 = vunpack.c.h.b16 %v1284
      %v1402 = vunpack.c.l.b16 %v1285
      %v1403 = vunpack.c.h.b16 %v1285
      %v1404 = vunpack.c.l.b16 %v1286
      %v1405 = vunpack.c.h.b16 %v1286
      %v1406 = vunpack.c.l.b16 %v1287
      %v1407 = vunpack.c.h.b16 %v1287
      %v1408 = vunpack.c.l.b16 %v1288
      %v1409 = vunpack.c.h.b16 %v1288
      %v1410 = vunpack.c.l.b16 %v1289
      %v1411 = vunpack.c.h.b16 %v1289
      %v1412 = vunpack.c.l.b16 %v1290
      %v1413 = vunpack.c.h.b16 %v1290
      %v1414 = vunpack.c.l.b16 %v1291
      %v1415 = vunpack.c.h.b16 %v1291
      %v1416 = vunpack.c.l.b16 %v1292
      %v1417 = vunpack.c.h.b16 %v1292
      %v1418 = vunpack.c.l.b16 %v1293
      %v1419 = vunpack.c.h.b16 %v1293
      %v1420 = vunpack.c.l.b16 %v1294
      %v1421 = vunpack.c.h.b16 %v1294
      %v1422 = vunpack.c.l.b16 %v1295
      %v1423 = vunpack.c.h.b16 %v1295
      %v1424 = vunpack.c.l.b16 %v1296
      %v1425 = vunpack.c.h.b16 %v1296
      %v1426 = vpack.c.b16 %v1364, %v1362
      %v1427 = vpack.c.b16 %v1365, %v1363
      %v1428 = vpack.c.b16 %v1368, %v1366
      %v1429 = vpack.c.b16 %v1369, %v1367
      %v1430 = vpack.c.b16 %v1372, %v1370
      %v1431 = vpack.c.b16 %v1373, %v1371
      %v1432 = vpack.c.b16 %v1376, %v1374
      %v1433 = vpack.c.b16 %v1377, %v1375
      %v1434 = vpack.c.b16 %v1380, %v1378
      %v1435 = vpack.c.b16 %v1381, %v1379
      %v1436 = vpack.c.b16 %v1384, %v1382
      %v1437 = vpack.c.b16 %v1385, %v1383
      %v1438 = vpack.c.b16 %v1388, %v1386
      %v1439 = vpack.c.b16 %v1389, %v1387
      %v1440 = vpack.c.b16 %v1392, %v1390
      %v1441 = vpack.c.b16 %v1393, %v1391
      %v1442 = vpack.c.b16 %v1396, %v1394
      %v1443 = vpack.c.b16 %v1397, %v1395
      %v1444 = vpack.c.b16 %v1400, %v1398
      %v1445 = vpack.c.b16 %v1401, %v1399
      %v1446 = vpack.c.b16 %v1404, %v1402
      %v1447 = vpack.c.b16 %v1405, %v1403
      %v1448 = vpack.c.b16 %v1408, %v1406
      %v1449 = vpack.c.b16 %v1409, %v1407
      %v1450 = vpack.c.b16 %v1412, %v1410
      %v1451 = vpack.c.b16 %v1413, %v1411
      %v1452 = vpack.c.b16 %v1416, %v1414
      %v1453 = vpack.c.b16 %v1417, %v1415
      %v1454 = vpack.c.b16 %v1420, %v1418
      %v1455 = vpack.c.b16 %v1421, %v1419
      %v1456 = vpack.c.b16 %v1424, %v1422
      %v1457 = vpack.c.b16 %v1425, %v1423
      %v1522 = vunpack.c.l.b16 %v1298
      %v1523 = vunpack.c.l.b16 %v1299
      %v1524 = vunpack.c.l.b16 %v1300
      %v1525 = vunpack.c.l.b16 %v1301
      %v1526 = vunpack.c.l.b16 %v1302
      %v1527 = vunpack.c.l.b16 %v1303
      %v1528 = vunpack.c.l.b16 %v1304
      %v1529 = vunpack.c.l.b16 %v1305
      %v1530 = vunpack.c.l.b16 %v1306
      %v1531 = vunpack.c.l.b16 %v1307
      %v1532 = vunpack.c.l.b16 %v1308
      %v1533 = vunpack.c.l.b16 %v1309
      %v1534 = vunpack.c.l.b16 %v1310
      %v1535 = vunpack.c.l.b16 %v1311
      %v1536 = vunpack.c.l.b16 %v1312
      %v1537 = vunpack.c.l.b16 %v1313
      %v1538 = vunpack.c.l.b16 %v1314
      %v1539 = vunpack.c.l.b16 %v1315
      %v1540 = vunpack.c.l.b16 %v1316
      %v1541 = vunpack.c.l.b16 %v1317
      %v1542 = vunpack.c.l.b16 %v1318
      %v1543 = vunpack.c.l.b16 %v1319
      %v1544 = vunpack.c.l.b16 %v1320
      %v1545 = vunpack.c.l.b16 %v1321
      %v1546 = vunpack.c.l.b16 %v1322
      %v1547 = vunpack.c.l.b16 %v1323
      %v1548 = vunpack.c.l.b16 %v1324
      %v1549 = vunpack.c.l.b16 %v1325
      %v1550 = vunpack.c.l.b16 %v1326
      %v1551 = vunpack.c.l.b16 %v1327
      %v1552 = vunpack.c.l.b16 %v1328
      %v1553 = vunpack.c.l.b16 %v1329
      %v1554 = vpack.c.b16 %v1523, %v1522
      %v1555 = vpack.c.b16 %v1525, %v1524
      %v1556 = vpack.c.b16 %v1527, %v1526
      %v1557 = vpack.c.b16 %v1529, %v1528
      %v1558 = vpack.c.b16 %v1531, %v1530
      %v1559 = vpack.c.b16 %v1533, %v1532
      %v1560 = vpack.c.b16 %v1535, %v1534
      %v1561 = vpack.c.b16 %v1537, %v1536
      %v1562 = vpack.c.b16 %v1539, %v1538
      %v1563 = vpack.c.b16 %v1541, %v1540
      %v1564 = vpack.c.b16 %v1543, %v1542
      %v1565 = vpack.c.b16 %v1545, %v1544
      %v1566 = vpack.c.b16 %v1547, %v1546
      %v1567 = vpack.c.b16 %v1549, %v1548
      %v1568 = vpack.c.b16 %v1551, %v1550
      %v1569 = vpack.c.b16 %v1553, %v1552
      %1586 = vmatprep.subr.bf16.mxu0 0
      %1587 = vmatpush1.bf16.msra.mxu0 %v1561
      %1588 = vmatprep.subr.bf16.mxu0 0
      %1589 = vmatpush1.bf16.msra.mxu0 %v1560
      %1590 = vmatprep.subr.bf16.mxu0 0
      %1591 = vmatpush1.bf16.msra.mxu0 %v1559
      %1592 = vmatprep.subr.bf16.mxu0 0
      %1593 = vmatpush1.bf16.msra.mxu0 %v1558
      %1594 = vmatprep.subr.bf16.mxu0 0
      %1595 = vmatpush1.bf16.msra.mxu0 %v1557
      %1596 = vmatprep.subr.bf16.mxu0 0
      %1597 = vmatpush1.bf16.msra.mxu0 %v1556
      %1598 = vmatprep.subr.bf16.mxu0 0
      %1599 = vmatpush1.bf16.msra.mxu0 %v1555
      %1600 = vmatprep.subr.bf16.mxu0 0
      %1601 = vmatpush1.bf16.msra.mxu0 %v1554
      %1602 = vmatprep.subr.bf16.mxu0 0
      %1603 = vmatpush2.bf16.msra.mxu0 %v1569
      %1604 = vmatprep.subr.bf16.mxu0 0
      %1605 = vmatpush2.bf16.msra.mxu0 %v1568
      %1606 = vmatprep.subr.bf16.mxu0 0
      %1607 = vmatpush2.bf16.msra.mxu0 %v1567
      %1608 = vmatprep.subr.bf16.mxu0 0
      %1609 = vmatpush2.bf16.msra.mxu0 %v1566
      %1610 = vmatprep.subr.bf16.mxu0 0
      %1611 = vmatpush2.bf16.msra.mxu0 %v1565
      %1612 = vmatprep.subr.bf16.mxu0 0
      %1613 = vmatpush2.bf16.msra.mxu0 %v1564
      %1614 = vmatprep.subr.bf16.mxu0 0
      %1615 = vmatpush2.bf16.msra.mxu0 %v1563
      %1616 = vmatprep.subr.bf16.mxu0 0
      %1617 = vmatpush2.bf16.msra.mxu0 %v1562
      %1618 = vmatprep.mubr.bf16.mxu0 %v1427
      %1619 = vmatmul.mubr.bf16.gmra.mxu0 %v1426
      %v1620 = vpop.f32.mrf.mxu0
      %v1621 = vadd.f32 0.0, %v1620
      %v1622 = vpop.f32.mrf.mxu0
      %v1623 = vpop.f32.mrf.mxu0
      %v1624 = vadd.f32 0.0, %v1623
      %v1625 = vpop.f32.mrf.mxu0
      %1626 = vmatprep.mubr.bf16.mxu0 %v1429
      %1627 = vmatmul.mubr.bf16.gmra.mxu0 %v1428
      %v1628 = vpop.f32.mrf.mxu0
      %v1629 = vadd.f32 0.0, %v1628
      %v1630 = vpop.f32.mrf.mxu0
      %v1631 = vpop.f32.mrf.mxu0
      %v1632 = vadd.f32 0.0, %v1631
      %v1633 = vpop.f32.mrf.mxu0
      %1634 = vmatprep.mubr.bf16.mxu0 %v1431
      %1635 = vmatmul.mubr.bf16.gmra.mxu0 %v1430
      %v1636 = vpop.f32.mrf.mxu0
      %v1637 = vadd.f32 0.0, %v1636
      %v1638 = vpop.f32.mrf.mxu0
      %v1639 = vpop.f32.mrf.mxu0
      %v1640 = vadd.f32 0.0, %v1639
      %v1641 = vpop.f32.mrf.mxu0
      %1642 = vmatprep.mubr.bf16.mxu0 %v1433
      %1643 = vmatmul.mubr.bf16.gmra.mxu0 %v1432
      %v1644 = vpop.f32.mrf.mxu0
      %v1645 = vadd.f32 0.0, %v1644
      %v1646 = vpop.f32.mrf.mxu0
      %v1647 = vpop.f32.mrf.mxu0
      %v1648 = vadd.f32 0.0, %v1647
      %v1649 = vpop.f32.mrf.mxu0
      %1650 = vmatprep.mubr.bf16.mxu0 %v1435
      %1651 = vmatmul.mubr.bf16.gmra.mxu0 %v1434
      %v1652 = vpop.f32.mrf.mxu0
      %v1653 = vadd.f32 0.0, %v1652
      %v1654 = vpop.f32.mrf.mxu0
      %v1655 = vpop.f32.mrf.mxu0
      %v1656 = vadd.f32 0.0, %v1655
      %v1657 = vpop.f32.mrf.mxu0
      %1658 = vmatprep.mubr.bf16.mxu0 %v1437
      %1659 = vmatmul.mubr.bf16.gmra.mxu0 %v1436
      %v1660 = vpop.f32.mrf.mxu0
      %v1661 = vadd.f32 0.0, %v1660
      %v1662 = vpop.f32.mrf.mxu0
      %v1663 = vpop.f32.mrf.mxu0
      %v1664 = vadd.f32 0.0, %v1663
      %v1665 = vpop.f32.mrf.mxu0
      %1666 = vmatprep.mubr.bf16.mxu0 %v1439
      %1667 = vmatmul.mubr.bf16.gmra.mxu0 %v1438
      %v1668 = vpop.f32.mrf.mxu0
      %v1669 = vadd.f32 0.0, %v1668
      %v1670 = vpop.f32.mrf.mxu0
      %v1671 = vpop.f32.mrf.mxu0
      %v1672 = vadd.f32 0.0, %v1671
      %v1673 = vpop.f32.mrf.mxu0
      %1674 = vmatprep.mubr.bf16.mxu0 %v1441
      %1675 = vmatmul.mubr.bf16.gmra.mxu0 %v1440
      %v1676 = vpop.f32.mrf.mxu0
      %v1677 = vadd.f32 0.0, %v1676
      %v1678 = vpop.f32.mrf.mxu0
      %v1679 = vpop.f32.mrf.mxu0
      %v1680 = vadd.f32 0.0, %v1679
      %v1681 = vpop.f32.mrf.mxu0
      %1682 = vmatprep.mubr.bf16.mxu0 %v1443
      %1683 = vmatmul.mubr.bf16.gmra.mxu0 %v1442
      %v1684 = vpop.f32.mrf.mxu0
      %v1685 = vadd.f32 0.0, %v1684
      %v1686 = vpop.f32.mrf.mxu0
      %v1687 = vpop.f32.mrf.mxu0
      %v1688 = vadd.f32 0.0, %v1687
      %v1689 = vpop.f32.mrf.mxu0
      %1690 = vmatprep.mubr.bf16.mxu0 %v1445
      %1691 = vmatmul.mubr.bf16.gmra.mxu0 %v1444
      %v1692 = vpop.f32.mrf.mxu0
      %v1693 = vadd.f32 0.0, %v1692
      %v1694 = vpop.f32.mrf.mxu0
      %v1695 = vpop.f32.mrf.mxu0
      %v1696 = vadd.f32 0.0, %v1695
      %v1697 = vpop.f32.mrf.mxu0
      %1698 = vmatprep.mubr.bf16.mxu0 %v1447
      %1699 = vmatmul.mubr.bf16.gmra.mxu0 %v1446
      %v1700 = vpop.f32.mrf.mxu0
      %v1701 = vadd.f32 0.0, %v1700
      %v1702 = vpop.f32.mrf.mxu0
      %v1703 = vpop.f32.mrf.mxu0
      %v1704 = vadd.f32 0.0, %v1703
      %v1705 = vpop.f32.mrf.mxu0
      %1706 = vmatprep.mubr.bf16.mxu0 %v1449
      %1707 = vmatmul.mubr.bf16.gmra.mxu0 %v1448
      %v1708 = vpop.f32.mrf.mxu0
      %v1709 = vadd.f32 0.0, %v1708
      %v1710 = vpop.f32.mrf.mxu0
      %v1711 = vpop.f32.mrf.mxu0
      %v1712 = vadd.f32 0.0, %v1711
      %v1713 = vpop.f32.mrf.mxu0
      %1714 = vmatprep.mubr.bf16.mxu0 %v1451
      %1715 = vmatmul.mubr.bf16.gmra.mxu0 %v1450
      %v1716 = vpop.f32.mrf.mxu0
      %v1717 = vadd.f32 0.0, %v1716
      %v1718 = vpop.f32.mrf.mxu0
      %v1719 = vpop.f32.mrf.mxu0
      %v1720 = vadd.f32 0.0, %v1719
      %v1721 = vpop.f32.mrf.mxu0
      %1722 = vmatprep.mubr.bf16.mxu0 %v1453
      %1723 = vmatmul.mubr.bf16.gmra.mxu0 %v1452
      %v1724 = vpop.f32.mrf.mxu0
      %v1725 = vadd.f32 0.0, %v1724
      %v1726 = vpop.f32.mrf.mxu0
      %v1727 = vpop.f32.mrf.mxu0
      %v1728 = vadd.f32 0.0, %v1727
      %v1729 = vpop.f32.mrf.mxu0
      %1730 = vmatprep.mubr.bf16.mxu0 %v1455
      %1731 = vmatmul.mubr.bf16.gmra.mxu0 %v1454
      %v1732 = vpop.f32.mrf.mxu0
      %v1733 = vadd.f32 0.0, %v1732
      %v1734 = vpop.f32.mrf.mxu0
      %v1735 = vpop.f32.mrf.mxu0
      %v1736 = vadd.f32 0.0, %v1735
      %v1737 = vpop.f32.mrf.mxu0
      %1738 = vmatprep.mubr.bf16.mxu0 %v1457
      %1739 = vmatmul.mubr.bf16.gmra.mxu0 %v1456
      %v1740 = vpop.f32.mrf.mxu0
      %v1741 = vadd.f32 0.0, %v1740
      %v1742 = vpop.f32.mrf.mxu0
      %v1743 = vpop.f32.mrf.mxu0
      %v1744 = vadd.f32 0.0, %v1743
      %v1745 = vpop.f32.mrf.mxu0
      %1746 = vdwg.mxu0
      %v1747 = vadd.f32 %v1135, %v1621
      %v1748 = vadd.f32 %v1138, %v1624
      %v1749 = vadd.f32 %v1143, %v1629
      %v1750 = vadd.f32 %v1146, %v1632
      %v1751 = vadd.f32 %v1151, %v1637
      %v1752 = vadd.f32 %v1154, %v1640
      %v1753 = vadd.f32 %v1159, %v1645
      %v1754 = vadd.f32 %v1162, %v1648
      %v1755 = vadd.f32 %v1167, %v1653
      %v1756 = vadd.f32 %v1170, %v1656
      %v1757 = vadd.f32 %v1175, %v1661
      %v1758 = vadd.f32 %v1178, %v1664
      %v1759 = vadd.f32 %v1183, %v1669
      %v1760 = vadd.f32 %v1186, %v1672
      %v1761 = vadd.f32 %v1191, %v1677
      %v1762 = vadd.f32 %v1194, %v1680
      %v1763 = vadd.f32 %v1199, %v1685
      %v1764 = vadd.f32 %v1202, %v1688
      %v1765 = vadd.f32 %v1207, %v1693
      %v1766 = vadd.f32 %v1210, %v1696
      %v1767 = vadd.f32 %v1215, %v1701
      %v1768 = vadd.f32 %v1218, %v1704
      %v1769 = vadd.f32 %v1223, %v1709
      %v1770 = vadd.f32 %v1226, %v1712
      %v1771 = vadd.f32 %v1231, %v1717
      %v1772 = vadd.f32 %v1234, %v1720
      %v1773 = vadd.f32 %v1239, %v1725
      %v1774 = vadd.f32 %v1242, %v1728
      %v1775 = vadd.f32 %v1247, %v1733
      %v1776 = vadd.f32 %v1250, %v1736
      %v1777 = vadd.f32 %v1255, %v1741
      %v1778 = vadd.f32 %v1258, %v1744
      %v1779 = vld [vmem:[%s2] sm:$0x1]
      %v1781 = vlaneseq
      %v1782 = vshrl.u32 %v1781, 7
      %v1783 = vsub.s32 0, %v1782
      %v1784 = vrot.slane %v1779, %v1783
      %v1786 = vmul.f32 %v1747, %v1784
      %v1787 = vmul.f32 %v1748, %v1784
      %v1788 = vmul.f32 %v1749, %v1784
      %v1789 = vmul.f32 %v1750, %v1784
      %v1790 = vmul.f32 %v1751, %v1784
      %v1791 = vmul.f32 %v1752, %v1784
      %v1792 = vmul.f32 %v1753, %v1784
      %v1793 = vmul.f32 %v1754, %v1784
      %v1794 = vmul.f32 %v1755, %v1784
      %v1795 = vmul.f32 %v1756, %v1784
      %v1796 = vmul.f32 %v1757, %v1784
      %v1797 = vmul.f32 %v1758, %v1784
      %v1798 = vmul.f32 %v1759, %v1784
      %v1799 = vmul.f32 %v1760, %v1784
      %v1800 = vmul.f32 %v1761, %v1784
      %v1801 = vmul.f32 %v1762, %v1784
      %v1802 = vmul.f32 %v1763, %v1784
      %v1803 = vmul.f32 %v1764, %v1784
      %v1804 = vmul.f32 %v1765, %v1784
      %v1805 = vmul.f32 %v1766, %v1784
      %v1806 = vmul.f32 %v1767, %v1784
      %v1807 = vmul.f32 %v1768, %v1784
      %v1808 = vmul.f32 %v1769, %v1784
      %v1809 = vmul.f32 %v1770, %v1784
      %v1810 = vmul.f32 %v1771, %v1784
      %v1811 = vmul.f32 %v1772, %v1784
      %v1812 = vmul.f32 %v1773, %v1784
      %v1813 = vmul.f32 %v1774, %v1784
      %v1814 = vmul.f32 %v1775, %v1784
      %v1815 = vmul.f32 %v1776, %v1784
      %v1816 = vmul.f32 %v1777, %v1784
      %v1817 = vmul.f32 %v1778, %v1784
      %v1818 = vld [vmem:[%s3] sm:$0x1]
      %v1820 = vlaneseq
      %v1821 = vshrl.u32 %v1820, 7
      %v1822 = vsub.s32 0, %v1821
      %v1823 = vrot.slane %v1818, %v1822
      %v1825 = vadd.f32 %v1786, %v1823
      %v1826 = vadd.f32 %v1787, %v1823
      %v1827 = vadd.f32 %v1788, %v1823
      %v1828 = vadd.f32 %v1789, %v1823
      %v1829 = vadd.f32 %v1790, %v1823
      %v1830 = vadd.f32 %v1791, %v1823
      %v1831 = vadd.f32 %v1792, %v1823
      %v1832 = vadd.f32 %v1793, %v1823
      %v1833 = vadd.f32 %v1794, %v1823
      %v1834 = vadd.f32 %v1795, %v1823
      %v1835 = vadd.f32 %v1796, %v1823
      %v1836 = vadd.f32 %v1797, %v1823
      %v1837 = vadd.f32 %v1798, %v1823
      %v1838 = vadd.f32 %v1799, %v1823
      %v1839 = vadd.f32 %v1800, %v1823
      %v1840 = vadd.f32 %v1801, %v1823
      %v1841 = vadd.f32 %v1802, %v1823
      %v1842 = vadd.f32 %v1803, %v1823
      %v1843 = vadd.f32 %v1804, %v1823
      %v1844 = vadd.f32 %v1805, %v1823
      %v1845 = vadd.f32 %v1806, %v1823
      %v1846 = vadd.f32 %v1807, %v1823
      %v1847 = vadd.f32 %v1808, %v1823
      %v1848 = vadd.f32 %v1809, %v1823
      %v1849 = vadd.f32 %v1810, %v1823
      %v1850 = vadd.f32 %v1811, %v1823
      %v1851 = vadd.f32 %v1812, %v1823
      %v1852 = vadd.f32 %v1813, %v1823
      %v1853 = vadd.f32 %v1814, %v1823
      %v1854 = vadd.f32 %v1815, %v1823
      %v1855 = vadd.f32 %v1816, %v1823
      %v1856 = vadd.f32 %v1817, %v1823
      %v1857 = vld [vmem:[%s276] sm:$0xf]
      %v1858 = vld [vmem:[%s276 + $0x4] sm:$0xf]
      %v1859 = vld [vmem:[%s276 + $0x8] sm:$0xf]
      %v1860 = vld [vmem:[%s276 + $0xc] sm:$0xf]
      %v1861 = vld [vmem:[%s276 + $0x10] sm:$0xf]
      %v1862 = vld [vmem:[%s276 + $0x14] sm:$0xf]
      %v1863 = vld [vmem:[%s276 + $0x18] sm:$0xf]
      %v1864 = vld [vmem:[%s276 + $0x1c] sm:$0xf]
      %v1865 = vld [vmem:[%s276 + $0x20] sm:$0xf]
      %v1866 = vld [vmem:[%s276 + $0x24] sm:$0xf]
      %v1867 = vld [vmem:[%s276 + $0x28] sm:$0xf]
      %v1868 = vld [vmem:[%s276 + $0x2c] sm:$0xf]
      %v1869 = vld [vmem:[%s276 + $0x30] sm:$0xf]
      %v1870 = vld [vmem:[%s276 + $0x34] sm:$0xf]
      %v1871 = vld [vmem:[%s276 + $0x38] sm:$0xf]
      %v1872 = vld [vmem:[%s276 + $0x3c] sm:$0xf]
      %v1873 = vld [vmem:[%s276 + $0x40] sm:$0xf]
      %v1874 = vld [vmem:[%s276 + $0x44] sm:$0xf]
      %v1875 = vld [vmem:[%s276 + $0x48] sm:$0xf]
      %v1876 = vld [vmem:[%s276 + $0x4c] sm:$0xf]
      %v1877 = vld [vmem:[%s276 + $0x50] sm:$0xf]
      %v1878 = vld [vmem:[%s276 + $0x54] sm:$0xf]
      %v1879 = vld [vmem:[%s276 + $0x58] sm:$0xf]
      %v1880 = vld [vmem:[%s276 + $0x5c] sm:$0xf]
      %v1881 = vld [vmem:[%s276 + $0x60] sm:$0xf]
      %v1882 = vld [vmem:[%s276 + $0x64] sm:$0xf]
      %v1883 = vld [vmem:[%s276 + $0x68] sm:$0xf]
      %v1884 = vld [vmem:[%s276 + $0x6c] sm:$0xf]
      %v1885 = vld [vmem:[%s276 + $0x70] sm:$0xf]
      %v1886 = vld [vmem:[%s276 + $0x74] sm:$0xf]
      %v1887 = vld [vmem:[%s276 + $0x78] sm:$0xf]
      %v1888 = vld [vmem:[%s276 + $0x7c] sm:$0xf]
      %v1889 = vunpack.c.l.bf16 %v1857
      %v1890 = vunpack.c.l.bf16 %v1858
      %v1891 = vunpack.c.l.bf16 %v1859
      %v1892 = vunpack.c.l.bf16 %v1860
      %v1893 = vunpack.c.l.bf16 %v1861
      %v1894 = vunpack.c.l.bf16 %v1862
      %v1895 = vunpack.c.l.bf16 %v1863
      %v1896 = vunpack.c.l.bf16 %v1864
      %v1897 = vunpack.c.l.bf16 %v1865
      %v1898 = vunpack.c.l.bf16 %v1866
      %v1899 = vunpack.c.l.bf16 %v1867
      %v1900 = vunpack.c.l.bf16 %v1868
      %v1901 = vunpack.c.l.bf16 %v1869
      %v1902 = vunpack.c.l.bf16 %v1870
      %v1903 = vunpack.c.l.bf16 %v1871
      %v1904 = vunpack.c.l.bf16 %v1872
      %v1905 = vunpack.c.l.bf16 %v1873
      %v1906 = vunpack.c.l.bf16 %v1874
      %v1907 = vunpack.c.l.bf16 %v1875
      %v1908 = vunpack.c.l.bf16 %v1876
      %v1909 = vunpack.c.l.bf16 %v1877
      %v1910 = vunpack.c.l.bf16 %v1878
      %v1911 = vunpack.c.l.bf16 %v1879
      %v1912 = vunpack.c.l.bf16 %v1880
      %v1913 = vunpack.c.l.bf16 %v1881
      %v1914 = vunpack.c.l.bf16 %v1882
      %v1915 = vunpack.c.l.bf16 %v1883
      %v1916 = vunpack.c.l.bf16 %v1884
      %v1917 = vunpack.c.l.bf16 %v1885
      %v1918 = vunpack.c.l.bf16 %v1886
      %v1919 = vunpack.c.l.bf16 %v1887
      %v1920 = vunpack.c.l.bf16 %v1888
      %v1921 = vadd.f32 %v1825, %v1889
      %v1922 = vadd.f32 %v1826, %v1890
      %v1923 = vadd.f32 %v1827, %v1891
      %v1924 = vadd.f32 %v1828, %v1892
      %v1925 = vadd.f32 %v1829, %v1893
      %v1926 = vadd.f32 %v1830, %v1894
      %v1927 = vadd.f32 %v1831, %v1895
      %v1928 = vadd.f32 %v1832, %v1896
      %v1929 = vadd.f32 %v1833, %v1897
      %v1930 = vadd.f32 %v1834, %v1898
      %v1931 = vadd.f32 %v1835, %v1899
      %v1932 = vadd.f32 %v1836, %v1900
      %v1933 = vadd.f32 %v1837, %v1901
      %v1934 = vadd.f32 %v1838, %v1902
      %v1935 = vadd.f32 %v1839, %v1903
      %v1936 = vadd.f32 %v1840, %v1904
      %v1937 = vadd.f32 %v1841, %v1905
      %v1938 = vadd.f32 %v1842, %v1906
      %v1939 = vadd.f32 %v1843, %v1907
      %v1940 = vadd.f32 %v1844, %v1908
      %v1941 = vadd.f32 %v1845, %v1909
      %v1942 = vadd.f32 %v1846, %v1910
      %v1943 = vadd.f32 %v1847, %v1911
      %v1944 = vadd.f32 %v1848, %v1912
      %v1945 = vadd.f32 %v1849, %v1913
      %v1946 = vadd.f32 %v1850, %v1914
      %v1947 = vadd.f32 %v1851, %v1915
      %v1948 = vadd.f32 %v1852, %v1916
      %v1949 = vadd.f32 %v1853, %v1917
      %v1950 = vadd.f32 %v1854, %v1918
      %v1951 = vadd.f32 %v1855, %v1919
      %v1952 = vadd.f32 %v1856, %v1920
      %v1953 = vmax.f32 %v1921, 0.0
      %v1954 = vmax.f32 %v1922, 0.0
      %v1955 = vmax.f32 %v1923, 0.0
      %v1956 = vmax.f32 %v1924, 0.0
      %v1957 = vmax.f32 %v1925, 0.0
      %v1958 = vmax.f32 %v1926, 0.0
      %v1959 = vmax.f32 %v1927, 0.0
      %v1960 = vmax.f32 %v1928, 0.0
      %v1961 = vmax.f32 %v1929, 0.0
      %v1962 = vmax.f32 %v1930, 0.0
      %v1963 = vmax.f32 %v1931, 0.0
      %v1964 = vmax.f32 %v1932, 0.0
      %v1965 = vmax.f32 %v1933, 0.0
      %v1966 = vmax.f32 %v1934, 0.0
      %v1967 = vmax.f32 %v1935, 0.0
      %v1968 = vmax.f32 %v1936, 0.0
      %v1969 = vmax.f32 %v1937, 0.0
      %v1970 = vmax.f32 %v1938, 0.0
      %v1971 = vmax.f32 %v1939, 0.0
      %v1972 = vmax.f32 %v1940, 0.0
      %v1973 = vmax.f32 %v1941, 0.0
      %v1974 = vmax.f32 %v1942, 0.0
      %v1975 = vmax.f32 %v1943, 0.0
      %v1976 = vmax.f32 %v1944, 0.0
      %v1977 = vmax.f32 %v1945, 0.0
      %v1978 = vmax.f32 %v1946, 0.0
      %v1979 = vmax.f32 %v1947, 0.0
      %v1980 = vmax.f32 %v1948, 0.0
      %v1981 = vmax.f32 %v1949, 0.0
      %v1982 = vmax.f32 %v1950, 0.0
      %v1983 = vmax.f32 %v1951, 0.0
      %v1984 = vmax.f32 %v1952, 0.0
      %v1985 = vpack.c.bf16 %v1954, %v1953
      %v1986 = vpack.c.bf16 %v1956, %v1955
      %v1987 = vpack.c.bf16 %v1958, %v1957
      %v1988 = vpack.c.bf16 %v1960, %v1959
      %v1989 = vpack.c.bf16 %v1962, %v1961
      %v1990 = vpack.c.bf16 %v1964, %v1963
      %v1991 = vpack.c.bf16 %v1966, %v1965
      %v1992 = vpack.c.bf16 %v1968, %v1967
      %v1993 = vpack.c.bf16 %v1970, %v1969
      %v1994 = vpack.c.bf16 %v1972, %v1971
      %v1995 = vpack.c.bf16 %v1974, %v1973
      %v1996 = vpack.c.bf16 %v1976, %v1975
      %v1997 = vpack.c.bf16 %v1978, %v1977
      %v1998 = vpack.c.bf16 %v1980, %v1979
      %v1999 = vpack.c.bf16 %v1982, %v1981
      %v2000 = vpack.c.bf16 %v1984, %v1983
      %v2017 = vunpack.c.l.b16 %v1985
      %v2018 = vunpack.c.h.b16 %v1985
      %v2019 = vunpack.c.l.b16 %v1986
      %v2020 = vunpack.c.h.b16 %v1986
      %v2021 = vunpack.c.l.b16 %v1987
      %v2022 = vunpack.c.h.b16 %v1987
      %v2023 = vunpack.c.l.b16 %v1988
      %v2024 = vunpack.c.h.b16 %v1988
      %v2025 = vunpack.c.l.b16 %v1989
      %v2026 = vunpack.c.h.b16 %v1989
      %v2027 = vunpack.c.l.b16 %v1990
      %v2028 = vunpack.c.h.b16 %v1990
      %v2029 = vunpack.c.l.b16 %v1991
      %v2030 = vunpack.c.h.b16 %v1991
      %v2031 = vunpack.c.l.b16 %v1992
      %v2032 = vunpack.c.h.b16 %v1992
      %v2033 = vunpack.c.l.b16 %v1993
      %v2034 = vunpack.c.h.b16 %v1993
      %v2035 = vunpack.c.l.b16 %v1994
      %v2036 = vunpack.c.h.b16 %v1994
      %v2037 = vunpack.c.l.b16 %v1995
      %v2038 = vunpack.c.h.b16 %v1995
      %v2039 = vunpack.c.l.b16 %v1996
      %v2040 = vunpack.c.h.b16 %v1996
      %v2041 = vunpack.c.l.b16 %v1997
      %v2042 = vunpack.c.h.b16 %v1997
      %v2043 = vunpack.c.l.b16 %v1998
      %v2044 = vunpack.c.h.b16 %v1998
      %v2045 = vunpack.c.l.b16 %v1999
      %v2046 = vunpack.c.h.b16 %v1999
      %v2047 = vunpack.c.l.b16 %v2000
      %v2048 = vunpack.c.h.b16 %v2000
      %v2049 = vpack.c.b16 %v2017, %v2017
      %v2050 = vpack.c.b16 %v2018, %v2018
      %v2051 = vpack.c.b16 %v2019, %v2019
      %v2052 = vpack.c.b16 %v2020, %v2020
      %v2053 = vpack.c.b16 %v2021, %v2021
      %v2054 = vpack.c.b16 %v2022, %v2022
      %v2055 = vpack.c.b16 %v2023, %v2023
      %v2056 = vpack.c.b16 %v2024, %v2024
      %v2057 = vpack.c.b16 %v2025, %v2025
      %v2058 = vpack.c.b16 %v2026, %v2026
      %v2059 = vpack.c.b16 %v2027, %v2027
      %v2060 = vpack.c.b16 %v2028, %v2028
      %v2061 = vpack.c.b16 %v2029, %v2029
      %v2062 = vpack.c.b16 %v2030, %v2030
      %v2063 = vpack.c.b16 %v2031, %v2031
      %v2064 = vpack.c.b16 %v2032, %v2032
      %v2065 = vpack.c.b16 %v2033, %v2033
      %v2066 = vpack.c.b16 %v2034, %v2034
      %v2067 = vpack.c.b16 %v2035, %v2035
      %v2068 = vpack.c.b16 %v2036, %v2036
      %v2069 = vpack.c.b16 %v2037, %v2037
      %v2070 = vpack.c.b16 %v2038, %v2038
      %v2071 = vpack.c.b16 %v2039, %v2039
      %v2072 = vpack.c.b16 %v2040, %v2040
      %v2073 = vpack.c.b16 %v2041, %v2041
      %v2074 = vpack.c.b16 %v2042, %v2042
      %v2075 = vpack.c.b16 %v2043, %v2043
      %v2076 = vpack.c.b16 %v2044, %v2044
      %v2077 = vpack.c.b16 %v2045, %v2045
      %v2078 = vpack.c.b16 %v2046, %v2046
      %v2079 = vpack.c.b16 %v2047, %v2047
      %v2080 = vpack.c.b16 %v2048, %v2048
      %2113 = vst [vmem:[%s287] sm:$0xf] %v2049
      %2114 = vst [vmem:[%s287 + $0x4] sm:$0xf] %v2050
      %2115 = vst [vmem:[%s287 + $0x8] sm:$0xf] %v2051
      %2116 = vst [vmem:[%s287 + $0xc] sm:$0xf] %v2052
      %2117 = vst [vmem:[%s287 + $0x10] sm:$0xf] %v2053
      %2118 = vst [vmem:[%s287 + $0x14] sm:$0xf] %v2054
      %2119 = vst [vmem:[%s287 + $0x18] sm:$0xf] %v2055
      %2120 = vst [vmem:[%s287 + $0x1c] sm:$0xf] %v2056
      %2121 = vst [vmem:[%s287 + $0x20] sm:$0xf] %v2057
      %2122 = vst [vmem:[%s287 + $0x24] sm:$0xf] %v2058
      %2123 = vst [vmem:[%s287 + $0x28] sm:$0xf] %v2059
      %2124 = vst [vmem:[%s287 + $0x2c] sm:$0xf] %v2060
      %2125 = vst [vmem:[%s287 + $0x30] sm:$0xf] %v2061
      %2126 = vst [vmem:[%s287 + $0x34] sm:$0xf] %v2062
      %2127 = vst [vmem:[%s287 + $0x38] sm:$0xf] %v2063
      %2128 = vst [vmem:[%s287 + $0x3c] sm:$0xf] %v2064
      %2129 = vst [vmem:[%s287 + $0x40] sm:$0xf] %v2065
      %2130 = vst [vmem:[%s287 + $0x44] sm:$0xf] %v2066
      %2131 = vst [vmem:[%s287 + $0x48] sm:$0xf] %v2067
      %2132 = vst [vmem:[%s287 + $0x4c] sm:$0xf] %v2068
      %2133 = vst [vmem:[%s287 + $0x50] sm:$0xf] %v2069
      %2134 = vst [vmem:[%s287 + $0x54] sm:$0xf] %v2070
      %2135 = vst [vmem:[%s287 + $0x58] sm:$0xf] %v2071
      %2136 = vst [vmem:[%s287 + $0x5c] sm:$0xf] %v2072
      %2137 = vst [vmem:[%s287 + $0x60] sm:$0xf] %v2073
      %2138 = vst [vmem:[%s287 + $0x64] sm:$0xf] %v2074
      %2139 = vst [vmem:[%s287 + $0x68] sm:$0xf] %v2075
      %2140 = vst [vmem:[%s287 + $0x6c] sm:$0xf] %v2076
      %2141 = vst [vmem:[%s287 + $0x70] sm:$0xf] %v2077
      %2142 = vst [vmem:[%s287 + $0x74] sm:$0xf] %v2078
      %2143 = vst [vmem:[%s287 + $0x78] sm:$0xf] %v2079
      %2144 = vst [vmem:[%s287 + $0x7c] sm:$0xf] %v2080
      %s2145 = smul.u32 16, %s21
      %p2146 = scmp.lt.s32.totalorder %s20, 1
      %s2147 = scalar_select %p2146, %s20, 1
      %p2148 = scmp.lt.s32.totalorder %s2145, 15
      %s2149 = scalar_select %p2148, %s2145, 15
      %s2150 = smul.addr %s2149, 2
      %s2151 = smul.addr %s2147, 32
      %s2152 = sadd.s32 %s2150, %s2151
      %s2153 = smul.addr %s2152, 4
      %s2154 = scalar_lea.vmem %s5, %s2153
      // Predicated region
      $region41: #{_lambda_.16} parent=39 // pred_check
        %p2155 = pneg %p165
      $region42: #{_lambda_.16} parent=39 // pred_check_branch
        %2157 = sbr.rel (%p2155) target = $region44
      $region43: #{_lambda_.16} parent=39 // pred_region
        %s2158 = smul.u32 16, %s21
      $region44: #{_lambda_.16} parent=39 // pred_fallthru
        _
    $region40: #{_lambda_.16} parent=5 // pred_fallthru
      _
    %p2159 = scmp.le.s32.totalorder 2, %s11
    // Predicated region
    $region45: #{_lambda_.16} parent=5 // pred_check
      %p2160 = pneg %p2159
    $region46: #{_lambda_.16} parent=5 // pred_check_branch
      %2162 = sbr.rel (%p2160) target = $region48
    $region47: #{_lambda_.16} parent=5 // pred_region
      %s2163 = ssub.s32 %s11, 2
      // Predicated region
      $region49: #{_lambda_.16} parent=47 // pred_check
        %p2164 = pneg %p171
      $region50: #{_lambda_.16} parent=47 // pred_check_branch
        %2166 = sbr.rel (%p2164) target = $region52
      $region51: #{_lambda_.16} parent=47 // pred_region
        %s2167 = smul.u32 16, %s23
        %p2168 = scmp.lt.s32.totalorder %s22, 1
        %s2169 = scalar_select %p2168, %s22, 1
        %p2170 = scmp.lt.s32.totalorder %s2167, 15
        %s2171 = scalar_select %p2170, %s2167, 15
        %s2172 = smul.addr %s2171, 2
        %s2173 = smul.addr %s2169, 32
        %s2174 = sadd.s32 %s2172, %s2173
        %s2175 = smul.addr %s2174, 4
        %s2176 = scalar_lea.vmem %s5, %s2175
      $region52: #{_lambda_.16} parent=47 // pred_fallthru
        _
    $region48: #{_lambda_.16} parent=5 // pred_fallthru
      _
  $region6: #{_lambda_.16} parent=0 // loop_footer
    %s15 = sadd.s32 1, %s11
  $region7: #{_lambda_.16} parent=0 // loop_footer_branch
    %10 = sbr.rel target = $region3
  $region8: #{_lambda_.16} parent=0 // loop_exit
    _

// kernel: _lambda_.19
$region0: #{_lambda_.19}
  #allocation0 [shape = 'u32[]', space=smem, size = 0x4, offset = 0x4, fixed_abs, tag = 'smem constant byte address 0x4 - core index']
  #allocation1 [shape = 'u32[144,128]{1,0:T(1,128)}', space=vmem, size = 0x12000, scoped, tag = 'internal scratch']
  %s0 = inlined_call_operand.vmem [shape: bf16[512,128], index: 0, kind: input, shape index: {}, may-alias: {0,6}]
  %s1 = inlined_call_operand.vmem [shape: bf16[512,128], index: 1, kind: input, shape index: {}]
  %s2 = inlined_call_operand.vmem [shape: bf16[128,128], index: 2, kind: input, shape index: {}]
  %s3 = inlined_call_operand.vmem [shape: bf16[128,128], index: 3, kind: input, shape index: {}]
  %s4 = inlined_call_operand.vmem [shape: f32[1,128], index: 4, kind: input, shape index: {}]
  %s5 = inlined_call_operand.vmem [shape: f32[1,128], index: 5, kind: input, shape index: {}]
  %s6 = inlined_call_operand.vmem [shape: bf16[512,128], index: 6, kind: input, shape index: {}, may-alias: {0,6}]
  %s7 = inlined_call_operand.vmem [shape: bf16[512,128], index: 7, kind: output, shape index: {}]
  %s8 = sld [smem:[#allocation0]]
  $region38: #{_lambda_.19} parent=0
    _
  %s10 = ssub.s32 1, %s8
  %s11 = scalar_select 0, %s10, %s8
  // Predicated region
  $region2: #{_lambda_.19} parent=0 // pred_check
    _
  $region3: #{_lambda_.19} parent=0 // pred_check_branch
    %13 = sbr.rel (0) target = $region5
  $region4: #{_lambda_.19} parent=0 // pred_region
    _
  $region5: #{_lambda_.19} parent=0 // pred_fallthru
    _
  // Predicated region
  $region6: #{_lambda_.19} parent=0 // pred_check
    _
  $region7: #{_lambda_.19} parent=0 // pred_check_branch
    %15 = sbr.rel (0) target = $region9
  $region8: #{_lambda_.19} parent=0 // pred_region
    _
  $region9: #{_lambda_.19} parent=0 // pred_fallthru
    _
  // Predicated region
  $region10: #{_lambda_.19} parent=0 // pred_check
    _
  $region11: #{_lambda_.19} parent=0 // pred_check_branch
    %17 = sbr.rel (0) target = $region13
  $region12: #{_lambda_.19} parent=0 // pred_region
    _
  $region13: #{_lambda_.19} parent=0 // pred_fallthru
    _
  // Predicated region
  $region14: #{_lambda_.19} parent=0 // pred_check
    _
  $region15: #{_lambda_.19} parent=0 // pred_check_branch
    %19 = sbr.rel (0) target = $region17
  $region16: #{_lambda_.19} parent=0 // pred_region
    _
  $region17: #{_lambda_.19} parent=0 // pred_fallthru
    _
  // Predicated region
  $region18: #{_lambda_.19} parent=0 // pred_check
    _
  $region19: #{_lambda_.19} parent=0 // pred_check_branch
    %21 = sbr.rel (0) target = $region21
  $region20: #{_lambda_.19} parent=0 // pred_region
    _
  $region21: #{_lambda_.19} parent=0 // pred_fallthru
    _
  // Predicated region
  $region22: #{_lambda_.19} parent=0 // pred_check
    _
  $region23: #{_lambda_.19} parent=0 // pred_check_branch
    %23 = sbr.rel (0) target = $region25
  $region24: #{_lambda_.19} parent=0 // pred_region
    _
  $region25: #{_lambda_.19} parent=0 // pred_fallthru
    _
  // Predicated region
  $region26: #{_lambda_.19} parent=0 // pred_check
    _
  $region27: #{_lambda_.19} parent=0 // pred_check_branch
    %25 = sbr.rel (0) target = $region29
  $region28: #{_lambda_.19} parent=0 // pred_region
    _
  $region29: #{_lambda_.19} parent=0 // pred_fallthru
    _
  %v27 = vld [vmem:[%s0] sm:$0xf]
  %v28 = vld [vmem:[%s0 + $0x4] sm:$0xf]
  %v29 = vld [vmem:[%s0 + $0x8] sm:$0xf]
  %v30 = vld [vmem:[%s0 + $0xc] sm:$0xf]
  %v31 = vld [vmem:[%s0 + $0x10] sm:$0xf]
  %v32 = vld [vmem:[%s0 + $0x14] sm:$0xf]
  %v33 = vld [vmem:[%s0 + $0x18] sm:$0xf]
  %v34 = vld [vmem:[%s0 + $0x1c] sm:$0xf]
  %v35 = vld [vmem:[%s0 + $0x20] sm:$0xf]
  %v36 = vld [vmem:[%s0 + $0x24] sm:$0xf]
  %v37 = vld [vmem:[%s0 + $0x28] sm:$0xf]
  %v38 = vld [vmem:[%s0 + $0x2c] sm:$0xf]
  %v39 = vld [vmem:[%s0 + $0x30] sm:$0xf]
  %v40 = vld [vmem:[%s0 + $0x34] sm:$0xf]
  %v41 = vld [vmem:[%s0 + $0x38] sm:$0xf]
  %v42 = vld [vmem:[%s0 + $0x3c] sm:$0xf]
  %v43 = vld [vmem:[%s0 + $0x40] sm:$0xf]
  %v44 = vld [vmem:[%s0 + $0x44] sm:$0xf]
  %v45 = vld [vmem:[%s0 + $0x48] sm:$0xf]
  %v46 = vld [vmem:[%s0 + $0x4c] sm:$0xf]
  %v47 = vld [vmem:[%s0 + $0x50] sm:$0xf]
  %v48 = vld [vmem:[%s0 + $0x54] sm:$0xf]
  %v49 = vld [vmem:[%s0 + $0x58] sm:$0xf]
  %v50 = vld [vmem:[%s0 + $0x5c] sm:$0xf]
  %v51 = vld [vmem:[%s0 + $0x60] sm:$0xf]
  %v52 = vld [vmem:[%s0 + $0x64] sm:$0xf]
  %v53 = vld [vmem:[%s0 + $0x68] sm:$0xf]
  %v54 = vld [vmem:[%s0 + $0x6c] sm:$0xf]
  %v55 = vld [vmem:[%s0 + $0x70] sm:$0xf]
  %v56 = vld [vmem:[%s0 + $0x74] sm:$0xf]
  %v57 = vld [vmem:[%s0 + $0x78] sm:$0xf]
  %v58 = vld [vmem:[%s0 + $0x7c] sm:$0xf]
  %v59 = vld [vmem:[%s0 + $0x80] sm:$0xf]
  %v60 = vld [vmem:[%s0 + $0x84] sm:$0xf]
  %v61 = vld [vmem:[%s0 + $0x88] sm:$0xf]
  %v62 = vld [vmem:[%s0 + $0x8c] sm:$0xf]
  %v63 = vld [vmem:[%s0 + $0x90] sm:$0xf]
  %v64 = vld [vmem:[%s0 + $0x94] sm:$0xf]
  %v65 = vld [vmem:[%s0 + $0x98] sm:$0xf]
  %v66 = vld [vmem:[%s0 + $0x9c] sm:$0xf]
  %v67 = vld [vmem:[%s0 + $0xa0] sm:$0xf]
  %v68 = vld [vmem:[%s0 + $0xa4] sm:$0xf]
  %v69 = vld [vmem:[%s0 + $0xa8] sm:$0xf]
  %v70 = vld [vmem:[%s0 + $0xac] sm:$0xf]
  %v71 = vld [vmem:[%s0 + $0xb0] sm:$0xf]
  %v72 = vld [vmem:[%s0 + $0xb4] sm:$0xf]
  %v73 = vld [vmem:[%s0 + $0xb8] sm:$0xf]
  %v74 = vld [vmem:[%s0 + $0xbc] sm:$0xf]
  %v75 = vld [vmem:[%s0 + $0xc0] sm:$0xf]
  %v76 = vld [vmem:[%s0 + $0xc4] sm:$0xf]
  %v77 = vld [vmem:[%s0 + $0xc8] sm:$0xf]
  %v78 = vld [vmem:[%s0 + $0xcc] sm:$0xf]
  %v79 = vld [vmem:[%s0 + $0xd0] sm:$0xf]
  %v80 = vld [vmem:[%s0 + $0xd4] sm:$0xf]
  %v81 = vld [vmem:[%s0 + $0xd8] sm:$0xf]
  %v82 = vld [vmem:[%s0 + $0xdc] sm:$0xf]
  %v83 = vld [vmem:[%s0 + $0xe0] sm:$0xf]
  %v84 = vld [vmem:[%s0 + $0xe4] sm:$0xf]
  %v85 = vld [vmem:[%s0 + $0xe8] sm:$0xf]
  %v86 = vld [vmem:[%s0 + $0xec] sm:$0xf]
  %v87 = vld [vmem:[%s0 + $0xf0] sm:$0xf]
  %v88 = vld [vmem:[%s0 + $0xf4] sm:$0xf]
  %v89 = vld [vmem:[%s0 + $0xf8] sm:$0xf]
  %v90 = vld [vmem:[%s0 + $0xfc] sm:$0xf]
  %v91 = vld [vmem:[%s2] sm:$0xf]
  %v92 = vld [vmem:[%s2 + $0x4] sm:$0xf]
  %v93 = vld [vmem:[%s2 + $0x8] sm:$0xf]
  %v94 = vld [vmem:[%s2 + $0xc] sm:$0xf]
  %v95 = vld [vmem:[%s2 + $0x10] sm:$0xf]
  %v96 = vld [vmem:[%s2 + $0x14] sm:$0xf]
  %v97 = vld [vmem:[%s2 + $0x18] sm:$0xf]
  %v98 = vld [vmem:[%s2 + $0x1c] sm:$0xf]
  %v99 = vld [vmem:[%s2 + $0x20] sm:$0xf]
  %v100 = vld [vmem:[%s2 + $0x24] sm:$0xf]
  %v101 = vld [vmem:[%s2 + $0x28] sm:$0xf]
  %v102 = vld [vmem:[%s2 + $0x2c] sm:$0xf]
  %v103 = vld [vmem:[%s2 + $0x30] sm:$0xf]
  %v104 = vld [vmem:[%s2 + $0x34] sm:$0xf]
  %v105 = vld [vmem:[%s2 + $0x38] sm:$0xf]
  %v106 = vld [vmem:[%s2 + $0x3c] sm:$0xf]
  %v107 = vld [vmem:[%s1] sm:$0xf]
  %v108 = vld [vmem:[%s1 + $0x4] sm:$0xf]
  %v109 = vld [vmem:[%s1 + $0x8] sm:$0xf]
  %v110 = vld [vmem:[%s1 + $0xc] sm:$0xf]
  %v111 = vld [vmem:[%s1 + $0x10] sm:$0xf]
  %v112 = vld [vmem:[%s1 + $0x14] sm:$0xf]
  %v113 = vld [vmem:[%s1 + $0x18] sm:$0xf]
  %v114 = vld [vmem:[%s1 + $0x1c] sm:$0xf]
  %v115 = vld [vmem:[%s1 + $0x20] sm:$0xf]
  %v116 = vld [vmem:[%s1 + $0x24] sm:$0xf]
  %v117 = vld [vmem:[%s1 + $0x28] sm:$0xf]
  %v118 = vld [vmem:[%s1 + $0x2c] sm:$0xf]
  %v119 = vld [vmem:[%s1 + $0x30] sm:$0xf]
  %v120 = vld [vmem:[%s1 + $0x34] sm:$0xf]
  %v121 = vld [vmem:[%s1 + $0x38] sm:$0xf]
  %v122 = vld [vmem:[%s1 + $0x3c] sm:$0xf]
  %v123 = vld [vmem:[%s1 + $0x40] sm:$0xf]
  %v124 = vld [vmem:[%s1 + $0x44] sm:$0xf]
  %v125 = vld [vmem:[%s1 + $0x48] sm:$0xf]
  %v126 = vld [vmem:[%s1 + $0x4c] sm:$0xf]
  %v127 = vld [vmem:[%s1 + $0x50] sm:$0xf]
  %v128 = vld [vmem:[%s1 + $0x54] sm:$0xf]
  %v129 = vld [vmem:[%s1 + $0x58] sm:$0xf]
  %v130 = vld [vmem:[%s1 + $0x5c] sm:$0xf]
  %v131 = vld [vmem:[%s1 + $0x60] sm:$0xf]
  %v132 = vld [vmem:[%s1 + $0x64] sm:$0xf]
  %v133 = vld [vmem:[%s1 + $0x68] sm:$0xf]
  %v134 = vld [vmem:[%s1 + $0x6c] sm:$0xf]
  %v135 = vld [vmem:[%s1 + $0x70] sm:$0xf]
  %v136 = vld [vmem:[%s1 + $0x74] sm:$0xf]
  %v137 = vld [vmem:[%s1 + $0x78] sm:$0xf]
  %v138 = vld [vmem:[%s1 + $0x7c] sm:$0xf]
  %v139 = vld [vmem:[%s1 + $0x80] sm:$0xf]
  %v140 = vld [vmem:[%s1 + $0x84] sm:$0xf]
  %v141 = vld [vmem:[%s1 + $0x88] sm:$0xf]
  %v142 = vld [vmem:[%s1 + $0x8c] sm:$0xf]
  %v143 = vld [vmem:[%s1 + $0x90] sm:$0xf]
  %v144 = vld [vmem:[%s1 + $0x94] sm:$0xf]
  %v145 = vld [vmem:[%s1 + $0x98] sm:$0xf]
  %v146 = vld [vmem:[%s1 + $0x9c] sm:$0xf]
  %v147 = vld [vmem:[%s1 + $0xa0] sm:$0xf]
  %v148 = vld [vmem:[%s1 + $0xa4] sm:$0xf]
  %v149 = vld [vmem:[%s1 + $0xa8] sm:$0xf]
  %v150 = vld [vmem:[%s1 + $0xac] sm:$0xf]
  %v151 = vld [vmem:[%s1 + $0xb0] sm:$0xf]
  %v152 = vld [vmem:[%s1 + $0xb4] sm:$0xf]
  %v153 = vld [vmem:[%s1 + $0xb8] sm:$0xf]
  %v154 = vld [vmem:[%s1 + $0xbc] sm:$0xf]
  %v155 = vld [vmem:[%s1 + $0xc0] sm:$0xf]
  %v156 = vld [vmem:[%s1 + $0xc4] sm:$0xf]
  %v157 = vld [vmem:[%s1 + $0xc8] sm:$0xf]
  %v158 = vld [vmem:[%s1 + $0xcc] sm:$0xf]
  %v159 = vld [vmem:[%s1 + $0xd0] sm:$0xf]
  %v160 = vld [vmem:[%s1 + $0xd4] sm:$0xf]
  %v161 = vld [vmem:[%s1 + $0xd8] sm:$0xf]
  %v162 = vld [vmem:[%s1 + $0xdc] sm:$0xf]
  %v163 = vld [vmem:[%s1 + $0xe0] sm:$0xf]
  %v164 = vld [vmem:[%s1 + $0xe4] sm:$0xf]
  %v165 = vld [vmem:[%s1 + $0xe8] sm:$0xf]
  %v166 = vld [vmem:[%s1 + $0xec] sm:$0xf]
  %v167 = vld [vmem:[%s1 + $0xf0] sm:$0xf]
  %v168 = vld [vmem:[%s1 + $0xf4] sm:$0xf]
  %v169 = vld [vmem:[%s1 + $0xf8] sm:$0xf]
  %v170 = vld [vmem:[%s1 + $0xfc] sm:$0xf]
  %v171 = vld [vmem:[%s3] sm:$0xf]
  %v172 = vld [vmem:[%s3 + $0x4] sm:$0xf]
  %v173 = vld [vmem:[%s3 + $0x8] sm:$0xf]
  %v174 = vld [vmem:[%s3 + $0xc] sm:$0xf]
  %v175 = vld [vmem:[%s3 + $0x10] sm:$0xf]
  %v176 = vld [vmem:[%s3 + $0x14] sm:$0xf]
  %v177 = vld [vmem:[%s3 + $0x18] sm:$0xf]
  %v178 = vld [vmem:[%s3 + $0x1c] sm:$0xf]
  %v179 = vld [vmem:[%s3 + $0x20] sm:$0xf]
  %v180 = vld [vmem:[%s3 + $0x24] sm:$0xf]
  %v181 = vld [vmem:[%s3 + $0x28] sm:$0xf]
  %v182 = vld [vmem:[%s3 + $0x2c] sm:$0xf]
  %v183 = vld [vmem:[%s3 + $0x30] sm:$0xf]
  %v184 = vld [vmem:[%s3 + $0x34] sm:$0xf]
  %v185 = vld [vmem:[%s3 + $0x38] sm:$0xf]
  %v186 = vld [vmem:[%s3 + $0x3c] sm:$0xf]
  %v251 = vunpack.c.l.b16 %v107
  %v252 = vunpack.c.l.b16 %v108
  %v253 = vunpack.c.l.b16 %v109
  %v254 = vunpack.c.l.b16 %v110
  %v255 = vunpack.c.l.b16 %v111
  %v256 = vunpack.c.l.b16 %v112
  %v257 = vunpack.c.l.b16 %v113
  %v258 = vunpack.c.l.b16 %v114
  %v259 = vunpack.c.l.b16 %v115
  %v260 = vunpack.c.l.b16 %v116
  %v261 = vunpack.c.l.b16 %v117
  %v262 = vunpack.c.l.b16 %v118
  %v263 = vunpack.c.l.b16 %v119
  %v264 = vunpack.c.l.b16 %v120
  %v265 = vunpack.c.l.b16 %v121
  %v266 = vunpack.c.l.b16 %v122
  %v267 = vunpack.c.l.b16 %v123
  %v268 = vunpack.c.l.b16 %v124
  %v269 = vunpack.c.l.b16 %v125
  %v270 = vunpack.c.l.b16 %v126
  %v271 = vunpack.c.l.b16 %v127
  %v272 = vunpack.c.l.b16 %v128
  %v273 = vunpack.c.l.b16 %v129
  %v274 = vunpack.c.l.b16 %v130
  %v275 = vunpack.c.l.b16 %v131
  %v276 = vunpack.c.l.b16 %v132
  %v277 = vunpack.c.l.b16 %v133
  %v278 = vunpack.c.l.b16 %v134
  %v279 = vunpack.c.l.b16 %v135
  %v280 = vunpack.c.l.b16 %v136
  %v281 = vunpack.c.l.b16 %v137
  %v282 = vunpack.c.l.b16 %v138
  %v283 = vunpack.c.l.b16 %v139
  %v284 = vunpack.c.l.b16 %v140
  %v285 = vunpack.c.l.b16 %v141
  %v286 = vunpack.c.l.b16 %v142
  %v287 = vunpack.c.l.b16 %v143
  %v288 = vunpack.c.l.b16 %v144
  %v289 = vunpack.c.l.b16 %v145
  %v290 = vunpack.c.l.b16 %v146
  %v291 = vunpack.c.l.b16 %v147
  %v292 = vunpack.c.l.b16 %v148
  %v293 = vunpack.c.l.b16 %v149
  %v294 = vunpack.c.l.b16 %v150
  %v295 = vunpack.c.l.b16 %v151
  %v296 = vunpack.c.l.b16 %v152
  %v297 = vunpack.c.l.b16 %v153
  %v298 = vunpack.c.l.b16 %v154
  %v299 = vunpack.c.l.b16 %v155
  %v300 = vunpack.c.l.b16 %v156
  %v301 = vunpack.c.l.b16 %v157
  %v302 = vunpack.c.l.b16 %v158
  %v303 = vunpack.c.l.b16 %v159
  %v304 = vunpack.c.l.b16 %v160
  %v305 = vunpack.c.l.b16 %v161
  %v306 = vunpack.c.l.b16 %v162
  %v307 = vunpack.c.l.b16 %v163
  %v308 = vunpack.c.l.b16 %v164
  %v309 = vunpack.c.l.b16 %v165
  %v310 = vunpack.c.l.b16 %v166
  %v311 = vunpack.c.l.b16 %v167
  %v312 = vunpack.c.l.b16 %v168
  %v313 = vunpack.c.l.b16 %v169
  %v314 = vunpack.c.l.b16 %v170
  %v315 = vpack.c.b16 %v252, %v251
  %v316 = vpack.c.b16 %v254, %v253
  %v317 = vpack.c.b16 %v256, %v255
  %v318 = vpack.c.b16 %v258, %v257
  %v319 = vpack.c.b16 %v260, %v259
  %v320 = vpack.c.b16 %v262, %v261
  %v321 = vpack.c.b16 %v264, %v263
  %v322 = vpack.c.b16 %v266, %v265
  %v323 = vpack.c.b16 %v268, %v267
  %v324 = vpack.c.b16 %v270, %v269
  %v325 = vpack.c.b16 %v272, %v271
  %v326 = vpack.c.b16 %v274, %v273
  %v327 = vpack.c.b16 %v276, %v275
  %v328 = vpack.c.b16 %v278, %v277
  %v329 = vpack.c.b16 %v280, %v279
  %v330 = vpack.c.b16 %v282, %v281
  %v331 = vpack.c.b16 %v284, %v283
  %v332 = vpack.c.b16 %v286, %v285
  %v333 = vpack.c.b16 %v288, %v287
  %v334 = vpack.c.b16 %v290, %v289
  %v335 = vpack.c.b16 %v292, %v291
  %v336 = vpack.c.b16 %v294, %v293
  %v337 = vpack.c.b16 %v296, %v295
  %v338 = vpack.c.b16 %v298, %v297
  %v339 = vpack.c.b16 %v300, %v299
  %v340 = vpack.c.b16 %v302, %v301
  %v341 = vpack.c.b16 %v304, %v303
  %v342 = vpack.c.b16 %v306, %v305
  %v343 = vpack.c.b16 %v308, %v307
  %v344 = vpack.c.b16 %v310, %v309
  %v345 = vpack.c.b16 %v312, %v311
  %v346 = vpack.c.b16 %v314, %v313
  %v395 = vunpack.c.l.b16 %v171
  %v396 = vunpack.c.l.b16 %v172
  %v397 = vunpack.c.l.b16 %v173
  %v398 = vunpack.c.l.b16 %v174
  %v399 = vunpack.c.l.b16 %v175
  %v400 = vunpack.c.l.b16 %v176
  %v401 = vunpack.c.l.b16 %v177
  %v402 = vunpack.c.l.b16 %v178
  %v403 = vunpack.c.l.b16 %v179
  %v404 = vunpack.c.l.b16 %v180
  %v405 = vunpack.c.l.b16 %v181
  %v406 = vunpack.c.l.b16 %v182
  %v407 = vunpack.c.l.b16 %v183
  %v408 = vunpack.c.l.b16 %v184
  %v409 = vunpack.c.l.b16 %v185
  %v410 = vunpack.c.l.b16 %v186
  %v411 = vpack.c.b16 %v396, %v395
  %v412 = vpack.c.b16 %v398, %v397
  %v413 = vpack.c.b16 %v400, %v399
  %v414 = vpack.c.b16 %v402, %v401
  %v415 = vpack.c.b16 %v404, %v403
  %v416 = vpack.c.b16 %v406, %v405
  %v417 = vpack.c.b16 %v408, %v407
  %v418 = vpack.c.b16 %v410, %v409
  %427 = vmatprep.subr.bf16.mxu0 0
  %428 = vmatpush1.bf16.msra.mxu0 %v418
  %429 = vmatprep.subr.bf16.mxu0 0
  %430 = vmatpush1.bf16.msra.mxu0 %v417
  %431 = vmatprep.subr.bf16.mxu0 0
  %432 = vmatpush1.bf16.msra.mxu0 %v416
  %433 = vmatprep.subr.bf16.mxu0 0
  %434 = vmatpush1.bf16.msra.mxu0 %v415
  %435 = vmatprep.subr.bf16.mxu0 0
  %436 = vmatpush1.bf16.msra.mxu0 %v414
  %437 = vmatprep.subr.bf16.mxu0 0
  %438 = vmatpush1.bf16.msra.mxu0 %v413
  %439 = vmatprep.subr.bf16.mxu0 0
  %440 = vmatpush1.bf16.msra.mxu0 %v412
  %441 = vmatprep.subr.bf16.mxu0 0
  %442 = vmatpush1.bf16.msra.mxu0 %v411
  %443 = vmatprep.subr.bf16.mxu0 0
  %444 = vmatpush2.bf16.msra.mxu0 0
  %445 = vmatprep.subr.bf16.mxu0 0
  %446 = vmatpush2.bf16.msra.mxu0 0
  %447 = vmatprep.subr.bf16.mxu0 0
  %448 = vmatpush2.bf16.msra.mxu0 0
  %449 = vmatprep.subr.bf16.mxu0 0
  %450 = vmatpush2.bf16.msra.mxu0 0
  %451 = vmatprep.subr.bf16.mxu0 0
  %452 = vmatpush2.bf16.msra.mxu0 0
  %453 = vmatprep.subr.bf16.mxu0 0
  %454 = vmatpush2.bf16.msra.mxu0 0
  %455 = vmatprep.subr.bf16.mxu0 0
  %456 = vmatpush2.bf16.msra.mxu0 0
  %457 = vmatprep.subr.bf16.mxu0 0
  %458 = vmatpush2.bf16.msra.mxu0 0
  %459 = vmatprep.mubr.bf16.mxu0 0
  %460 = vmatmul.mubr.bf16.gmra.mxu0 %v315
  %v461 = vpop.f32.mrf.mxu0
  %v462 = vadd.f32 0.0, %v461
  %v463 = vpop.f32.mrf.mxu0
  %v464 = vpop.f32.mrf.mxu0
  %v465 = vadd.f32 0.0, %v464
  %v466 = vpop.f32.mrf.mxu0
  %467 = vmatprep.mubr.bf16.mxu0 0
  %468 = vmatmul.mubr.bf16.gmra.mxu0 %v316
  %v469 = vpop.f32.mrf.mxu0
  %v470 = vadd.f32 0.0, %v469
  %v471 = vpop.f32.mrf.mxu0
  %v472 = vpop.f32.mrf.mxu0
  %v473 = vadd.f32 0.0, %v472
  %v474 = vpop.f32.mrf.mxu0
  %475 = vmatprep.mubr.bf16.mxu0 0
  %476 = vmatmul.mubr.bf16.gmra.mxu0 %v317
  %v477 = vpop.f32.mrf.mxu0
  %v478 = vadd.f32 0.0, %v477
  %v479 = vpop.f32.mrf.mxu0
  %v480 = vpop.f32.mrf.mxu0
  %v481 = vadd.f32 0.0, %v480
  %v482 = vpop.f32.mrf.mxu0
  %483 = vmatprep.mubr.bf16.mxu0 0
  %484 = vmatmul.mubr.bf16.gmra.mxu0 %v318
  %v485 = vpop.f32.mrf.mxu0
  %v486 = vadd.f32 0.0, %v485
  %v487 = vpop.f32.mrf.mxu0
  %v488 = vpop.f32.mrf.mxu0
  %v489 = vadd.f32 0.0, %v488
  %v490 = vpop.f32.mrf.mxu0
  %491 = vmatprep.mubr.bf16.mxu0 0
  %492 = vmatmul.mubr.bf16.gmra.mxu0 %v319
  %v493 = vpop.f32.mrf.mxu0
  %v494 = vadd.f32 0.0, %v493
  %v495 = vpop.f32.mrf.mxu0
  %v496 = vpop.f32.mrf.mxu0
  %v497 = vadd.f32 0.0, %v496
  %v498 = vpop.f32.mrf.mxu0
  %499 = vmatprep.mubr.bf16.mxu0 0
  %500 = vmatmul.mubr.bf16.gmra.mxu0 %v320
  %v501 = vpop.f32.mrf.mxu0
  %v502 = vadd.f32 0.0, %v501
  %v503 = vpop.f32.mrf.mxu0
  %v504 = vpop.f32.mrf.mxu0
  %v505 = vadd.f32 0.0, %v504
  %v506 = vpop.f32.mrf.mxu0
  %507 = vmatprep.mubr.bf16.mxu0 0
  %508 = vmatmul.mubr.bf16.gmra.mxu0 %v321
  %v509 = vpop.f32.mrf.mxu0
  %v510 = vadd.f32 0.0, %v509
  %v511 = vpop.f32.mrf.mxu0
  %v512 = vpop.f32.mrf.mxu0
  %v513 = vadd.f32 0.0, %v512
  %v514 = vpop.f32.mrf.mxu0
  %515 = vmatprep.mubr.bf16.mxu0 0
  %516 = vmatmul.mubr.bf16.gmra.mxu0 %v322
  %v517 = vpop.f32.mrf.mxu0
  %v518 = vadd.f32 0.0, %v517
  %v519 = vpop.f32.mrf.mxu0
  %v520 = vpop.f32.mrf.mxu0
  %v521 = vadd.f32 0.0, %v520
  %v522 = vpop.f32.mrf.mxu0
  %523 = vmatprep.mubr.bf16.mxu0 0
  %524 = vmatmul.mubr.bf16.gmra.mxu0 %v323
  %v525 = vpop.f32.mrf.mxu0
  %v526 = vadd.f32 0.0, %v525
  %v527 = vpop.f32.mrf.mxu0
  %v528 = vpop.f32.mrf.mxu0
  %v529 = vadd.f32 0.0, %v528
  %v530 = vpop.f32.mrf.mxu0
  %531 = vmatprep.mubr.bf16.mxu0 0
  %532 = vmatmul.mubr.bf16.gmra.mxu0 %v324
  %v533 = vpop.f32.mrf.mxu0
  %v534 = vadd.f32 0.0, %v533
  %v535 = vpop.f32.mrf.mxu0
  %v536 = vpop.f32.mrf.mxu0
  %v537 = vadd.f32 0.0, %v536
  %v538 = vpop.f32.mrf.mxu0
  %539 = vmatprep.mubr.bf16.mxu0 0
  %540 = vmatmul.mubr.bf16.gmra.mxu0 %v325
  %v541 = vpop.f32.mrf.mxu0
  %v542 = vadd.f32 0.0, %v541
  %v543 = vpop.f32.mrf.mxu0
  %v544 = vpop.f32.mrf.mxu0
  %v545 = vadd.f32 0.0, %v544
  %v546 = vpop.f32.mrf.mxu0
  %547 = vmatprep.mubr.bf16.mxu0 0
  %548 = vmatmul.mubr.bf16.gmra.mxu0 %v326
  %v549 = vpop.f32.mrf.mxu0
  %v550 = vadd.f32 0.0, %v549
  %v551 = vpop.f32.mrf.mxu0
  %v552 = vpop.f32.mrf.mxu0
  %v553 = vadd.f32 0.0, %v552
  %v554 = vpop.f32.mrf.mxu0
  %555 = vmatprep.mubr.bf16.mxu0 0
  %556 = vmatmul.mubr.bf16.gmra.mxu0 %v327
  %v557 = vpop.f32.mrf.mxu0
  %v558 = vadd.f32 0.0, %v557
  %v559 = vpop.f32.mrf.mxu0
  %v560 = vpop.f32.mrf.mxu0
  %v561 = vadd.f32 0.0, %v560
  %v562 = vpop.f32.mrf.mxu0
  %563 = vmatprep.mubr.bf16.mxu0 0
  %564 = vmatmul.mubr.bf16.gmra.mxu0 %v328
  %v565 = vpop.f32.mrf.mxu0
  %v566 = vadd.f32 0.0, %v565
  %v567 = vpop.f32.mrf.mxu0
  %v568 = vpop.f32.mrf.mxu0
  %v569 = vadd.f32 0.0, %v568
  %v570 = vpop.f32.mrf.mxu0
  %571 = vmatprep.mubr.bf16.mxu0 0
  %572 = vmatmul.mubr.bf16.gmra.mxu0 %v329
  %v573 = vpop.f32.mrf.mxu0
  %v574 = vadd.f32 0.0, %v573
  %v575 = vpop.f32.mrf.mxu0
  %v576 = vpop.f32.mrf.mxu0
  %v577 = vadd.f32 0.0, %v576
  %v578 = vpop.f32.mrf.mxu0
  %579 = vmatprep.mubr.bf16.mxu0 0
  %580 = vmatmul.mubr.bf16.gmra.mxu0 %v330
  %v581 = vpop.f32.mrf.mxu0
  %v582 = vadd.f32 0.0, %v581
  %v583 = vpop.f32.mrf.mxu0
  %v584 = vpop.f32.mrf.mxu0
  %v585 = vadd.f32 0.0, %v584
  %v586 = vpop.f32.mrf.mxu0
  %587 = vmatprep.mubr.bf16.mxu0 0
  %588 = vmatmul.mubr.bf16.gmra.mxu0 %v331
  %v589 = vpop.f32.mrf.mxu0
  %v590 = vadd.f32 0.0, %v589
  %v591 = vpop.f32.mrf.mxu0
  %v592 = vpop.f32.mrf.mxu0
  %v593 = vadd.f32 0.0, %v592
  %v594 = vpop.f32.mrf.mxu0
  %595 = vmatprep.mubr.bf16.mxu0 0
  %596 = vmatmul.mubr.bf16.gmra.mxu0 %v332
  %v597 = vpop.f32.mrf.mxu0
  %v598 = vadd.f32 0.0, %v597
  %v599 = vpop.f32.mrf.mxu0
  %v600 = vpop.f32.mrf.mxu0
  %v601 = vadd.f32 0.0, %v600
  %v602 = vpop.f32.mrf.mxu0
  %603 = vmatprep.mubr.bf16.mxu0 0
  %604 = vmatmul.mubr.bf16.gmra.mxu0 %v333
  %v605 = vpop.f32.mrf.mxu0
  %v606 = vadd.f32 0.0, %v605
  %v607 = vpop.f32.mrf.mxu0
  %v608 = vpop.f32.mrf.mxu0
  %v609 = vadd.f32 0.0, %v608
  %v610 = vpop.f32.mrf.mxu0
  %611 = vmatprep.mubr.bf16.mxu0 0
  %612 = vmatmul.mubr.bf16.gmra.mxu0 %v334
  %v613 = vpop.f32.mrf.mxu0
  %v614 = vadd.f32 0.0, %v613
  %v615 = vpop.f32.mrf.mxu0
  %v616 = vpop.f32.mrf.mxu0
  %v617 = vadd.f32 0.0, %v616
  %v618 = vpop.f32.mrf.mxu0
  %619 = vmatprep.mubr.bf16.mxu0 0
  %620 = vmatmul.mubr.bf16.gmra.mxu0 %v335
  %v621 = vpop.f32.mrf.mxu0
  %v622 = vadd.f32 0.0, %v621
  %v623 = vpop.f32.mrf.mxu0
  %v624 = vpop.f32.mrf.mxu0
  %v625 = vadd.f32 0.0, %v624
  %v626 = vpop.f32.mrf.mxu0
  %627 = vmatprep.mubr.bf16.mxu0 0
  %628 = vmatmul.mubr.bf16.gmra.mxu0 %v336
  %v629 = vpop.f32.mrf.mxu0
  %v630 = vadd.f32 0.0, %v629
  %v631 = vpop.f32.mrf.mxu0
  %v632 = vpop.f32.mrf.mxu0
  %v633 = vadd.f32 0.0, %v632
  %v634 = vpop.f32.mrf.mxu0
  %635 = vmatprep.mubr.bf16.mxu0 0
  %636 = vmatmul.mubr.bf16.gmra.mxu0 %v337
  %v637 = vpop.f32.mrf.mxu0
  %v638 = vadd.f32 0.0, %v637
  %v639 = vpop.f32.mrf.mxu0
  %v640 = vpop.f32.mrf.mxu0
  %v641 = vadd.f32 0.0, %v640
  %v642 = vpop.f32.mrf.mxu0
  %643 = vmatprep.mubr.bf16.mxu0 0
  %644 = vmatmul.mubr.bf16.gmra.mxu0 %v338
  %v645 = vpop.f32.mrf.mxu0
  %v646 = vadd.f32 0.0, %v645
  %v647 = vpop.f32.mrf.mxu0
  %v648 = vpop.f32.mrf.mxu0
  %v649 = vadd.f32 0.0, %v648
  %v650 = vpop.f32.mrf.mxu0
  %651 = vmatprep.mubr.bf16.mxu0 0
  %652 = vmatmul.mubr.bf16.gmra.mxu0 %v339
  %v653 = vpop.f32.mrf.mxu0
  %v654 = vadd.f32 0.0, %v653
  %v655 = vpop.f32.mrf.mxu0
  %v656 = vpop.f32.mrf.mxu0
  %v657 = vadd.f32 0.0, %v656
  %v658 = vpop.f32.mrf.mxu0
  %659 = vmatprep.mubr.bf16.mxu0 0
  %660 = vmatmul.mubr.bf16.gmra.mxu0 %v340
  %v661 = vpop.f32.mrf.mxu0
  %v662 = vadd.f32 0.0, %v661
  %v663 = vpop.f32.mrf.mxu0
  %v664 = vpop.f32.mrf.mxu0
  %v665 = vadd.f32 0.0, %v664
  %v666 = vpop.f32.mrf.mxu0
  %667 = vmatprep.mubr.bf16.mxu0 0
  %668 = vmatmul.mubr.bf16.gmra.mxu0 %v341
  %v669 = vpop.f32.mrf.mxu0
  %v670 = vadd.f32 0.0, %v669
  %v671 = vpop.f32.mrf.mxu0
  %v672 = vpop.f32.mrf.mxu0
  %v673 = vadd.f32 0.0, %v672
  %v674 = vpop.f32.mrf.mxu0
  %675 = vmatprep.mubr.bf16.mxu0 0
  %676 = vmatmul.mubr.bf16.gmra.mxu0 %v342
  %v677 = vpop.f32.mrf.mxu0
  %v678 = vadd.f32 0.0, %v677
  %v679 = vpop.f32.mrf.mxu0
  %v680 = vpop.f32.mrf.mxu0
  %v681 = vadd.f32 0.0, %v680
  %v682 = vpop.f32.mrf.mxu0
  %683 = vmatprep.mubr.bf16.mxu0 0
  %684 = vmatmul.mubr.bf16.gmra.mxu0 %v343
  %v685 = vpop.f32.mrf.mxu0
  %v686 = vadd.f32 0.0, %v685
  %v687 = vpop.f32.mrf.mxu0
  %v688 = vpop.f32.mrf.mxu0
  %v689 = vadd.f32 0.0, %v688
  %v690 = vpop.f32.mrf.mxu0
  %691 = vmatprep.mubr.bf16.mxu0 0
  %692 = vmatmul.mubr.bf16.gmra.mxu0 %v344
  %v693 = vpop.f32.mrf.mxu0
  %v694 = vadd.f32 0.0, %v693
  %v695 = vpop.f32.mrf.mxu0
  %v696 = vpop.f32.mrf.mxu0
  %v697 = vadd.f32 0.0, %v696
  %v698 = vpop.f32.mrf.mxu0
  %699 = vmatprep.mubr.bf16.mxu0 0
  %700 = vmatmul.mubr.bf16.gmra.mxu0 %v345
  %v701 = vpop.f32.mrf.mxu0
  %v702 = vadd.f32 0.0, %v701
  %v703 = vpop.f32.mrf.mxu0
  %v704 = vpop.f32.mrf.mxu0
  %v705 = vadd.f32 0.0, %v704
  %v706 = vpop.f32.mrf.mxu0
  %707 = vmatprep.mubr.bf16.mxu0 0
  %708 = vmatmul.mubr.bf16.gmra.mxu0 %v346
  %v709 = vpop.f32.mrf.mxu0
  %v710 = vadd.f32 0.0, %v709
  %v711 = vpop.f32.mrf.mxu0
  %v712 = vpop.f32.mrf.mxu0
  %v713 = vadd.f32 0.0, %v712
  %v714 = vpop.f32.mrf.mxu0
  %715 = vdwg.mxu0
  %v780 = vunpack.c.l.b16 %v27
  %v781 = vunpack.c.l.b16 %v28
  %v782 = vunpack.c.l.b16 %v29
  %v783 = vunpack.c.l.b16 %v30
  %v784 = vunpack.c.l.b16 %v31
  %v785 = vunpack.c.l.b16 %v32
  %v786 = vunpack.c.l.b16 %v33
  %v787 = vunpack.c.l.b16 %v34
  %v788 = vunpack.c.l.b16 %v35
  %v789 = vunpack.c.l.b16 %v36
  %v790 = vunpack.c.l.b16 %v37
  %v791 = vunpack.c.l.b16 %v38
  %v792 = vunpack.c.l.b16 %v39
  %v793 = vunpack.c.l.b16 %v40
  %v794 = vunpack.c.l.b16 %v41
  %v795 = vunpack.c.l.b16 %v42
  %v796 = vunpack.c.l.b16 %v43
  %v797 = vunpack.c.l.b16 %v44
  %v798 = vunpack.c.l.b16 %v45
  %v799 = vunpack.c.l.b16 %v46
  %v800 = vunpack.c.l.b16 %v47
  %v801 = vunpack.c.l.b16 %v48
  %v802 = vunpack.c.l.b16 %v49
  %v803 = vunpack.c.l.b16 %v50
  %v804 = vunpack.c.l.b16 %v51
  %v805 = vunpack.c.l.b16 %v52
  %v806 = vunpack.c.l.b16 %v53
  %v807 = vunpack.c.l.b16 %v54
  %v808 = vunpack.c.l.b16 %v55
  %v809 = vunpack.c.l.b16 %v56
  %v810 = vunpack.c.l.b16 %v57
  %v811 = vunpack.c.l.b16 %v58
  %v812 = vunpack.c.l.b16 %v59
  %v813 = vunpack.c.l.b16 %v60
  %v814 = vunpack.c.l.b16 %v61
  %v815 = vunpack.c.l.b16 %v62
  %v816 = vunpack.c.l.b16 %v63
  %v817 = vunpack.c.l.b16 %v64
  %v818 = vunpack.c.l.b16 %v65
  %v819 = vunpack.c.l.b16 %v66
  %v820 = vunpack.c.l.b16 %v67
  %v821 = vunpack.c.l.b16 %v68
  %v822 = vunpack.c.l.b16 %v69
  %v823 = vunpack.c.l.b16 %v70
  %v824 = vunpack.c.l.b16 %v71
  %v825 = vunpack.c.l.b16 %v72
  %v826 = vunpack.c.l.b16 %v73
  %v827 = vunpack.c.l.b16 %v74
  %v828 = vunpack.c.l.b16 %v75
  %v829 = vunpack.c.l.b16 %v76
  %v830 = vunpack.c.l.b16 %v77
  %v831 = vunpack.c.l.b16 %v78
  %v832 = vunpack.c.l.b16 %v79
  %v833 = vunpack.c.l.b16 %v80
  %v834 = vunpack.c.l.b16 %v81
  %v835 = vunpack.c.l.b16 %v82
  %v836 = vunpack.c.l.b16 %v83
  %v837 = vunpack.c.l.b16 %v84
  %v838 = vunpack.c.l.b16 %v85
  %v839 = vunpack.c.l.b16 %v86
  %v840 = vunpack.c.l.b16 %v87
  %v841 = vunpack.c.l.b16 %v88
  %v842 = vunpack.c.l.b16 %v89
  %v843 = vunpack.c.l.b16 %v90
  %v844 = vpack.c.b16 %v781, %v780
  %v845 = vpack.c.b16 %v783, %v782
  %v846 = vpack.c.b16 %v785, %v784
  %v847 = vpack.c.b16 %v787, %v786
  %v848 = vpack.c.b16 %v789, %v788
  %v849 = vpack.c.b16 %v791, %v790
  %v850 = vpack.c.b16 %v793, %v792
  %v851 = vpack.c.b16 %v795, %v794
  %v852 = vpack.c.b16 %v797, %v796
  %v853 = vpack.c.b16 %v799, %v798
  %v854 = vpack.c.b16 %v801, %v800
  %v855 = vpack.c.b16 %v803, %v802
  %v856 = vpack.c.b16 %v805, %v804
  %v857 = vpack.c.b16 %v807, %v806
  %v858 = vpack.c.b16 %v809, %v808
  %v859 = vpack.c.b16 %v811, %v810
  %v860 = vpack.c.b16 %v813, %v812
  %v861 = vpack.c.b16 %v815, %v814
  %v862 = vpack.c.b16 %v817, %v816
  %v863 = vpack.c.b16 %v819, %v818
  %v864 = vpack.c.b16 %v821, %v820
  %v865 = vpack.c.b16 %v823, %v822
  %v866 = vpack.c.b16 %v825, %v824
  %v867 = vpack.c.b16 %v827, %v826
  %v868 = vpack.c.b16 %v829, %v828
  %v869 = vpack.c.b16 %v831, %v830
  %v870 = vpack.c.b16 %v833, %v832
  %v871 = vpack.c.b16 %v835, %v834
  %v872 = vpack.c.b16 %v837, %v836
  %v873 = vpack.c.b16 %v839, %v838
  %v874 = vpack.c.b16 %v841, %v840
  %v875 = vpack.c.b16 %v843, %v842
  %v924 = vunpack.c.l.b16 %v91
  %v925 = vunpack.c.l.b16 %v92
  %v926 = vunpack.c.l.b16 %v93
  %v927 = vunpack.c.l.b16 %v94
  %v928 = vunpack.c.l.b16 %v95
  %v929 = vunpack.c.l.b16 %v96
  %v930 = vunpack.c.l.b16 %v97
  %v931 = vunpack.c.l.b16 %v98
  %v932 = vunpack.c.l.b16 %v99
  %v933 = vunpack.c.l.b16 %v100
  %v934 = vunpack.c.l.b16 %v101
  %v935 = vunpack.c.l.b16 %v102
  %v936 = vunpack.c.l.b16 %v103
  %v937 = vunpack.c.l.b16 %v104
  %v938 = vunpack.c.l.b16 %v105
  %v939 = vunpack.c.l.b16 %v106
  %v940 = vpack.c.b16 %v925, %v924
  %v941 = vpack.c.b16 %v927, %v926
  %v942 = vpack.c.b16 %v929, %v928
  %v943 = vpack.c.b16 %v931, %v930
  %v944 = vpack.c.b16 %v933, %v932
  %v945 = vpack.c.b16 %v935, %v934
  %v946 = vpack.c.b16 %v937, %v936
  %v947 = vpack.c.b16 %v939, %v938
  %956 = vmatprep.subr.bf16.mxu0 0
  %957 = vmatpush1.bf16.msra.mxu0 %v947
  %958 = vmatprep.subr.bf16.mxu0 0
  %959 = vmatpush1.bf16.msra.mxu0 %v946
  %960 = vmatprep.subr.bf16.mxu0 0
  %961 = vmatpush1.bf16.msra.mxu0 %v945
  %962 = vmatprep.subr.bf16.mxu0 0
  %963 = vmatpush1.bf16.msra.mxu0 %v944
  %964 = vmatprep.subr.bf16.mxu0 0
  %965 = vmatpush1.bf16.msra.mxu0 %v943
  %966 = vmatprep.subr.bf16.mxu0 0
  %967 = vmatpush1.bf16.msra.mxu0 %v942
  %968 = vmatprep.subr.bf16.mxu0 0
  %969 = vmatpush1.bf16.msra.mxu0 %v941
  %970 = vmatprep.subr.bf16.mxu0 0
  %971 = vmatpush1.bf16.msra.mxu0 %v940
  %972 = vmatprep.subr.bf16.mxu0 0
  %973 = vmatpush2.bf16.msra.mxu0 0
  %974 = vmatprep.subr.bf16.mxu0 0
  %975 = vmatpush2.bf16.msra.mxu0 0
  %976 = vmatprep.subr.bf16.mxu0 0
  %977 = vmatpush2.bf16.msra.mxu0 0
  %978 = vmatprep.subr.bf16.mxu0 0
  %979 = vmatpush2.bf16.msra.mxu0 0
  %980 = vmatprep.subr.bf16.mxu0 0
  %981 = vmatpush2.bf16.msra.mxu0 0
  %982 = vmatprep.subr.bf16.mxu0 0
  %983 = vmatpush2.bf16.msra.mxu0 0
  %984 = vmatprep.subr.bf16.mxu0 0
  %985 = vmatpush2.bf16.msra.mxu0 0
  %986 = vmatprep.subr.bf16.mxu0 0
  %987 = vmatpush2.bf16.msra.mxu0 0
  %988 = vmatprep.mubr.bf16.mxu0 0
  %989 = vmatmul.mubr.bf16.gmra.mxu0 %v844
  %v990 = vpop.f32.mrf.mxu0
  %v991 = vadd.f32 %v462, %v990
  %v992 = vpop.f32.mrf.mxu0
  %v993 = vpop.f32.mrf.mxu0
  %v994 = vadd.f32 %v465, %v993
  %v995 = vpop.f32.mrf.mxu0
  %996 = vmatprep.mubr.bf16.mxu0 0
  %997 = vmatmul.mubr.bf16.gmra.mxu0 %v845
  %v998 = vpop.f32.mrf.mxu0
  %v999 = vadd.f32 %v470, %v998
  %v1000 = vpop.f32.mrf.mxu0
  %v1001 = vpop.f32.mrf.mxu0
  %v1002 = vadd.f32 %v473, %v1001
  %v1003 = vpop.f32.mrf.mxu0
  %1004 = vmatprep.mubr.bf16.mxu0 0
  %1005 = vmatmul.mubr.bf16.gmra.mxu0 %v846
  %v1006 = vpop.f32.mrf.mxu0
  %v1007 = vadd.f32 %v478, %v1006
  %v1008 = vpop.f32.mrf.mxu0
  %v1009 = vpop.f32.mrf.mxu0
  %v1010 = vadd.f32 %v481, %v1009
  %v1011 = vpop.f32.mrf.mxu0
  %1012 = vmatprep.mubr.bf16.mxu0 0
  %1013 = vmatmul.mubr.bf16.gmra.mxu0 %v847
  %v1014 = vpop.f32.mrf.mxu0
  %v1015 = vadd.f32 %v486, %v1014
  %v1016 = vpop.f32.mrf.mxu0
  %v1017 = vpop.f32.mrf.mxu0
  %v1018 = vadd.f32 %v489, %v1017
  %v1019 = vpop.f32.mrf.mxu0
  %1020 = vmatprep.mubr.bf16.mxu0 0
  %1021 = vmatmul.mubr.bf16.gmra.mxu0 %v848
  %v1022 = vpop.f32.mrf.mxu0
  %v1023 = vadd.f32 %v494, %v1022
  %v1024 = vpop.f32.mrf.mxu0
  %v1025 = vpop.f32.mrf.mxu0
  %v1026 = vadd.f32 %v497, %v1025
  %v1027 = vpop.f32.mrf.mxu0
  %1028 = vmatprep.mubr.bf16.mxu0 0
  %1029 = vmatmul.mubr.bf16.gmra.mxu0 %v849
  %v1030 = vpop.f32.mrf.mxu0
  %v1031 = vadd.f32 %v502, %v1030
  %v1032 = vpop.f32.mrf.mxu0
  %v1033 = vpop.f32.mrf.mxu0
  %v1034 = vadd.f32 %v505, %v1033
  %v1035 = vpop.f32.mrf.mxu0
  %1036 = vmatprep.mubr.bf16.mxu0 0
  %1037 = vmatmul.mubr.bf16.gmra.mxu0 %v850
  %v1038 = vpop.f32.mrf.mxu0
  %v1039 = vadd.f32 %v510, %v1038
  %v1040 = vpop.f32.mrf.mxu0
  %v1041 = vpop.f32.mrf.mxu0
  %v1042 = vadd.f32 %v513, %v1041
  %v1043 = vpop.f32.mrf.mxu0
  %1044 = vmatprep.mubr.bf16.mxu0 0
  %1045 = vmatmul.mubr.bf16.gmra.mxu0 %v851
  %v1046 = vpop.f32.mrf.mxu0
  %v1047 = vadd.f32 %v518, %v1046
  %v1048 = vpop.f32.mrf.mxu0
  %v1049 = vpop.f32.mrf.mxu0
  %v1050 = vadd.f32 %v521, %v1049
  %v1051 = vpop.f32.mrf.mxu0
  %1052 = vmatprep.mubr.bf16.mxu0 0
  %1053 = vmatmul.mubr.bf16.gmra.mxu0 %v852
  %v1054 = vpop.f32.mrf.mxu0
  %v1055 = vadd.f32 %v526, %v1054
  %v1056 = vpop.f32.mrf.mxu0
  %v1057 = vpop.f32.mrf.mxu0
  %v1058 = vadd.f32 %v529, %v1057
  %v1059 = vpop.f32.mrf.mxu0
  %1060 = vmatprep.mubr.bf16.mxu0 0
  %1061 = vmatmul.mubr.bf16.gmra.mxu0 %v853
  %v1062 = vpop.f32.mrf.mxu0
  %v1063 = vadd.f32 %v534, %v1062
  %v1064 = vpop.f32.mrf.mxu0
  %v1065 = vpop.f32.mrf.mxu0
  %v1066 = vadd.f32 %v537, %v1065
  %v1067 = vpop.f32.mrf.mxu0
  %1068 = vmatprep.mubr.bf16.mxu0 0
  %1069 = vmatmul.mubr.bf16.gmra.mxu0 %v854
  %v1070 = vpop.f32.mrf.mxu0
  %v1071 = vadd.f32 %v542, %v1070
  %v1072 = vpop.f32.mrf.mxu0
  %v1073 = vpop.f32.mrf.mxu0
  %v1074 = vadd.f32 %v545, %v1073
  %v1075 = vpop.f32.mrf.mxu0
  %1076 = vmatprep.mubr.bf16.mxu0 0
  %1077 = vmatmul.mubr.bf16.gmra.mxu0 %v855
  %v1078 = vpop.f32.mrf.mxu0
  %v1079 = vadd.f32 %v550, %v1078
  %v1080 = vpop.f32.mrf.mxu0
  %v1081 = vpop.f32.mrf.mxu0
  %v1082 = vadd.f32 %v553, %v1081
  %v1083 = vpop.f32.mrf.mxu0
  %1084 = vmatprep.mubr.bf16.mxu0 0
  %1085 = vmatmul.mubr.bf16.gmra.mxu0 %v856
  %v1086 = vpop.f32.mrf.mxu0
  %v1087 = vadd.f32 %v558, %v1086
  %v1088 = vpop.f32.mrf.mxu0
  %v1089 = vpop.f32.mrf.mxu0
  %v1090 = vadd.f32 %v561, %v1089
  %v1091 = vpop.f32.mrf.mxu0
  %1092 = vmatprep.mubr.bf16.mxu0 0
  %1093 = vmatmul.mubr.bf16.gmra.mxu0 %v857
  %v1094 = vpop.f32.mrf.mxu0
  %v1095 = vadd.f32 %v566, %v1094
  %v1096 = vpop.f32.mrf.mxu0
  %v1097 = vpop.f32.mrf.mxu0
  %v1098 = vadd.f32 %v569, %v1097
  %v1099 = vpop.f32.mrf.mxu0
  %1100 = vmatprep.mubr.bf16.mxu0 0
  %1101 = vmatmul.mubr.bf16.gmra.mxu0 %v858
  %v1102 = vpop.f32.mrf.mxu0
  %v1103 = vadd.f32 %v574, %v1102
  %v1104 = vpop.f32.mrf.mxu0
  %v1105 = vpop.f32.mrf.mxu0
  %v1106 = vadd.f32 %v577, %v1105
  %v1107 = vpop.f32.mrf.mxu0
  %1108 = vmatprep.mubr.bf16.mxu0 0
  %1109 = vmatmul.mubr.bf16.gmra.mxu0 %v859
  %v1110 = vpop.f32.mrf.mxu0
  %v1111 = vadd.f32 %v582, %v1110
  %v1112 = vpop.f32.mrf.mxu0
  %v1113 = vpop.f32.mrf.mxu0
  %v1114 = vadd.f32 %v585, %v1113
  %v1115 = vpop.f32.mrf.mxu0
  %1116 = vmatprep.mubr.bf16.mxu0 0
  %1117 = vmatmul.mubr.bf16.gmra.mxu0 %v860
  %v1118 = vpop.f32.mrf.mxu0
  %v1119 = vadd.f32 %v590, %v1118
  %v1120 = vpop.f32.mrf.mxu0
  %v1121 = vpop.f32.mrf.mxu0
  %v1122 = vadd.f32 %v593, %v1121
  %v1123 = vpop.f32.mrf.mxu0
  %1124 = vmatprep.mubr.bf16.mxu0 0
  %1125 = vmatmul.mubr.bf16.gmra.mxu0 %v861
  %v1126 = vpop.f32.mrf.mxu0
  %v1127 = vadd.f32 %v598, %v1126
  %v1128 = vpop.f32.mrf.mxu0
  %v1129 = vpop.f32.mrf.mxu0
  %v1130 = vadd.f32 %v601, %v1129
  %v1131 = vpop.f32.mrf.mxu0
  %1132 = vmatprep.mubr.bf16.mxu0 0
  %1133 = vmatmul.mubr.bf16.gmra.mxu0 %v862
  %v1134 = vpop.f32.mrf.mxu0
  %v1135 = vadd.f32 %v606, %v1134
  %v1136 = vpop.f32.mrf.mxu0
  %v1137 = vpop.f32.mrf.mxu0
  %v1138 = vadd.f32 %v609, %v1137
  %v1139 = vpop.f32.mrf.mxu0
  %1140 = vmatprep.mubr.bf16.mxu0 0
  %1141 = vmatmul.mubr.bf16.gmra.mxu0 %v863
  %v1142 = vpop.f32.mrf.mxu0
  %v1143 = vadd.f32 %v614, %v1142
  %v1144 = vpop.f32.mrf.mxu0
  %v1145 = vpop.f32.mrf.mxu0
  %v1146 = vadd.f32 %v617, %v1145
  %v1147 = vpop.f32.mrf.mxu0
  %1148 = vmatprep.mubr.bf16.mxu0 0
  %1149 = vmatmul.mubr.bf16.gmra.mxu0 %v864
  %v1150 = vpop.f32.mrf.mxu0
  %v1151 = vadd.f32 %v622, %v1150
  %v1152 = vpop.f32.mrf.mxu0
  %v1153 = vpop.f32.mrf.mxu0
  %v1154 = vadd.f32 %v625, %v1153
  %v1155 = vpop.f32.mrf.mxu0
  %1156 = vmatprep.mubr.bf16.mxu0 0
  %1157 = vmatmul.mubr.bf16.gmra.mxu0 %v865
  %v1158 = vpop.f32.mrf.mxu0
  %v1159 = vadd.f32 %v630, %v1158
  %v1160 = vpop.f32.mrf.mxu0
  %v1161 = vpop.f32.mrf.mxu0
  %v1162 = vadd.f32 %v633, %v1161
  %v1163 = vpop.f32.mrf.mxu0
  %1164 = vmatprep.mubr.bf16.mxu0 0
  %1165 = vmatmul.mubr.bf16.gmra.mxu0 %v866
  %v1166 = vpop.f32.mrf.mxu0
  %v1167 = vadd.f32 %v638, %v1166
  %v1168 = vpop.f32.mrf.mxu0
  %v1169 = vpop.f32.mrf.mxu0
  %v1170 = vadd.f32 %v641, %v1169
  %v1171 = vpop.f32.mrf.mxu0
  %1172 = vmatprep.mubr.bf16.mxu0 0
  %1173 = vmatmul.mubr.bf16.gmra.mxu0 %v867
  %v1174 = vpop.f32.mrf.mxu0
  %v1175 = vadd.f32 %v646, %v1174
  %v1176 = vpop.f32.mrf.mxu0
  %v1177 = vpop.f32.mrf.mxu0
  %v1178 = vadd.f32 %v649, %v1177
  %v1179 = vpop.f32.mrf.mxu0
  %1180 = vmatprep.mubr.bf16.mxu0 0
  %1181 = vmatmul.mubr.bf16.gmra.mxu0 %v868
  %v1182 = vpop.f32.mrf.mxu0
  %v1183 = vadd.f32 %v654, %v1182
  %v1184 = vpop.f32.mrf.mxu0
  %v1185 = vpop.f32.mrf.mxu0
  %v1186 = vadd.f32 %v657, %v1185
  %v1187 = vpop.f32.mrf.mxu0
  %1188 = vmatprep.mubr.bf16.mxu0 0
  %1189 = vmatmul.mubr.bf16.gmra.mxu0 %v869
  %v1190 = vpop.f32.mrf.mxu0
  %v1191 = vadd.f32 %v662, %v1190
  %v1192 = vpop.f32.mrf.mxu0
  %v1193 = vpop.f32.mrf.mxu0
  %v1194 = vadd.f32 %v665, %v1193
  %v1195 = vpop.f32.mrf.mxu0
  %1196 = vmatprep.mubr.bf16.mxu0 0
  %1197 = vmatmul.mubr.bf16.gmra.mxu0 %v870
  %v1198 = vpop.f32.mrf.mxu0
  %v1199 = vadd.f32 %v670, %v1198
  %v1200 = vpop.f32.mrf.mxu0
  %v1201 = vpop.f32.mrf.mxu0
  %v1202 = vadd.f32 %v673, %v1201
  %v1203 = vpop.f32.mrf.mxu0
  %1204 = vmatprep.mubr.bf16.mxu0 0
  %1205 = vmatmul.mubr.bf16.gmra.mxu0 %v871
  %v1206 = vpop.f32.mrf.mxu0
  %v1207 = vadd.f32 %v678, %v1206
  %v1208 = vpop.f32.mrf.mxu0
  %v1209 = vpop.f32.mrf.mxu0
  %v1210 = vadd.f32 %v681, %v1209
  %v1211 = vpop.f32.mrf.mxu0
  %1212 = vmatprep.mubr.bf16.mxu0 0
  %1213 = vmatmul.mubr.bf16.gmra.mxu0 %v872
  %v1214 = vpop.f32.mrf.mxu0
  %v1215 = vadd.f32 %v686, %v1214
  %v1216 = vpop.f32.mrf.mxu0
  %v1217 = vpop.f32.mrf.mxu0
  %v1218 = vadd.f32 %v689, %v1217
  %v1219 = vpop.f32.mrf.mxu0
  %1220 = vmatprep.mubr.bf16.mxu0 0
  %1221 = vmatmul.mubr.bf16.gmra.mxu0 %v873
  %v1222 = vpop.f32.mrf.mxu0
  %v1223 = vadd.f32 %v694, %v1222
  %v1224 = vpop.f32.mrf.mxu0
  %v1225 = vpop.f32.mrf.mxu0
  %v1226 = vadd.f32 %v697, %v1225
  %v1227 = vpop.f32.mrf.mxu0
  %1228 = vmatprep.mubr.bf16.mxu0 0
  %1229 = vmatmul.mubr.bf16.gmra.mxu0 %v874
  %v1230 = vpop.f32.mrf.mxu0
  %v1231 = vadd.f32 %v702, %v1230
  %v1232 = vpop.f32.mrf.mxu0
  %v1233 = vpop.f32.mrf.mxu0
  %v1234 = vadd.f32 %v705, %v1233
  %v1235 = vpop.f32.mrf.mxu0
  %1236 = vmatprep.mubr.bf16.mxu0 0
  %1237 = vmatmul.mubr.bf16.gmra.mxu0 %v875
  %v1238 = vpop.f32.mrf.mxu0
  %v1239 = vadd.f32 %v710, %v1238
  %v1240 = vpop.f32.mrf.mxu0
  %v1241 = vpop.f32.mrf.mxu0
  %v1242 = vadd.f32 %v713, %v1241
  %v1243 = vpop.f32.mrf.mxu0
  %1244 = vdwg.mxu0
  %v1245 = vld [vmem:[%s4] sm:$0x1]
  %v1247 = vlaneseq
  %v1248 = vshrl.u32 %v1247, 7
  %v1249 = vsub.s32 0, %v1248
  %v1250 = vrot.slane %v1245, %v1249
  %v1252 = vmul.f32 %v991, %v1250
  %v1253 = vmul.f32 %v994, %v1250
  %v1254 = vmul.f32 %v999, %v1250
  %v1255 = vmul.f32 %v1002, %v1250
  %v1256 = vmul.f32 %v1007, %v1250
  %v1257 = vmul.f32 %v1010, %v1250
  %v1258 = vmul.f32 %v1015, %v1250
  %v1259 = vmul.f32 %v1018, %v1250
  %v1260 = vmul.f32 %v1023, %v1250
  %v1261 = vmul.f32 %v1026, %v1250
  %v1262 = vmul.f32 %v1031, %v1250
  %v1263 = vmul.f32 %v1034, %v1250
  %v1264 = vmul.f32 %v1039, %v1250
  %v1265 = vmul.f32 %v1042, %v1250
  %v1266 = vmul.f32 %v1047, %v1250
  %v1267 = vmul.f32 %v1050, %v1250
  %v1268 = vmul.f32 %v1055, %v1250
  %v1269 = vmul.f32 %v1058, %v1250
  %v1270 = vmul.f32 %v1063, %v1250
  %v1271 = vmul.f32 %v1066, %v1250
  %v1272 = vmul.f32 %v1071, %v1250
  %v1273 = vmul.f32 %v1074, %v1250
  %v1274 = vmul.f32 %v1079, %v1250
  %v1275 = vmul.f32 %v1082, %v1250
  %v1276 = vmul.f32 %v1087, %v1250
  %v1277 = vmul.f32 %v1090, %v1250
  %v1278 = vmul.f32 %v1095, %v1250
  %v1279 = vmul.f32 %v1098, %v1250
  %v1280 = vmul.f32 %v1103, %v1250
  %v1281 = vmul.f32 %v1106, %v1250
  %v1282 = vmul.f32 %v1111, %v1250
  %v1283 = vmul.f32 %v1114, %v1250
  %v1284 = vmul.f32 %v1119, %v1250
  %v1285 = vmul.f32 %v1122, %v1250
  %v1286 = vmul.f32 %v1127, %v1250
  %v1287 = vmul.f32 %v1130, %v1250
  %v1288 = vmul.f32 %v1135, %v1250
  %v1289 = vmul.f32 %v1138, %v1250
  %v1290 = vmul.f32 %v1143, %v1250
  %v1291 = vmul.f32 %v1146, %v1250
  %v1292 = vmul.f32 %v1151, %v1250
  %v1293 = vmul.f32 %v1154, %v1250
  %v1294 = vmul.f32 %v1159, %v1250
  %v1295 = vmul.f32 %v1162, %v1250
  %v1296 = vmul.f32 %v1167, %v1250
  %v1297 = vmul.f32 %v1170, %v1250
  %v1298 = vmul.f32 %v1175, %v1250
  %v1299 = vmul.f32 %v1178, %v1250
  %v1300 = vmul.f32 %v1183, %v1250
  %v1301 = vmul.f32 %v1186, %v1250
  %v1302 = vmul.f32 %v1191, %v1250
  %v1303 = vmul.f32 %v1194, %v1250
  %v1304 = vmul.f32 %v1199, %v1250
  %v1305 = vmul.f32 %v1202, %v1250
  %v1306 = vmul.f32 %v1207, %v1250
  %v1307 = vmul.f32 %v1210, %v1250
  %v1308 = vmul.f32 %v1215, %v1250
  %v1309 = vmul.f32 %v1218, %v1250
  %v1310 = vmul.f32 %v1223, %v1250
  %v1311 = vmul.f32 %v1226, %v1250
  %v1312 = vmul.f32 %v1231, %v1250
  %v1313 = vmul.f32 %v1234, %v1250
  %v1314 = vmul.f32 %v1239, %v1250
  %v1315 = vmul.f32 %v1242, %v1250
  %v1316 = vld [vmem:[%s5] sm:$0x1]
  %v1318 = vlaneseq
  %v1319 = vshrl.u32 %v1318, 7
  %v1320 = vsub.s32 0, %v1319
  %v1321 = vrot.slane %v1316, %v1320
  %v1323 = vadd.f32 %v1252, %v1321
  %v1324 = vadd.f32 %v1253, %v1321
  %v1325 = vadd.f32 %v1254, %v1321
  %v1326 = vadd.f32 %v1255, %v1321
  %v1327 = vadd.f32 %v1256, %v1321
  %v1328 = vadd.f32 %v1257, %v1321
  %v1329 = vadd.f32 %v1258, %v1321
  %v1330 = vadd.f32 %v1259, %v1321
  %v1331 = vadd.f32 %v1260, %v1321
  %v1332 = vadd.f32 %v1261, %v1321
  %v1333 = vadd.f32 %v1262, %v1321
  %v1334 = vadd.f32 %v1263, %v1321
  %v1335 = vadd.f32 %v1264, %v1321
  %v1336 = vadd.f32 %v1265, %v1321
  %v1337 = vadd.f32 %v1266, %v1321
  %v1338 = vadd.f32 %v1267, %v1321
  %v1339 = vadd.f32 %v1268, %v1321
  %v1340 = vadd.f32 %v1269, %v1321
  %v1341 = vadd.f32 %v1270, %v1321
  %v1342 = vadd.f32 %v1271, %v1321
  %v1343 = vadd.f32 %v1272, %v1321
  %v1344 = vadd.f32 %v1273, %v1321
  %v1345 = vadd.f32 %v1274, %v1321
  %v1346 = vadd.f32 %v1275, %v1321
  %v1347 = vadd.f32 %v1276, %v1321
  %v1348 = vadd.f32 %v1277, %v1321
  %v1349 = vadd.f32 %v1278, %v1321
  %v1350 = vadd.f32 %v1279, %v1321
  %v1351 = vadd.f32 %v1280, %v1321
  %v1352 = vadd.f32 %v1281, %v1321
  %v1353 = vadd.f32 %v1282, %v1321
  %v1354 = vadd.f32 %v1283, %v1321
  %v1355 = vadd.f32 %v1284, %v1321
  %v1356 = vadd.f32 %v1285, %v1321
  %v1357 = vadd.f32 %v1286, %v1321
  %v1358 = vadd.f32 %v1287, %v1321
  %v1359 = vadd.f32 %v1288, %v1321
  %v1360 = vadd.f32 %v1289, %v1321
  %v1361 = vadd.f32 %v1290, %v1321
  %v1362 = vadd.f32 %v1291, %v1321
  %v1363 = vadd.f32 %v1292, %v1321
  %v1364 = vadd.f32 %v1293, %v1321
  %v1365 = vadd.f32 %v1294, %v1321
  %v1366 = vadd.f32 %v1295, %v1321
  %v1367 = vadd.f32 %v1296, %v1321
  %v1368 = vadd.f32 %v1297, %v1321
  %v1369 = vadd.f32 %v1298, %v1321
  %v1370 = vadd.f32 %v1299, %v1321
  %v1371 = vadd.f32 %v1300, %v1321
  %v1372 = vadd.f32 %v1301, %v1321
  %v1373 = vadd.f32 %v1302, %v1321
  %v1374 = vadd.f32 %v1303, %v1321
  %v1375 = vadd.f32 %v1304, %v1321
  %v1376 = vadd.f32 %v1305, %v1321
  %v1377 = vadd.f32 %v1306, %v1321
  %v1378 = vadd.f32 %v1307, %v1321
  %v1379 = vadd.f32 %v1308, %v1321
  %v1380 = vadd.f32 %v1309, %v1321
  %v1381 = vadd.f32 %v1310, %v1321
  %v1382 = vadd.f32 %v1311, %v1321
  %v1383 = vadd.f32 %v1312, %v1321
  %v1384 = vadd.f32 %v1313, %v1321
  %v1385 = vadd.f32 %v1314, %v1321
  %v1386 = vadd.f32 %v1315, %v1321
  %v1387 = vld [vmem:[%s6] sm:$0xf]
  %v1388 = vld [vmem:[%s6 + $0x4] sm:$0xf]
  %v1389 = vld [vmem:[%s6 + $0x8] sm:$0xf]
  %v1390 = vld [vmem:[%s6 + $0xc] sm:$0xf]
  %v1391 = vld [vmem:[%s6 + $0x10] sm:$0xf]
  %v1392 = vld [vmem:[%s6 + $0x14] sm:$0xf]
  %v1393 = vld [vmem:[%s6 + $0x18] sm:$0xf]
  %v1394 = vld [vmem:[%s6 + $0x1c] sm:$0xf]
  %v1395 = vld [vmem:[%s6 + $0x20] sm:$0xf]
  %v1396 = vld [vmem:[%s6 + $0x24] sm:$0xf]
  %v1397 = vld [vmem:[%s6 + $0x28] sm:$0xf]
  %v1398 = vld [vmem:[%s6 + $0x2c] sm:$0xf]
  %v1399 = vld [vmem:[%s6 + $0x30] sm:$0xf]
  %v1400 = vld [vmem:[%s6 + $0x34] sm:$0xf]
  %v1401 = vld [vmem:[%s6 + $0x38] sm:$0xf]
  %v1402 = vld [vmem:[%s6 + $0x3c] sm:$0xf]
  %v1403 = vld [vmem:[%s6 + $0x40] sm:$0xf]
  %v1404 = vld [vmem:[%s6 + $0x44] sm:$0xf]
  %v1405 = vld [vmem:[%s6 + $0x48] sm:$0xf]
  %v1406 = vld [vmem:[%s6 + $0x4c] sm:$0xf]
  %v1407 = vld [vmem:[%s6 + $0x50] sm:$0xf]
  %v1408 = vld [vmem:[%s6 + $0x54] sm:$0xf]
  %v1409 = vld [vmem:[%s6 + $0x58] sm:$0xf]
  %v1410 = vld [vmem:[%s6 + $0x5c] sm:$0xf]
  %v1411 = vld [vmem:[%s6 + $0x60] sm:$0xf]
  %v1412 = vld [vmem:[%s6 + $0x64] sm:$0xf]
  %v1413 = vld [vmem:[%s6 + $0x68] sm:$0xf]
  %v1414 = vld [vmem:[%s6 + $0x6c] sm:$0xf]
  %v1415 = vld [vmem:[%s6 + $0x70] sm:$0xf]
  %v1416 = vld [vmem:[%s6 + $0x74] sm:$0xf]
  %v1417 = vld [vmem:[%s6 + $0x78] sm:$0xf]
  %v1418 = vld [vmem:[%s6 + $0x7c] sm:$0xf]
  %v1419 = vld [vmem:[%s6 + $0x80] sm:$0xf]
  %v1420 = vld [vmem:[%s6 + $0x84] sm:$0xf]
  %v1421 = vld [vmem:[%s6 + $0x88] sm:$0xf]
  %v1422 = vld [vmem:[%s6 + $0x8c] sm:$0xf]
  %v1423 = vld [vmem:[%s6 + $0x90] sm:$0xf]
  %v1424 = vld [vmem:[%s6 + $0x94] sm:$0xf]
  %v1425 = vld [vmem:[%s6 + $0x98] sm:$0xf]
  %v1426 = vld [vmem:[%s6 + $0x9c] sm:$0xf]
  %v1427 = vld [vmem:[%s6 + $0xa0] sm:$0xf]
  %v1428 = vld [vmem:[%s6 + $0xa4] sm:$0xf]
  %v1429 = vld [vmem:[%s6 + $0xa8] sm:$0xf]
  %v1430 = vld [vmem:[%s6 + $0xac] sm:$0xf]
  %v1431 = vld [vmem:[%s6 + $0xb0] sm:$0xf]
  %v1432 = vld [vmem:[%s6 + $0xb4] sm:$0xf]
  %v1433 = vld [vmem:[%s6 + $0xb8] sm:$0xf]
  %v1434 = vld [vmem:[%s6 + $0xbc] sm:$0xf]
  %v1435 = vld [vmem:[%s6 + $0xc0] sm:$0xf]
  %v1436 = vld [vmem:[%s6 + $0xc4] sm:$0xf]
  %v1437 = vld [vmem:[%s6 + $0xc8] sm:$0xf]
  %v1438 = vld [vmem:[%s6 + $0xcc] sm:$0xf]
  %v1439 = vld [vmem:[%s6 + $0xd0] sm:$0xf]
  %v1440 = vld [vmem:[%s6 + $0xd4] sm:$0xf]
  %v1441 = vld [vmem:[%s6 + $0xd8] sm:$0xf]
  %v1442 = vld [vmem:[%s6 + $0xdc] sm:$0xf]
  %v1443 = vld [vmem:[%s6 + $0xe0] sm:$0xf]
  %v1444 = vld [vmem:[%s6 + $0xe4] sm:$0xf]
  %v1445 = vld [vmem:[%s6 + $0xe8] sm:$0xf]
  %v1446 = vld [vmem:[%s6 + $0xec] sm:$0xf]
  %v1447 = vld [vmem:[%s6 + $0xf0] sm:$0xf]
  %v1448 = vld [vmem:[%s6 + $0xf4] sm:$0xf]
  %v1449 = vld [vmem:[%s6 + $0xf8] sm:$0xf]
  %v1450 = vld [vmem:[%s6 + $0xfc] sm:$0xf]
  %v1451 = vunpack.c.l.bf16 %v1387
  %v1452 = vunpack.c.l.bf16 %v1388
  %v1453 = vunpack.c.l.bf16 %v1389
  %v1454 = vunpack.c.l.bf16 %v1390
  %v1455 = vunpack.c.l.bf16 %v1391
  %v1456 = vunpack.c.l.bf16 %v1392
  %v1457 = vunpack.c.l.bf16 %v1393
  %v1458 = vunpack.c.l.bf16 %v1394
  %v1459 = vunpack.c.l.bf16 %v1395
  %v1460 = vunpack.c.l.bf16 %v1396
  %v1461 = vunpack.c.l.bf16 %v1397
  %v1462 = vunpack.c.l.bf16 %v1398
  %v1463 = vunpack.c.l.bf16 %v1399
  %v1464 = vunpack.c.l.bf16 %v1400
  %v1465 = vunpack.c.l.bf16 %v1401
  %v1466 = vunpack.c.l.bf16 %v1402
  %v1467 = vunpack.c.l.bf16 %v1403
  %v1468 = vunpack.c.l.bf16 %v1404
  %v1469 = vunpack.c.l.bf16 %v1405
  %v1470 = vunpack.c.l.bf16 %v1406
  %v1471 = vunpack.c.l.bf16 %v1407
  %v1472 = vunpack.c.l.bf16 %v1408
  %v1473 = vunpack.c.l.bf16 %v1409
  %v1474 = vunpack.c.l.bf16 %v1410
  %v1475 = vunpack.c.l.bf16 %v1411
  %v1476 = vunpack.c.l.bf16 %v1412
  %v1477 = vunpack.c.l.bf16 %v1413
  %v1478 = vunpack.c.l.bf16 %v1414
  %v1479 = vunpack.c.l.bf16 %v1415
  %v1480 = vunpack.c.l.bf16 %v1416
  %v1481 = vunpack.c.l.bf16 %v1417
  %v1482 = vunpack.c.l.bf16 %v1418
  %v1483 = vunpack.c.l.bf16 %v1419
  %v1484 = vunpack.c.l.bf16 %v1420
  %v1485 = vunpack.c.l.bf16 %v1421
  %v1486 = vunpack.c.l.bf16 %v1422
  %v1487 = vunpack.c.l.bf16 %v1423
  %v1488 = vunpack.c.l.bf16 %v1424
  %v1489 = vunpack.c.l.bf16 %v1425
  %v1490 = vunpack.c.l.bf16 %v1426
  %v1491 = vunpack.c.l.bf16 %v1427
  %v1492 = vunpack.c.l.bf16 %v1428
  %v1493 = vunpack.c.l.bf16 %v1429
  %v1494 = vunpack.c.l.bf16 %v1430
  %v1495 = vunpack.c.l.bf16 %v1431
  %v1496 = vunpack.c.l.bf16 %v1432
  %v1497 = vunpack.c.l.bf16 %v1433
  %v1498 = vunpack.c.l.bf16 %v1434
  %v1499 = vunpack.c.l.bf16 %v1435
  %v1500 = vunpack.c.l.bf16 %v1436
  %v1501 = vunpack.c.l.bf16 %v1437
  %v1502 = vunpack.c.l.bf16 %v1438
  %v1503 = vunpack.c.l.bf16 %v1439
  %v1504 = vunpack.c.l.bf16 %v1440
  %v1505 = vunpack.c.l.bf16 %v1441
  %v1506 = vunpack.c.l.bf16 %v1442
  %v1507 = vunpack.c.l.bf16 %v1443
  %v1508 = vunpack.c.l.bf16 %v1444
  %v1509 = vunpack.c.l.bf16 %v1445
  %v1510 = vunpack.c.l.bf16 %v1446
  %v1511 = vunpack.c.l.bf16 %v1447
  %v1512 = vunpack.c.l.bf16 %v1448
  %v1513 = vunpack.c.l.bf16 %v1449
  %v1514 = vunpack.c.l.bf16 %v1450
  %v1515 = vadd.f32 %v1323, %v1451
  %v1516 = vadd.f32 %v1324, %v1452
  %v1517 = vadd.f32 %v1325, %v1453
  %v1518 = vadd.f32 %v1326, %v1454
  %v1519 = vadd.f32 %v1327, %v1455
  %v1520 = vadd.f32 %v1328, %v1456
  %v1521 = vadd.f32 %v1329, %v1457
  %v1522 = vadd.f32 %v1330, %v1458
  %v1523 = vadd.f32 %v1331, %v1459
  %v1524 = vadd.f32 %v1332, %v1460
  %v1525 = vadd.f32 %v1333, %v1461
  %v1526 = vadd.f32 %v1334, %v1462
  %v1527 = vadd.f32 %v1335, %v1463
  %v1528 = vadd.f32 %v1336, %v1464
  %v1529 = vadd.f32 %v1337, %v1465
  %v1530 = vadd.f32 %v1338, %v1466
  %v1531 = vadd.f32 %v1339, %v1467
  %v1532 = vadd.f32 %v1340, %v1468
  %v1533 = vadd.f32 %v1341, %v1469
  %v1534 = vadd.f32 %v1342, %v1470
  %v1535 = vadd.f32 %v1343, %v1471
  %v1536 = vadd.f32 %v1344, %v1472
  %v1537 = vadd.f32 %v1345, %v1473
  %v1538 = vadd.f32 %v1346, %v1474
  %v1539 = vadd.f32 %v1347, %v1475
  %v1540 = vadd.f32 %v1348, %v1476
  %v1541 = vadd.f32 %v1349, %v1477
  %v1542 = vadd.f32 %v1350, %v1478
  %v1543 = vadd.f32 %v1351, %v1479
  %v1544 = vadd.f32 %v1352, %v1480
  %v1545 = vadd.f32 %v1353, %v1481
  %v1546 = vadd.f32 %v1354, %v1482
  %v1547 = vadd.f32 %v1355, %v1483
  %v1548 = vadd.f32 %v1356, %v1484
  %v1549 = vadd.f32 %v1357, %v1485
  %v1550 = vadd.f32 %v1358, %v1486
  %v1551 = vadd.f32 %v1359, %v1487
  %v1552 = vadd.f32 %v1360, %v1488
  %v1553 = vadd.f32 %v1361, %v1489
  %v1554 = vadd.f32 %v1362, %v1490
  %v1555 = vadd.f32 %v1363, %v1491
  %v1556 = vadd.f32 %v1364, %v1492
  %v1557 = vadd.f32 %v1365, %v1493
  %v1558 = vadd.f32 %v1366, %v1494
  %v1559 = vadd.f32 %v1367, %v1495
  %v1560 = vadd.f32 %v1368, %v1496
  %v1561 = vadd.f32 %v1369, %v1497
  %v1562 = vadd.f32 %v1370, %v1498
  %v1563 = vadd.f32 %v1371, %v1499
  %v1564 = vadd.f32 %v1372, %v1500
  %v1565 = vadd.f32 %v1373, %v1501
  %v1566 = vadd.f32 %v1374, %v1502
  %v1567 = vadd.f32 %v1375, %v1503
  %v1568 = vadd.f32 %v1376, %v1504
  %v1569 = vadd.f32 %v1377, %v1505
  %v1570 = vadd.f32 %v1378, %v1506
  %v1571 = vadd.f32 %v1379, %v1507
  %v1572 = vadd.f32 %v1380, %v1508
  %v1573 = vadd.f32 %v1381, %v1509
  %v1574 = vadd.f32 %v1382, %v1510
  %v1575 = vadd.f32 %v1383, %v1511
  %v1576 = vadd.f32 %v1384, %v1512
  %v1577 = vadd.f32 %v1385, %v1513
  %v1578 = vadd.f32 %v1386, %v1514
  %v1579 = vmax.f32 %v1515, 0.0
  %v1580 = vmax.f32 %v1516, 0.0
  %v1581 = vmax.f32 %v1517, 0.0
  %v1582 = vmax.f32 %v1518, 0.0
  %v1583 = vmax.f32 %v1519, 0.0
  %v1584 = vmax.f32 %v1520, 0.0
  %v1585 = vmax.f32 %v1521, 0.0
  %v1586 = vmax.f32 %v1522, 0.0
  %v1587 = vmax.f32 %v1523, 0.0
  %v1588 = vmax.f32 %v1524, 0.0
  %v1589 = vmax.f32 %v1525, 0.0
  %v1590 = vmax.f32 %v1526, 0.0
  %v1591 = vmax.f32 %v1527, 0.0
  %v1592 = vmax.f32 %v1528, 0.0
  %v1593 = vmax.f32 %v1529, 0.0
  %v1594 = vmax.f32 %v1530, 0.0
  %v1595 = vmax.f32 %v1531, 0.0
  %v1596 = vmax.f32 %v1532, 0.0
  %v1597 = vmax.f32 %v1533, 0.0
  %v1598 = vmax.f32 %v1534, 0.0
  %v1599 = vmax.f32 %v1535, 0.0
  %v1600 = vmax.f32 %v1536, 0.0
  %v1601 = vmax.f32 %v1537, 0.0
  %v1602 = vmax.f32 %v1538, 0.0
  %v1603 = vmax.f32 %v1539, 0.0
  %v1604 = vmax.f32 %v1540, 0.0
  %v1605 = vmax.f32 %v1541, 0.0
  %v1606 = vmax.f32 %v1542, 0.0
  %v1607 = vmax.f32 %v1543, 0.0
  %v1608 = vmax.f32 %v1544, 0.0
  %v1609 = vmax.f32 %v1545, 0.0
  %v1610 = vmax.f32 %v1546, 0.0
  %v1611 = vmax.f32 %v1547, 0.0
  %v1612 = vmax.f32 %v1548, 0.0
  %v1613 = vmax.f32 %v1549, 0.0
  %v1614 = vmax.f32 %v1550, 0.0
  %v1615 = vmax.f32 %v1551, 0.0
  %v1616 = vmax.f32 %v1552, 0.0
  %v1617 = vmax.f32 %v1553, 0.0
  %v1618 = vmax.f32 %v1554, 0.0
  %v1619 = vmax.f32 %v1555, 0.0
  %v1620 = vmax.f32 %v1556, 0.0
  %v1621 = vmax.f32 %v1557, 0.0
  %v1622 = vmax.f32 %v1558, 0.0
  %v1623 = vmax.f32 %v1559, 0.0
  %v1624 = vmax.f32 %v1560, 0.0
  %v1625 = vmax.f32 %v1561, 0.0
  %v1626 = vmax.f32 %v1562, 0.0
  %v1627 = vmax.f32 %v1563, 0.0
  %v1628 = vmax.f32 %v1564, 0.0
  %v1629 = vmax.f32 %v1565, 0.0
  %v1630 = vmax.f32 %v1566, 0.0
  %v1631 = vmax.f32 %v1567, 0.0
  %v1632 = vmax.f32 %v1568, 0.0
  %v1633 = vmax.f32 %v1569, 0.0
  %v1634 = vmax.f32 %v1570, 0.0
  %v1635 = vmax.f32 %v1571, 0.0
  %v1636 = vmax.f32 %v1572, 0.0
  %v1637 = vmax.f32 %v1573, 0.0
  %v1638 = vmax.f32 %v1574, 0.0
  %v1639 = vmax.f32 %v1575, 0.0
  %v1640 = vmax.f32 %v1576, 0.0
  %v1641 = vmax.f32 %v1577, 0.0
  %v1642 = vmax.f32 %v1578, 0.0
  %v1643 = vpack.c.bf16 %v1580, %v1579
  %v1644 = vpack.c.bf16 %v1582, %v1581
  %v1645 = vpack.c.bf16 %v1584, %v1583
  %v1646 = vpack.c.bf16 %v1586, %v1585
  %v1647 = vpack.c.bf16 %v1588, %v1587
  %v1648 = vpack.c.bf16 %v1590, %v1589
  %v1649 = vpack.c.bf16 %v1592, %v1591
  %v1650 = vpack.c.bf16 %v1594, %v1593
  %v1651 = vpack.c.bf16 %v1596, %v1595
  %v1652 = vpack.c.bf16 %v1598, %v1597
  %v1653 = vpack.c.bf16 %v1600, %v1599
  %v1654 = vpack.c.bf16 %v1602, %v1601
  %v1655 = vpack.c.bf16 %v1604, %v1603
  %v1656 = vpack.c.bf16 %v1606, %v1605
  %v1657 = vpack.c.bf16 %v1608, %v1607
  %v1658 = vpack.c.bf16 %v1610, %v1609
  %v1659 = vpack.c.bf16 %v1612, %v1611
  %v1660 = vpack.c.bf16 %v1614, %v1613
  %v1661 = vpack.c.bf16 %v1616, %v1615
  %v1662 = vpack.c.bf16 %v1618, %v1617
  %v1663 = vpack.c.bf16 %v1620, %v1619
  %v1664 = vpack.c.bf16 %v1622, %v1621
  %v1665 = vpack.c.bf16 %v1624, %v1623
  %v1666 = vpack.c.bf16 %v1626, %v1625
  %v1667 = vpack.c.bf16 %v1628, %v1627
  %v1668 = vpack.c.bf16 %v1630, %v1629
  %v1669 = vpack.c.bf16 %v1632, %v1631
  %v1670 = vpack.c.bf16 %v1634, %v1633
  %v1671 = vpack.c.bf16 %v1636, %v1635
  %v1672 = vpack.c.bf16 %v1638, %v1637
  %v1673 = vpack.c.bf16 %v1640, %v1639
  %v1674 = vpack.c.bf16 %v1642, %v1641
  %v1707 = vunpack.c.l.b16 %v1643
  %v1708 = vunpack.c.h.b16 %v1643
  %v1709 = vunpack.c.l.b16 %v1644
  %v1710 = vunpack.c.h.b16 %v1644
  %v1711 = vunpack.c.l.b16 %v1645
  %v1712 = vunpack.c.h.b16 %v1645
  %v1713 = vunpack.c.l.b16 %v1646
  %v1714 = vunpack.c.h.b16 %v1646
  %v1715 = vunpack.c.l.b16 %v1647
  %v1716 = vunpack.c.h.b16 %v1647
  %v1717 = vunpack.c.l.b16 %v1648
  %v1718 = vunpack.c.h.b16 %v1648
  %v1719 = vunpack.c.l.b16 %v1649
  %v1720 = vunpack.c.h.b16 %v1649
  %v1721 = vunpack.c.l.b16 %v1650
  %v1722 = vunpack.c.h.b16 %v1650
  %v1723 = vunpack.c.l.b16 %v1651
  %v1724 = vunpack.c.h.b16 %v1651
  %v1725 = vunpack.c.l.b16 %v1652
  %v1726 = vunpack.c.h.b16 %v1652
  %v1727 = vunpack.c.l.b16 %v1653
  %v1728 = vunpack.c.h.b16 %v1653
  %v1729 = vunpack.c.l.b16 %v1654
  %v1730 = vunpack.c.h.b16 %v1654
  %v1731 = vunpack.c.l.b16 %v1655
  %v1732 = vunpack.c.h.b16 %v1655
  %v1733 = vunpack.c.l.b16 %v1656
  %v1734 = vunpack.c.h.b16 %v1656
  %v1735 = vunpack.c.l.b16 %v1657
  %v1736 = vunpack.c.h.b16 %v1657
  %v1737 = vunpack.c.l.b16 %v1658
  %v1738 = vunpack.c.h.b16 %v1658
  %v1739 = vunpack.c.l.b16 %v1659
  %v1740 = vunpack.c.h.b16 %v1659
  %v1741 = vunpack.c.l.b16 %v1660
  %v1742 = vunpack.c.h.b16 %v1660
  %v1743 = vunpack.c.l.b16 %v1661
  %v1744 = vunpack.c.h.b16 %v1661
  %v1745 = vunpack.c.l.b16 %v1662
  %v1746 = vunpack.c.h.b16 %v1662
  %v1747 = vunpack.c.l.b16 %v1663
  %v1748 = vunpack.c.h.b16 %v1663
  %v1749 = vunpack.c.l.b16 %v1664
  %v1750 = vunpack.c.h.b16 %v1664
  %v1751 = vunpack.c.l.b16 %v1665
  %v1752 = vunpack.c.h.b16 %v1665
  %v1753 = vunpack.c.l.b16 %v1666
  %v1754 = vunpack.c.h.b16 %v1666
  %v1755 = vunpack.c.l.b16 %v1667
  %v1756 = vunpack.c.h.b16 %v1667
  %v1757 = vunpack.c.l.b16 %v1668
  %v1758 = vunpack.c.h.b16 %v1668
  %v1759 = vunpack.c.l.b16 %v1669
  %v1760 = vunpack.c.h.b16 %v1669
  %v1761 = vunpack.c.l.b16 %v1670
  %v1762 = vunpack.c.h.b16 %v1670
  %v1763 = vunpack.c.l.b16 %v1671
  %v1764 = vunpack.c.h.b16 %v1671
  %v1765 = vunpack.c.l.b16 %v1672
  %v1766 = vunpack.c.h.b16 %v1672
  %v1767 = vunpack.c.l.b16 %v1673
  %v1768 = vunpack.c.h.b16 %v1673
  %v1769 = vunpack.c.l.b16 %v1674
  %v1770 = vunpack.c.h.b16 %v1674
  %v1771 = vpack.c.b16 %v1707, %v1707
  %v1772 = vpack.c.b16 %v1708, %v1708
  %v1773 = vpack.c.b16 %v1709, %v1709
  %v1774 = vpack.c.b16 %v1710, %v1710
  %v1775 = vpack.c.b16 %v1711, %v1711
  %v1776 = vpack.c.b16 %v1712, %v1712
  %v1777 = vpack.c.b16 %v1713, %v1713
  %v1778 = vpack.c.b16 %v1714, %v1714
  %v1779 = vpack.c.b16 %v1715, %v1715
  %v1780 = vpack.c.b16 %v1716, %v1716
  %v1781 = vpack.c.b16 %v1717, %v1717
  %v1782 = vpack.c.b16 %v1718, %v1718
  %v1783 = vpack.c.b16 %v1719, %v1719
  %v1784 = vpack.c.b16 %v1720, %v1720
  %v1785 = vpack.c.b16 %v1721, %v1721
  %v1786 = vpack.c.b16 %v1722, %v1722
  %v1787 = vpack.c.b16 %v1723, %v1723
  %v1788 = vpack.c.b16 %v1724, %v1724
  %v1789 = vpack.c.b16 %v1725, %v1725
  %v1790 = vpack.c.b16 %v1726, %v1726
  %v1791 = vpack.c.b16 %v1727, %v1727
  %v1792 = vpack.c.b16 %v1728, %v1728
  %v1793 = vpack.c.b16 %v1729, %v1729
  %v1794 = vpack.c.b16 %v1730, %v1730
  %v1795 = vpack.c.b16 %v1731, %v1731
  %v1796 = vpack.c.b16 %v1732, %v1732
  %v1797 = vpack.c.b16 %v1733, %v1733
  %v1798 = vpack.c.b16 %v1734, %v1734
  %v1799 = vpack.c.b16 %v1735, %v1735
  %v1800 = vpack.c.b16 %v1736, %v1736
  %v1801 = vpack.c.b16 %v1737, %v1737
  %v1802 = vpack.c.b16 %v1738, %v1738
  %v1803 = vpack.c.b16 %v1739, %v1739
  %v1804 = vpack.c.b16 %v1740, %v1740
  %v1805 = vpack.c.b16 %v1741, %v1741
  %v1806 = vpack.c.b16 %v1742, %v1742
  %v1807 = vpack.c.b16 %v1743, %v1743
  %v1808 = vpack.c.b16 %v1744, %v1744
  %v1809 = vpack.c.b16 %v1745, %v1745
  %v1810 = vpack.c.b16 %v1746, %v1746
  %v1811 = vpack.c.b16 %v1747, %v1747
  %v1812 = vpack.c.b16 %v1748, %v1748
  %v1813 = vpack.c.b16 %v1749, %v1749
  %v1814 = vpack.c.b16 %v1750, %v1750
  %v1815 = vpack.c.b16 %v1751, %v1751
  %v1816 = vpack.c.b16 %v1752, %v1752
  %v1817 = vpack.c.b16 %v1753, %v1753
  %v1818 = vpack.c.b16 %v1754, %v1754
  %v1819 = vpack.c.b16 %v1755, %v1755
  %v1820 = vpack.c.b16 %v1756, %v1756
  %v1821 = vpack.c.b16 %v1757, %v1757
  %v1822 = vpack.c.b16 %v1758, %v1758
  %v1823 = vpack.c.b16 %v1759, %v1759
  %v1824 = vpack.c.b16 %v1760, %v1760
  %v1825 = vpack.c.b16 %v1761, %v1761
  %v1826 = vpack.c.b16 %v1762, %v1762
  %v1827 = vpack.c.b16 %v1763, %v1763
  %v1828 = vpack.c.b16 %v1764, %v1764
  %v1829 = vpack.c.b16 %v1765, %v1765
  %v1830 = vpack.c.b16 %v1766, %v1766
  %v1831 = vpack.c.b16 %v1767, %v1767
  %v1832 = vpack.c.b16 %v1768, %v1768
  %v1833 = vpack.c.b16 %v1769, %v1769
  %v1834 = vpack.c.b16 %v1770, %v1770
  %1899 = vst [vmem:[%s7] sm:$0xf] %v1771
  %1900 = vst [vmem:[%s7 + $0x4] sm:$0xf] %v1772
  %1901 = vst [vmem:[%s7 + $0x8] sm:$0xf] %v1773
  %1902 = vst [vmem:[%s7 + $0xc] sm:$0xf] %v1774
  %1903 = vst [vmem:[%s7 + $0x10] sm:$0xf] %v1775
  %1904 = vst [vmem:[%s7 + $0x14] sm:$0xf] %v1776
  %1905 = vst [vmem:[%s7 + $0x18] sm:$0xf] %v1777
  %1906 = vst [vmem:[%s7 + $0x1c] sm:$0xf] %v1778
  %1907 = vst [vmem:[%s7 + $0x20] sm:$0xf] %v1779
  %1908 = vst [vmem:[%s7 + $0x24] sm:$0xf] %v1780
  %1909 = vst [vmem:[%s7 + $0x28] sm:$0xf] %v1781
  %1910 = vst [vmem:[%s7 + $0x2c] sm:$0xf] %v1782
  %1911 = vst [vmem:[%s7 + $0x30] sm:$0xf] %v1783
  %1912 = vst [vmem:[%s7 + $0x34] sm:$0xf] %v1784
  %1913 = vst [vmem:[%s7 + $0x38] sm:$0xf] %v1785
  %1914 = vst [vmem:[%s7 + $0x3c] sm:$0xf] %v1786
  %1915 = vst [vmem:[%s7 + $0x40] sm:$0xf] %v1787
  %1916 = vst [vmem:[%s7 + $0x44] sm:$0xf] %v1788
  %1917 = vst [vmem:[%s7 + $0x48] sm:$0xf] %v1789
  %1918 = vst [vmem:[%s7 + $0x4c] sm:$0xf] %v1790
  %1919 = vst [vmem:[%s7 + $0x50] sm:$0xf] %v1791
  %1920 = vst [vmem:[%s7 + $0x54] sm:$0xf] %v1792
  %1921 = vst [vmem:[%s7 + $0x58] sm:$0xf] %v1793
  %1922 = vst [vmem:[%s7 + $0x5c] sm:$0xf] %v1794
  %1923 = vst [vmem:[%s7 + $0x60] sm:$0xf] %v1795
  %1924 = vst [vmem:[%s7 + $0x64] sm:$0xf] %v1796
  %1925 = vst [vmem:[%s7 + $0x68] sm:$0xf] %v1797
  %1926 = vst [vmem:[%s7 + $0x6c] sm:$0xf] %v1798
  %1927 = vst [vmem:[%s7 + $0x70] sm:$0xf] %v1799
  %1928 = vst [vmem:[%s7 + $0x74] sm:$0xf] %v1800
  %1929 = vst [vmem:[%s7 + $0x78] sm:$0xf] %v1801
  %1930 = vst [vmem:[%s7 + $0x7c] sm:$0xf] %v1802
  %1931 = vst [vmem:[%s7 + $0x80] sm:$0xf] %v1803
  %1932 = vst [vmem:[%s7 + $0x84] sm:$0xf] %v1804
  %1933 = vst [vmem:[%s7 + $0x88] sm:$0xf] %v1805
  %1934 = vst [vmem:[%s7 + $0x8c] sm:$0xf] %v1806
  %1935 = vst [vmem:[%s7 + $0x90] sm:$0xf] %v1807
  %1936 = vst [vmem:[%s7 + $0x94] sm:$0xf] %v1808
  %1937 = vst [vmem:[%s7 + $0x98] sm:$0xf] %v1809
  %1938 = vst [vmem:[%s7 + $0x9c] sm:$0xf] %v1810
  %1939 = vst [vmem:[%s7 + $0xa0] sm:$0xf] %v1811
  %1940 = vst [vmem:[%s7 + $0xa4] sm:$0xf] %v1812
  %1941 = vst [vmem:[%s7 + $0xa8] sm:$0xf] %v1813
  %1942 = vst [vmem:[%s7 + $0xac] sm:$0xf] %v1814
  %1943 = vst [vmem:[%s7 + $0xb0] sm:$0xf] %v1815
  %1944 = vst [vmem:[%s7 + $0xb4] sm:$0xf] %v1816
  %1945 = vst [vmem:[%s7 + $0xb8] sm:$0xf] %v1817
  %1946 = vst [vmem:[%s7 + $0xbc] sm:$0xf] %v1818
  %1947 = vst [vmem:[%s7 + $0xc0] sm:$0xf] %v1819
  %1948 = vst [vmem:[%s7 + $0xc4] sm:$0xf] %v1820
  %1949 = vst [vmem:[%s7 + $0xc8] sm:$0xf] %v1821
  %1950 = vst [vmem:[%s7 + $0xcc] sm:$0xf] %v1822
  %1951 = vst [vmem:[%s7 + $0xd0] sm:$0xf] %v1823
  %1952 = vst [vmem:[%s7 + $0xd4] sm:$0xf] %v1824
  %1953 = vst [vmem:[%s7 + $0xd8] sm:$0xf] %v1825
  %1954 = vst [vmem:[%s7 + $0xdc] sm:$0xf] %v1826
  %1955 = vst [vmem:[%s7 + $0xe0] sm:$0xf] %v1827
  %1956 = vst [vmem:[%s7 + $0xe4] sm:$0xf] %v1828
  %1957 = vst [vmem:[%s7 + $0xe8] sm:$0xf] %v1829
  %1958 = vst [vmem:[%s7 + $0xec] sm:$0xf] %v1830
  %1959 = vst [vmem:[%s7 + $0xf0] sm:$0xf] %v1831
  %1960 = vst [vmem:[%s7 + $0xf4] sm:$0xf] %v1832
  %1961 = vst [vmem:[%s7 + $0xf8] sm:$0xf] %v1833
  %1962 = vst [vmem:[%s7 + $0xfc] sm:$0xf] %v1834
  // Predicated region
  $region30: #{_lambda_.19} parent=0 // pred_check
    _
  $region31: #{_lambda_.19} parent=0 // pred_check_branch
    %1964 = sbr.rel (0) target = $region33
  $region32: #{_lambda_.19} parent=0 // pred_region
    _
  $region33: #{_lambda_.19} parent=0 // pred_fallthru
    _
  // Predicated region
  $region34: #{_lambda_.19} parent=0 // pred_check
    _
  $region35: #{_lambda_.19} parent=0 // pred_check_branch
    %1966 = sbr.rel (0) target = $region37
  $region36: #{_lambda_.19} parent=0 // pred_region
    _
  $region37: #{_lambda_.19} parent=0 // pred_fallthru
    _

// kernel: _lambda_.24
$region0: #{_lambda_.24}
  #allocation0 [shape = 'u32[]', space=smem, size = 0x4, offset = 0x4, fixed_abs, tag = 'smem constant byte address 0x4 - core index']
  #allocation1 [shape = 'u32[144,128]{1,0:T(1,128)}', space=vmem, size = 0x12000, scoped, tag = 'internal scratch']
  %s0 = inlined_call_operand.vmem [shape: bf16[512,128], index: 0, kind: input, shape index: {}, may-alias: {0,10}]
  %s1 = inlined_call_operand.vmem [shape: bf16[512,128], index: 1, kind: input, shape index: {}]
  %s2 = inlined_call_operand.vmem [shape: bf16[512,128], index: 2, kind: input, shape index: {}]
  %s3 = inlined_call_operand.vmem [shape: bf16[512,128], index: 3, kind: input, shape index: {}]
  %s4 = inlined_call_operand.vmem [shape: bf16[128,128], index: 4, kind: input, shape index: {}]
  %s5 = inlined_call_operand.vmem [shape: bf16[128,128], index: 5, kind: input, shape index: {}]
  %s6 = inlined_call_operand.vmem [shape: bf16[128,128], index: 6, kind: input, shape index: {}]
  %s7 = inlined_call_operand.vmem [shape: bf16[128,128], index: 7, kind: input, shape index: {}]
  %s8 = inlined_call_operand.vmem [shape: f32[1,128], index: 8, kind: input, shape index: {}]
  %s9 = inlined_call_operand.vmem [shape: f32[1,128], index: 9, kind: input, shape index: {}]
  %s10 = inlined_call_operand.vmem [shape: bf16[512,128], index: 10, kind: input, shape index: {}, may-alias: {0,10}]
  %s11 = inlined_call_operand.vmem [shape: bf16[512,128], index: 11, kind: output, shape index: {}]
  %s12 = sld [smem:[#allocation0]]
  $region54: #{_lambda_.24} parent=0
    _
  %s14 = ssub.s32 1, %s12
  %s15 = scalar_select 0, %s14, %s12
  // Predicated region
  $region2: #{_lambda_.24} parent=0 // pred_check
    _
  $region3: #{_lambda_.24} parent=0 // pred_check_branch
    %17 = sbr.rel (0) target = $region5
  $region4: #{_lambda_.24} parent=0 // pred_region
    _
  $region5: #{_lambda_.24} parent=0 // pred_fallthru
    _
  // Predicated region
  $region6: #{_lambda_.24} parent=0 // pred_check
    _
  $region7: #{_lambda_.24} parent=0 // pred_check_branch
    %19 = sbr.rel (0) target = $region9
  $region8: #{_lambda_.24} parent=0 // pred_region
    _
  $region9: #{_lambda_.24} parent=0 // pred_fallthru
    _
  // Predicated region
  $region10: #{_lambda_.24} parent=0 // pred_check
    _
  $region11: #{_lambda_.24} parent=0 // pred_check_branch
    %21 = sbr.rel (0) target = $region13
  $region12: #{_lambda_.24} parent=0 // pred_region
    _
  $region13: #{_lambda_.24} parent=0 // pred_fallthru
    _
  // Predicated region
  $region14: #{_lambda_.24} parent=0 // pred_check
    _
  $region15: #{_lambda_.24} parent=0 // pred_check_branch
    %23 = sbr.rel (0) target = $region17
  $region16: #{_lambda_.24} parent=0 // pred_region
    _
  $region17: #{_lambda_.24} parent=0 // pred_fallthru
    _
  // Predicated region
  $region18: #{_lambda_.24} parent=0 // pred_check
    _
  $region19: #{_lambda_.24} parent=0 // pred_check_branch
    %25 = sbr.rel (0) target = $region21
  $region20: #{_lambda_.24} parent=0 // pred_region
    _
  $region21: #{_lambda_.24} parent=0 // pred_fallthru
    _
  // Predicated region
  $region22: #{_lambda_.24} parent=0 // pred_check
    _
  $region23: #{_lambda_.24} parent=0 // pred_check_branch
    %27 = sbr.rel (0) target = $region25
  $region24: #{_lambda_.24} parent=0 // pred_region
    _
  $region25: #{_lambda_.24} parent=0 // pred_fallthru
    _
  // Predicated region
  $region26: #{_lambda_.24} parent=0 // pred_check
    _
  $region27: #{_lambda_.24} parent=0 // pred_check_branch
    %29 = sbr.rel (0) target = $region29
  $region28: #{_lambda_.24} parent=0 // pred_region
    _
  $region29: #{_lambda_.24} parent=0 // pred_fallthru
    _
  // Predicated region
  $region30: #{_lambda_.24} parent=0 // pred_check
    _
  $region31: #{_lambda_.24} parent=0 // pred_check_branch
    %31 = sbr.rel (0) target = $region33
  $region32: #{_lambda_.24} parent=0 // pred_region
    _
  $region33: #{_lambda_.24} parent=0 // pred_fallthru
    _
  // Predicated region
  $region34: #{_lambda_.24} parent=0 // pred_check
    _
  $region35: #{_lambda_.24} parent=0 // pred_check_branch
    %33 = sbr.rel (0) target = $region37
  $region36: #{_lambda_.24} parent=0 // pred_region
    _
  $region37: #{_lambda_.24} parent=0 // pred_fallthru
    _
  // Predicated region
  $region38: #{_lambda_.24} parent=0 // pred_check
    _
  $region39: #{_lambda_.24} parent=0 // pred_check_branch
    %35 = sbr.rel (0) target = $region41
  $region40: #{_lambda_.24} parent=0 // pred_region
    _
  $region41: #{_lambda_.24} parent=0 // pred_fallthru
    _
  // Predicated region
  $region42: #{_lambda_.24} parent=0 // pred_check
    _
  $region43: #{_lambda_.24} parent=0 // pred_check_branch
    %37 = sbr.rel (0) target = $region45
  $region44: #{_lambda_.24} parent=0 // pred_region
    _
  $region45: #{_lambda_.24} parent=0 // pred_fallthru
    _
  %v39 = vld [vmem:[%s0] sm:$0xf]
  %v40 = vld [vmem:[%s0 + $0x4] sm:$0xf]
  %v41 = vld [vmem:[%s0 + $0x8] sm:$0xf]
  %v42 = vld [vmem:[%s0 + $0xc] sm:$0xf]
  %v43 = vld [vmem:[%s0 + $0x10] sm:$0xf]
  %v44 = vld [vmem:[%s0 + $0x14] sm:$0xf]
  %v45 = vld [vmem:[%s0 + $0x18] sm:$0xf]
  %v46 = vld [vmem:[%s0 + $0x1c] sm:$0xf]
  %v47 = vld [vmem:[%s0 + $0x20] sm:$0xf]
  %v48 = vld [vmem:[%s0 + $0x24] sm:$0xf]
  %v49 = vld [vmem:[%s0 + $0x28] sm:$0xf]
  %v50 = vld [vmem:[%s0 + $0x2c] sm:$0xf]
  %v51 = vld [vmem:[%s0 + $0x30] sm:$0xf]
  %v52 = vld [vmem:[%s0 + $0x34] sm:$0xf]
  %v53 = vld [vmem:[%s0 + $0x38] sm:$0xf]
  %v54 = vld [vmem:[%s0 + $0x3c] sm:$0xf]
  %v55 = vld [vmem:[%s0 + $0x40] sm:$0xf]
  %v56 = vld [vmem:[%s0 + $0x44] sm:$0xf]
  %v57 = vld [vmem:[%s0 + $0x48] sm:$0xf]
  %v58 = vld [vmem:[%s0 + $0x4c] sm:$0xf]
  %v59 = vld [vmem:[%s0 + $0x50] sm:$0xf]
  %v60 = vld [vmem:[%s0 + $0x54] sm:$0xf]
  %v61 = vld [vmem:[%s0 + $0x58] sm:$0xf]
  %v62 = vld [vmem:[%s0 + $0x5c] sm:$0xf]
  %v63 = vld [vmem:[%s0 + $0x60] sm:$0xf]
  %v64 = vld [vmem:[%s0 + $0x64] sm:$0xf]
  %v65 = vld [vmem:[%s0 + $0x68] sm:$0xf]
  %v66 = vld [vmem:[%s0 + $0x6c] sm:$0xf]
  %v67 = vld [vmem:[%s0 + $0x70] sm:$0xf]
  %v68 = vld [vmem:[%s0 + $0x74] sm:$0xf]
  %v69 = vld [vmem:[%s0 + $0x78] sm:$0xf]
  %v70 = vld [vmem:[%s0 + $0x7c] sm:$0xf]
  %v71 = vld [vmem:[%s0 + $0x80] sm:$0xf]
  %v72 = vld [vmem:[%s0 + $0x84] sm:$0xf]
  %v73 = vld [vmem:[%s0 + $0x88] sm:$0xf]
  %v74 = vld [vmem:[%s0 + $0x8c] sm:$0xf]
  %v75 = vld [vmem:[%s0 + $0x90] sm:$0xf]
  %v76 = vld [vmem:[%s0 + $0x94] sm:$0xf]
  %v77 = vld [vmem:[%s0 + $0x98] sm:$0xf]
  %v78 = vld [vmem:[%s0 + $0x9c] sm:$0xf]
  %v79 = vld [vmem:[%s0 + $0xa0] sm:$0xf]
  %v80 = vld [vmem:[%s0 + $0xa4] sm:$0xf]
  %v81 = vld [vmem:[%s0 + $0xa8] sm:$0xf]
  %v82 = vld [vmem:[%s0 + $0xac] sm:$0xf]
  %v83 = vld [vmem:[%s0 + $0xb0] sm:$0xf]
  %v84 = vld [vmem:[%s0 + $0xb4] sm:$0xf]
  %v85 = vld [vmem:[%s0 + $0xb8] sm:$0xf]
  %v86 = vld [vmem:[%s0 + $0xbc] sm:$0xf]
  %v87 = vld [vmem:[%s0 + $0xc0] sm:$0xf]
  %v88 = vld [vmem:[%s0 + $0xc4] sm:$0xf]
  %v89 = vld [vmem:[%s0 + $0xc8] sm:$0xf]
  %v90 = vld [vmem:[%s0 + $0xcc] sm:$0xf]
  %v91 = vld [vmem:[%s0 + $0xd0] sm:$0xf]
  %v92 = vld [vmem:[%s0 + $0xd4] sm:$0xf]
  %v93 = vld [vmem:[%s0 + $0xd8] sm:$0xf]
  %v94 = vld [vmem:[%s0 + $0xdc] sm:$0xf]
  %v95 = vld [vmem:[%s0 + $0xe0] sm:$0xf]
  %v96 = vld [vmem:[%s0 + $0xe4] sm:$0xf]
  %v97 = vld [vmem:[%s0 + $0xe8] sm:$0xf]
  %v98 = vld [vmem:[%s0 + $0xec] sm:$0xf]
  %v99 = vld [vmem:[%s0 + $0xf0] sm:$0xf]
  %v100 = vld [vmem:[%s0 + $0xf4] sm:$0xf]
  %v101 = vld [vmem:[%s0 + $0xf8] sm:$0xf]
  %v102 = vld [vmem:[%s0 + $0xfc] sm:$0xf]
  %v103 = vld [vmem:[%s4] sm:$0xf]
  %v104 = vld [vmem:[%s4 + $0x4] sm:$0xf]
  %v105 = vld [vmem:[%s4 + $0x8] sm:$0xf]
  %v106 = vld [vmem:[%s4 + $0xc] sm:$0xf]
  %v107 = vld [vmem:[%s4 + $0x10] sm:$0xf]
  %v108 = vld [vmem:[%s4 + $0x14] sm:$0xf]
  %v109 = vld [vmem:[%s4 + $0x18] sm:$0xf]
  %v110 = vld [vmem:[%s4 + $0x1c] sm:$0xf]
  %v111 = vld [vmem:[%s4 + $0x20] sm:$0xf]
  %v112 = vld [vmem:[%s4 + $0x24] sm:$0xf]
  %v113 = vld [vmem:[%s4 + $0x28] sm:$0xf]
  %v114 = vld [vmem:[%s4 + $0x2c] sm:$0xf]
  %v115 = vld [vmem:[%s4 + $0x30] sm:$0xf]
  %v116 = vld [vmem:[%s4 + $0x34] sm:$0xf]
  %v117 = vld [vmem:[%s4 + $0x38] sm:$0xf]
  %v118 = vld [vmem:[%s4 + $0x3c] sm:$0xf]
  %v119 = vld [vmem:[%s1] sm:$0xf]
  %v120 = vld [vmem:[%s1 + $0x4] sm:$0xf]
  %v121 = vld [vmem:[%s1 + $0x8] sm:$0xf]
  %v122 = vld [vmem:[%s1 + $0xc] sm:$0xf]
  %v123 = vld [vmem:[%s1 + $0x10] sm:$0xf]
  %v124 = vld [vmem:[%s1 + $0x14] sm:$0xf]
  %v125 = vld [vmem:[%s1 + $0x18] sm:$0xf]
  %v126 = vld [vmem:[%s1 + $0x1c] sm:$0xf]
  %v127 = vld [vmem:[%s1 + $0x20] sm:$0xf]
  %v128 = vld [vmem:[%s1 + $0x24] sm:$0xf]
  %v129 = vld [vmem:[%s1 + $0x28] sm:$0xf]
  %v130 = vld [vmem:[%s1 + $0x2c] sm:$0xf]
  %v131 = vld [vmem:[%s1 + $0x30] sm:$0xf]
  %v132 = vld [vmem:[%s1 + $0x34] sm:$0xf]
  %v133 = vld [vmem:[%s1 + $0x38] sm:$0xf]
  %v134 = vld [vmem:[%s1 + $0x3c] sm:$0xf]
  %v135 = vld [vmem:[%s1 + $0x40] sm:$0xf]
  %v136 = vld [vmem:[%s1 + $0x44] sm:$0xf]
  %v137 = vld [vmem:[%s1 + $0x48] sm:$0xf]
  %v138 = vld [vmem:[%s1 + $0x4c] sm:$0xf]
  %v139 = vld [vmem:[%s1 + $0x50] sm:$0xf]
  %v140 = vld [vmem:[%s1 + $0x54] sm:$0xf]
  %v141 = vld [vmem:[%s1 + $0x58] sm:$0xf]
  %v142 = vld [vmem:[%s1 + $0x5c] sm:$0xf]
  %v143 = vld [vmem:[%s1 + $0x60] sm:$0xf]
  %v144 = vld [vmem:[%s1 + $0x64] sm:$0xf]
  %v145 = vld [vmem:[%s1 + $0x68] sm:$0xf]
  %v146 = vld [vmem:[%s1 + $0x6c] sm:$0xf]
  %v147 = vld [vmem:[%s1 + $0x70] sm:$0xf]
  %v148 = vld [vmem:[%s1 + $0x74] sm:$0xf]
  %v149 = vld [vmem:[%s1 + $0x78] sm:$0xf]
  %v150 = vld [vmem:[%s1 + $0x7c] sm:$0xf]
  %v151 = vld [vmem:[%s1 + $0x80] sm:$0xf]
  %v152 = vld [vmem:[%s1 + $0x84] sm:$0xf]
  %v153 = vld [vmem:[%s1 + $0x88] sm:$0xf]
  %v154 = vld [vmem:[%s1 + $0x8c] sm:$0xf]
  %v155 = vld [vmem:[%s1 + $0x90] sm:$0xf]
  %v156 = vld [vmem:[%s1 + $0x94] sm:$0xf]
  %v157 = vld [vmem:[%s1 + $0x98] sm:$0xf]
  %v158 = vld [vmem:[%s1 + $0x9c] sm:$0xf]
  %v159 = vld [vmem:[%s1 + $0xa0] sm:$0xf]
  %v160 = vld [vmem:[%s1 + $0xa4] sm:$0xf]
  %v161 = vld [vmem:[%s1 + $0xa8] sm:$0xf]
  %v162 = vld [vmem:[%s1 + $0xac] sm:$0xf]
  %v163 = vld [vmem:[%s1 + $0xb0] sm:$0xf]
  %v164 = vld [vmem:[%s1 + $0xb4] sm:$0xf]
  %v165 = vld [vmem:[%s1 + $0xb8] sm:$0xf]
  %v166 = vld [vmem:[%s1 + $0xbc] sm:$0xf]
  %v167 = vld [vmem:[%s1 + $0xc0] sm:$0xf]
  %v168 = vld [vmem:[%s1 + $0xc4] sm:$0xf]
  %v169 = vld [vmem:[%s1 + $0xc8] sm:$0xf]
  %v170 = vld [vmem:[%s1 + $0xcc] sm:$0xf]
  %v171 = vld [vmem:[%s1 + $0xd0] sm:$0xf]
  %v172 = vld [vmem:[%s1 + $0xd4] sm:$0xf]
  %v173 = vld [vmem:[%s1 + $0xd8] sm:$0xf]
  %v174 = vld [vmem:[%s1 + $0xdc] sm:$0xf]
  %v175 = vld [vmem:[%s1 + $0xe0] sm:$0xf]
  %v176 = vld [vmem:[%s1 + $0xe4] sm:$0xf]
  %v177 = vld [vmem:[%s1 + $0xe8] sm:$0xf]
  %v178 = vld [vmem:[%s1 + $0xec] sm:$0xf]
  %v179 = vld [vmem:[%s1 + $0xf0] sm:$0xf]
  %v180 = vld [vmem:[%s1 + $0xf4] sm:$0xf]
  %v181 = vld [vmem:[%s1 + $0xf8] sm:$0xf]
  %v182 = vld [vmem:[%s1 + $0xfc] sm:$0xf]
  %v183 = vld [vmem:[%s5] sm:$0xf]
  %v184 = vld [vmem:[%s5 + $0x4] sm:$0xf]
  %v185 = vld [vmem:[%s5 + $0x8] sm:$0xf]
  %v186 = vld [vmem:[%s5 + $0xc] sm:$0xf]
  %v187 = vld [vmem:[%s5 + $0x10] sm:$0xf]
  %v188 = vld [vmem:[%s5 + $0x14] sm:$0xf]
  %v189 = vld [vmem:[%s5 + $0x18] sm:$0xf]
  %v190 = vld [vmem:[%s5 + $0x1c] sm:$0xf]
  %v191 = vld [vmem:[%s5 + $0x20] sm:$0xf]
  %v192 = vld [vmem:[%s5 + $0x24] sm:$0xf]
  %v193 = vld [vmem:[%s5 + $0x28] sm:$0xf]
  %v194 = vld [vmem:[%s5 + $0x2c] sm:$0xf]
  %v195 = vld [vmem:[%s5 + $0x30] sm:$0xf]
  %v196 = vld [vmem:[%s5 + $0x34] sm:$0xf]
  %v197 = vld [vmem:[%s5 + $0x38] sm:$0xf]
  %v198 = vld [vmem:[%s5 + $0x3c] sm:$0xf]
  %v263 = vunpack.c.l.b16 %v119
  %v264 = vunpack.c.l.b16 %v120
  %v265 = vunpack.c.l.b16 %v121
  %v266 = vunpack.c.l.b16 %v122
  %v267 = vunpack.c.l.b16 %v123
  %v268 = vunpack.c.l.b16 %v124
  %v269 = vunpack.c.l.b16 %v125
  %v270 = vunpack.c.l.b16 %v126
  %v271 = vunpack.c.l.b16 %v127
  %v272 = vunpack.c.l.b16 %v128
  %v273 = vunpack.c.l.b16 %v129
  %v274 = vunpack.c.l.b16 %v130
  %v275 = vunpack.c.l.b16 %v131
  %v276 = vunpack.c.l.b16 %v132
  %v277 = vunpack.c.l.b16 %v133
  %v278 = vunpack.c.l.b16 %v134
  %v279 = vunpack.c.l.b16 %v135
  %v280 = vunpack.c.l.b16 %v136
  %v281 = vunpack.c.l.b16 %v137
  %v282 = vunpack.c.l.b16 %v138
  %v283 = vunpack.c.l.b16 %v139
  %v284 = vunpack.c.l.b16 %v140
  %v285 = vunpack.c.l.b16 %v141
  %v286 = vunpack.c.l.b16 %v142
  %v287 = vunpack.c.l.b16 %v143
  %v288 = vunpack.c.l.b16 %v144
  %v289 = vunpack.c.l.b16 %v145
  %v290 = vunpack.c.l.b16 %v146
  %v291 = vunpack.c.l.b16 %v147
  %v292 = vunpack.c.l.b16 %v148
  %v293 = vunpack.c.l.b16 %v149
  %v294 = vunpack.c.l.b16 %v150
  %v295 = vunpack.c.l.b16 %v151
  %v296 = vunpack.c.l.b16 %v152
  %v297 = vunpack.c.l.b16 %v153
  %v298 = vunpack.c.l.b16 %v154
  %v299 = vunpack.c.l.b16 %v155
  %v300 = vunpack.c.l.b16 %v156
  %v301 = vunpack.c.l.b16 %v157
  %v302 = vunpack.c.l.b16 %v158
  %v303 = vunpack.c.l.b16 %v159
  %v304 = vunpack.c.l.b16 %v160
  %v305 = vunpack.c.l.b16 %v161
  %v306 = vunpack.c.l.b16 %v162
  %v307 = vunpack.c.l.b16 %v163
  %v308 = vunpack.c.l.b16 %v164
  %v309 = vunpack.c.l.b16 %v165
  %v310 = vunpack.c.l.b16 %v166
  %v311 = vunpack.c.l.b16 %v167
  %v312 = vunpack.c.l.b16 %v168
  %v313 = vunpack.c.l.b16 %v169
  %v314 = vunpack.c.l.b16 %v170
  %v315 = vunpack.c.l.b16 %v171
  %v316 = vunpack.c.l.b16 %v172
  %v317 = vunpack.c.l.b16 %v173
  %v318 = vunpack.c.l.b16 %v174
  %v319 = vunpack.c.l.b16 %v175
  %v320 = vunpack.c.l.b16 %v176
  %v321 = vunpack.c.l.b16 %v177
  %v322 = vunpack.c.l.b16 %v178
  %v323 = vunpack.c.l.b16 %v179
  %v324 = vunpack.c.l.b16 %v180
  %v325 = vunpack.c.l.b16 %v181
  %v326 = vunpack.c.l.b16 %v182
  %v327 = vpack.c.b16 %v264, %v263
  %v328 = vpack.c.b16 %v266, %v265
  %v329 = vpack.c.b16 %v268, %v267
  %v330 = vpack.c.b16 %v270, %v269
  %v331 = vpack.c.b16 %v272, %v271
  %v332 = vpack.c.b16 %v274, %v273
  %v333 = vpack.c.b16 %v276, %v275
  %v334 = vpack.c.b16 %v278, %v277
  %v335 = vpack.c.b16 %v280, %v279
  %v336 = vpack.c.b16 %v282, %v281
  %v337 = vpack.c.b16 %v284, %v283
  %v338 = vpack.c.b16 %v286, %v285
  %v339 = vpack.c.b16 %v288, %v287
  %v340 = vpack.c.b16 %v290, %v289
  %v341 = vpack.c.b16 %v292, %v291
  %v342 = vpack.c.b16 %v294, %v293
  %v343 = vpack.c.b16 %v296, %v295
  %v344 = vpack.c.b16 %v298, %v297
  %v345 = vpack.c.b16 %v300, %v299
  %v346 = vpack.c.b16 %v302, %v301
  %v347 = vpack.c.b16 %v304, %v303
  %v348 = vpack.c.b16 %v306, %v305
  %v349 = vpack.c.b16 %v308, %v307
  %v350 = vpack.c.b16 %v310, %v309
  %v351 = vpack.c.b16 %v312, %v311
  %v352 = vpack.c.b16 %v314, %v313
  %v353 = vpack.c.b16 %v316, %v315
  %v354 = vpack.c.b16 %v318, %v317
  %v355 = vpack.c.b16 %v320, %v319
  %v356 = vpack.c.b16 %v322, %v321
  %v357 = vpack.c.b16 %v324, %v323
  %v358 = vpack.c.b16 %v326, %v325
  %v407 = vunpack.c.l.b16 %v183
  %v408 = vunpack.c.l.b16 %v184
  %v409 = vunpack.c.l.b16 %v185
  %v410 = vunpack.c.l.b16 %v186
  %v411 = vunpack.c.l.b16 %v187
  %v412 = vunpack.c.l.b16 %v188
  %v413 = vunpack.c.l.b16 %v189
  %v414 = vunpack.c.l.b16 %v190
  %v415 = vunpack.c.l.b16 %v191
  %v416 = vunpack.c.l.b16 %v192
  %v417 = vunpack.c.l.b16 %v193
  %v418 = vunpack.c.l.b16 %v194
  %v419 = vunpack.c.l.b16 %v195
  %v420 = vunpack.c.l.b16 %v196
  %v421 = vunpack.c.l.b16 %v197
  %v422 = vunpack.c.l.b16 %v198
  %v423 = vpack.c.b16 %v408, %v407
  %v424 = vpack.c.b16 %v410, %v409
  %v425 = vpack.c.b16 %v412, %v411
  %v426 = vpack.c.b16 %v414, %v413
  %v427 = vpack.c.b16 %v416, %v415
  %v428 = vpack.c.b16 %v418, %v417
  %v429 = vpack.c.b16 %v420, %v419
  %v430 = vpack.c.b16 %v422, %v421
  %439 = vmatprep.subr.bf16.mxu0 0
  %440 = vmatpush1.bf16.msra.mxu0 %v430
  %441 = vmatprep.subr.bf16.mxu0 0
  %442 = vmatpush1.bf16.msra.mxu0 %v429
  %443 = vmatprep.subr.bf16.mxu0 0
  %444 = vmatpush1.bf16.msra.mxu0 %v428
  %445 = vmatprep.subr.bf16.mxu0 0
  %446 = vmatpush1.bf16.msra.mxu0 %v427
  %447 = vmatprep.subr.bf16.mxu0 0
  %448 = vmatpush1.bf16.msra.mxu0 %v426
  %449 = vmatprep.subr.bf16.mxu0 0
  %450 = vmatpush1.bf16.msra.mxu0 %v425
  %451 = vmatprep.subr.bf16.mxu0 0
  %452 = vmatpush1.bf16.msra.mxu0 %v424
  %453 = vmatprep.subr.bf16.mxu0 0
  %454 = vmatpush1.bf16.msra.mxu0 %v423
  %455 = vmatprep.subr.bf16.mxu0 0
  %456 = vmatpush2.bf16.msra.mxu0 0
  %457 = vmatprep.subr.bf16.mxu0 0
  %458 = vmatpush2.bf16.msra.mxu0 0
  %459 = vmatprep.subr.bf16.mxu0 0
  %460 = vmatpush2.bf16.msra.mxu0 0
  %461 = vmatprep.subr.bf16.mxu0 0
  %462 = vmatpush2.bf16.msra.mxu0 0
  %463 = vmatprep.subr.bf16.mxu0 0
  %464 = vmatpush2.bf16.msra.mxu0 0
  %465 = vmatprep.subr.bf16.mxu0 0
  %466 = vmatpush2.bf16.msra.mxu0 0
  %467 = vmatprep.subr.bf16.mxu0 0
  %468 = vmatpush2.bf16.msra.mxu0 0
  %469 = vmatprep.subr.bf16.mxu0 0
  %470 = vmatpush2.bf16.msra.mxu0 0
  %471 = vmatprep.mubr.bf16.mxu0 0
  %472 = vmatmul.mubr.bf16.gmra.mxu0 %v327
  %v473 = vpop.f32.mrf.mxu0
  %v474 = vadd.f32 0.0, %v473
  %v475 = vpop.f32.mrf.mxu0
  %v476 = vpop.f32.mrf.mxu0
  %v477 = vadd.f32 0.0, %v476
  %v478 = vpop.f32.mrf.mxu0
  %479 = vmatprep.mubr.bf16.mxu0 0
  %480 = vmatmul.mubr.bf16.gmra.mxu0 %v328
  %v481 = vpop.f32.mrf.mxu0
  %v482 = vadd.f32 0.0, %v481
  %v483 = vpop.f32.mrf.mxu0
  %v484 = vpop.f32.mrf.mxu0
  %v485 = vadd.f32 0.0, %v484
  %v486 = vpop.f32.mrf.mxu0
  %487 = vmatprep.mubr.bf16.mxu0 0
  %488 = vmatmul.mubr.bf16.gmra.mxu0 %v329
  %v489 = vpop.f32.mrf.mxu0
  %v490 = vadd.f32 0.0, %v489
  %v491 = vpop.f32.mrf.mxu0
  %v492 = vpop.f32.mrf.mxu0
  %v493 = vadd.f32 0.0, %v492
  %v494 = vpop.f32.mrf.mxu0
  %495 = vmatprep.mubr.bf16.mxu0 0
  %496 = vmatmul.mubr.bf16.gmra.mxu0 %v330
  %v497 = vpop.f32.mrf.mxu0
  %v498 = vadd.f32 0.0, %v497
  %v499 = vpop.f32.mrf.mxu0
  %v500 = vpop.f32.mrf.mxu0
  %v501 = vadd.f32 0.0, %v500
  %v502 = vpop.f32.mrf.mxu0
  %503 = vmatprep.mubr.bf16.mxu0 0
  %504 = vmatmul.mubr.bf16.gmra.mxu0 %v331
  %v505 = vpop.f32.mrf.mxu0
  %v506 = vadd.f32 0.0, %v505
  %v507 = vpop.f32.mrf.mxu0
  %v508 = vpop.f32.mrf.mxu0
  %v509 = vadd.f32 0.0, %v508
  %v510 = vpop.f32.mrf.mxu0
  %511 = vmatprep.mubr.bf16.mxu0 0
  %512 = vmatmul.mubr.bf16.gmra.mxu0 %v332
  %v513 = vpop.f32.mrf.mxu0
  %v514 = vadd.f32 0.0, %v513
  %v515 = vpop.f32.mrf.mxu0
  %v516 = vpop.f32.mrf.mxu0
  %v517 = vadd.f32 0.0, %v516
  %v518 = vpop.f32.mrf.mxu0
  %519 = vmatprep.mubr.bf16.mxu0 0
  %520 = vmatmul.mubr.bf16.gmra.mxu0 %v333
  %v521 = vpop.f32.mrf.mxu0
  %v522 = vadd.f32 0.0, %v521
  %v523 = vpop.f32.mrf.mxu0
  %v524 = vpop.f32.mrf.mxu0
  %v525 = vadd.f32 0.0, %v524
  %v526 = vpop.f32.mrf.mxu0
  %527 = vmatprep.mubr.bf16.mxu0 0
  %528 = vmatmul.mubr.bf16.gmra.mxu0 %v334
  %v529 = vpop.f32.mrf.mxu0
  %v530 = vadd.f32 0.0, %v529
  %v531 = vpop.f32.mrf.mxu0
  %v532 = vpop.f32.mrf.mxu0
  %v533 = vadd.f32 0.0, %v532
  %v534 = vpop.f32.mrf.mxu0
  %535 = vmatprep.mubr.bf16.mxu0 0
  %536 = vmatmul.mubr.bf16.gmra.mxu0 %v335
  %v537 = vpop.f32.mrf.mxu0
  %v538 = vadd.f32 0.0, %v537
  %v539 = vpop.f32.mrf.mxu0
  %v540 = vpop.f32.mrf.mxu0
  %v541 = vadd.f32 0.0, %v540
  %v542 = vpop.f32.mrf.mxu0
  %543 = vmatprep.mubr.bf16.mxu0 0
  %544 = vmatmul.mubr.bf16.gmra.mxu0 %v336
  %v545 = vpop.f32.mrf.mxu0
  %v546 = vadd.f32 0.0, %v545
  %v547 = vpop.f32.mrf.mxu0
  %v548 = vpop.f32.mrf.mxu0
  %v549 = vadd.f32 0.0, %v548
  %v550 = vpop.f32.mrf.mxu0
  %551 = vmatprep.mubr.bf16.mxu0 0
  %552 = vmatmul.mubr.bf16.gmra.mxu0 %v337
  %v553 = vpop.f32.mrf.mxu0
  %v554 = vadd.f32 0.0, %v553
  %v555 = vpop.f32.mrf.mxu0
  %v556 = vpop.f32.mrf.mxu0
  %v557 = vadd.f32 0.0, %v556
  %v558 = vpop.f32.mrf.mxu0
  %559 = vmatprep.mubr.bf16.mxu0 0
  %560 = vmatmul.mubr.bf16.gmra.mxu0 %v338
  %v561 = vpop.f32.mrf.mxu0
  %v562 = vadd.f32 0.0, %v561
  %v563 = vpop.f32.mrf.mxu0
  %v564 = vpop.f32.mrf.mxu0
  %v565 = vadd.f32 0.0, %v564
  %v566 = vpop.f32.mrf.mxu0
  %567 = vmatprep.mubr.bf16.mxu0 0
  %568 = vmatmul.mubr.bf16.gmra.mxu0 %v339
  %v569 = vpop.f32.mrf.mxu0
  %v570 = vadd.f32 0.0, %v569
  %v571 = vpop.f32.mrf.mxu0
  %v572 = vpop.f32.mrf.mxu0
  %v573 = vadd.f32 0.0, %v572
  %v574 = vpop.f32.mrf.mxu0
  %575 = vmatprep.mubr.bf16.mxu0 0
  %576 = vmatmul.mubr.bf16.gmra.mxu0 %v340
  %v577 = vpop.f32.mrf.mxu0
  %v578 = vadd.f32 0.0, %v577
  %v579 = vpop.f32.mrf.mxu0
  %v580 = vpop.f32.mrf.mxu0
  %v581 = vadd.f32 0.0, %v580
  %v582 = vpop.f32.mrf.mxu0
  %583 = vmatprep.mubr.bf16.mxu0 0
  %584 = vmatmul.mubr.bf16.gmra.mxu0 %v341
  %v585 = vpop.f32.mrf.mxu0
  %v586 = vadd.f32 0.0, %v585
  %v587 = vpop.f32.mrf.mxu0
  %v588 = vpop.f32.mrf.mxu0
  %v589 = vadd.f32 0.0, %v588
  %v590 = vpop.f32.mrf.mxu0
  %591 = vmatprep.mubr.bf16.mxu0 0
  %592 = vmatmul.mubr.bf16.gmra.mxu0 %v342
  %v593 = vpop.f32.mrf.mxu0
  %v594 = vadd.f32 0.0, %v593
  %v595 = vpop.f32.mrf.mxu0
  %v596 = vpop.f32.mrf.mxu0
  %v597 = vadd.f32 0.0, %v596
  %v598 = vpop.f32.mrf.mxu0
  %599 = vmatprep.mubr.bf16.mxu0 0
  %600 = vmatmul.mubr.bf16.gmra.mxu0 %v343
  %v601 = vpop.f32.mrf.mxu0
  %v602 = vadd.f32 0.0, %v601
  %v603 = vpop.f32.mrf.mxu0
  %v604 = vpop.f32.mrf.mxu0
  %v605 = vadd.f32 0.0, %v604
  %v606 = vpop.f32.mrf.mxu0
  %607 = vmatprep.mubr.bf16.mxu0 0
  %608 = vmatmul.mubr.bf16.gmra.mxu0 %v344
  %v609 = vpop.f32.mrf.mxu0
  %v610 = vadd.f32 0.0, %v609
  %v611 = vpop.f32.mrf.mxu0
  %v612 = vpop.f32.mrf.mxu0
  %v613 = vadd.f32 0.0, %v612
  %v614 = vpop.f32.mrf.mxu0
  %615 = vmatprep.mubr.bf16.mxu0 0
  %616 = vmatmul.mubr.bf16.gmra.mxu0 %v345
  %v617 = vpop.f32.mrf.mxu0
  %v618 = vadd.f32 0.0, %v617
  %v619 = vpop.f32.mrf.mxu0
  %v620 = vpop.f32.mrf.mxu0
  %v621 = vadd.f32 0.0, %v620
  %v622 = vpop.f32.mrf.mxu0
  %623 = vmatprep.mubr.bf16.mxu0 0
  %624 = vmatmul.mubr.bf16.gmra.mxu0 %v346
  %v625 = vpop.f32.mrf.mxu0
  %v626 = vadd.f32 0.0, %v625
  %v627 = vpop.f32.mrf.mxu0
  %v628 = vpop.f32.mrf.mxu0
  %v629 = vadd.f32 0.0, %v628
  %v630 = vpop.f32.mrf.mxu0
  %631 = vmatprep.mubr.bf16.mxu0 0
  %632 = vmatmul.mubr.bf16.gmra.mxu0 %v347
  %v633 = vpop.f32.mrf.mxu0
  %v634 = vadd.f32 0.0, %v633
  %v635 = vpop.f32.mrf.mxu0
  %v636 = vpop.f32.mrf.mxu0
  %v637 = vadd.f32 0.0, %v636
  %v638 = vpop.f32.mrf.mxu0
  %639 = vmatprep.mubr.bf16.mxu0 0
  %640 = vmatmul.mubr.bf16.gmra.mxu0 %v348
  %v641 = vpop.f32.mrf.mxu0
  %v642 = vadd.f32 0.0, %v641
  %v643 = vpop.f32.mrf.mxu0
  %v644 = vpop.f32.mrf.mxu0
  %v645 = vadd.f32 0.0, %v644
  %v646 = vpop.f32.mrf.mxu0
  %647 = vmatprep.mubr.bf16.mxu0 0
  %648 = vmatmul.mubr.bf16.gmra.mxu0 %v349
  %v649 = vpop.f32.mrf.mxu0
  %v650 = vadd.f32 0.0, %v649
  %v651 = vpop.f32.mrf.mxu0
  %v652 = vpop.f32.mrf.mxu0
  %v653 = vadd.f32 0.0, %v652
  %v654 = vpop.f32.mrf.mxu0
  %655 = vmatprep.mubr.bf16.mxu0 0
  %656 = vmatmul.mubr.bf16.gmra.mxu0 %v350
  %v657 = vpop.f32.mrf.mxu0
  %v658 = vadd.f32 0.0, %v657
  %v659 = vpop.f32.mrf.mxu0
  %v660 = vpop.f32.mrf.mxu0
  %v661 = vadd.f32 0.0, %v660
  %v662 = vpop.f32.mrf.mxu0
  %663 = vmatprep.mubr.bf16.mxu0 0
  %664 = vmatmul.mubr.bf16.gmra.mxu0 %v351
  %v665 = vpop.f32.mrf.mxu0
  %v666 = vadd.f32 0.0, %v665
  %v667 = vpop.f32.mrf.mxu0
  %v668 = vpop.f32.mrf.mxu0
  %v669 = vadd.f32 0.0, %v668
  %v670 = vpop.f32.mrf.mxu0
  %671 = vmatprep.mubr.bf16.mxu0 0
  %672 = vmatmul.mubr.bf16.gmra.mxu0 %v352
  %v673 = vpop.f32.mrf.mxu0
  %v674 = vadd.f32 0.0, %v673
  %v675 = vpop.f32.mrf.mxu0
  %v676 = vpop.f32.mrf.mxu0
  %v677 = vadd.f32 0.0, %v676
  %v678 = vpop.f32.mrf.mxu0
  %679 = vmatprep.mubr.bf16.mxu0 0
  %680 = vmatmul.mubr.bf16.gmra.mxu0 %v353
  %v681 = vpop.f32.mrf.mxu0
  %v682 = vadd.f32 0.0, %v681
  %v683 = vpop.f32.mrf.mxu0
  %v684 = vpop.f32.mrf.mxu0
  %v685 = vadd.f32 0.0, %v684
  %v686 = vpop.f32.mrf.mxu0
  %687 = vmatprep.mubr.bf16.mxu0 0
  %688 = vmatmul.mubr.bf16.gmra.mxu0 %v354
  %v689 = vpop.f32.mrf.mxu0
  %v690 = vadd.f32 0.0, %v689
  %v691 = vpop.f32.mrf.mxu0
  %v692 = vpop.f32.mrf.mxu0
  %v693 = vadd.f32 0.0, %v692
  %v694 = vpop.f32.mrf.mxu0
  %695 = vmatprep.mubr.bf16.mxu0 0
  %696 = vmatmul.mubr.bf16.gmra.mxu0 %v355
  %v697 = vpop.f32.mrf.mxu0
  %v698 = vadd.f32 0.0, %v697
  %v699 = vpop.f32.mrf.mxu0
  %v700 = vpop.f32.mrf.mxu0
  %v701 = vadd.f32 0.0, %v700
  %v702 = vpop.f32.mrf.mxu0
  %703 = vmatprep.mubr.bf16.mxu0 0
  %704 = vmatmul.mubr.bf16.gmra.mxu0 %v356
  %v705 = vpop.f32.mrf.mxu0
  %v706 = vadd.f32 0.0, %v705
  %v707 = vpop.f32.mrf.mxu0
  %v708 = vpop.f32.mrf.mxu0
  %v709 = vadd.f32 0.0, %v708
  %v710 = vpop.f32.mrf.mxu0
  %711 = vmatprep.mubr.bf16.mxu0 0
  %712 = vmatmul.mubr.bf16.gmra.mxu0 %v357
  %v713 = vpop.f32.mrf.mxu0
  %v714 = vadd.f32 0.0, %v713
  %v715 = vpop.f32.mrf.mxu0
  %v716 = vpop.f32.mrf.mxu0
  %v717 = vadd.f32 0.0, %v716
  %v718 = vpop.f32.mrf.mxu0
  %719 = vmatprep.mubr.bf16.mxu0 0
  %720 = vmatmul.mubr.bf16.gmra.mxu0 %v358
  %v721 = vpop.f32.mrf.mxu0
  %v722 = vadd.f32 0.0, %v721
  %v723 = vpop.f32.mrf.mxu0
  %v724 = vpop.f32.mrf.mxu0
  %v725 = vadd.f32 0.0, %v724
  %v726 = vpop.f32.mrf.mxu0
  %727 = vdwg.mxu0
  %v792 = vunpack.c.l.b16 %v39
  %v793 = vunpack.c.l.b16 %v40
  %v794 = vunpack.c.l.b16 %v41
  %v795 = vunpack.c.l.b16 %v42
  %v796 = vunpack.c.l.b16 %v43
  %v797 = vunpack.c.l.b16 %v44
  %v798 = vunpack.c.l.b16 %v45
  %v799 = vunpack.c.l.b16 %v46
  %v800 = vunpack.c.l.b16 %v47
  %v801 = vunpack.c.l.b16 %v48
  %v802 = vunpack.c.l.b16 %v49
  %v803 = vunpack.c.l.b16 %v50
  %v804 = vunpack.c.l.b16 %v51
  %v805 = vunpack.c.l.b16 %v52
  %v806 = vunpack.c.l.b16 %v53
  %v807 = vunpack.c.l.b16 %v54
  %v808 = vunpack.c.l.b16 %v55
  %v809 = vunpack.c.l.b16 %v56
  %v810 = vunpack.c.l.b16 %v57
  %v811 = vunpack.c.l.b16 %v58
  %v812 = vunpack.c.l.b16 %v59
  %v813 = vunpack.c.l.b16 %v60
  %v814 = vunpack.c.l.b16 %v61
  %v815 = vunpack.c.l.b16 %v62
  %v816 = vunpack.c.l.b16 %v63
  %v817 = vunpack.c.l.b16 %v64
  %v818 = vunpack.c.l.b16 %v65
  %v819 = vunpack.c.l.b16 %v66
  %v820 = vunpack.c.l.b16 %v67
  %v821 = vunpack.c.l.b16 %v68
  %v822 = vunpack.c.l.b16 %v69
  %v823 = vunpack.c.l.b16 %v70
  %v824 = vunpack.c.l.b16 %v71
  %v825 = vunpack.c.l.b16 %v72
  %v826 = vunpack.c.l.b16 %v73
  %v827 = vunpack.c.l.b16 %v74
  %v828 = vunpack.c.l.b16 %v75
  %v829 = vunpack.c.l.b16 %v76
  %v830 = vunpack.c.l.b16 %v77
  %v831 = vunpack.c.l.b16 %v78
  %v832 = vunpack.c.l.b16 %v79
  %v833 = vunpack.c.l.b16 %v80
  %v834 = vunpack.c.l.b16 %v81
  %v835 = vunpack.c.l.b16 %v82
  %v836 = vunpack.c.l.b16 %v83
  %v837 = vunpack.c.l.b16 %v84
  %v838 = vunpack.c.l.b16 %v85
  %v839 = vunpack.c.l.b16 %v86
  %v840 = vunpack.c.l.b16 %v87
  %v841 = vunpack.c.l.b16 %v88
  %v842 = vunpack.c.l.b16 %v89
  %v843 = vunpack.c.l.b16 %v90
  %v844 = vunpack.c.l.b16 %v91
  %v845 = vunpack.c.l.b16 %v92
  %v846 = vunpack.c.l.b16 %v93
  %v847 = vunpack.c.l.b16 %v94
  %v848 = vunpack.c.l.b16 %v95
  %v849 = vunpack.c.l.b16 %v96
  %v850 = vunpack.c.l.b16 %v97
  %v851 = vunpack.c.l.b16 %v98
  %v852 = vunpack.c.l.b16 %v99
  %v853 = vunpack.c.l.b16 %v100
  %v854 = vunpack.c.l.b16 %v101
  %v855 = vunpack.c.l.b16 %v102
  %v856 = vpack.c.b16 %v793, %v792
  %v857 = vpack.c.b16 %v795, %v794
  %v858 = vpack.c.b16 %v797, %v796
  %v859 = vpack.c.b16 %v799, %v798
  %v860 = vpack.c.b16 %v801, %v800
  %v861 = vpack.c.b16 %v803, %v802
  %v862 = vpack.c.b16 %v805, %v804
  %v863 = vpack.c.b16 %v807, %v806
  %v864 = vpack.c.b16 %v809, %v808
  %v865 = vpack.c.b16 %v811, %v810
  %v866 = vpack.c.b16 %v813, %v812
  %v867 = vpack.c.b16 %v815, %v814
  %v868 = vpack.c.b16 %v817, %v816
  %v869 = vpack.c.b16 %v819, %v818
  %v870 = vpack.c.b16 %v821, %v820
  %v871 = vpack.c.b16 %v823, %v822
  %v872 = vpack.c.b16 %v825, %v824
  %v873 = vpack.c.b16 %v827, %v826
  %v874 = vpack.c.b16 %v829, %v828
  %v875 = vpack.c.b16 %v831, %v830
  %v876 = vpack.c.b16 %v833, %v832
  %v877 = vpack.c.b16 %v835, %v834
  %v878 = vpack.c.b16 %v837, %v836
  %v879 = vpack.c.b16 %v839, %v838
  %v880 = vpack.c.b16 %v841, %v840
  %v881 = vpack.c.b16 %v843, %v842
  %v882 = vpack.c.b16 %v845, %v844
  %v883 = vpack.c.b16 %v847, %v846
  %v884 = vpack.c.b16 %v849, %v848
  %v885 = vpack.c.b16 %v851, %v850
  %v886 = vpack.c.b16 %v853, %v852
  %v887 = vpack.c.b16 %v855, %v854
  %v936 = vunpack.c.l.b16 %v103
  %v937 = vunpack.c.l.b16 %v104
  %v938 = vunpack.c.l.b16 %v105
  %v939 = vunpack.c.l.b16 %v106
  %v940 = vunpack.c.l.b16 %v107
  %v941 = vunpack.c.l.b16 %v108
  %v942 = vunpack.c.l.b16 %v109
  %v943 = vunpack.c.l.b16 %v110
  %v944 = vunpack.c.l.b16 %v111
  %v945 = vunpack.c.l.b16 %v112
  %v946 = vunpack.c.l.b16 %v113
  %v947 = vunpack.c.l.b16 %v114
  %v948 = vunpack.c.l.b16 %v115
  %v949 = vunpack.c.l.b16 %v116
  %v950 = vunpack.c.l.b16 %v117
  %v951 = vunpack.c.l.b16 %v118
  %v952 = vpack.c.b16 %v937, %v936
  %v953 = vpack.c.b16 %v939, %v938
  %v954 = vpack.c.b16 %v941, %v940
  %v955 = vpack.c.b16 %v943, %v942
  %v956 = vpack.c.b16 %v945, %v944
  %v957 = vpack.c.b16 %v947, %v946
  %v958 = vpack.c.b16 %v949, %v948
  %v959 = vpack.c.b16 %v951, %v950
  %968 = vmatprep.subr.bf16.mxu0 0
  %969 = vmatpush1.bf16.msra.mxu0 %v959
  %970 = vmatprep.subr.bf16.mxu0 0
  %971 = vmatpush1.bf16.msra.mxu0 %v958
  %972 = vmatprep.subr.bf16.mxu0 0
  %973 = vmatpush1.bf16.msra.mxu0 %v957
  %974 = vmatprep.subr.bf16.mxu0 0
  %975 = vmatpush1.bf16.msra.mxu0 %v956
  %976 = vmatprep.subr.bf16.mxu0 0
  %977 = vmatpush1.bf16.msra.mxu0 %v955
  %978 = vmatprep.subr.bf16.mxu0 0
  %979 = vmatpush1.bf16.msra.mxu0 %v954
  %980 = vmatprep.subr.bf16.mxu0 0
  %981 = vmatpush1.bf16.msra.mxu0 %v953
  %982 = vmatprep.subr.bf16.mxu0 0
  %983 = vmatpush1.bf16.msra.mxu0 %v952
  %984 = vmatprep.subr.bf16.mxu0 0
  %985 = vmatpush2.bf16.msra.mxu0 0
  %986 = vmatprep.subr.bf16.mxu0 0
  %987 = vmatpush2.bf16.msra.mxu0 0
  %988 = vmatprep.subr.bf16.mxu0 0
  %989 = vmatpush2.bf16.msra.mxu0 0
  %990 = vmatprep.subr.bf16.mxu0 0
  %991 = vmatpush2.bf16.msra.mxu0 0
  %992 = vmatprep.subr.bf16.mxu0 0
  %993 = vmatpush2.bf16.msra.mxu0 0
  %994 = vmatprep.subr.bf16.mxu0 0
  %995 = vmatpush2.bf16.msra.mxu0 0
  %996 = vmatprep.subr.bf16.mxu0 0
  %997 = vmatpush2.bf16.msra.mxu0 0
  %998 = vmatprep.subr.bf16.mxu0 0
  %999 = vmatpush2.bf16.msra.mxu0 0
  %1000 = vmatprep.mubr.bf16.mxu0 0
  %1001 = vmatmul.mubr.bf16.gmra.mxu0 %v856
  %v1002 = vpop.f32.mrf.mxu0
  %v1003 = vadd.f32 %v474, %v1002
  %v1004 = vpop.f32.mrf.mxu0
  %v1005 = vpop.f32.mrf.mxu0
  %v1006 = vadd.f32 %v477, %v1005
  %v1007 = vpop.f32.mrf.mxu0
  %1008 = vmatprep.mubr.bf16.mxu0 0
  %1009 = vmatmul.mubr.bf16.gmra.mxu0 %v857
  %v1010 = vpop.f32.mrf.mxu0
  %v1011 = vadd.f32 %v482, %v1010
  %v1012 = vpop.f32.mrf.mxu0
  %v1013 = vpop.f32.mrf.mxu0
  %v1014 = vadd.f32 %v485, %v1013
  %v1015 = vpop.f32.mrf.mxu0
  %1016 = vmatprep.mubr.bf16.mxu0 0
  %1017 = vmatmul.mubr.bf16.gmra.mxu0 %v858
  %v1018 = vpop.f32.mrf.mxu0
  %v1019 = vadd.f32 %v490, %v1018
  %v1020 = vpop.f32.mrf.mxu0
  %v1021 = vpop.f32.mrf.mxu0
  %v1022 = vadd.f32 %v493, %v1021
  %v1023 = vpop.f32.mrf.mxu0
  %1024 = vmatprep.mubr.bf16.mxu0 0
  %1025 = vmatmul.mubr.bf16.gmra.mxu0 %v859
  %v1026 = vpop.f32.mrf.mxu0
  %v1027 = vadd.f32 %v498, %v1026
  %v1028 = vpop.f32.mrf.mxu0
  %v1029 = vpop.f32.mrf.mxu0
  %v1030 = vadd.f32 %v501, %v1029
  %v1031 = vpop.f32.mrf.mxu0
  %1032 = vmatprep.mubr.bf16.mxu0 0
  %1033 = vmatmul.mubr.bf16.gmra.mxu0 %v860
  %v1034 = vpop.f32.mrf.mxu0
  %v1035 = vadd.f32 %v506, %v1034
  %v1036 = vpop.f32.mrf.mxu0
  %v1037 = vpop.f32.mrf.mxu0
  %v1038 = vadd.f32 %v509, %v1037
  %v1039 = vpop.f32.mrf.mxu0
  %1040 = vmatprep.mubr.bf16.mxu0 0
  %1041 = vmatmul.mubr.bf16.gmra.mxu0 %v861
  %v1042 = vpop.f32.mrf.mxu0
  %v1043 = vadd.f32 %v514, %v1042
  %v1044 = vpop.f32.mrf.mxu0
  %v1045 = vpop.f32.mrf.mxu0
  %v1046 = vadd.f32 %v517, %v1045
  %v1047 = vpop.f32.mrf.mxu0
  %1048 = vmatprep.mubr.bf16.mxu0 0
  %1049 = vmatmul.mubr.bf16.gmra.mxu0 %v862
  %v1050 = vpop.f32.mrf.mxu0
  %v1051 = vadd.f32 %v522, %v1050
  %v1052 = vpop.f32.mrf.mxu0
  %v1053 = vpop.f32.mrf.mxu0
  %v1054 = vadd.f32 %v525, %v1053
  %v1055 = vpop.f32.mrf.mxu0
  %1056 = vmatprep.mubr.bf16.mxu0 0
  %1057 = vmatmul.mubr.bf16.gmra.mxu0 %v863
  %v1058 = vpop.f32.mrf.mxu0
  %v1059 = vadd.f32 %v530, %v1058
  %v1060 = vpop.f32.mrf.mxu0
  %v1061 = vpop.f32.mrf.mxu0
  %v1062 = vadd.f32 %v533, %v1061
  %v1063 = vpop.f32.mrf.mxu0
  %1064 = vmatprep.mubr.bf16.mxu0 0
  %1065 = vmatmul.mubr.bf16.gmra.mxu0 %v864
  %v1066 = vpop.f32.mrf.mxu0
  %v1067 = vadd.f32 %v538, %v1066
  %v1068 = vpop.f32.mrf.mxu0
  %v1069 = vpop.f32.mrf.mxu0
  %v1070 = vadd.f32 %v541, %v1069
  %v1071 = vpop.f32.mrf.mxu0
  %1072 = vmatprep.mubr.bf16.mxu0 0
  %1073 = vmatmul.mubr.bf16.gmra.mxu0 %v865
  %v1074 = vpop.f32.mrf.mxu0
  %v1075 = vadd.f32 %v546, %v1074
  %v1076 = vpop.f32.mrf.mxu0
  %v1077 = vpop.f32.mrf.mxu0
  %v1078 = vadd.f32 %v549, %v1077
  %v1079 = vpop.f32.mrf.mxu0
  %1080 = vmatprep.mubr.bf16.mxu0 0
  %1081 = vmatmul.mubr.bf16.gmra.mxu0 %v866
  %v1082 = vpop.f32.mrf.mxu0
  %v1083 = vadd.f32 %v554, %v1082
  %v1084 = vpop.f32.mrf.mxu0
  %v1085 = vpop.f32.mrf.mxu0
  %v1086 = vadd.f32 %v557, %v1085
  %v1087 = vpop.f32.mrf.mxu0
  %1088 = vmatprep.mubr.bf16.mxu0 0
  %1089 = vmatmul.mubr.bf16.gmra.mxu0 %v867
  %v1090 = vpop.f32.mrf.mxu0
  %v1091 = vadd.f32 %v562, %v1090
  %v1092 = vpop.f32.mrf.mxu0
  %v1093 = vpop.f32.mrf.mxu0
  %v1094 = vadd.f32 %v565, %v1093
  %v1095 = vpop.f32.mrf.mxu0
  %1096 = vmatprep.mubr.bf16.mxu0 0
  %1097 = vmatmul.mubr.bf16.gmra.mxu0 %v868
  %v1098 = vpop.f32.mrf.mxu0
  %v1099 = vadd.f32 %v570, %v1098
  %v1100 = vpop.f32.mrf.mxu0
  %v1101 = vpop.f32.mrf.mxu0
  %v1102 = vadd.f32 %v573, %v1101
  %v1103 = vpop.f32.mrf.mxu0
  %1104 = vmatprep.mubr.bf16.mxu0 0
  %1105 = vmatmul.mubr.bf16.gmra.mxu0 %v869
  %v1106 = vpop.f32.mrf.mxu0
  %v1107 = vadd.f32 %v578, %v1106
  %v1108 = vpop.f32.mrf.mxu0
  %v1109 = vpop.f32.mrf.mxu0
  %v1110 = vadd.f32 %v581, %v1109
  %v1111 = vpop.f32.mrf.mxu0
  %1112 = vmatprep.mubr.bf16.mxu0 0
  %1113 = vmatmul.mubr.bf16.gmra.mxu0 %v870
  %v1114 = vpop.f32.mrf.mxu0
  %v1115 = vadd.f32 %v586, %v1114
  %v1116 = vpop.f32.mrf.mxu0
  %v1117 = vpop.f32.mrf.mxu0
  %v1118 = vadd.f32 %v589, %v1117
  %v1119 = vpop.f32.mrf.mxu0
  %1120 = vmatprep.mubr.bf16.mxu0 0
  %1121 = vmatmul.mubr.bf16.gmra.mxu0 %v871
  %v1122 = vpop.f32.mrf.mxu0
  %v1123 = vadd.f32 %v594, %v1122
  %v1124 = vpop.f32.mrf.mxu0
  %v1125 = vpop.f32.mrf.mxu0
  %v1126 = vadd.f32 %v597, %v1125
  %v1127 = vpop.f32.mrf.mxu0
  %1128 = vmatprep.mubr.bf16.mxu0 0
  %1129 = vmatmul.mubr.bf16.gmra.mxu0 %v872
  %v1130 = vpop.f32.mrf.mxu0
  %v1131 = vadd.f32 %v602, %v1130
  %v1132 = vpop.f32.mrf.mxu0
  %v1133 = vpop.f32.mrf.mxu0
  %v1134 = vadd.f32 %v605, %v1133
  %v1135 = vpop.f32.mrf.mxu0
  %1136 = vmatprep.mubr.bf16.mxu0 0
  %1137 = vmatmul.mubr.bf16.gmra.mxu0 %v873
  %v1138 = vpop.f32.mrf.mxu0
  %v1139 = vadd.f32 %v610, %v1138
  %v1140 = vpop.f32.mrf.mxu0
  %v1141 = vpop.f32.mrf.mxu0
  %v1142 = vadd.f32 %v613, %v1141
  %v1143 = vpop.f32.mrf.mxu0
  %1144 = vmatprep.mubr.bf16.mxu0 0
  %1145 = vmatmul.mubr.bf16.gmra.mxu0 %v874
  %v1146 = vpop.f32.mrf.mxu0
  %v1147 = vadd.f32 %v618, %v1146
  %v1148 = vpop.f32.mrf.mxu0
  %v1149 = vpop.f32.mrf.mxu0
  %v1150 = vadd.f32 %v621, %v1149
  %v1151 = vpop.f32.mrf.mxu0
  %1152 = vmatprep.mubr.bf16.mxu0 0
  %1153 = vmatmul.mubr.bf16.gmra.mxu0 %v875
  %v1154 = vpop.f32.mrf.mxu0
  %v1155 = vadd.f32 %v626, %v1154
  %v1156 = vpop.f32.mrf.mxu0
  %v1157 = vpop.f32.mrf.mxu0
  %v1158 = vadd.f32 %v629, %v1157
  %v1159 = vpop.f32.mrf.mxu0
  %1160 = vmatprep.mubr.bf16.mxu0 0
  %1161 = vmatmul.mubr.bf16.gmra.mxu0 %v876
  %v1162 = vpop.f32.mrf.mxu0
  %v1163 = vadd.f32 %v634, %v1162
  %v1164 = vpop.f32.mrf.mxu0
  %v1165 = vpop.f32.mrf.mxu0
  %v1166 = vadd.f32 %v637, %v1165
  %v1167 = vpop.f32.mrf.mxu0
  %1168 = vmatprep.mubr.bf16.mxu0 0
  %1169 = vmatmul.mubr.bf16.gmra.mxu0 %v877
  %v1170 = vpop.f32.mrf.mxu0
  %v1171 = vadd.f32 %v642, %v1170
  %v1172 = vpop.f32.mrf.mxu0
  %v1173 = vpop.f32.mrf.mxu0
  %v1174 = vadd.f32 %v645, %v1173
  %v1175 = vpop.f32.mrf.mxu0
  %1176 = vmatprep.mubr.bf16.mxu0 0
  %1177 = vmatmul.mubr.bf16.gmra.mxu0 %v878
  %v1178 = vpop.f32.mrf.mxu0
  %v1179 = vadd.f32 %v650, %v1178
  %v1180 = vpop.f32.mrf.mxu0
  %v1181 = vpop.f32.mrf.mxu0
  %v1182 = vadd.f32 %v653, %v1181
  %v1183 = vpop.f32.mrf.mxu0
  %1184 = vmatprep.mubr.bf16.mxu0 0
  %1185 = vmatmul.mubr.bf16.gmra.mxu0 %v879
  %v1186 = vpop.f32.mrf.mxu0
  %v1187 = vadd.f32 %v658, %v1186
  %v1188 = vpop.f32.mrf.mxu0
  %v1189 = vpop.f32.mrf.mxu0
  %v1190 = vadd.f32 %v661, %v1189
  %v1191 = vpop.f32.mrf.mxu0
  %1192 = vmatprep.mubr.bf16.mxu0 0
  %1193 = vmatmul.mubr.bf16.gmra.mxu0 %v880
  %v1194 = vpop.f32.mrf.mxu0
  %v1195 = vadd.f32 %v666, %v1194
  %v1196 = vpop.f32.mrf.mxu0
  %v1197 = vpop.f32.mrf.mxu0
  %v1198 = vadd.f32 %v669, %v1197
  %v1199 = vpop.f32.mrf.mxu0
  %1200 = vmatprep.mubr.bf16.mxu0 0
  %1201 = vmatmul.mubr.bf16.gmra.mxu0 %v881
  %v1202 = vpop.f32.mrf.mxu0
  %v1203 = vadd.f32 %v674, %v1202
  %v1204 = vpop.f32.mrf.mxu0
  %v1205 = vpop.f32.mrf.mxu0
  %v1206 = vadd.f32 %v677, %v1205
  %v1207 = vpop.f32.mrf.mxu0
  %1208 = vmatprep.mubr.bf16.mxu0 0
  %1209 = vmatmul.mubr.bf16.gmra.mxu0 %v882
  %v1210 = vpop.f32.mrf.mxu0
  %v1211 = vadd.f32 %v682, %v1210
  %v1212 = vpop.f32.mrf.mxu0
  %v1213 = vpop.f32.mrf.mxu0
  %v1214 = vadd.f32 %v685, %v1213
  %v1215 = vpop.f32.mrf.mxu0
  %1216 = vmatprep.mubr.bf16.mxu0 0
  %1217 = vmatmul.mubr.bf16.gmra.mxu0 %v883
  %v1218 = vpop.f32.mrf.mxu0
  %v1219 = vadd.f32 %v690, %v1218
  %v1220 = vpop.f32.mrf.mxu0
  %v1221 = vpop.f32.mrf.mxu0
  %v1222 = vadd.f32 %v693, %v1221
  %v1223 = vpop.f32.mrf.mxu0
  %1224 = vmatprep.mubr.bf16.mxu0 0
  %1225 = vmatmul.mubr.bf16.gmra.mxu0 %v884
  %v1226 = vpop.f32.mrf.mxu0
  %v1227 = vadd.f32 %v698, %v1226
  %v1228 = vpop.f32.mrf.mxu0
  %v1229 = vpop.f32.mrf.mxu0
  %v1230 = vadd.f32 %v701, %v1229
  %v1231 = vpop.f32.mrf.mxu0
  %1232 = vmatprep.mubr.bf16.mxu0 0
  %1233 = vmatmul.mubr.bf16.gmra.mxu0 %v885
  %v1234 = vpop.f32.mrf.mxu0
  %v1235 = vadd.f32 %v706, %v1234
  %v1236 = vpop.f32.mrf.mxu0
  %v1237 = vpop.f32.mrf.mxu0
  %v1238 = vadd.f32 %v709, %v1237
  %v1239 = vpop.f32.mrf.mxu0
  %1240 = vmatprep.mubr.bf16.mxu0 0
  %1241 = vmatmul.mubr.bf16.gmra.mxu0 %v886
  %v1242 = vpop.f32.mrf.mxu0
  %v1243 = vadd.f32 %v714, %v1242
  %v1244 = vpop.f32.mrf.mxu0
  %v1245 = vpop.f32.mrf.mxu0
  %v1246 = vadd.f32 %v717, %v1245
  %v1247 = vpop.f32.mrf.mxu0
  %1248 = vmatprep.mubr.bf16.mxu0 0
  %1249 = vmatmul.mubr.bf16.gmra.mxu0 %v887
  %v1250 = vpop.f32.mrf.mxu0
  %v1251 = vadd.f32 %v722, %v1250
  %v1252 = vpop.f32.mrf.mxu0
  %v1253 = vpop.f32.mrf.mxu0
  %v1254 = vadd.f32 %v725, %v1253
  %v1255 = vpop.f32.mrf.mxu0
  %1256 = vdwg.mxu0
  %v1257 = vld [vmem:[%s2] sm:$0xf]
  %v1258 = vld [vmem:[%s2 + $0x4] sm:$0xf]
  %v1259 = vld [vmem:[%s2 + $0x8] sm:$0xf]
  %v1260 = vld [vmem:[%s2 + $0xc] sm:$0xf]
  %v1261 = vld [vmem:[%s2 + $0x10] sm:$0xf]
  %v1262 = vld [vmem:[%s2 + $0x14] sm:$0xf]
  %v1263 = vld [vmem:[%s2 + $0x18] sm:$0xf]
  %v1264 = vld [vmem:[%s2 + $0x1c] sm:$0xf]
  %v1265 = vld [vmem:[%s2 + $0x20] sm:$0xf]
  %v1266 = vld [vmem:[%s2 + $0x24] sm:$0xf]
  %v1267 = vld [vmem:[%s2 + $0x28] sm:$0xf]
  %v1268 = vld [vmem:[%s2 + $0x2c] sm:$0xf]
  %v1269 = vld [vmem:[%s2 + $0x30] sm:$0xf]
  %v1270 = vld [vmem:[%s2 + $0x34] sm:$0xf]
  %v1271 = vld [vmem:[%s2 + $0x38] sm:$0xf]
  %v1272 = vld [vmem:[%s2 + $0x3c] sm:$0xf]
  %v1273 = vld [vmem:[%s2 + $0x40] sm:$0xf]
  %v1274 = vld [vmem:[%s2 + $0x44] sm:$0xf]
  %v1275 = vld [vmem:[%s2 + $0x48] sm:$0xf]
  %v1276 = vld [vmem:[%s2 + $0x4c] sm:$0xf]
  %v1277 = vld [vmem:[%s2 + $0x50] sm:$0xf]
  %v1278 = vld [vmem:[%s2 + $0x54] sm:$0xf]
  %v1279 = vld [vmem:[%s2 + $0x58] sm:$0xf]
  %v1280 = vld [vmem:[%s2 + $0x5c] sm:$0xf]
  %v1281 = vld [vmem:[%s2 + $0x60] sm:$0xf]
  %v1282 = vld [vmem:[%s2 + $0x64] sm:$0xf]
  %v1283 = vld [vmem:[%s2 + $0x68] sm:$0xf]
  %v1284 = vld [vmem:[%s2 + $0x6c] sm:$0xf]
  %v1285 = vld [vmem:[%s2 + $0x70] sm:$0xf]
  %v1286 = vld [vmem:[%s2 + $0x74] sm:$0xf]
  %v1287 = vld [vmem:[%s2 + $0x78] sm:$0xf]
  %v1288 = vld [vmem:[%s2 + $0x7c] sm:$0xf]
  %v1289 = vld [vmem:[%s2 + $0x80] sm:$0xf]
  %v1290 = vld [vmem:[%s2 + $0x84] sm:$0xf]
  %v1291 = vld [vmem:[%s2 + $0x88] sm:$0xf]
  %v1292 = vld [vmem:[%s2 + $0x8c] sm:$0xf]
  %v1293 = vld [vmem:[%s2 + $0x90] sm:$0xf]
  %v1294 = vld [vmem:[%s2 + $0x94] sm:$0xf]
  %v1295 = vld [vmem:[%s2 + $0x98] sm:$0xf]
  %v1296 = vld [vmem:[%s2 + $0x9c] sm:$0xf]
  %v1297 = vld [vmem:[%s2 + $0xa0] sm:$0xf]
  %v1298 = vld [vmem:[%s2 + $0xa4] sm:$0xf]
  %v1299 = vld [vmem:[%s2 + $0xa8] sm:$0xf]
  %v1300 = vld [vmem:[%s2 + $0xac] sm:$0xf]
  %v1301 = vld [vmem:[%s2 + $0xb0] sm:$0xf]
  %v1302 = vld [vmem:[%s2 + $0xb4] sm:$0xf]
  %v1303 = vld [vmem:[%s2 + $0xb8] sm:$0xf]
  %v1304 = vld [vmem:[%s2 + $0xbc] sm:$0xf]
  %v1305 = vld [vmem:[%s2 + $0xc0] sm:$0xf]
  %v1306 = vld [vmem:[%s2 + $0xc4] sm:$0xf]
  %v1307 = vld [vmem:[%s2 + $0xc8] sm:$0xf]
  %v1308 = vld [vmem:[%s2 + $0xcc] sm:$0xf]
  %v1309 = vld [vmem:[%s2 + $0xd0] sm:$0xf]
  %v1310 = vld [vmem:[%s2 + $0xd4] sm:$0xf]
  %v1311 = vld [vmem:[%s2 + $0xd8] sm:$0xf]
  %v1312 = vld [vmem:[%s2 + $0xdc] sm:$0xf]
  %v1313 = vld [vmem:[%s2 + $0xe0] sm:$0xf]
  %v1314 = vld [vmem:[%s2 + $0xe4] sm:$0xf]
  %v1315 = vld [vmem:[%s2 + $0xe8] sm:$0xf]
  %v1316 = vld [vmem:[%s2 + $0xec] sm:$0xf]
  %v1317 = vld [vmem:[%s2 + $0xf0] sm:$0xf]
  %v1318 = vld [vmem:[%s2 + $0xf4] sm:$0xf]
  %v1319 = vld [vmem:[%s2 + $0xf8] sm:$0xf]
  %v1320 = vld [vmem:[%s2 + $0xfc] sm:$0xf]
  %v1321 = vld [vmem:[%s6] sm:$0xf]
  %v1322 = vld [vmem:[%s6 + $0x4] sm:$0xf]
  %v1323 = vld [vmem:[%s6 + $0x8] sm:$0xf]
  %v1324 = vld [vmem:[%s6 + $0xc] sm:$0xf]
  %v1325 = vld [vmem:[%s6 + $0x10] sm:$0xf]
  %v1326 = vld [vmem:[%s6 + $0x14] sm:$0xf]
  %v1327 = vld [vmem:[%s6 + $0x18] sm:$0xf]
  %v1328 = vld [vmem:[%s6 + $0x1c] sm:$0xf]
  %v1329 = vld [vmem:[%s6 + $0x20] sm:$0xf]
  %v1330 = vld [vmem:[%s6 + $0x24] sm:$0xf]
  %v1331 = vld [vmem:[%s6 + $0x28] sm:$0xf]
  %v1332 = vld [vmem:[%s6 + $0x2c] sm:$0xf]
  %v1333 = vld [vmem:[%s6 + $0x30] sm:$0xf]
  %v1334 = vld [vmem:[%s6 + $0x34] sm:$0xf]
  %v1335 = vld [vmem:[%s6 + $0x38] sm:$0xf]
  %v1336 = vld [vmem:[%s6 + $0x3c] sm:$0xf]
  %v1401 = vunpack.c.l.b16 %v1257
  %v1402 = vunpack.c.l.b16 %v1258
  %v1403 = vunpack.c.l.b16 %v1259
  %v1404 = vunpack.c.l.b16 %v1260
  %v1405 = vunpack.c.l.b16 %v1261
  %v1406 = vunpack.c.l.b16 %v1262
  %v1407 = vunpack.c.l.b16 %v1263
  %v1408 = vunpack.c.l.b16 %v1264
  %v1409 = vunpack.c.l.b16 %v1265
  %v1410 = vunpack.c.l.b16 %v1266
  %v1411 = vunpack.c.l.b16 %v1267
  %v1412 = vunpack.c.l.b16 %v1268
  %v1413 = vunpack.c.l.b16 %v1269
  %v1414 = vunpack.c.l.b16 %v1270
  %v1415 = vunpack.c.l.b16 %v1271
  %v1416 = vunpack.c.l.b16 %v1272
  %v1417 = vunpack.c.l.b16 %v1273
  %v1418 = vunpack.c.l.b16 %v1274
  %v1419 = vunpack.c.l.b16 %v1275
  %v1420 = vunpack.c.l.b16 %v1276
  %v1421 = vunpack.c.l.b16 %v1277
  %v1422 = vunpack.c.l.b16 %v1278
  %v1423 = vunpack.c.l.b16 %v1279
  %v1424 = vunpack.c.l.b16 %v1280
  %v1425 = vunpack.c.l.b16 %v1281
  %v1426 = vunpack.c.l.b16 %v1282
  %v1427 = vunpack.c.l.b16 %v1283
  %v1428 = vunpack.c.l.b16 %v1284
  %v1429 = vunpack.c.l.b16 %v1285
  %v1430 = vunpack.c.l.b16 %v1286
  %v1431 = vunpack.c.l.b16 %v1287
  %v1432 = vunpack.c.l.b16 %v1288
  %v1433 = vunpack.c.l.b16 %v1289
  %v1434 = vunpack.c.l.b16 %v1290
  %v1435 = vunpack.c.l.b16 %v1291
  %v1436 = vunpack.c.l.b16 %v1292
  %v1437 = vunpack.c.l.b16 %v1293
  %v1438 = vunpack.c.l.b16 %v1294
  %v1439 = vunpack.c.l.b16 %v1295
  %v1440 = vunpack.c.l.b16 %v1296
  %v1441 = vunpack.c.l.b16 %v1297
  %v1442 = vunpack.c.l.b16 %v1298
  %v1443 = vunpack.c.l.b16 %v1299
  %v1444 = vunpack.c.l.b16 %v1300
  %v1445 = vunpack.c.l.b16 %v1301
  %v1446 = vunpack.c.l.b16 %v1302
  %v1447 = vunpack.c.l.b16 %v1303
  %v1448 = vunpack.c.l.b16 %v1304
  %v1449 = vunpack.c.l.b16 %v1305
  %v1450 = vunpack.c.l.b16 %v1306
  %v1451 = vunpack.c.l.b16 %v1307
  %v1452 = vunpack.c.l.b16 %v1308
  %v1453 = vunpack.c.l.b16 %v1309
  %v1454 = vunpack.c.l.b16 %v1310
  %v1455 = vunpack.c.l.b16 %v1311
  %v1456 = vunpack.c.l.b16 %v1312
  %v1457 = vunpack.c.l.b16 %v1313
  %v1458 = vunpack.c.l.b16 %v1314
  %v1459 = vunpack.c.l.b16 %v1315
  %v1460 = vunpack.c.l.b16 %v1316
  %v1461 = vunpack.c.l.b16 %v1317
  %v1462 = vunpack.c.l.b16 %v1318
  %v1463 = vunpack.c.l.b16 %v1319
  %v1464 = vunpack.c.l.b16 %v1320
  %v1465 = vpack.c.b16 %v1402, %v1401
  %v1466 = vpack.c.b16 %v1404, %v1403
  %v1467 = vpack.c.b16 %v1406, %v1405
  %v1468 = vpack.c.b16 %v1408, %v1407
  %v1469 = vpack.c.b16 %v1410, %v1409
  %v1470 = vpack.c.b16 %v1412, %v1411
  %v1471 = vpack.c.b16 %v1414, %v1413
  %v1472 = vpack.c.b16 %v1416, %v1415
  %v1473 = vpack.c.b16 %v1418, %v1417
  %v1474 = vpack.c.b16 %v1420, %v1419
  %v1475 = vpack.c.b16 %v1422, %v1421
  %v1476 = vpack.c.b16 %v1424, %v1423
  %v1477 = vpack.c.b16 %v1426, %v1425
  %v1478 = vpack.c.b16 %v1428, %v1427
  %v1479 = vpack.c.b16 %v1430, %v1429
  %v1480 = vpack.c.b16 %v1432, %v1431
  %v1481 = vpack.c.b16 %v1434, %v1433
  %v1482 = vpack.c.b16 %v1436, %v1435
  %v1483 = vpack.c.b16 %v1438, %v1437
  %v1484 = vpack.c.b16 %v1440, %v1439
  %v1485 = vpack.c.b16 %v1442, %v1441
  %v1486 = vpack.c.b16 %v1444, %v1443
  %v1487 = vpack.c.b16 %v1446, %v1445
  %v1488 = vpack.c.b16 %v1448, %v1447
  %v1489 = vpack.c.b16 %v1450, %v1449
  %v1490 = vpack.c.b16 %v1452, %v1451
  %v1491 = vpack.c.b16 %v1454, %v1453
  %v1492 = vpack.c.b16 %v1456, %v1455
  %v1493 = vpack.c.b16 %v1458, %v1457
  %v1494 = vpack.c.b16 %v1460, %v1459
  %v1495 = vpack.c.b16 %v1462, %v1461
  %v1496 = vpack.c.b16 %v1464, %v1463
  %v1545 = vunpack.c.l.b16 %v1321
  %v1546 = vunpack.c.l.b16 %v1322
  %v1547 = vunpack.c.l.b16 %v1323
  %v1548 = vunpack.c.l.b16 %v1324
  %v1549 = vunpack.c.l.b16 %v1325
  %v1550 = vunpack.c.l.b16 %v1326
  %v1551 = vunpack.c.l.b16 %v1327
  %v1552 = vunpack.c.l.b16 %v1328
  %v1553 = vunpack.c.l.b16 %v1329
  %v1554 = vunpack.c.l.b16 %v1330
  %v1555 = vunpack.c.l.b16 %v1331
  %v1556 = vunpack.c.l.b16 %v1332
  %v1557 = vunpack.c.l.b16 %v1333
  %v1558 = vunpack.c.l.b16 %v1334
  %v1559 = vunpack.c.l.b16 %v1335
  %v1560 = vunpack.c.l.b16 %v1336
  %v1561 = vpack.c.b16 %v1546, %v1545
  %v1562 = vpack.c.b16 %v1548, %v1547
  %v1563 = vpack.c.b16 %v1550, %v1549
  %v1564 = vpack.c.b16 %v1552, %v1551
  %v1565 = vpack.c.b16 %v1554, %v1553
  %v1566 = vpack.c.b16 %v1556, %v1555
  %v1567 = vpack.c.b16 %v1558, %v1557
  %v1568 = vpack.c.b16 %v1560, %v1559
  %1577 = vmatprep.subr.bf16.mxu0 0
  %1578 = vmatpush1.bf16.msra.mxu0 %v1568
  %1579 = vmatprep.subr.bf16.mxu0 0
  %1580 = vmatpush1.bf16.msra.mxu0 %v1567
  %1581 = vmatprep.subr.bf16.mxu0 0
  %1582 = vmatpush1.bf16.msra.mxu0 %v1566
  %1583 = vmatprep.subr.bf16.mxu0 0
  %1584 = vmatpush1.bf16.msra.mxu0 %v1565
  %1585 = vmatprep.subr.bf16.mxu0 0
  %1586 = vmatpush1.bf16.msra.mxu0 %v1564
  %1587 = vmatprep.subr.bf16.mxu0 0
  %1588 = vmatpush1.bf16.msra.mxu0 %v1563
  %1589 = vmatprep.subr.bf16.mxu0 0
  %1590 = vmatpush1.bf16.msra.mxu0 %v1562
  %1591 = vmatprep.subr.bf16.mxu0 0
  %1592 = vmatpush1.bf16.msra.mxu0 %v1561
  %1593 = vmatprep.subr.bf16.mxu0 0
  %1594 = vmatpush2.bf16.msra.mxu0 0
  %1595 = vmatprep.subr.bf16.mxu0 0
  %1596 = vmatpush2.bf16.msra.mxu0 0
  %1597 = vmatprep.subr.bf16.mxu0 0
  %1598 = vmatpush2.bf16.msra.mxu0 0
  %1599 = vmatprep.subr.bf16.mxu0 0
  %1600 = vmatpush2.bf16.msra.mxu0 0
  %1601 = vmatprep.subr.bf16.mxu0 0
  %1602 = vmatpush2.bf16.msra.mxu0 0
  %1603 = vmatprep.subr.bf16.mxu0 0
  %1604 = vmatpush2.bf16.msra.mxu0 0
  %1605 = vmatprep.subr.bf16.mxu0 0
  %1606 = vmatpush2.bf16.msra.mxu0 0
  %1607 = vmatprep.subr.bf16.mxu0 0
  %1608 = vmatpush2.bf16.msra.mxu0 0
  %1609 = vmatprep.mubr.bf16.mxu0 0
  %1610 = vmatmul.mubr.bf16.gmra.mxu0 %v1465
  %v1611 = vpop.f32.mrf.mxu0
  %v1612 = vadd.f32 0.0, %v1611
  %v1613 = vpop.f32.mrf.mxu0
  %v1614 = vpop.f32.mrf.mxu0
  %v1615 = vadd.f32 0.0, %v1614
  %v1616 = vpop.f32.mrf.mxu0
  %1617 = vmatprep.mubr.bf16.mxu0 0
  %1618 = vmatmul.mubr.bf16.gmra.mxu0 %v1466
  %v1619 = vpop.f32.mrf.mxu0
  %v1620 = vadd.f32 0.0, %v1619
  %v1621 = vpop.f32.mrf.mxu0
  %v1622 = vpop.f32.mrf.mxu0
  %v1623 = vadd.f32 0.0, %v1622
  %v1624 = vpop.f32.mrf.mxu0
  %1625 = vmatprep.mubr.bf16.mxu0 0
  %1626 = vmatmul.mubr.bf16.gmra.mxu0 %v1467
  %v1627 = vpop.f32.mrf.mxu0
  %v1628 = vadd.f32 0.0, %v1627
  %v1629 = vpop.f32.mrf.mxu0
  %v1630 = vpop.f32.mrf.mxu0
  %v1631 = vadd.f32 0.0, %v1630
  %v1632 = vpop.f32.mrf.mxu0
  %1633 = vmatprep.mubr.bf16.mxu0 0
  %1634 = vmatmul.mubr.bf16.gmra.mxu0 %v1468
  %v1635 = vpop.f32.mrf.mxu0
  %v1636 = vadd.f32 0.0, %v1635
  %v1637 = vpop.f32.mrf.mxu0
  %v1638 = vpop.f32.mrf.mxu0
  %v1639 = vadd.f32 0.0, %v1638
  %v1640 = vpop.f32.mrf.mxu0
  %1641 = vmatprep.mubr.bf16.mxu0 0
  %1642 = vmatmul.mubr.bf16.gmra.mxu0 %v1469
  %v1643 = vpop.f32.mrf.mxu0
  %v1644 = vadd.f32 0.0, %v1643
  %v1645 = vpop.f32.mrf.mxu0
  %v1646 = vpop.f32.mrf.mxu0
  %v1647 = vadd.f32 0.0, %v1646
  %v1648 = vpop.f32.mrf.mxu0
  %1649 = vmatprep.mubr.bf16.mxu0 0
  %1650 = vmatmul.mubr.bf16.gmra.mxu0 %v1470
  %v1651 = vpop.f32.mrf.mxu0
  %v1652 = vadd.f32 0.0, %v1651
  %v1653 = vpop.f32.mrf.mxu0
  %v1654 = vpop.f32.mrf.mxu0
  %v1655 = vadd.f32 0.0, %v1654
  %v1656 = vpop.f32.mrf.mxu0
  %1657 = vmatprep.mubr.bf16.mxu0 0
  %1658 = vmatmul.mubr.bf16.gmra.mxu0 %v1471
  %v1659 = vpop.f32.mrf.mxu0
  %v1660 = vadd.f32 0.0, %v1659
  %v1661 = vpop.f32.mrf.mxu0
  %v1662 = vpop.f32.mrf.mxu0
  %v1663 = vadd.f32 0.0, %v1662
  %v1664 = vpop.f32.mrf.mxu0
  %1665 = vmatprep.mubr.bf16.mxu0 0
  %1666 = vmatmul.mubr.bf16.gmra.mxu0 %v1472
  %v1667 = vpop.f32.mrf.mxu0
  %v1668 = vadd.f32 0.0, %v1667
  %v1669 = vpop.f32.mrf.mxu0
  %v1670 = vpop.f32.mrf.mxu0
  %v1671 = vadd.f32 0.0, %v1670
  %v1672 = vpop.f32.mrf.mxu0
  %1673 = vmatprep.mubr.bf16.mxu0 0
  %1674 = vmatmul.mubr.bf16.gmra.mxu0 %v1473
  %v1675 = vpop.f32.mrf.mxu0
  %v1676 = vadd.f32 0.0, %v1675
  %v1677 = vpop.f32.mrf.mxu0
  %v1678 = vpop.f32.mrf.mxu0
  %v1679 = vadd.f32 0.0, %v1678
  %v1680 = vpop.f32.mrf.mxu0
  %1681 = vmatprep.mubr.bf16.mxu0 0
  %1682 = vmatmul.mubr.bf16.gmra.mxu0 %v1474
  %v1683 = vpop.f32.mrf.mxu0
  %v1684 = vadd.f32 0.0, %v1683
  %v1685 = vpop.f32.mrf.mxu0
  %v1686 = vpop.f32.mrf.mxu0
  %v1687 = vadd.f32 0.0, %v1686
  %v1688 = vpop.f32.mrf.mxu0
  %1689 = vmatprep.mubr.bf16.mxu0 0
  %1690 = vmatmul.mubr.bf16.gmra.mxu0 %v1475
  %v1691 = vpop.f32.mrf.mxu0
  %v1692 = vadd.f32 0.0, %v1691
  %v1693 = vpop.f32.mrf.mxu0
  %v1694 = vpop.f32.mrf.mxu0
  %v1695 = vadd.f32 0.0, %v1694
  %v1696 = vpop.f32.mrf.mxu0
  %1697 = vmatprep.mubr.bf16.mxu0 0
  %1698 = vmatmul.mubr.bf16.gmra.mxu0 %v1476
  %v1699 = vpop.f32.mrf.mxu0
  %v1700 = vadd.f32 0.0, %v1699
  %v1701 = vpop.f32.mrf.mxu0
  %v1702 = vpop.f32.mrf.mxu0
  %v1703 = vadd.f32 0.0, %v1702
  %v1704 = vpop.f32.mrf.mxu0
  %1705 = vmatprep.mubr.bf16.mxu0 0
  %1706 = vmatmul.mubr.bf16.gmra.mxu0 %v1477
  %v1707 = vpop.f32.mrf.mxu0
  %v1708 = vadd.f32 0.0, %v1707
  %v1709 = vpop.f32.mrf.mxu0
  %v1710 = vpop.f32.mrf.mxu0
  %v1711 = vadd.f32 0.0, %v1710
  %v1712 = vpop.f32.mrf.mxu0
  %1713 = vmatprep.mubr.bf16.mxu0 0
  %1714 = vmatmul.mubr.bf16.gmra.mxu0 %v1478
  %v1715 = vpop.f32.mrf.mxu0
  %v1716 = vadd.f32 0.0, %v1715
  %v1717 = vpop.f32.mrf.mxu0
  %v1718 = vpop.f32.mrf.mxu0
  %v1719 = vadd.f32 0.0, %v1718
  %v1720 = vpop.f32.mrf.mxu0
  %1721 = vmatprep.mubr.bf16.mxu0 0
  %1722 = vmatmul.mubr.bf16.gmra.mxu0 %v1479
  %v1723 = vpop.f32.mrf.mxu0
  %v1724 = vadd.f32 0.0, %v1723
  %v1725 = vpop.f32.mrf.mxu0
  %v1726 = vpop.f32.mrf.mxu0
  %v1727 = vadd.f32 0.0, %v1726
  %v1728 = vpop.f32.mrf.mxu0
  %1729 = vmatprep.mubr.bf16.mxu0 0
  %1730 = vmatmul.mubr.bf16.gmra.mxu0 %v1480
  %v1731 = vpop.f32.mrf.mxu0
  %v1732 = vadd.f32 0.0, %v1731
  %v1733 = vpop.f32.mrf.mxu0
  %v1734 = vpop.f32.mrf.mxu0
  %v1735 = vadd.f32 0.0, %v1734
  %v1736 = vpop.f32.mrf.mxu0
  %1737 = vmatprep.mubr.bf16.mxu0 0
  %1738 = vmatmul.mubr.bf16.gmra.mxu0 %v1481
  %v1739 = vpop.f32.mrf.mxu0
  %v1740 = vadd.f32 0.0, %v1739
  %v1741 = vpop.f32.mrf.mxu0
  %v1742 = vpop.f32.mrf.mxu0
  %v1743 = vadd.f32 0.0, %v1742
  %v1744 = vpop.f32.mrf.mxu0
  %1745 = vmatprep.mubr.bf16.mxu0 0
  %1746 = vmatmul.mubr.bf16.gmra.mxu0 %v1482
  %v1747 = vpop.f32.mrf.mxu0
  %v1748 = vadd.f32 0.0, %v1747
  %v1749 = vpop.f32.mrf.mxu0
  %v1750 = vpop.f32.mrf.mxu0
  %v1751 = vadd.f32 0.0, %v1750
  %v1752 = vpop.f32.mrf.mxu0
  %1753 = vmatprep.mubr.bf16.mxu0 0
  %1754 = vmatmul.mubr.bf16.gmra.mxu0 %v1483
  %v1755 = vpop.f32.mrf.mxu0
  %v1756 = vadd.f32 0.0, %v1755
  %v1757 = vpop.f32.mrf.mxu0
  %v1758 = vpop.f32.mrf.mxu0
  %v1759 = vadd.f32 0.0, %v1758
  %v1760 = vpop.f32.mrf.mxu0
  %1761 = vmatprep.mubr.bf16.mxu0 0
  %1762 = vmatmul.mubr.bf16.gmra.mxu0 %v1484
  %v1763 = vpop.f32.mrf.mxu0
  %v1764 = vadd.f32 0.0, %v1763
  %v1765 = vpop.f32.mrf.mxu0
  %v1766 = vpop.f32.mrf.mxu0
  %v1767 = vadd.f32 0.0, %v1766
  %v1768 = vpop.f32.mrf.mxu0
  %1769 = vmatprep.mubr.bf16.mxu0 0
  %1770 = vmatmul.mubr.bf16.gmra.mxu0 %v1485
  %v1771 = vpop.f32.mrf.mxu0
  %v1772 = vadd.f32 0.0, %v1771
  %v1773 = vpop.f32.mrf.mxu0
  %v1774 = vpop.f32.mrf.mxu0
  %v1775 = vadd.f32 0.0, %v1774
  %v1776 = vpop.f32.mrf.mxu0
  %1777 = vmatprep.mubr.bf16.mxu0 0
  %1778 = vmatmul.mubr.bf16.gmra.mxu0 %v1486
  %v1779 = vpop.f32.mrf.mxu0
  %v1780 = vadd.f32 0.0, %v1779
  %v1781 = vpop.f32.mrf.mxu0
  %v1782 = vpop.f32.mrf.mxu0
  %v1783 = vadd.f32 0.0, %v1782
  %v1784 = vpop.f32.mrf.mxu0
  %1785 = vmatprep.mubr.bf16.mxu0 0
  %1786 = vmatmul.mubr.bf16.gmra.mxu0 %v1487
  %v1787 = vpop.f32.mrf.mxu0
  %v1788 = vadd.f32 0.0, %v1787
  %v1789 = vpop.f32.mrf.mxu0
  %v1790 = vpop.f32.mrf.mxu0
  %v1791 = vadd.f32 0.0, %v1790
  %v1792 = vpop.f32.mrf.mxu0
  %1793 = vmatprep.mubr.bf16.mxu0 0
  %1794 = vmatmul.mubr.bf16.gmra.mxu0 %v1488
  %v1795 = vpop.f32.mrf.mxu0
  %v1796 = vadd.f32 0.0, %v1795
  %v1797 = vpop.f32.mrf.mxu0
  %v1798 = vpop.f32.mrf.mxu0
  %v1799 = vadd.f32 0.0, %v1798
  %v1800 = vpop.f32.mrf.mxu0
  %1801 = vmatprep.mubr.bf16.mxu0 0
  %1802 = vmatmul.mubr.bf16.gmra.mxu0 %v1489
  %v1803 = vpop.f32.mrf.mxu0
  %v1804 = vadd.f32 0.0, %v1803
  %v1805 = vpop.f32.mrf.mxu0
  %v1806 = vpop.f32.mrf.mxu0
  %v1807 = vadd.f32 0.0, %v1806
  %v1808 = vpop.f32.mrf.mxu0
  %1809 = vmatprep.mubr.bf16.mxu0 0
  %1810 = vmatmul.mubr.bf16.gmra.mxu0 %v1490
  %v1811 = vpop.f32.mrf.mxu0
  %v1812 = vadd.f32 0.0, %v1811
  %v1813 = vpop.f32.mrf.mxu0
  %v1814 = vpop.f32.mrf.mxu0
  %v1815 = vadd.f32 0.0, %v1814
  %v1816 = vpop.f32.mrf.mxu0
  %1817 = vmatprep.mubr.bf16.mxu0 0
  %1818 = vmatmul.mubr.bf16.gmra.mxu0 %v1491
  %v1819 = vpop.f32.mrf.mxu0
  %v1820 = vadd.f32 0.0, %v1819
  %v1821 = vpop.f32.mrf.mxu0
  %v1822 = vpop.f32.mrf.mxu0
  %v1823 = vadd.f32 0.0, %v1822
  %v1824 = vpop.f32.mrf.mxu0
  %1825 = vmatprep.mubr.bf16.mxu0 0
  %1826 = vmatmul.mubr.bf16.gmra.mxu0 %v1492
  %v1827 = vpop.f32.mrf.mxu0
  %v1828 = vadd.f32 0.0, %v1827
  %v1829 = vpop.f32.mrf.mxu0
  %v1830 = vpop.f32.mrf.mxu0
  %v1831 = vadd.f32 0.0, %v1830
  %v1832 = vpop.f32.mrf.mxu0
  %1833 = vmatprep.mubr.bf16.mxu0 0
  %1834 = vmatmul.mubr.bf16.gmra.mxu0 %v1493
  %v1835 = vpop.f32.mrf.mxu0
  %v1836 = vadd.f32 0.0, %v1835
  %v1837 = vpop.f32.mrf.mxu0
  %v1838 = vpop.f32.mrf.mxu0
  %v1839 = vadd.f32 0.0, %v1838
  %v1840 = vpop.f32.mrf.mxu0
  %1841 = vmatprep.mubr.bf16.mxu0 0
  %1842 = vmatmul.mubr.bf16.gmra.mxu0 %v1494
  %v1843 = vpop.f32.mrf.mxu0
  %v1844 = vadd.f32 0.0, %v1843
  %v1845 = vpop.f32.mrf.mxu0
  %v1846 = vpop.f32.mrf.mxu0
  %v1847 = vadd.f32 0.0, %v1846
  %v1848 = vpop.f32.mrf.mxu0
  %1849 = vmatprep.mubr.bf16.mxu0 0
  %1850 = vmatmul.mubr.bf16.gmra.mxu0 %v1495
  %v1851 = vpop.f32.mrf.mxu0
  %v1852 = vadd.f32 0.0, %v1851
  %v1853 = vpop.f32.mrf.mxu0
  %v1854 = vpop.f32.mrf.mxu0
  %v1855 = vadd.f32 0.0, %v1854
  %v1856 = vpop.f32.mrf.mxu0
  %1857 = vmatprep.mubr.bf16.mxu0 0
  %1858 = vmatmul.mubr.bf16.gmra.mxu0 %v1496
  %v1859 = vpop.f32.mrf.mxu0
  %v1860 = vadd.f32 0.0, %v1859
  %v1861 = vpop.f32.mrf.mxu0
  %v1862 = vpop.f32.mrf.mxu0
  %v1863 = vadd.f32 0.0, %v1862
  %v1864 = vpop.f32.mrf.mxu0
  %1865 = vdwg.mxu0
  %v1866 = vadd.f32 %v1003, %v1612
  %v1867 = vadd.f32 %v1006, %v1615
  %v1868 = vadd.f32 %v1011, %v1620
  %v1869 = vadd.f32 %v1014, %v1623
  %v1870 = vadd.f32 %v1019, %v1628
  %v1871 = vadd.f32 %v1022, %v1631
  %v1872 = vadd.f32 %v1027, %v1636
  %v1873 = vadd.f32 %v1030, %v1639
  %v1874 = vadd.f32 %v1035, %v1644
  %v1875 = vadd.f32 %v1038, %v1647
  %v1876 = vadd.f32 %v1043, %v1652
  %v1877 = vadd.f32 %v1046, %v1655
  %v1878 = vadd.f32 %v1051, %v1660
  %v1879 = vadd.f32 %v1054, %v1663
  %v1880 = vadd.f32 %v1059, %v1668
  %v1881 = vadd.f32 %v1062, %v1671
  %v1882 = vadd.f32 %v1067, %v1676
  %v1883 = vadd.f32 %v1070, %v1679
  %v1884 = vadd.f32 %v1075, %v1684
  %v1885 = vadd.f32 %v1078, %v1687
  %v1886 = vadd.f32 %v1083, %v1692
  %v1887 = vadd.f32 %v1086, %v1695
  %v1888 = vadd.f32 %v1091, %v1700
  %v1889 = vadd.f32 %v1094, %v1703
  %v1890 = vadd.f32 %v1099, %v1708
  %v1891 = vadd.f32 %v1102, %v1711
  %v1892 = vadd.f32 %v1107, %v1716
  %v1893 = vadd.f32 %v1110, %v1719
  %v1894 = vadd.f32 %v1115, %v1724
  %v1895 = vadd.f32 %v1118, %v1727
  %v1896 = vadd.f32 %v1123, %v1732
  %v1897 = vadd.f32 %v1126, %v1735
  %v1898 = vadd.f32 %v1131, %v1740
  %v1899 = vadd.f32 %v1134, %v1743
  %v1900 = vadd.f32 %v1139, %v1748
  %v1901 = vadd.f32 %v1142, %v1751
  %v1902 = vadd.f32 %v1147, %v1756
  %v1903 = vadd.f32 %v1150, %v1759
  %v1904 = vadd.f32 %v1155, %v1764
  %v1905 = vadd.f32 %v1158, %v1767
  %v1906 = vadd.f32 %v1163, %v1772
  %v1907 = vadd.f32 %v1166, %v1775
  %v1908 = vadd.f32 %v1171, %v1780
  %v1909 = vadd.f32 %v1174, %v1783
  %v1910 = vadd.f32 %v1179, %v1788
  %v1911 = vadd.f32 %v1182, %v1791
  %v1912 = vadd.f32 %v1187, %v1796
  %v1913 = vadd.f32 %v1190, %v1799
  %v1914 = vadd.f32 %v1195, %v1804
  %v1915 = vadd.f32 %v1198, %v1807
  %v1916 = vadd.f32 %v1203, %v1812
  %v1917 = vadd.f32 %v1206, %v1815
  %v1918 = vadd.f32 %v1211, %v1820
  %v1919 = vadd.f32 %v1214, %v1823
  %v1920 = vadd.f32 %v1219, %v1828
  %v1921 = vadd.f32 %v1222, %v1831
  %v1922 = vadd.f32 %v1227, %v1836
  %v1923 = vadd.f32 %v1230, %v1839
  %v1924 = vadd.f32 %v1235, %v1844
  %v1925 = vadd.f32 %v1238, %v1847
  %v1926 = vadd.f32 %v1243, %v1852
  %v1927 = vadd.f32 %v1246, %v1855
  %v1928 = vadd.f32 %v1251, %v1860
  %v1929 = vadd.f32 %v1254, %v1863
  %v1930 = vld [vmem:[%s3] sm:$0xf]
  %v1931 = vld [vmem:[%s3 + $0x4] sm:$0xf]
  %v1932 = vld [vmem:[%s3 + $0x8] sm:$0xf]
  %v1933 = vld [vmem:[%s3 + $0xc] sm:$0xf]
  %v1934 = vld [vmem:[%s3 + $0x10] sm:$0xf]
  %v1935 = vld [vmem:[%s3 + $0x14] sm:$0xf]
  %v1936 = vld [vmem:[%s3 + $0x18] sm:$0xf]
  %v1937 = vld [vmem:[%s3 + $0x1c] sm:$0xf]
  %v1938 = vld [vmem:[%s3 + $0x20] sm:$0xf]
  %v1939 = vld [vmem:[%s3 + $0x24] sm:$0xf]
  %v1940 = vld [vmem:[%s3 + $0x28] sm:$0xf]
  %v1941 = vld [vmem:[%s3 + $0x2c] sm:$0xf]
  %v1942 = vld [vmem:[%s3 + $0x30] sm:$0xf]
  %v1943 = vld [vmem:[%s3 + $0x34] sm:$0xf]
  %v1944 = vld [vmem:[%s3 + $0x38] sm:$0xf]
  %v1945 = vld [vmem:[%s3 + $0x3c] sm:$0xf]
  %v1946 = vld [vmem:[%s3 + $0x40] sm:$0xf]
  %v1947 = vld [vmem:[%s3 + $0x44] sm:$0xf]
  %v1948 = vld [vmem:[%s3 + $0x48] sm:$0xf]
  %v1949 = vld [vmem:[%s3 + $0x4c] sm:$0xf]
  %v1950 = vld [vmem:[%s3 + $0x50] sm:$0xf]
  %v1951 = vld [vmem:[%s3 + $0x54] sm:$0xf]
  %v1952 = vld [vmem:[%s3 + $0x58] sm:$0xf]
  %v1953 = vld [vmem:[%s3 + $0x5c] sm:$0xf]
  %v1954 = vld [vmem:[%s3 + $0x60] sm:$0xf]
  %v1955 = vld [vmem:[%s3 + $0x64] sm:$0xf]
  %v1956 = vld [vmem:[%s3 + $0x68] sm:$0xf]
  %v1957 = vld [vmem:[%s3 + $0x6c] sm:$0xf]
  %v1958 = vld [vmem:[%s3 + $0x70] sm:$0xf]
  %v1959 = vld [vmem:[%s3 + $0x74] sm:$0xf]
  %v1960 = vld [vmem:[%s3 + $0x78] sm:$0xf]
  %v1961 = vld [vmem:[%s3 + $0x7c] sm:$0xf]
  %v1962 = vld [vmem:[%s3 + $0x80] sm:$0xf]
  %v1963 = vld [vmem:[%s3 + $0x84] sm:$0xf]
  %v1964 = vld [vmem:[%s3 + $0x88] sm:$0xf]
  %v1965 = vld [vmem:[%s3 + $0x8c] sm:$0xf]
  %v1966 = vld [vmem:[%s3 + $0x90] sm:$0xf]
  %v1967 = vld [vmem:[%s3 + $0x94] sm:$0xf]
  %v1968 = vld [vmem:[%s3 + $0x98] sm:$0xf]
  %v1969 = vld [vmem:[%s3 + $0x9c] sm:$0xf]
  %v1970 = vld [vmem:[%s3 + $0xa0] sm:$0xf]
  %v1971 = vld [vmem:[%s3 + $0xa4] sm:$0xf]
  %v1972 = vld [vmem:[%s3 + $0xa8] sm:$0xf]
  %v1973 = vld [vmem:[%s3 + $0xac] sm:$0xf]
  %v1974 = vld [vmem:[%s3 + $0xb0] sm:$0xf]
  %v1975 = vld [vmem:[%s3 + $0xb4] sm:$0xf]
  %v1976 = vld [vmem:[%s3 + $0xb8] sm:$0xf]
  %v1977 = vld [vmem:[%s3 + $0xbc] sm:$0xf]
  %v1978 = vld [vmem:[%s3 + $0xc0] sm:$0xf]
  %v1979 = vld [vmem:[%s3 + $0xc4] sm:$0xf]
  %v1980 = vld [vmem:[%s3 + $0xc8] sm:$0xf]
  %v1981 = vld [vmem:[%s3 + $0xcc] sm:$0xf]
  %v1982 = vld [vmem:[%s3 + $0xd0] sm:$0xf]
  %v1983 = vld [vmem:[%s3 + $0xd4] sm:$0xf]
  %v1984 = vld [vmem:[%s3 + $0xd8] sm:$0xf]
  %v1985 = vld [vmem:[%s3 + $0xdc] sm:$0xf]
  %v1986 = vld [vmem:[%s3 + $0xe0] sm:$0xf]
  %v1987 = vld [vmem:[%s3 + $0xe4] sm:$0xf]
  %v1988 = vld [vmem:[%s3 + $0xe8] sm:$0xf]
  %v1989 = vld [vmem:[%s3 + $0xec] sm:$0xf]
  %v1990 = vld [vmem:[%s3 + $0xf0] sm:$0xf]
  %v1991 = vld [vmem:[%s3 + $0xf4] sm:$0xf]
  %v1992 = vld [vmem:[%s3 + $0xf8] sm:$0xf]
  %v1993 = vld [vmem:[%s3 + $0xfc] sm:$0xf]
  %v1994 = vld [vmem:[%s7] sm:$0xf]
  %v1995 = vld [vmem:[%s7 + $0x4] sm:$0xf]
  %v1996 = vld [vmem:[%s7 + $0x8] sm:$0xf]
  %v1997 = vld [vmem:[%s7 + $0xc] sm:$0xf]
  %v1998 = vld [vmem:[%s7 + $0x10] sm:$0xf]
  %v1999 = vld [vmem:[%s7 + $0x14] sm:$0xf]
  %v2000 = vld [vmem:[%s7 + $0x18] sm:$0xf]
  %v2001 = vld [vmem:[%s7 + $0x1c] sm:$0xf]
  %v2002 = vld [vmem:[%s7 + $0x20] sm:$0xf]
  %v2003 = vld [vmem:[%s7 + $0x24] sm:$0xf]
  %v2004 = vld [vmem:[%s7 + $0x28] sm:$0xf]
  %v2005 = vld [vmem:[%s7 + $0x2c] sm:$0xf]
  %v2006 = vld [vmem:[%s7 + $0x30] sm:$0xf]
  %v2007 = vld [vmem:[%s7 + $0x34] sm:$0xf]
  %v2008 = vld [vmem:[%s7 + $0x38] sm:$0xf]
  %v2009 = vld [vmem:[%s7 + $0x3c] sm:$0xf]
  %v2074 = vunpack.c.l.b16 %v1930
  %v2075 = vunpack.c.l.b16 %v1931
  %v2076 = vunpack.c.l.b16 %v1932
  %v2077 = vunpack.c.l.b16 %v1933
  %v2078 = vunpack.c.l.b16 %v1934
  %v2079 = vunpack.c.l.b16 %v1935
  %v2080 = vunpack.c.l.b16 %v1936
  %v2081 = vunpack.c.l.b16 %v1937
  %v2082 = vunpack.c.l.b16 %v1938
  %v2083 = vunpack.c.l.b16 %v1939
  %v2084 = vunpack.c.l.b16 %v1940
  %v2085 = vunpack.c.l.b16 %v1941
  %v2086 = vunpack.c.l.b16 %v1942
  %v2087 = vunpack.c.l.b16 %v1943
  %v2088 = vunpack.c.l.b16 %v1944
  %v2089 = vunpack.c.l.b16 %v1945
  %v2090 = vunpack.c.l.b16 %v1946
  %v2091 = vunpack.c.l.b16 %v1947
  %v2092 = vunpack.c.l.b16 %v1948
  %v2093 = vunpack.c.l.b16 %v1949
  %v2094 = vunpack.c.l.b16 %v1950
  %v2095 = vunpack.c.l.b16 %v1951
  %v2096 = vunpack.c.l.b16 %v1952
  %v2097 = vunpack.c.l.b16 %v1953
  %v2098 = vunpack.c.l.b16 %v1954
  %v2099 = vunpack.c.l.b16 %v1955
  %v2100 = vunpack.c.l.b16 %v1956
  %v2101 = vunpack.c.l.b16 %v1957
  %v2102 = vunpack.c.l.b16 %v1958
  %v2103 = vunpack.c.l.b16 %v1959
  %v2104 = vunpack.c.l.b16 %v1960
  %v2105 = vunpack.c.l.b16 %v1961
  %v2106 = vunpack.c.l.b16 %v1962
  %v2107 = vunpack.c.l.b16 %v1963
  %v2108 = vunpack.c.l.b16 %v1964
  %v2109 = vunpack.c.l.b16 %v1965
  %v2110 = vunpack.c.l.b16 %v1966
  %v2111 = vunpack.c.l.b16 %v1967
  %v2112 = vunpack.c.l.b16 %v1968
  %v2113 = vunpack.c.l.b16 %v1969
  %v2114 = vunpack.c.l.b16 %v1970
  %v2115 = vunpack.c.l.b16 %v1971
  %v2116 = vunpack.c.l.b16 %v1972
  %v2117 = vunpack.c.l.b16 %v1973
  %v2118 = vunpack.c.l.b16 %v1974
  %v2119 = vunpack.c.l.b16 %v1975
  %v2120 = vunpack.c.l.b16 %v1976
  %v2121 = vunpack.c.l.b16 %v1977
  %v2122 = vunpack.c.l.b16 %v1978
  %v2123 = vunpack.c.l.b16 %v1979
  %v2124 = vunpack.c.l.b16 %v1980
  %v2125 = vunpack.c.l.b16 %v1981
  %v2126 = vunpack.c.l.b16 %v1982
  %v2127 = vunpack.c.l.b16 %v1983
  %v2128 = vunpack.c.l.b16 %v1984
  %v2129 = vunpack.c.l.b16 %v1985
  %v2130 = vunpack.c.l.b16 %v1986
  %v2131 = vunpack.c.l.b16 %v1987
  %v2132 = vunpack.c.l.b16 %v1988
  %v2133 = vunpack.c.l.b16 %v1989
  %v2134 = vunpack.c.l.b16 %v1990
  %v2135 = vunpack.c.l.b16 %v1991
  %v2136 = vunpack.c.l.b16 %v1992
  %v2137 = vunpack.c.l.b16 %v1993
  %v2138 = vpack.c.b16 %v2075, %v2074
  %v2139 = vpack.c.b16 %v2077, %v2076
  %v2140 = vpack.c.b16 %v2079, %v2078
  %v2141 = vpack.c.b16 %v2081, %v2080
  %v2142 = vpack.c.b16 %v2083, %v2082
  %v2143 = vpack.c.b16 %v2085, %v2084
  %v2144 = vpack.c.b16 %v2087, %v2086
  %v2145 = vpack.c.b16 %v2089, %v2088
  %v2146 = vpack.c.b16 %v2091, %v2090
  %v2147 = vpack.c.b16 %v2093, %v2092
  %v2148 = vpack.c.b16 %v2095, %v2094
  %v2149 = vpack.c.b16 %v2097, %v2096
  %v2150 = vpack.c.b16 %v2099, %v2098
  %v2151 = vpack.c.b16 %v2101, %v2100
  %v2152 = vpack.c.b16 %v2103, %v2102
  %v2153 = vpack.c.b16 %v2105, %v2104
  %v2154 = vpack.c.b16 %v2107, %v2106
  %v2155 = vpack.c.b16 %v2109, %v2108
  %v2156 = vpack.c.b16 %v2111, %v2110
  %v2157 = vpack.c.b16 %v2113, %v2112
  %v2158 = vpack.c.b16 %v2115, %v2114
  %v2159 = vpack.c.b16 %v2117, %v2116
  %v2160 = vpack.c.b16 %v2119, %v2118
  %v2161 = vpack.c.b16 %v2121, %v2120
  %v2162 = vpack.c.b16 %v2123, %v2122
  %v2163 = vpack.c.b16 %v2125, %v2124
  %v2164 = vpack.c.b16 %v2127, %v2126
  %v2165 = vpack.c.b16 %v2129, %v2128
  %v2166 = vpack.c.b16 %v2131, %v2130
  %v2167 = vpack.c.b16 %v2133, %v2132
  %v2168 = vpack.c.b16 %v2135, %v2134
  %v2169 = vpack.c.b16 %v2137, %v2136
  %v2218 = vunpack.c.l.b16 %v1994
  %v2219 = vunpack.c.l.b16 %v1995
  %v2220 = vunpack.c.l.b16 %v1996
  %v2221 = vunpack.c.l.b16 %v1997
  %v2222 = vunpack.c.l.b16 %v1998
  %v2223 = vunpack.c.l.b16 %v1999
  %v2224 = vunpack.c.l.b16 %v2000
  %v2225 = vunpack.c.l.b16 %v2001
  %v2226 = vunpack.c.l.b16 %v2002
  %v2227 = vunpack.c.l.b16 %v2003
  %v2228 = vunpack.c.l.b16 %v2004
  %v2229 = vunpack.c.l.b16 %v2005
  %v2230 = vunpack.c.l.b16 %v2006
  %v2231 = vunpack.c.l.b16 %v2007
  %v2232 = vunpack.c.l.b16 %v2008
  %v2233 = vunpack.c.l.b16 %v2009
  %v2234 = vpack.c.b16 %v2219, %v2218
  %v2235 = vpack.c.b16 %v2221, %v2220
  %v2236 = vpack.c.b16 %v2223, %v2222
  %v2237 = vpack.c.b16 %v2225, %v2224
  %v2238 = vpack.c.b16 %v2227, %v2226
  %v2239 = vpack.c.b16 %v2229, %v2228
  %v2240 = vpack.c.b16 %v2231, %v2230
  %v2241 = vpack.c.b16 %v2233, %v2232
  %2250 = vmatprep.subr.bf16.mxu0 0
  %2251 = vmatpush1.bf16.msra.mxu0 %v2241
  %2252 = vmatprep.subr.bf16.mxu0 0
  %2253 = vmatpush1.bf16.msra.mxu0 %v2240
  %2254 = vmatprep.subr.bf16.mxu0 0
  %2255 = vmatpush1.bf16.msra.mxu0 %v2239
  %2256 = vmatprep.subr.bf16.mxu0 0
  %2257 = vmatpush1.bf16.msra.mxu0 %v2238
  %2258 = vmatprep.subr.bf16.mxu0 0
  %2259 = vmatpush1.bf16.msra.mxu0 %v2237
  %2260 = vmatprep.subr.bf16.mxu0 0
  %2261 = vmatpush1.bf16.msra.mxu0 %v2236
  %2262 = vmatprep.subr.bf16.mxu0 0
  %2263 = vmatpush1.bf16.msra.mxu0 %v2235
  %2264 = vmatprep.subr.bf16.mxu0 0
  %2265 = vmatpush1.bf16.msra.mxu0 %v2234
  %2266 = vmatprep.subr.bf16.mxu0 0
  %2267 = vmatpush2.bf16.msra.mxu0 0
  %2268 = vmatprep.subr.bf16.mxu0 0
  %2269 = vmatpush2.bf16.msra.mxu0 0
  %2270 = vmatprep.subr.bf16.mxu0 0
  %2271 = vmatpush2.bf16.msra.mxu0 0
  %2272 = vmatprep.subr.bf16.mxu0 0
  %2273 = vmatpush2.bf16.msra.mxu0 0
  %2274 = vmatprep.subr.bf16.mxu0 0
  %2275 = vmatpush2.bf16.msra.mxu0 0
  %2276 = vmatprep.subr.bf16.mxu0 0
  %2277 = vmatpush2.bf16.msra.mxu0 0
  %2278 = vmatprep.subr.bf16.mxu0 0
  %2279 = vmatpush2.bf16.msra.mxu0 0
  %2280 = vmatprep.subr.bf16.mxu0 0
  %2281 = vmatpush2.bf16.msra.mxu0 0
  %2282 = vmatprep.mubr.bf16.mxu0 0
  %2283 = vmatmul.mubr.bf16.gmra.mxu0 %v2138
  %v2284 = vpop.f32.mrf.mxu0
  %v2285 = vadd.f32 0.0, %v2284
  %v2286 = vpop.f32.mrf.mxu0
  %v2287 = vpop.f32.mrf.mxu0
  %v2288 = vadd.f32 0.0, %v2287
  %v2289 = vpop.f32.mrf.mxu0
  %2290 = vmatprep.mubr.bf16.mxu0 0
  %2291 = vmatmul.mubr.bf16.gmra.mxu0 %v2139
  %v2292 = vpop.f32.mrf.mxu0
  %v2293 = vadd.f32 0.0, %v2292
  %v2294 = vpop.f32.mrf.mxu0
  %v2295 = vpop.f32.mrf.mxu0
  %v2296 = vadd.f32 0.0, %v2295
  %v2297 = vpop.f32.mrf.mxu0
  %2298 = vmatprep.mubr.bf16.mxu0 0
  %2299 = vmatmul.mubr.bf16.gmra.mxu0 %v2140
  %v2300 = vpop.f32.mrf.mxu0
  %v2301 = vadd.f32 0.0, %v2300
  %v2302 = vpop.f32.mrf.mxu0
  %v2303 = vpop.f32.mrf.mxu0
  %v2304 = vadd.f32 0.0, %v2303
  %v2305 = vpop.f32.mrf.mxu0
  %2306 = vmatprep.mubr.bf16.mxu0 0
  %2307 = vmatmul.mubr.bf16.gmra.mxu0 %v2141
  %v2308 = vpop.f32.mrf.mxu0
  %v2309 = vadd.f32 0.0, %v2308
  %v2310 = vpop.f32.mrf.mxu0
  %v2311 = vpop.f32.mrf.mxu0
  %v2312 = vadd.f32 0.0, %v2311
  %v2313 = vpop.f32.mrf.mxu0
  %2314 = vmatprep.mubr.bf16.mxu0 0
  %2315 = vmatmul.mubr.bf16.gmra.mxu0 %v2142
  %v2316 = vpop.f32.mrf.mxu0
  %v2317 = vadd.f32 0.0, %v2316
  %v2318 = vpop.f32.mrf.mxu0
  %v2319 = vpop.f32.mrf.mxu0
  %v2320 = vadd.f32 0.0, %v2319
  %v2321 = vpop.f32.mrf.mxu0
  %2322 = vmatprep.mubr.bf16.mxu0 0
  %2323 = vmatmul.mubr.bf16.gmra.mxu0 %v2143
  %v2324 = vpop.f32.mrf.mxu0
  %v2325 = vadd.f32 0.0, %v2324
  %v2326 = vpop.f32.mrf.mxu0
  %v2327 = vpop.f32.mrf.mxu0
  %v2328 = vadd.f32 0.0, %v2327
  %v2329 = vpop.f32.mrf.mxu0
  %2330 = vmatprep.mubr.bf16.mxu0 0
  %2331 = vmatmul.mubr.bf16.gmra.mxu0 %v2144
  %v2332 = vpop.f32.mrf.mxu0
  %v2333 = vadd.f32 0.0, %v2332
  %v2334 = vpop.f32.mrf.mxu0
  %v2335 = vpop.f32.mrf.mxu0
  %v2336 = vadd.f32 0.0, %v2335
  %v2337 = vpop.f32.mrf.mxu0
  %2338 = vmatprep.mubr.bf16.mxu0 0
  %2339 = vmatmul.mubr.bf16.gmra.mxu0 %v2145
  %v2340 = vpop.f32.mrf.mxu0
  %v2341 = vadd.f32 0.0, %v2340
  %v2342 = vpop.f32.mrf.mxu0
  %v2343 = vpop.f32.mrf.mxu0
  %v2344 = vadd.f32 0.0, %v2343
  %v2345 = vpop.f32.mrf.mxu0
  %2346 = vmatprep.mubr.bf16.mxu0 0
  %2347 = vmatmul.mubr.bf16.gmra.mxu0 %v2146
  %v2348 = vpop.f32.mrf.mxu0
  %v2349 = vadd.f32 0.0, %v2348
  %v2350 = vpop.f32.mrf.mxu0
  %v2351 = vpop.f32.mrf.mxu0
  %v2352 = vadd.f32 0.0, %v2351
  %v2353 = vpop.f32.mrf.mxu0
  %2354 = vmatprep.mubr.bf16.mxu0 0
  %2355 = vmatmul.mubr.bf16.gmra.mxu0 %v2147
  %v2356 = vpop.f32.mrf.mxu0
  %v2357 = vadd.f32 0.0, %v2356
  %v2358 = vpop.f32.mrf.mxu0
  %v2359 = vpop.f32.mrf.mxu0
  %v2360 = vadd.f32 0.0, %v2359
  %v2361 = vpop.f32.mrf.mxu0
  %2362 = vmatprep.mubr.bf16.mxu0 0
  %2363 = vmatmul.mubr.bf16.gmra.mxu0 %v2148
  %v2364 = vpop.f32.mrf.mxu0
  %v2365 = vadd.f32 0.0, %v2364
  %v2366 = vpop.f32.mrf.mxu0
  %v2367 = vpop.f32.mrf.mxu0
  %v2368 = vadd.f32 0.0, %v2367
  %v2369 = vpop.f32.mrf.mxu0
  %2370 = vmatprep.mubr.bf16.mxu0 0
  %2371 = vmatmul.mubr.bf16.gmra.mxu0 %v2149
  %v2372 = vpop.f32.mrf.mxu0
  %v2373 = vadd.f32 0.0, %v2372
  %v2374 = vpop.f32.mrf.mxu0
  %v2375 = vpop.f32.mrf.mxu0
  %v2376 = vadd.f32 0.0, %v2375
  %v2377 = vpop.f32.mrf.mxu0
  %2378 = vmatprep.mubr.bf16.mxu0 0
  %2379 = vmatmul.mubr.bf16.gmra.mxu0 %v2150
  %v2380 = vpop.f32.mrf.mxu0
  %v2381 = vadd.f32 0.0, %v2380
  %v2382 = vpop.f32.mrf.mxu0
  %v2383 = vpop.f32.mrf.mxu0
  %v2384 = vadd.f32 0.0, %v2383
  %v2385 = vpop.f32.mrf.mxu0
  %2386 = vmatprep.mubr.bf16.mxu0 0
  %2387 = vmatmul.mubr.bf16.gmra.mxu0 %v2151
  %v2388 = vpop.f32.mrf.mxu0
  %v2389 = vadd.f32 0.0, %v2388
  %v2390 = vpop.f32.mrf.mxu0
  %v2391 = vpop.f32.mrf.mxu0
  %v2392 = vadd.f32 0.0, %v2391
  %v2393 = vpop.f32.mrf.mxu0
  %2394 = vmatprep.mubr.bf16.mxu0 0
  %2395 = vmatmul.mubr.bf16.gmra.mxu0 %v2152
  %v2396 = vpop.f32.mrf.mxu0
  %v2397 = vadd.f32 0.0, %v2396
  %v2398 = vpop.f32.mrf.mxu0
  %v2399 = vpop.f32.mrf.mxu0
  %v2400 = vadd.f32 0.0, %v2399
  %v2401 = vpop.f32.mrf.mxu0
  %2402 = vmatprep.mubr.bf16.mxu0 0
  %2403 = vmatmul.mubr.bf16.gmra.mxu0 %v2153
  %v2404 = vpop.f32.mrf.mxu0
  %v2405 = vadd.f32 0.0, %v2404
  %v2406 = vpop.f32.mrf.mxu0
  %v2407 = vpop.f32.mrf.mxu0
  %v2408 = vadd.f32 0.0, %v2407
  %v2409 = vpop.f32.mrf.mxu0
  %2410 = vmatprep.mubr.bf16.mxu0 0
  %2411 = vmatmul.mubr.bf16.gmra.mxu0 %v2154
  %v2412 = vpop.f32.mrf.mxu0
  %v2413 = vadd.f32 0.0, %v2412
  %v2414 = vpop.f32.mrf.mxu0
  %v2415 = vpop.f32.mrf.mxu0
  %v2416 = vadd.f32 0.0, %v2415
  %v2417 = vpop.f32.mrf.mxu0
  %2418 = vmatprep.mubr.bf16.mxu0 0
  %2419 = vmatmul.mubr.bf16.gmra.mxu0 %v2155
  %v2420 = vpop.f32.mrf.mxu0
  %v2421 = vadd.f32 0.0, %v2420
  %v2422 = vpop.f32.mrf.mxu0
  %v2423 = vpop.f32.mrf.mxu0
  %v2424 = vadd.f32 0.0, %v2423
  %v2425 = vpop.f32.mrf.mxu0
  %2426 = vmatprep.mubr.bf16.mxu0 0
  %2427 = vmatmul.mubr.bf16.gmra.mxu0 %v2156
  %v2428 = vpop.f32.mrf.mxu0
  %v2429 = vadd.f32 0.0, %v2428
  %v2430 = vpop.f32.mrf.mxu0
  %v2431 = vpop.f32.mrf.mxu0
  %v2432 = vadd.f32 0.0, %v2431
  %v2433 = vpop.f32.mrf.mxu0
  %2434 = vmatprep.mubr.bf16.mxu0 0
  %2435 = vmatmul.mubr.bf16.gmra.mxu0 %v2157
  %v2436 = vpop.f32.mrf.mxu0
  %v2437 = vadd.f32 0.0, %v2436
  %v2438 = vpop.f32.mrf.mxu0
  %v2439 = vpop.f32.mrf.mxu0
  %v2440 = vadd.f32 0.0, %v2439
  %v2441 = vpop.f32.mrf.mxu0
  %2442 = vmatprep.mubr.bf16.mxu0 0
  %2443 = vmatmul.mubr.bf16.gmra.mxu0 %v2158
  %v2444 = vpop.f32.mrf.mxu0
  %v2445 = vadd.f32 0.0, %v2444
  %v2446 = vpop.f32.mrf.mxu0
  %v2447 = vpop.f32.mrf.mxu0
  %v2448 = vadd.f32 0.0, %v2447
  %v2449 = vpop.f32.mrf.mxu0
  %2450 = vmatprep.mubr.bf16.mxu0 0
  %2451 = vmatmul.mubr.bf16.gmra.mxu0 %v2159
  %v2452 = vpop.f32.mrf.mxu0
  %v2453 = vadd.f32 0.0, %v2452
  %v2454 = vpop.f32.mrf.mxu0
  %v2455 = vpop.f32.mrf.mxu0
  %v2456 = vadd.f32 0.0, %v2455
  %v2457 = vpop.f32.mrf.mxu0
  %2458 = vmatprep.mubr.bf16.mxu0 0
  %2459 = vmatmul.mubr.bf16.gmra.mxu0 %v2160
  %v2460 = vpop.f32.mrf.mxu0
  %v2461 = vadd.f32 0.0, %v2460
  %v2462 = vpop.f32.mrf.mxu0
  %v2463 = vpop.f32.mrf.mxu0
  %v2464 = vadd.f32 0.0, %v2463
  %v2465 = vpop.f32.mrf.mxu0
  %2466 = vmatprep.mubr.bf16.mxu0 0
  %2467 = vmatmul.mubr.bf16.gmra.mxu0 %v2161
  %v2468 = vpop.f32.mrf.mxu0
  %v2469 = vadd.f32 0.0, %v2468
  %v2470 = vpop.f32.mrf.mxu0
  %v2471 = vpop.f32.mrf.mxu0
  %v2472 = vadd.f32 0.0, %v2471
  %v2473 = vpop.f32.mrf.mxu0
  %2474 = vmatprep.mubr.bf16.mxu0 0
  %2475 = vmatmul.mubr.bf16.gmra.mxu0 %v2162
  %v2476 = vpop.f32.mrf.mxu0
  %v2477 = vadd.f32 0.0, %v2476
  %v2478 = vpop.f32.mrf.mxu0
  %v2479 = vpop.f32.mrf.mxu0
  %v2480 = vadd.f32 0.0, %v2479
  %v2481 = vpop.f32.mrf.mxu0
  %2482 = vmatprep.mubr.bf16.mxu0 0
  %2483 = vmatmul.mubr.bf16.gmra.mxu0 %v2163
  %v2484 = vpop.f32.mrf.mxu0
  %v2485 = vadd.f32 0.0, %v2484
  %v2486 = vpop.f32.mrf.mxu0
  %v2487 = vpop.f32.mrf.mxu0
  %v2488 = vadd.f32 0.0, %v2487
  %v2489 = vpop.f32.mrf.mxu0
  %2490 = vmatprep.mubr.bf16.mxu0 0
  %2491 = vmatmul.mubr.bf16.gmra.mxu0 %v2164
  %v2492 = vpop.f32.mrf.mxu0
  %v2493 = vadd.f32 0.0, %v2492
  %v2494 = vpop.f32.mrf.mxu0
  %v2495 = vpop.f32.mrf.mxu0
  %v2496 = vadd.f32 0.0, %v2495
  %v2497 = vpop.f32.mrf.mxu0
  %2498 = vmatprep.mubr.bf16.mxu0 0
  %2499 = vmatmul.mubr.bf16.gmra.mxu0 %v2165
  %v2500 = vpop.f32.mrf.mxu0
  %v2501 = vadd.f32 0.0, %v2500
  %v2502 = vpop.f32.mrf.mxu0
  %v2503 = vpop.f32.mrf.mxu0
  %v2504 = vadd.f32 0.0, %v2503
  %v2505 = vpop.f32.mrf.mxu0
  %2506 = vmatprep.mubr.bf16.mxu0 0
  %2507 = vmatmul.mubr.bf16.gmra.mxu0 %v2166
  %v2508 = vpop.f32.mrf.mxu0
  %v2509 = vadd.f32 0.0, %v2508
  %v2510 = vpop.f32.mrf.mxu0
  %v2511 = vpop.f32.mrf.mxu0
  %v2512 = vadd.f32 0.0, %v2511
  %v2513 = vpop.f32.mrf.mxu0
  %2514 = vmatprep.mubr.bf16.mxu0 0
  %2515 = vmatmul.mubr.bf16.gmra.mxu0 %v2167
  %v2516 = vpop.f32.mrf.mxu0
  %v2517 = vadd.f32 0.0, %v2516
  %v2518 = vpop.f32.mrf.mxu0
  %v2519 = vpop.f32.mrf.mxu0
  %v2520 = vadd.f32 0.0, %v2519
  %v2521 = vpop.f32.mrf.mxu0
  %2522 = vmatprep.mubr.bf16.mxu0 0
  %2523 = vmatmul.mubr.bf16.gmra.mxu0 %v2168
  %v2524 = vpop.f32.mrf.mxu0
  %v2525 = vadd.f32 0.0, %v2524
  %v2526 = vpop.f32.mrf.mxu0
  %v2527 = vpop.f32.mrf.mxu0
  %v2528 = vadd.f32 0.0, %v2527
  %v2529 = vpop.f32.mrf.mxu0
  %2530 = vmatprep.mubr.bf16.mxu0 0
  %2531 = vmatmul.mubr.bf16.gmra.mxu0 %v2169
  %v2532 = vpop.f32.mrf.mxu0
  %v2533 = vadd.f32 0.0, %v2532
  %v2534 = vpop.f32.mrf.mxu0
  %v2535 = vpop.f32.mrf.mxu0
  %v2536 = vadd.f32 0.0, %v2535
  %v2537 = vpop.f32.mrf.mxu0
  %2538 = vdwg.mxu0
  %v2539 = vadd.f32 %v1866, %v2285
  %v2540 = vadd.f32 %v1867, %v2288
  %v2541 = vadd.f32 %v1868, %v2293
  %v2542 = vadd.f32 %v1869, %v2296
  %v2543 = vadd.f32 %v1870, %v2301
  %v2544 = vadd.f32 %v1871, %v2304
  %v2545 = vadd.f32 %v1872, %v2309
  %v2546 = vadd.f32 %v1873, %v2312
  %v2547 = vadd.f32 %v1874, %v2317
  %v2548 = vadd.f32 %v1875, %v2320
  %v2549 = vadd.f32 %v1876, %v2325
  %v2550 = vadd.f32 %v1877, %v2328
  %v2551 = vadd.f32 %v1878, %v2333
  %v2552 = vadd.f32 %v1879, %v2336
  %v2553 = vadd.f32 %v1880, %v2341
  %v2554 = vadd.f32 %v1881, %v2344
  %v2555 = vadd.f32 %v1882, %v2349
  %v2556 = vadd.f32 %v1883, %v2352
  %v2557 = vadd.f32 %v1884, %v2357
  %v2558 = vadd.f32 %v1885, %v2360
  %v2559 = vadd.f32 %v1886, %v2365
  %v2560 = vadd.f32 %v1887, %v2368
  %v2561 = vadd.f32 %v1888, %v2373
  %v2562 = vadd.f32 %v1889, %v2376
  %v2563 = vadd.f32 %v1890, %v2381
  %v2564 = vadd.f32 %v1891, %v2384
  %v2565 = vadd.f32 %v1892, %v2389
  %v2566 = vadd.f32 %v1893, %v2392
  %v2567 = vadd.f32 %v1894, %v2397
  %v2568 = vadd.f32 %v1895, %v2400
  %v2569 = vadd.f32 %v1896, %v2405
  %v2570 = vadd.f32 %v1897, %v2408
  %v2571 = vadd.f32 %v1898, %v2413
  %v2572 = vadd.f32 %v1899, %v2416
  %v2573 = vadd.f32 %v1900, %v2421
  %v2574 = vadd.f32 %v1901, %v2424
  %v2575 = vadd.f32 %v1902, %v2429
  %v2576 = vadd.f32 %v1903, %v2432
  %v2577 = vadd.f32 %v1904, %v2437
  %v2578 = vadd.f32 %v1905, %v2440
  %v2579 = vadd.f32 %v1906, %v2445
  %v2580 = vadd.f32 %v1907, %v2448
  %v2581 = vadd.f32 %v1908, %v2453
  %v2582 = vadd.f32 %v1909, %v2456
  %v2583 = vadd.f32 %v1910, %v2461
  %v2584 = vadd.f32 %v1911, %v2464
  %v2585 = vadd.f32 %v1912, %v2469
  %v2586 = vadd.f32 %v1913, %v2472
  %v2587 = vadd.f32 %v1914, %v2477
  %v2588 = vadd.f32 %v1915, %v2480
  %v2589 = vadd.f32 %v1916, %v2485
  %v2590 = vadd.f32 %v1917, %v2488
  %v2591 = vadd.f32 %v1918, %v2493
  %v2592 = vadd.f32 %v1919, %v2496
  %v2593 = vadd.f32 %v1920, %v2501
  %v2594 = vadd.f32 %v1921, %v2504
  %v2595 = vadd.f32 %v1922, %v2509
  %v2596 = vadd.f32 %v1923, %v2512
  %v2597 = vadd.f32 %v1924, %v2517
  %v2598 = vadd.f32 %v1925, %v2520
  %v2599 = vadd.f32 %v1926, %v2525
  %v2600 = vadd.f32 %v1927, %v2528
  %v2601 = vadd.f32 %v1928, %v2533
  %v2602 = vadd.f32 %v1929, %v2536
  %v2603 = vld [vmem:[%s8] sm:$0x1]
  %v2605 = vlaneseq
  %v2606 = vshrl.u32 %v2605, 7
  %v2607 = vsub.s32 0, %v2606
  %v2608 = vrot.slane %v2603, %v2607
  %v2610 = vmul.f32 %v2539, %v2608
  %v2611 = vmul.f32 %v2540, %v2608
  %v2612 = vmul.f32 %v2541, %v2608
  %v2613 = vmul.f32 %v2542, %v2608
  %v2614 = vmul.f32 %v2543, %v2608
  %v2615 = vmul.f32 %v2544, %v2608
  %v2616 = vmul.f32 %v2545, %v2608
  %v2617 = vmul.f32 %v2546, %v2608
  %v2618 = vmul.f32 %v2547, %v2608
  %v2619 = vmul.f32 %v2548, %v2608
  %v2620 = vmul.f32 %v2549, %v2608
  %v2621 = vmul.f32 %v2550, %v2608
  %v2622 = vmul.f32 %v2551, %v2608
  %v2623 = vmul.f32 %v2552, %v2608
  %v2624 = vmul.f32 %v2553, %v2608
  %v2625 = vmul.f32 %v2554, %v2608
  %v2626 = vmul.f32 %v2555, %v2608
  %v2627 = vmul.f32 %v2556, %v2608
  %v2628 = vmul.f32 %v2557, %v2608
  %v2629 = vmul.f32 %v2558, %v2608
  %v2630 = vmul.f32 %v2559, %v2608
  %v2631 = vmul.f32 %v2560, %v2608
  %v2632 = vmul.f32 %v2561, %v2608
  %v2633 = vmul.f32 %v2562, %v2608
  %v2634 = vmul.f32 %v2563, %v2608
  %v2635 = vmul.f32 %v2564, %v2608
  %v2636 = vmul.f32 %v2565, %v2608
  %v2637 = vmul.f32 %v2566, %v2608
  %v2638 = vmul.f32 %v2567, %v2608
  %v2639 = vmul.f32 %v2568, %v2608
  %v2640 = vmul.f32 %v2569, %v2608
  %v2641 = vmul.f32 %v2570, %v2608
  %v2642 = vmul.f32 %v2571, %v2608
  %v2643 = vmul.f32 %v2572, %v2608
  %v2644 = vmul.f32 %v2573, %v2608
  %v2645 = vmul.f32 %v2574, %v2608
  %v2646 = vmul.f32 %v2575, %v2608
  %v2647 = vmul.f32 %v2576, %v2608
  %v2648 = vmul.f32 %v2577, %v2608
  %v2649 = vmul.f32 %v2578, %v2608
  %v2650 = vmul.f32 %v2579, %v2608
  %v2651 = vmul.f32 %v2580, %v2608
  %v2652 = vmul.f32 %v2581, %v2608
  %v2653 = vmul.f32 %v2582, %v2608
  %v2654 = vmul.f32 %v2583, %v2608
  %v2655 = vmul.f32 %v2584, %v2608
  %v2656 = vmul.f32 %v2585, %v2608
  %v2657 = vmul.f32 %v2586, %v2608
  %v2658 = vmul.f32 %v2587, %v2608
  %v2659 = vmul.f32 %v2588, %v2608
  %v2660 = vmul.f32 %v2589, %v2608
  %v2661 = vmul.f32 %v2590, %v2608
  %v2662 = vmul.f32 %v2591, %v2608
  %v2663 = vmul.f32 %v2592, %v2608
  %v2664 = vmul.f32 %v2593, %v2608
  %v2665 = vmul.f32 %v2594, %v2608
  %v2666 = vmul.f32 %v2595, %v2608
  %v2667 = vmul.f32 %v2596, %v2608
  %v2668 = vmul.f32 %v2597, %v2608
  %v2669 = vmul.f32 %v2598, %v2608
  %v2670 = vmul.f32 %v2599, %v2608
  %v2671 = vmul.f32 %v2600, %v2608
  %v2672 = vmul.f32 %v2601, %v2608
  %v2673 = vmul.f32 %v2602, %v2608
  %v2674 = vld [vmem:[%s9] sm:$0x1]
  %v2676 = vlaneseq
  %v2677 = vshrl.u32 %v2676, 7
  %v2678 = vsub.s32 0, %v2677
  %v2679 = vrot.slane %v2674, %v2678
  %v2681 = vadd.f32 %v2610, %v2679
  %v2682 = vadd.f32 %v2611, %v2679
  %v2683 = vadd.f32 %v2612, %v2679
  %v2684 = vadd.f32 %v2613, %v2679
  %v2685 = vadd.f32 %v2614, %v2679
  %v2686 = vadd.f32 %v2615, %v2679
  %v2687 = vadd.f32 %v2616, %v2679
  %v2688 = vadd.f32 %v2617, %v2679
  %v2689 = vadd.f32 %v2618, %v2679
  %v2690 = vadd.f32 %v2619, %v2679
  %v2691 = vadd.f32 %v2620, %v2679
  %v2692 = vadd.f32 %v2621, %v2679
  %v2693 = vadd.f32 %v2622, %v2679
  %v2694 = vadd.f32 %v2623, %v2679
  %v2695 = vadd.f32 %v2624, %v2679
  %v2696 = vadd.f32 %v2625, %v2679
  %v2697 = vadd.f32 %v2626, %v2679
  %v2698 = vadd.f32 %v2627, %v2679
  %v2699 = vadd.f32 %v2628, %v2679
  %v2700 = vadd.f32 %v2629, %v2679
  %v2701 = vadd.f32 %v2630, %v2679
  %v2702 = vadd.f32 %v2631, %v2679
  %v2703 = vadd.f32 %v2632, %v2679
  %v2704 = vadd.f32 %v2633, %v2679
  %v2705 = vadd.f32 %v2634, %v2679
  %v2706 = vadd.f32 %v2635, %v2679
  %v2707 = vadd.f32 %v2636, %v2679
  %v2708 = vadd.f32 %v2637, %v2679
  %v2709 = vadd.f32 %v2638, %v2679
  %v2710 = vadd.f32 %v2639, %v2679
  %v2711 = vadd.f32 %v2640, %v2679
  %v2712 = vadd.f32 %v2641, %v2679
  %v2713 = vadd.f32 %v2642, %v2679
  %v2714 = vadd.f32 %v2643, %v2679
  %v2715 = vadd.f32 %v2644, %v2679
  %v2716 = vadd.f32 %v2645, %v2679
  %v2717 = vadd.f32 %v2646, %v2679
  %v2718 = vadd.f32 %v2647, %v2679
  %v2719 = vadd.f32 %v2648, %v2679
  %v2720 = vadd.f32 %v2649, %v2679
  %v2721 = vadd.f32 %v2650, %v2679
  %v2722 = vadd.f32 %v2651, %v2679
  %v2723 = vadd.f32 %v2652, %v2679
  %v2724 = vadd.f32 %v2653, %v2679
  %v2725 = vadd.f32 %v2654, %v2679
  %v2726 = vadd.f32 %v2655, %v2679
  %v2727 = vadd.f32 %v2656, %v2679
  %v2728 = vadd.f32 %v2657, %v2679
  %v2729 = vadd.f32 %v2658, %v2679
  %v2730 = vadd.f32 %v2659, %v2679
  %v2731 = vadd.f32 %v2660, %v2679
  %v2732 = vadd.f32 %v2661, %v2679
  %v2733 = vadd.f32 %v2662, %v2679
  %v2734 = vadd.f32 %v2663, %v2679
  %v2735 = vadd.f32 %v2664, %v2679
  %v2736 = vadd.f32 %v2665, %v2679
  %v2737 = vadd.f32 %v2666, %v2679
  %v2738 = vadd.f32 %v2667, %v2679
  %v2739 = vadd.f32 %v2668, %v2679
  %v2740 = vadd.f32 %v2669, %v2679
  %v2741 = vadd.f32 %v2670, %v2679
  %v2742 = vadd.f32 %v2671, %v2679
  %v2743 = vadd.f32 %v2672, %v2679
  %v2744 = vadd.f32 %v2673, %v2679
  %v2745 = vld [vmem:[%s10] sm:$0xf]
  %v2746 = vld [vmem:[%s10 + $0x4] sm:$0xf]
  %v2747 = vld [vmem:[%s10 + $0x8] sm:$0xf]
  %v2748 = vld [vmem:[%s10 + $0xc] sm:$0xf]
  %v2749 = vld [vmem:[%s10 + $0x10] sm:$0xf]
  %v2750 = vld [vmem:[%s10 + $0x14] sm:$0xf]
  %v2751 = vld [vmem:[%s10 + $0x18] sm:$0xf]
  %v2752 = vld [vmem:[%s10 + $0x1c] sm:$0xf]
  %v2753 = vld [vmem:[%s10 + $0x20] sm:$0xf]
  %v2754 = vld [vmem:[%s10 + $0x24] sm:$0xf]
  %v2755 = vld [vmem:[%s10 + $0x28] sm:$0xf]
  %v2756 = vld [vmem:[%s10 + $0x2c] sm:$0xf]
  %v2757 = vld [vmem:[%s10 + $0x30] sm:$0xf]
  %v2758 = vld [vmem:[%s10 + $0x34] sm:$0xf]
  %v2759 = vld [vmem:[%s10 + $0x38] sm:$0xf]
  %v2760 = vld [vmem:[%s10 + $0x3c] sm:$0xf]
  %v2761 = vld [vmem:[%s10 + $0x40] sm:$0xf]
  %v2762 = vld [vmem:[%s10 + $0x44] sm:$0xf]
  %v2763 = vld [vmem:[%s10 + $0x48] sm:$0xf]
  %v2764 = vld [vmem:[%s10 + $0x4c] sm:$0xf]
  %v2765 = vld [vmem:[%s10 + $0x50] sm:$0xf]
  %v2766 = vld [vmem:[%s10 + $0x54] sm:$0xf]
  %v2767 = vld [vmem:[%s10 + $0x58] sm:$0xf]
  %v2768 = vld [vmem:[%s10 + $0x5c] sm:$0xf]
  %v2769 = vld [vmem:[%s10 + $0x60] sm:$0xf]
  %v2770 = vld [vmem:[%s10 + $0x64] sm:$0xf]
  %v2771 = vld [vmem:[%s10 + $0x68] sm:$0xf]
  %v2772 = vld [vmem:[%s10 + $0x6c] sm:$0xf]
  %v2773 = vld [vmem:[%s10 + $0x70] sm:$0xf]
  %v2774 = vld [vmem:[%s10 + $0x74] sm:$0xf]
  %v2775 = vld [vmem:[%s10 + $0x78] sm:$0xf]
  %v2776 = vld [vmem:[%s10 + $0x7c] sm:$0xf]
  %v2777 = vld [vmem:[%s10 + $0x80] sm:$0xf]
  %v2778 = vld [vmem:[%s10 + $0x84] sm:$0xf]
  %v2779 = vld [vmem:[%s10 + $0x88] sm:$0xf]
  %v2780 = vld [vmem:[%s10 + $0x8c] sm:$0xf]
  %v2781 = vld [vmem:[%s10 + $0x90] sm:$0xf]
  %v2782 = vld [vmem:[%s10 + $0x94] sm:$0xf]
  %v2783 = vld [vmem:[%s10 + $0x98] sm:$0xf]
  %v2784 = vld [vmem:[%s10 + $0x9c] sm:$0xf]
  %v2785 = vld [vmem:[%s10 + $0xa0] sm:$0xf]
  %v2786 = vld [vmem:[%s10 + $0xa4] sm:$0xf]
  %v2787 = vld [vmem:[%s10 + $0xa8] sm:$0xf]
  %v2788 = vld [vmem:[%s10 + $0xac] sm:$0xf]
  %v2789 = vld [vmem:[%s10 + $0xb0] sm:$0xf]
  %v2790 = vld [vmem:[%s10 + $0xb4] sm:$0xf]
  %v2791 = vld [vmem:[%s10 + $0xb8] sm:$0xf]
  %v2792 = vld [vmem:[%s10 + $0xbc] sm:$0xf]
  %v2793 = vld [vmem:[%s10 + $0xc0] sm:$0xf]
  %v2794 = vld [vmem:[%s10 + $0xc4] sm:$0xf]
  %v2795 = vld [vmem:[%s10 + $0xc8] sm:$0xf]
  %v2796 = vld [vmem:[%s10 + $0xcc] sm:$0xf]
  %v2797 = vld [vmem:[%s10 + $0xd0] sm:$0xf]
  %v2798 = vld [vmem:[%s10 + $0xd4] sm:$0xf]
  %v2799 = vld [vmem:[%s10 + $0xd8] sm:$0xf]
  %v2800 = vld [vmem:[%s10 + $0xdc] sm:$0xf]
  %v2801 = vld [vmem:[%s10 + $0xe0] sm:$0xf]
  %v2802 = vld [vmem:[%s10 + $0xe4] sm:$0xf]
  %v2803 = vld [vmem:[%s10 + $0xe8] sm:$0xf]
  %v2804 = vld [vmem:[%s10 + $0xec] sm:$0xf]
  %v2805 = vld [vmem:[%s10 + $0xf0] sm:$0xf]
  %v2806 = vld [vmem:[%s10 + $0xf4] sm:$0xf]
  %v2807 = vld [vmem:[%s10 + $0xf8] sm:$0xf]
  %v2808 = vld [vmem:[%s10 + $0xfc] sm:$0xf]
  %v2809 = vunpack.c.l.bf16 %v2745
  %v2810 = vunpack.c.l.bf16 %v2746
  %v2811 = vunpack.c.l.bf16 %v2747
  %v2812 = vunpack.c.l.bf16 %v2748
  %v2813 = vunpack.c.l.bf16 %v2749
  %v2814 = vunpack.c.l.bf16 %v2750
  %v2815 = vunpack.c.l.bf16 %v2751
  %v2816 = vunpack.c.l.bf16 %v2752
  %v2817 = vunpack.c.l.bf16 %v2753
  %v2818 = vunpack.c.l.bf16 %v2754
  %v2819 = vunpack.c.l.bf16 %v2755
  %v2820 = vunpack.c.l.bf16 %v2756
  %v2821 = vunpack.c.l.bf16 %v2757
  %v2822 = vunpack.c.l.bf16 %v2758
  %v2823 = vunpack.c.l.bf16 %v2759
  %v2824 = vunpack.c.l.bf16 %v2760
  %v2825 = vunpack.c.l.bf16 %v2761
  %v2826 = vunpack.c.l.bf16 %v2762
  %v2827 = vunpack.c.l.bf16 %v2763
  %v2828 = vunpack.c.l.bf16 %v2764
  %v2829 = vunpack.c.l.bf16 %v2765
  %v2830 = vunpack.c.l.bf16 %v2766
  %v2831 = vunpack.c.l.bf16 %v2767
  %v2832 = vunpack.c.l.bf16 %v2768
  %v2833 = vunpack.c.l.bf16 %v2769
  %v2834 = vunpack.c.l.bf16 %v2770
  %v2835 = vunpack.c.l.bf16 %v2771
  %v2836 = vunpack.c.l.bf16 %v2772
  %v2837 = vunpack.c.l.bf16 %v2773
  %v2838 = vunpack.c.l.bf16 %v2774
  %v2839 = vunpack.c.l.bf16 %v2775
  %v2840 = vunpack.c.l.bf16 %v2776
  %v2841 = vunpack.c.l.bf16 %v2777
  %v2842 = vunpack.c.l.bf16 %v2778
  %v2843 = vunpack.c.l.bf16 %v2779
  %v2844 = vunpack.c.l.bf16 %v2780
  %v2845 = vunpack.c.l.bf16 %v2781
  %v2846 = vunpack.c.l.bf16 %v2782
  %v2847 = vunpack.c.l.bf16 %v2783
  %v2848 = vunpack.c.l.bf16 %v2784
  %v2849 = vunpack.c.l.bf16 %v2785
  %v2850 = vunpack.c.l.bf16 %v2786
  %v2851 = vunpack.c.l.bf16 %v2787
  %v2852 = vunpack.c.l.bf16 %v2788
  %v2853 = vunpack.c.l.bf16 %v2789
  %v2854 = vunpack.c.l.bf16 %v2790
  %v2855 = vunpack.c.l.bf16 %v2791
  %v2856 = vunpack.c.l.bf16 %v2792
  %v2857 = vunpack.c.l.bf16 %v2793
  %v2858 = vunpack.c.l.bf16 %v2794
  %v2859 = vunpack.c.l.bf16 %v2795
  %v2860 = vunpack.c.l.bf16 %v2796
  %v2861 = vunpack.c.l.bf16 %v2797
  %v2862 = vunpack.c.l.bf16 %v2798
  %v2863 = vunpack.c.l.bf16 %v2799
  %v2864 = vunpack.c.l.bf16 %v2800
  %v2865 = vunpack.c.l.bf16 %v2801
  %v2866 = vunpack.c.l.bf16 %v2802
  %v2867 = vunpack.c.l.bf16 %v2803
  %v2868 = vunpack.c.l.bf16 %v2804
  %v2869 = vunpack.c.l.bf16 %v2805
  %v2870 = vunpack.c.l.bf16 %v2806
  %v2871 = vunpack.c.l.bf16 %v2807
  %v2872 = vunpack.c.l.bf16 %v2808
  %v2873 = vadd.f32 %v2681, %v2809
  %v2874 = vadd.f32 %v2682, %v2810
  %v2875 = vadd.f32 %v2683, %v2811
  %v2876 = vadd.f32 %v2684, %v2812
  %v2877 = vadd.f32 %v2685, %v2813
  %v2878 = vadd.f32 %v2686, %v2814
  %v2879 = vadd.f32 %v2687, %v2815
  %v2880 = vadd.f32 %v2688, %v2816
  %v2881 = vadd.f32 %v2689, %v2817
  %v2882 = vadd.f32 %v2690, %v2818
  %v2883 = vadd.f32 %v2691, %v2819
  %v2884 = vadd.f32 %v2692, %v2820
  %v2885 = vadd.f32 %v2693, %v2821
  %v2886 = vadd.f32 %v2694, %v2822
  %v2887 = vadd.f32 %v2695, %v2823
  %v2888 = vadd.f32 %v2696, %v2824
  %v2889 = vadd.f32 %v2697, %v2825
  %v2890 = vadd.f32 %v2698, %v2826
  %v2891 = vadd.f32 %v2699, %v2827
  %v2892 = vadd.f32 %v2700, %v2828
  %v2893 = vadd.f32 %v2701, %v2829
  %v2894 = vadd.f32 %v2702, %v2830
  %v2895 = vadd.f32 %v2703, %v2831
  %v2896 = vadd.f32 %v2704, %v2832
  %v2897 = vadd.f32 %v2705, %v2833
  %v2898 = vadd.f32 %v2706, %v2834
  %v2899 = vadd.f32 %v2707, %v2835
  %v2900 = vadd.f32 %v2708, %v2836
  %v2901 = vadd.f32 %v2709, %v2837
  %v2902 = vadd.f32 %v2710, %v2838
  %v2903 = vadd.f32 %v2711, %v2839
  %v2904 = vadd.f32 %v2712, %v2840
  %v2905 = vadd.f32 %v2713, %v2841
  %v2906 = vadd.f32 %v2714, %v2842
  %v2907 = vadd.f32 %v2715, %v2843
  %v2908 = vadd.f32 %v2716, %v2844
  %v2909 = vadd.f32 %v2717, %v2845
  %v2910 = vadd.f32 %v2718, %v2846
  %v2911 = vadd.f32 %v2719, %v2847
  %v2912 = vadd.f32 %v2720, %v2848
  %v2913 = vadd.f32 %v2721, %v2849
  %v2914 = vadd.f32 %v2722, %v2850
  %v2915 = vadd.f32 %v2723, %v2851
  %v2916 = vadd.f32 %v2724, %v2852
  %v2917 = vadd.f32 %v2725, %v2853
  %v2918 = vadd.f32 %v2726, %v2854
  %v2919 = vadd.f32 %v2727, %v2855
  %v2920 = vadd.f32 %v2728, %v2856
  %v2921 = vadd.f32 %v2729, %v2857
  %v2922 = vadd.f32 %v2730, %v2858
  %v2923 = vadd.f32 %v2731, %v2859
  %v2924 = vadd.f32 %v2732, %v2860
  %v2925 = vadd.f32 %v2733, %v2861
  %v2926 = vadd.f32 %v2734, %v2862
  %v2927 = vadd.f32 %v2735, %v2863
  %v2928 = vadd.f32 %v2736, %v2864
  %v2929 = vadd.f32 %v2737, %v2865
  %v2930 = vadd.f32 %v2738, %v2866
  %v2931 = vadd.f32 %v2739, %v2867
  %v2932 = vadd.f32 %v2740, %v2868
  %v2933 = vadd.f32 %v2741, %v2869
  %v2934 = vadd.f32 %v2742, %v2870
  %v2935 = vadd.f32 %v2743, %v2871
  %v2936 = vadd.f32 %v2744, %v2872
  %v2937 = vmax.f32 %v2873, 0.0
  %v2938 = vmax.f32 %v2874, 0.0
  %v2939 = vmax.f32 %v2875, 0.0
  %v2940 = vmax.f32 %v2876, 0.0
  %v2941 = vmax.f32 %v2877, 0.0
  %v2942 = vmax.f32 %v2878, 0.0
  %v2943 = vmax.f32 %v2879, 0.0
  %v2944 = vmax.f32 %v2880, 0.0
  %v2945 = vmax.f32 %v2881, 0.0
  %v2946 = vmax.f32 %v2882, 0.0
  %v2947 = vmax.f32 %v2883, 0.0
  %v2948 = vmax.f32 %v2884, 0.0
  %v2949 = vmax.f32 %v2885, 0.0
  %v2950 = vmax.f32 %v2886, 0.0
  %v2951 = vmax.f32 %v2887, 0.0
  %v2952 = vmax.f32 %v2888, 0.0
  %v2953 = vmax.f32 %v2889, 0.0
  %v2954 = vmax.f32 %v2890, 0.0
  %v2955 = vmax.f32 %v2891, 0.0
  %v2956 = vmax.f32 %v2892, 0.0
  %v2957 = vmax.f32 %v2893, 0.0
  %v2958 = vmax.f32 %v2894, 0.0
  %v2959 = vmax.f32 %v2895, 0.0
  %v2960 = vmax.f32 %v2896, 0.0
  %v2961 = vmax.f32 %v2897, 0.0
  %v2962 = vmax.f32 %v2898, 0.0
  %v2963 = vmax.f32 %v2899, 0.0
  %v2964 = vmax.f32 %v2900, 0.0
  %v2965 = vmax.f32 %v2901, 0.0
  %v2966 = vmax.f32 %v2902, 0.0
  %v2967 = vmax.f32 %v2903, 0.0
  %v2968 = vmax.f32 %v2904, 0.0
  %v2969 = vmax.f32 %v2905, 0.0
  %v2970 = vmax.f32 %v2906, 0.0
  %v2971 = vmax.f32 %v2907, 0.0
  %v2972 = vmax.f32 %v2908, 0.0
  %v2973 = vmax.f32 %v2909, 0.0
  %v2974 = vmax.f32 %v2910, 0.0
  %v2975 = vmax.f32 %v2911, 0.0
  %v2976 = vmax.f32 %v2912, 0.0
  %v2977 = vmax.f32 %v2913, 0.0
  %v2978 = vmax.f32 %v2914, 0.0
  %v2979 = vmax.f32 %v2915, 0.0
  %v2980 = vmax.f32 %v2916, 0.0
  %v2981 = vmax.f32 %v2917, 0.0
  %v2982 = vmax.f32 %v2918, 0.0
  %v2983 = vmax.f32 %v2919, 0.0
  %v2984 = vmax.f32 %v2920, 0.0
  %v2985 = vmax.f32 %v2921, 0.0
  %v2986 = vmax.f32 %v2922, 0.0
  %v2987 = vmax.f32 %v2923, 0.0
  %v2988 = vmax.f32 %v2924, 0.0
  %v2989 = vmax.f32 %v2925, 0.0
  %v2990 = vmax.f32 %v2926, 0.0
  %v2991 = vmax.f32 %v2927, 0.0
  %v2992 = vmax.f32 %v2928, 0.0
  %v2993 = vmax.f32 %v2929, 0.0
  %v2994 = vmax.f32 %v2930, 0.0
  %v2995 = vmax.f32 %v2931, 0.0
  %v2996 = vmax.f32 %v2932, 0.0
  %v2997 = vmax.f32 %v2933, 0.0
  %v2998 = vmax.f32 %v2934, 0.0
  %v2999 = vmax.f32 %v2935, 0.0
  %v3000 = vmax.f32 %v2936, 0.0
  %v3001 = vpack.c.bf16 %v2938, %v2937
  %v3002 = vpack.c.bf16 %v2940, %v2939
  %v3003 = vpack.c.bf16 %v2942, %v2941
  %v3004 = vpack.c.bf16 %v2944, %v2943
  %v3005 = vpack.c.bf16 %v2946, %v2945
  %v3006 = vpack.c.bf16 %v2948, %v2947
  %v3007 = vpack.c.bf16 %v2950, %v2949
  %v3008 = vpack.c.bf16 %v2952, %v2951
  %v3009 = vpack.c.bf16 %v2954, %v2953
  %v3010 = vpack.c.bf16 %v2956, %v2955
  %v3011 = vpack.c.bf16 %v2958, %v2957
  %v3012 = vpack.c.bf16 %v2960, %v2959
  %v3013 = vpack.c.bf16 %v2962, %v2961
  %v3014 = vpack.c.bf16 %v2964, %v2963
  %v3015 = vpack.c.bf16 %v2966, %v2965
  %v3016 = vpack.c.bf16 %v2968, %v2967
  %v3017 = vpack.c.bf16 %v2970, %v2969
  %v3018 = vpack.c.bf16 %v2972, %v2971
  %v3019 = vpack.c.bf16 %v2974, %v2973
  %v3020 = vpack.c.bf16 %v2976, %v2975
  %v3021 = vpack.c.bf16 %v2978, %v2977
  %v3022 = vpack.c.bf16 %v2980, %v2979
  %v3023 = vpack.c.bf16 %v2982, %v2981
  %v3024 = vpack.c.bf16 %v2984, %v2983
  %v3025 = vpack.c.bf16 %v2986, %v2985
  %v3026 = vpack.c.bf16 %v2988, %v2987
  %v3027 = vpack.c.bf16 %v2990, %v2989
  %v3028 = vpack.c.bf16 %v2992, %v2991
  %v3029 = vpack.c.bf16 %v2994, %v2993
  %v3030 = vpack.c.bf16 %v2996, %v2995
  %v3031 = vpack.c.bf16 %v2998, %v2997
  %v3032 = vpack.c.bf16 %v3000, %v2999
  %v3065 = vunpack.c.l.b16 %v3001
  %v3066 = vunpack.c.h.b16 %v3001
  %v3067 = vunpack.c.l.b16 %v3002
  %v3068 = vunpack.c.h.b16 %v3002
  %v3069 = vunpack.c.l.b16 %v3003
  %v3070 = vunpack.c.h.b16 %v3003
  %v3071 = vunpack.c.l.b16 %v3004
  %v3072 = vunpack.c.h.b16 %v3004
  %v3073 = vunpack.c.l.b16 %v3005
  %v3074 = vunpack.c.h.b16 %v3005
  %v3075 = vunpack.c.l.b16 %v3006
  %v3076 = vunpack.c.h.b16 %v3006
  %v3077 = vunpack.c.l.b16 %v3007
  %v3078 = vunpack.c.h.b16 %v3007
  %v3079 = vunpack.c.l.b16 %v3008
  %v3080 = vunpack.c.h.b16 %v3008
  %v3081 = vunpack.c.l.b16 %v3009
  %v3082 = vunpack.c.h.b16 %v3009
  %v3083 = vunpack.c.l.b16 %v3010
  %v3084 = vunpack.c.h.b16 %v3010
  %v3085 = vunpack.c.l.b16 %v3011
  %v3086 = vunpack.c.h.b16 %v3011
  %v3087 = vunpack.c.l.b16 %v3012
  %v3088 = vunpack.c.h.b16 %v3012
  %v3089 = vunpack.c.l.b16 %v3013
  %v3090 = vunpack.c.h.b16 %v3013
  %v3091 = vunpack.c.l.b16 %v3014
  %v3092 = vunpack.c.h.b16 %v3014
  %v3093 = vunpack.c.l.b16 %v3015
  %v3094 = vunpack.c.h.b16 %v3015
  %v3095 = vunpack.c.l.b16 %v3016
  %v3096 = vunpack.c.h.b16 %v3016
  %v3097 = vunpack.c.l.b16 %v3017
  %v3098 = vunpack.c.h.b16 %v3017
  %v3099 = vunpack.c.l.b16 %v3018
  %v3100 = vunpack.c.h.b16 %v3018
  %v3101 = vunpack.c.l.b16 %v3019
  %v3102 = vunpack.c.h.b16 %v3019
  %v3103 = vunpack.c.l.b16 %v3020
  %v3104 = vunpack.c.h.b16 %v3020
  %v3105 = vunpack.c.l.b16 %v3021
  %v3106 = vunpack.c.h.b16 %v3021
  %v3107 = vunpack.c.l.b16 %v3022
  %v3108 = vunpack.c.h.b16 %v3022
  %v3109 = vunpack.c.l.b16 %v3023
  %v3110 = vunpack.c.h.b16 %v3023
  %v3111 = vunpack.c.l.b16 %v3024
  %v3112 = vunpack.c.h.b16 %v3024
  %v3113 = vunpack.c.l.b16 %v3025
  %v3114 = vunpack.c.h.b16 %v3025
  %v3115 = vunpack.c.l.b16 %v3026
  %v3116 = vunpack.c.h.b16 %v3026
  %v3117 = vunpack.c.l.b16 %v3027
  %v3118 = vunpack.c.h.b16 %v3027
  %v3119 = vunpack.c.l.b16 %v3028
  %v3120 = vunpack.c.h.b16 %v3028
  %v3121 = vunpack.c.l.b16 %v3029
  %v3122 = vunpack.c.h.b16 %v3029
  %v3123 = vunpack.c.l.b16 %v3030
  %v3124 = vunpack.c.h.b16 %v3030
  %v3125 = vunpack.c.l.b16 %v3031
  %v3126 = vunpack.c.h.b16 %v3031
  %v3127 = vunpack.c.l.b16 %v3032
  %v3128 = vunpack.c.h.b16 %v3032
  %v3129 = vpack.c.b16 %v3065, %v3065
  %v3130 = vpack.c.b16 %v3066, %v3066
  %v3131 = vpack.c.b16 %v3067, %v3067
  %v3132 = vpack.c.b16 %v3068, %v3068
  %v3133 = vpack.c.b16 %v3069, %v3069
  %v3134 = vpack.c.b16 %v3070, %v3070
  %v3135 = vpack.c.b16 %v3071, %v3071
  %v3136 = vpack.c.b16 %v3072, %v3072
  %v3137 = vpack.c.b16 %v3073, %v3073
  %v3138 = vpack.c.b16 %v3074, %v3074
  %v3139 = vpack.c.b16 %v3075, %v3075
  %v3140 = vpack.c.b16 %v3076, %v3076
  %v3141 = vpack.c.b16 %v3077, %v3077
  %v3142 = vpack.c.b16 %v3078, %v3078
  %v3143 = vpack.c.b16 %v3079, %v3079
  %v3144 = vpack.c.b16 %v3080, %v3080
  %v3145 = vpack.c.b16 %v3081, %v3081
  %v3146 = vpack.c.b16 %v3082, %v3082
  %v3147 = vpack.c.b16 %v3083, %v3083
  %v3148 = vpack.c.b16 %v3084, %v3084
  %v3149 = vpack.c.b16 %v3085, %v3085
  %v3150 = vpack.c.b16 %v3086, %v3086
  %v3151 = vpack.c.b16 %v3087, %v3087
  %v3152 = vpack.c.b16 %v3088, %v3088
  %v3153 = vpack.c.b16 %v3089, %v3089
  %v3154 = vpack.c.b16 %v3090, %v3090
  %v3155 = vpack.c.b16 %v3091, %v3091
  %v3156 = vpack.c.b16 %v3092, %v3092
  %v3157 = vpack.c.b16 %v3093, %v3093
  %v3158 = vpack.c.b16 %v3094, %v3094
  %v3159 = vpack.c.b16 %v3095, %v3095
  %v3160 = vpack.c.b16 %v3096, %v3096
  %v3161 = vpack.c.b16 %v3097, %v3097
  %v3162 = vpack.c.b16 %v3098, %v3098
  %v3163 = vpack.c.b16 %v3099, %v3099
  %v3164 = vpack.c.b16 %v3100, %v3100
  %v3165 = vpack.c.b16 %v3101, %v3101
  %v3166 = vpack.c.b16 %v3102, %v3102
  %v3167 = vpack.c.b16 %v3103, %v3103
  %v3168 = vpack.c.b16 %v3104, %v3104
  %v3169 = vpack.c.b16 %v3105, %v3105
  %v3170 = vpack.c.b16 %v3106, %v3106
  %v3171 = vpack.c.b16 %v3107, %v3107
  %v3172 = vpack.c.b16 %v3108, %v3108
  %v3173 = vpack.c.b16 %v3109, %v3109
  %v3174 = vpack.c.b16 %v3110, %v3110
  %v3175 = vpack.c.b16 %v3111, %v3111
  %v3176 = vpack.c.b16 %v3112, %v3112
  %v3177 = vpack.c.b16 %v3113, %v3113
  %v3178 = vpack.c.b16 %v3114, %v3114
  %v3179 = vpack.c.b16 %v3115, %v3115
  %v3180 = vpack.c.b16 %v3116, %v3116
  %v3181 = vpack.c.b16 %v3117, %v3117
  %v3182 = vpack.c.b16 %v3118, %v3118
  %v3183 = vpack.c.b16 %v3119, %v3119
  %v3184 = vpack.c.b16 %v3120, %v3120
  %v3185 = vpack.c.b16 %v3121, %v3121
  %v3186 = vpack.c.b16 %v3122, %v3122
  %v3187 = vpack.c.b16 %v3123, %v3123
  %v3188 = vpack.c.b16 %v3124, %v3124
  %v3189 = vpack.c.b16 %v3125, %v3125
  %v3190 = vpack.c.b16 %v3126, %v3126
  %v3191 = vpack.c.b16 %v3127, %v3127
  %v3192 = vpack.c.b16 %v3128, %v3128
  %3257 = vst [vmem:[%s11] sm:$0xf] %v3129
  %3258 = vst [vmem:[%s11 + $0x4] sm:$0xf] %v3130
  %3259 = vst [vmem:[%s11 + $0x8] sm:$0xf] %v3131
  %3260 = vst [vmem:[%s11 + $0xc] sm:$0xf] %v3132
  %3261 = vst [vmem:[%s11 + $0x10] sm:$0xf] %v3133
  %3262 = vst [vmem:[%s11 + $0x14] sm:$0xf] %v3134
  %3263 = vst [vmem:[%s11 + $0x18] sm:$0xf] %v3135
  %3264 = vst [vmem:[%s11 + $0x1c] sm:$0xf] %v3136
  %3265 = vst [vmem:[%s11 + $0x20] sm:$0xf] %v3137
  %3266 = vst [vmem:[%s11 + $0x24] sm:$0xf] %v3138
  %3267 = vst [vmem:[%s11 + $0x28] sm:$0xf] %v3139
  %3268 = vst [vmem:[%s11 + $0x2c] sm:$0xf] %v3140
  %3269 = vst [vmem:[%s11 + $0x30] sm:$0xf] %v3141
  %3270 = vst [vmem:[%s11 + $0x34] sm:$0xf] %v3142
  %3271 = vst [vmem:[%s11 + $0x38] sm:$0xf] %v3143
  %3272 = vst [vmem:[%s11 + $0x3c] sm:$0xf] %v3144
  %3273 = vst [vmem:[%s11 + $0x40] sm:$0xf] %v3145
  %3274 = vst [vmem:[%s11 + $0x44] sm:$0xf] %v3146
  %3275 = vst [vmem:[%s11 + $0x48] sm:$0xf] %v3147
  %3276 = vst [vmem:[%s11 + $0x4c] sm:$0xf] %v3148
  %3277 = vst [vmem:[%s11 + $0x50] sm:$0xf] %v3149
  %3278 = vst [vmem:[%s11 + $0x54] sm:$0xf] %v3150
  %3279 = vst [vmem:[%s11 + $0x58] sm:$0xf] %v3151
  %3280 = vst [vmem:[%s11 + $0x5c] sm:$0xf] %v3152
  %3281 = vst [vmem:[%s11 + $0x60] sm:$0xf] %v3153
  %3282 = vst [vmem:[%s11 + $0x64] sm:$0xf] %v3154
  %3283 = vst [vmem:[%s11 + $0x68] sm:$0xf] %v3155
  %3284 = vst [vmem:[%s11 + $0x6c] sm:$0xf] %v3156
  %3285 = vst [vmem:[%s11 + $0x70] sm:$0xf] %v3157
  %3286 = vst [vmem:[%s11 + $0x74] sm:$0xf] %v3158
  %3287 = vst [vmem:[%s11 + $0x78] sm:$0xf] %v3159
  %3288 = vst [vmem:[%s11 + $0x7c] sm:$0xf] %v3160
  %3289 = vst [vmem:[%s11 + $0x80] sm:$0xf] %v3161
  %3290 = vst [vmem:[%s11 + $0x84] sm:$0xf] %v3162
  %3291 = vst [vmem:[%s11 + $0x88] sm:$0xf] %v3163
  %3292 = vst [vmem:[%s11 + $0x8c] sm:$0xf] %v3164
  %3293 = vst [vmem:[%s11 + $0x90] sm:$0xf] %v3165
  %3294 = vst [vmem:[%s11 + $0x94] sm:$0xf] %v3166
  %3295 = vst [vmem:[%s11 + $0x98] sm:$0xf] %v3167
  %3296 = vst [vmem:[%s11 + $0x9c] sm:$0xf] %v3168
  %3297 = vst [vmem:[%s11 + $0xa0] sm:$0xf] %v3169
  %3298 = vst [vmem:[%s11 + $0xa4] sm:$0xf] %v3170
  %3299 = vst [vmem:[%s11 + $0xa8] sm:$0xf] %v3171
  %3300 = vst [vmem:[%s11 + $0xac] sm:$0xf] %v3172
  %3301 = vst [vmem:[%s11 + $0xb0] sm:$0xf] %v3173
  %3302 = vst [vmem:[%s11 + $0xb4] sm:$0xf] %v3174
  %3303 = vst [vmem:[%s11 + $0xb8] sm:$0xf] %v3175
  %3304 = vst [vmem:[%s11 + $0xbc] sm:$0xf] %v3176
  %3305 = vst [vmem:[%s11 + $0xc0] sm:$0xf] %v3177
  %3306 = vst [vmem:[%s11 + $0xc4] sm:$0xf] %v3178
  %3307 = vst [vmem:[%s11 + $0xc8] sm:$0xf] %v3179
  %3308 = vst [vmem:[%s11 + $0xcc] sm:$0xf] %v3180
  %3309 = vst [vmem:[%s11 + $0xd0] sm:$0xf] %v3181
  %3310 = vst [vmem:[%s11 + $0xd4] sm:$0xf] %v3182
  %3311 = vst [vmem:[%s11 + $0xd8] sm:$0xf] %v3183
  %3312 = vst [vmem:[%s11 + $0xdc] sm:$0xf] %v3184
  %3313 = vst [vmem:[%s11 + $0xe0] sm:$0xf] %v3185
  %3314 = vst [vmem:[%s11 + $0xe4] sm:$0xf] %v3186
  %3315 = vst [vmem:[%s11 + $0xe8] sm:$0xf] %v3187
  %3316 = vst [vmem:[%s11 + $0xec] sm:$0xf] %v3188
  %3317 = vst [vmem:[%s11 + $0xf0] sm:$0xf] %v3189
  %3318 = vst [vmem:[%s11 + $0xf4] sm:$0xf] %v3190
  %3319 = vst [vmem:[%s11 + $0xf8] sm:$0xf] %v3191
  %3320 = vst [vmem:[%s11 + $0xfc] sm:$0xf] %v3192
  // Predicated region
  $region46: #{_lambda_.24} parent=0 // pred_check
    _
  $region47: #{_lambda_.24} parent=0 // pred_check_branch
    %3322 = sbr.rel (0) target = $region49
  $region48: #{_lambda_.24} parent=0 // pred_region
    _
  $region49: #{_lambda_.24} parent=0 // pred_fallthru
    _
  // Predicated region
  $region50: #{_lambda_.24} parent=0 // pred_check
    _
  $region51: #{_lambda_.24} parent=0 // pred_check_branch
    %3324 = sbr.rel (0) target = $region53
  $region52: #{_lambda_.24} parent=0 // pred_region
    _
  $region53: #{_lambda_.24} parent=0 // pred_fallthru
    _

</llo_original>
